<compile_context>
chip_gen: v5e
topology: v5e:2x2
jax: 0.10.0
libtpu: 0.0.40
codegen_flags: <defaults>
</compile_context>

<pallas_src>
import math

import jax
import jax.numpy as jnp
from jax import lax
from jax.experimental import pallas as pl
from jax.experimental.pallas import tpu as pltpu

_LANE = 128


def _round_up(n, m):
    return ((n + m - 1) // m) * m


def _geometry(H, W, K, stride, P):
    Hp1, Wp1 = H + 2 * P, W + 2 * P
    H1, W1 = (Hp1 - K) // stride + 1, (Wp1 - K) // stride + 1
    Hp2, Wp2 = H1 + 2 * P, W1 + 2 * P
    H2, W2 = Hp2 - K + 1, Wp2 - K + 1
    return dict(Hp1=Hp1, Wp1=Wp1, H1=H1, W1=W1,
                Hp2=Hp2, Wp2=Wp2, H2=H2, W2=W2)


# ------------------------------ fused kernel --------------------------------

def _make_branch_kernel(nb, H, W, Cin, K, stride, P, Cp, Cout, Cop, g, sdt):
    """Builds the fused 2-block DartsDwsBranch kernel for fixed static shapes.

    Kernel refs (per grid step = nb batch images, NHWC):
      x_ref     : (nb, H, W, Cin)       input images (true channel count)
      wt1_ref   : (K*K, Cp, Cp)  sdt    folded dw1*pw1 tap matrices
      s1/t1     : (1, Cp) f32           folded BN1 scale / shift
      wt2_ref   : (K*K, Cp, Cop) sdt    folded dw2*pw2 tap matrices
      s2/t2     : (1, Cop) f32          folded BN2 scale / shift
      out_ref   : (nb, H2, W2, Cout)
      xpad_ref  : (nb, Hp1, Wp1, Cp) VMEM sdt   padded relu(x) scratch
      midpad_ref: (nb, Hp2, Wp2, Cp) VMEM sdt   padded relu(mid) scratch
    """
    Hp1, Wp1, H1, W1 = g["Hp1"], g["Wp1"], g["H1"], g["W1"]
    Hp2, Wp2, H2, W2 = g["Hp2"], g["Wp2"], g["H2"], g["W2"]

    def dws_block(pad_ref, wt_ref, s_ref, t_ref, oh, ow, s):
        """ReLU'd/padded input (VMEM) -> depthwise+pointwise as K*K accumulating
        MXU matmuls -> BN affine.  Returns (nb*oh*ow, C_out_padded) in f32."""
        acc = None
        for kw in range(K):
            # ONE sublane-misaligned W window per kw (K per block, not K*K);
            # the per-kh slices below run along a major axis and are cheap.
            if s == 1:
                wplane = pad_ref[:, :, kw:kw + ow, :]
            else:
                # TODO(synk): stride>1 (reduction cells) could deinterleave W
                # once per block instead of K strided reads.
                wplane = pad_ref[:, :, pl.ds(kw, ow, s), :]
            for kh in range(K):
                if s == 1:
                    tap = wplane[:, kh:kh + oh, :, :]
                else:
                    tap = wplane[:, kh:kh + (oh - 1) * s + 1:s, :, :]
                lhs = tap.reshape(nb * oh * ow, Cp)
                term = jnp.dot(lhs, wt_ref[kh * K + kw],
                               preferred_element_type=jnp.float32)
                acc = term if acc is None else acc + term   # init = first tap
        return acc * s_ref[...] + t_ref[...]

    def kernel(x_ref, wt1_ref, s1_ref, t1_ref, wt2_ref, s2_ref, t2_ref,
               out_ref, xpad_ref, midpad_ref):
        z = lambda *shape: jnp.zeros(shape, sdt)

        # ---- stage block-1 input: zero only the P-wide halo strips and the
        # lane-padding channels; the interior data region is fully overwritten.
        if P > 0:
            xpad_ref[:, 0:P, :, :] = z(nb, P, Wp1, Cp)
            xpad_ref[:, P + H:Hp1, :, :] = z(nb, P, Wp1, Cp)
            xpad_ref[:, P:P + H, 0:P, :] = z(nb, H, P, Cp)
            xpad_ref[:, P:P + H, P + W:Wp1, :] = z(nb, H, P, Cp)
        # relu(pad(x)) == pad(relu(x)) since relu(0) == 0.
        xpad_ref[:, P:P + H, P:P + W, 0:Cin] = (
            jnp.maximum(x_ref[...], 0.0).astype(sdt))
        if Cin < Cp:
            # Lane padding done in VMEM (input travels HBM at true width).
            xpad_ref[:, P:P + H, P:P + W, Cin:Cp] = z(nb, H, W, Cp - Cin)

        # ---- block 1: ReLU -> dw KxK (stride) -> 1x1 -> BN (folded, MXU).
        y1 = dws_block(xpad_ref, wt1_ref, s1_ref, t1_ref, H1, W1, stride)

        # ---- stage block-2 input; intermediate never leaves VMEM.  The
        # lane-padded channels of y1 are exactly 0 (wt1 pad columns and BN1
        # pad scale/shift are zero), so the interior store covers all Cp lanes.
        if P > 0:
            midpad_ref[:, 0:P, :, :] = z(nb, P, Wp2, Cp)
            midpad_ref[:, P + H1:Hp2, :, :] = z(nb, P, Wp2, Cp)
            midpad_ref[:, P:P + H1, 0:P, :] = z(nb, H1, P, Cp)
            midpad_ref[:, P:P + H1, P + W1:Wp2, :] = z(nb, H1, P, Cp)
        midpad_ref[:, P:P + H1, P:P + W1, :] = (
            jnp.maximum(y1, 0.0).astype(sdt).reshape(nb, H1, W1, Cp))

        # ---- block 2: ReLU -> dw KxK (stride 1) -> 1x1 -> BN.
        y2 = dws_block(midpad_ref, wt2_ref, s2_ref, t2_ref, H2, W2, 1)
        y2 = y2.reshape(nb, H2, W2, Cop)
        # Store only the true output channels: HBM writes at true size.
        out_ref[...] = y2[:, :, :, 0:Cout].astype(out_ref.dtype)

    return kernel


# -------------------------------- wrappers -----------------------------------

def darts_dws_branch_nhwc(x, params, *, stride, padding, eps=1e-5,
                          compute_dtype=jnp.bfloat16, batch_block=None,
                          core_parallel=False):
    """DartsDwsBranch forward (BatchNorm eval mode).  NHWC in / NHWC out."""
    x = x.astype(jnp.float32)
    N, H, W, Cin = x.shape
    p1, p2 = params["conv1"], params["conv2"]
    kk = p1["dw_w"].shape[0]
    K = int(round(math.sqrt(kk)))
    assert K * K == kk, "depthwise kernel must be square"
    assert p2["dw_w"].shape[0] == kk
    Cmid = p1["pw_w"].shape[1]
    Cout = p2["pw_w"].shape[1]
    assert Cmid == Cin, "DartsDwsBranch uses mid_channels == in_channels"

    Cp = _round_up(max(Cin, Cmid), _LANE)     # lane width inside the kernel
    Cop = _round_up(Cout, _LANE)
    cdt = compute_dtype
    P = padding
    g = _geometry(H, W, K, stride, P)
    H2, W2 = g["H2"], g["W2"]

    # Fold the depthwise taps into the pointwise weights (wrapper-side, once):
    #   y[o] = sum_tap sum_c x_tap[c]*dw_tap[c]*pw[c,o] = sum_tap (x_tap @ Wtap[tap])[o]
    # so each DwsConv becomes K*K accumulating MXU matmuls (no VPU tap loop).
    # Pad rows/cols with zeros (keeps padded lanes exactly zero downstream).
    def fold_taps(dw, pw, cin, cout, cin_p, cout_p):
        wt = dw.astype(jnp.float32)[:, :, None] * pw.astype(jnp.float32)[None, :, :]
        wt = jnp.pad(wt, ((0, 0), (0, cin_p - cin), (0, cout_p - cout)))
        return wt.astype(cdt)

    wt1 = fold_taps(p1["dw_w"], p1["pw_w"], Cin, Cmid, Cp, Cp)
    wt2 = fold_taps(p2["dw_w"], p2["pw_w"], Cmid, Cout, Cp, Cop)

    def folded_bn(p, c, c_pad):
        scale = (p["gamma"] / jnp.sqrt(p["var"] + eps)).astype(jnp.float32)
        shift = (p["beta"] - p["mean"] * scale).astype(jnp.float32)
        return (jnp.pad(scale, (0, c_pad - c)).reshape(1, c_pad),
                jnp.pad(shift, (0, c_pad - c)).reshape(1, c_pad))

    s1, t1 = folded_bn(p1, Cmid, Cp)
    s2, t2 = folded_bn(p2, Cout, Cop)

    # Batch blocking: several images per grid step (fills MXU M, amortizes the
    # per-step overhead), auto-sized against a conservative VMEM budget.
    if batch_block is None:
        wdt = jnp.dtype(cdt).itemsize
        per_img = (2 * (H * W * Cin + H2 * W2 * Cout) * 4            # in/out blocks (x2 buf)
                   + (g["Hp1"] * g["Wp1"] + g["Hp2"] * g["Wp2"]) * Cp * wdt  # scratches
                   + 3 * (g["H1"] * g["W1"] + H2 * W2) * max(Cp, Cop) * 4)   # matmul temps
        fixed = 2 * (wt1.size + wt2.size) * wdt + 4 * max(Cp, Cop) * 4
        budget = 12 * 1024 * 1024
        batch_block = 1
        for cand in range(1, min(N, 8) + 1):
            if N % cand == 0 and fixed + cand * per_img <= budget:
                batch_block = cand
    nb = batch_block
    assert N % nb == 0, "batch_block must divide the batch size"

    kernel = _make_branch_kernel(nb, H, W, Cin, K, stride, P, Cp, Cout, Cop,
                                 g, cdt)

    grid_spec = pltpu.PrefetchScalarGridSpec(
        num_scalar_prefetch=0,
        grid=(N // nb,),
        in_specs=[
            pl.BlockSpec((nb, H, W, Cin), lambda b: (b, 0, 0, 0)),   # x (true C)
            pl.BlockSpec((kk, Cp, Cp), lambda b: (0, 0, 0)),         # tap mats 1
            pl.BlockSpec((1, Cp), lambda b: (0, 0)),                 # bn1 scale
            pl.BlockSpec((1, Cp), lambda b: (0, 0)),                 # bn1 shift
            pl.BlockSpec((kk, Cp, Cop), lambda b: (0, 0, 0)),        # tap mats 2
            pl.BlockSpec((1, Cop), lambda b: (0, 0)),                # bn2 scale
            pl.BlockSpec((1, Cop), lambda b: (0, 0)),                # bn2 shift
        ],
        out_specs=pl.BlockSpec((nb, H2, W2, Cout), lambda b: (b, 0, 0, 0)),
        scratch_shapes=[
            pltpu.VMEM((nb, g["Hp1"], g["Wp1"], Cp), cdt),   # padded relu(x)
            pltpu.VMEM((nb, g["Hp2"], g["Wp2"], Cp), cdt),   # padded relu(mid)
        ],
    )

    # core_parallel=True shards the batch grid explicitly across v7x's 2 TCs.
    batch_sem = pltpu.CORE_PARALLEL if core_parallel else "parallel"

    return pl.pallas_call(
        kernel,
        out_shape=jax.ShapeDtypeStruct((N, H2, W2, Cout), jnp.float32),
        grid_spec=grid_spec,
        compiler_params=pltpu.CompilerParams(
            dimension_semantics=(batch_sem,),
            vmem_limit_bytes=32 * 1024 * 1024,
        ),
    )(x, wt1, s1, t1, wt2, s2, t2)


def darts_dws_branch(x_nchw, params, *, stride, padding, **kwargs):
    """NCHW adapter (matches the PyTorch module interface).  Keep the
    surrounding model NHWC and call darts_dws_branch_nhwc directly to avoid
    these two (true-channel-width, hence cheap) layout passes."""
    x = jnp.transpose(x_nchw, (0, 2, 3, 1))
    out = darts_dws_branch_nhwc(x, params, stride=stride, padding=padding,
                                **kwargs)
    return jnp.transpose(out, (0, 3, 1, 2))


# ----------------------------- parameter init -------------------------------

def init_params(key, in_channels, out_channels, kernel_size):
    mid = in_channels
    ks = jax.random.split(key, 12)

    def bn(kg, kb, km, kv, c):
        return dict(
            gamma=jax.random.uniform(kg, (c,), jnp.float32, 0.5, 1.5),
            beta=jax.random.normal(kb, (c,), jnp.float32) * 0.1,
            mean=jax.random.normal(km, (c,), jnp.float32) * 0.1,
            var=jax.random.uniform(kv, (c,), jnp.float32, 0.5, 1.5),
        )

    kk = kernel_size * kernel_size
    return {
        "conv1": dict(
            dw_w=jax.random.normal(ks[0], (kk, in_channels), jnp.float32) * 0.2,
            pw_w=jax.random.normal(ks[1], (in_channels, mid), jnp.float32) * 0.2,
            **bn(ks[2], ks[3], ks[4], ks[5], mid),
        ),
        "conv2": dict(
            dw_w=jax.random.normal(ks[6], (kk, mid), jnp.float32) * 0.2,
            pw_w=jax.random.normal(ks[7], (mid, out_channels), jnp.float32) * 0.2,
            **bn(ks[8], ks[9], ks[10], ks[11], out_channels),
        ),
    }


# ------------------------- pure-JAX reference (check) ------------------------

def _ref_block(x_nhwc, p, stride, padding, eps=1e-5):
    K = int(round(math.sqrt(p["dw_w"].shape[0])))
    Cin = p["dw_w"].shape[1]
    Cout = p["pw_w"].shape[1]
    x = jnp.maximum(x_nhwc, 0.0)
    dw_hwio = p["dw_w"].reshape(K, K, 1, Cin)
    y = lax.conv_general_dilated(
        x, dw_hwio, window_strides=(stride, stride),
        padding=((padding, padding), (padding, padding)),
        dimension_numbers=("NHWC", "HWIO", "NHWC"),
        feature_group_count=Cin)
    y = lax.conv_general_dilated(
        y, p["pw_w"].reshape(1, 1, Cin, Cout), window_strides=(1, 1),
        padding="VALID", dimension_numbers=("NHWC", "HWIO", "NHWC"))
    scale = p["gamma"] / jnp.sqrt(p["var"] + eps)
    shift = p["beta"] - p["mean"] * scale
    return y * scale + shift


def _ref_branch(x_nchw, params, stride, padding):
    x = jnp.transpose(x_nchw, (0, 2, 3, 1))
    x = _ref_block(x, params["conv1"], stride, padding)
    x = _ref_block(x, params["conv2"], 1, padding)
    return jnp.transpose(x, (0, 3, 1, 2))


# ---------------------------------- main -------------------------------------

if __name__ == "__main__":
    key = jax.random.PRNGKey(0)
    k_x, k_p = jax.random.split(key)

    N, Cin, H, W = 2, 4, 16, 16
    Cout = 8
    kernel_size, stride, padding = 3, 1, 1

    x = jax.random.normal(k_x, (N, Cin, H, W), jnp.float32)
    params = init_params(k_p, Cin, Cout, kernel_size)

    H1 = (H + 2 * padding - kernel_size) // stride + 1
    H2 = H1 + 2 * padding - kernel_size + 1

    ref = jax.block_until_ready(_ref_branch(x, params, stride, padding))

    # f32 compute path (tight check against the lax.conv reference).
    out_f32 = jax.block_until_ready(
        darts_dws_branch(x, params, stride=stride, padding=padding,
                         compute_dtype=jnp.float32))
    assert out_f32.shape == (N, Cout, H2, H2), out_f32.shape
    err_f32 = float(jnp.max(jnp.abs(out_f32 - ref)))
    assert err_f32 < 2e-4, err_f32

    # Default path: bf16 MXU operands (tap matrices + padded activations),
    # f32 accumulation -- the v6e/v7x recommendation.
    out_bf16 = jax.block_until_ready(
        darts_dws_branch(x, params, stride=stride, padding=padding))
    assert out_bf16.shape == (N, Cout, H2, H2), out_bf16.shape
    err_bf16 = float(jnp.max(jnp.abs(out_bf16 - ref)))
    assert err_bf16 < 1e-1, err_bf16

    print("KERNEL_OK")
</pallas_src>

<mosaic_0001>
module attributes {stable_mosaic.version = 11 : i64} {
  func.func @kernel(%arg0: i32, %arg1: memref<2x16x16x4xf32, #tpu.memory_space<vmem>>, %arg2: memref<9x128x128xf32, #tpu.memory_space<vmem>>, %arg3: memref<1x128xf32, #tpu.memory_space<vmem>>, %arg4: memref<1x128xf32, #tpu.memory_space<vmem>>, %arg5: memref<9x128x128xf32, #tpu.memory_space<vmem>>, %arg6: memref<1x128xf32, #tpu.memory_space<vmem>>, %arg7: memref<1x128xf32, #tpu.memory_space<vmem>>, %arg8: memref<2x16x16x8xf32, #tpu.memory_space<vmem>>, %arg9: memref<2x18x18x128xf32, #tpu.memory_space<vmem>>, %arg10: memref<2x18x18x128xf32, #tpu.memory_space<vmem>>) attributes {dimension_semantics = [#tpu.dimension_semantics<parallel>], iteration_bounds = array<i64: 1>, scalar_prefetch = 0 : i64, scratch_operands = 2 : i64, tpu.core_type = #tpu.core_type<tc>, window_params = [{transform_indices = @transform_0, window_bounds = array<i64: 2, 16, 16, 4>}, {pipeline_mode = #tpu.pipeline_mode<synchronous>, transform_indices = @transform_1, window_bounds = array<i64: 9, 128, 128>}, {pipeline_mode = #tpu.pipeline_mode<synchronous>, transform_indices = @transform_2, window_bounds = array<i64: 1, 128>}, {pipeline_mode = #tpu.pipeline_mode<synchronous>, transform_indices = @transform_3, window_bounds = array<i64: 1, 128>}, {pipeline_mode = #tpu.pipeline_mode<synchronous>, transform_indices = @transform_4, window_bounds = array<i64: 9, 128, 128>}, {pipeline_mode = #tpu.pipeline_mode<synchronous>, transform_indices = @transform_5, window_bounds = array<i64: 1, 128>}, {pipeline_mode = #tpu.pipeline_mode<synchronous>, transform_indices = @transform_6, window_bounds = array<i64: 1, 128>}, {transform_indices = @transform_7, window_bounds = array<i64: 2, 16, 16, 8>}]} {
    %cst = arith.constant 0.000000e+00 : f32
    %0 = vector.broadcast %cst : f32 to vector<2x1x18x128xf32>
    %c0 = arith.constant 0 : index
    %c0_0 = arith.constant 0 : index
    %c0_1 = arith.constant 0 : index
    %c0_2 = arith.constant 0 : index
    %1 = vector.load %arg9[%c0, %c0_0, %c0_1, %c0_2] : memref<2x18x18x128xf32, #tpu.memory_space<vmem>>, vector<2x1x18x128xf32>
    tpu.vector_store %arg9[%c0, %c0_0, %c0_1, %c0_2], %0 {strides = array<i32>} : memref<2x18x18x128xf32, #tpu.memory_space<vmem>>, vector<2x1x18x128xf32>,
    %cst_3 = arith.constant 0.000000e+00 : f32
    %2 = vector.broadcast %cst_3 : f32 to vector<2x1x18x128xf32>
    %c0_4 = arith.constant 0 : index
    %c17 = arith.constant 17 : index
    %c0_5 = arith.constant 0 : index
    %c0_6 = arith.constant 0 : index
    %3 = vector.load %arg9[%c0_4, %c17, %c0_5, %c0_6] : memref<2x18x18x128xf32, #tpu.memory_space<vmem>>, vector<2x1x18x128xf32>
    tpu.vector_store %arg9[%c0_4, %c17, %c0_5, %c0_6], %2 {strides = array<i32>} : memref<2x18x18x128xf32, #tpu.memory_space<vmem>>, vector<2x1x18x128xf32>,
    %cst_7 = arith.constant 0.000000e+00 : f32
    %4 = vector.broadcast %cst_7 : f32 to vector<2x16x1x128xf32>
    %c0_8 = arith.constant 0 : index
    %c1 = arith.constant 1 : index
    %c0_9 = arith.constant 0 : index
    %c0_10 = arith.constant 0 : index
    %5 = vector.load %arg9[%c0_8, %c1, %c0_9, %c0_10] : memref<2x18x18x128xf32, #tpu.memory_space<vmem>>, vector<2x16x1x128xf32>
    tpu.vector_store %arg9[%c0_8, %c1, %c0_9, %c0_10], %4 {strides = array<i32>} : memref<2x18x18x128xf32, #tpu.memory_space<vmem>>, vector<2x16x1x128xf32>,
    %cst_11 = arith.constant 0.000000e+00 : f32
    %6 = vector.broadcast %cst_11 : f32 to vector<2x16x1x128xf32>
    %c0_12 = arith.constant 0 : index
    %c1_13 = arith.constant 1 : index
    %c17_14 = arith.constant 17 : index
    %c0_15 = arith.constant 0 : index
    %7 = vector.load %arg9[%c0_12, %c1_13, %c17_14, %c0_15] : memref<2x18x18x128xf32, #tpu.memory_space<vmem>>, vector<2x16x1x128xf32>
    tpu.vector_store %arg9[%c0_12, %c1_13, %c17_14, %c0_15], %6 {strides = array<i32>} : memref<2x18x18x128xf32, #tpu.memory_space<vmem>>, vector<2x16x1x128xf32>,
    %c0_16 = arith.constant 0 : index
    %c0_17 = arith.constant 0 : index
    %c0_18 = arith.constant 0 : index
    %c0_19 = arith.constant 0 : index
    %8 = vector.load %arg1[%c0_16, %c0_17, %c0_18, %c0_19] : memref<2x16x16x4xf32, #tpu.memory_space<vmem>>, vector<2x16x16x4xf32>
    %cst_20 = arith.constant 0.000000e+00 : f32
    %9 = vector.broadcast %cst_20 : f32 to vector<2x16x16x4xf32>
    %10 = arith.maximumf %8, %9 : vector<2x16x16x4xf32>
    %c0_21 = arith.constant 0 : index
    %c1_22 = arith.constant 1 : index
    %c1_23 = arith.constant 1 : index
    %c0_24 = arith.constant 0 : index
    %11 = vector.load %arg9[%c0_21, %c1_22, %c1_23, %c0_24] : memref<2x18x18x128xf32, #tpu.memory_space<vmem>>, vector<2x16x16x4xf32>
    tpu.vector_store %arg9[%c0_21, %c1_22, %c1_23, %c0_24], %10 {strides = array<i32>} : memref<2x18x18x128xf32, #tpu.memory_space<vmem>>, vector<2x16x16x4xf32>,
    %cst_25 = arith.constant 0.000000e+00 : f32
    %12 = vector.broadcast %cst_25 : f32 to vector<2x16x16x124xf32>
    %c0_26 = arith.constant 0 : index
    %c1_27 = arith.constant 1 : index
    %c1_28 = arith.constant 1 : index
    %c4 = arith.constant 4 : index
    %13 = vector.load %arg9[%c0_26, %c1_27, %c1_28, %c4] : memref<2x18x18x128xf32, #tpu.memory_space<vmem>>, vector<2x16x16x124xf32>
    tpu.vector_store %arg9[%c0_26, %c1_27, %c1_28, %c4], %12 {strides = array<i32>} : memref<2x18x18x128xf32, #tpu.memory_space<vmem>>, vector<2x16x16x124xf32>,
    %c0_29 = arith.constant 0 : index
    %c0_30 = arith.constant 0 : index
    %c0_31 = arith.constant 0 : index
    %c0_32 = arith.constant 0 : index
    %14 = vector.load %arg9[%c0_29, %c0_30, %c0_31, %c0_32] : memref<2x18x18x128xf32, #tpu.memory_space<vmem>>, vector<2x18x16x128xf32>
    %15 = vector.extract_strided_slice %14 {offsets = [0, 0, 0, 0], sizes = [2, 16, 16, 128], strides = [1, 1, 1, 1]} : vector<2x18x16x128xf32> to vector<2x16x16x128xf32>
    %16 = vector.shape_cast %15 : vector<2x16x16x128xf32> to vector<512x128xf32>
    %c0_33 = arith.constant 0 : index
    %c0_34 = arith.constant 0 : index
    %c0_35 = arith.constant 0 : index
    %17 = vector.load %arg2[%c0_33, %c0_34, %c0_35] : memref<9x128x128xf32, #tpu.memory_space<vmem>>, vector<1x128x128xf32>
    %18 = vector.shape_cast %17 : vector<1x128x128xf32> to vector<128x128xf32>
    %cst_36 = arith.constant dense<0.000000e+00> : vector<512x128xf32>
    %19 = tpu.matmul %16, %18, %cst_36 {dimension_numbers = #tpu.dot_dimension_numbers<[1], [0], [0], [1], [0, 0, 1, 1], [], []>} : vector<512x128xf32>, vector<128x128xf32>, vector<512x128xf32> -> vector<512x128xf32>
    %20 = vector.extract_strided_slice %14 {offsets = [0, 1, 0, 0], sizes = [2, 16, 16, 128], strides = [1, 1, 1, 1]} : vector<2x18x16x128xf32> to vector<2x16x16x128xf32>
    %21 = vector.shape_cast %20 : vector<2x16x16x128xf32> to vector<512x128xf32>
    %c3 = arith.constant 3 : index
    %c0_37 = arith.constant 0 : index
    %c0_38 = arith.constant 0 : index
    %22 = vector.load %arg2[%c3, %c0_37, %c0_38] : memref<9x128x128xf32, #tpu.memory_space<vmem>>, vector<1x128x128xf32>
    %23 = vector.shape_cast %22 : vector<1x128x128xf32> to vector<128x128xf32>
    %cst_39 = arith.constant dense<0.000000e+00> : vector<512x128xf32>
    %24 = tpu.matmul %21, %23, %cst_39 {dimension_numbers = #tpu.dot_dimension_numbers<[1], [0], [0], [1], [0, 0, 1, 1], [], []>} : vector<512x128xf32>, vector<128x128xf32>, vector<512x128xf32> -> vector<512x128xf32>
    %25 = arith.addf %19, %24 : vector<512x128xf32>
    %26 = vector.extract_strided_slice %14 {offsets = [0, 2, 0, 0], sizes = [2, 16, 16, 128], strides = [1, 1, 1, 1]} : vector<2x18x16x128xf32> to vector<2x16x16x128xf32>
    %27 = vector.shape_cast %26 : vector<2x16x16x128xf32> to vector<512x128xf32>
    %c6 = arith.constant 6 : index
    %c0_40 = arith.constant 0 : index
    %c0_41 = arith.constant 0 : index
    %28 = vector.load %arg2[%c6, %c0_40, %c0_41] : memref<9x128x128xf32, #tpu.memory_space<vmem>>, vector<1x128x128xf32>
    %29 = vector.shape_cast %28 : vector<1x128x128xf32> to vector<128x128xf32>
    %cst_42 = arith.constant dense<0.000000e+00> : vector<512x128xf32>
    %30 = tpu.matmul %27, %29, %cst_42 {dimension_numbers = #tpu.dot_dimension_numbers<[1], [0], [0], [1], [0, 0, 1, 1], [], []>} : vector<512x128xf32>, vector<128x128xf32>, vector<512x128xf32> -> vector<512x128xf32>
    %31 = arith.addf %25, %30 : vector<512x128xf32>
    %c0_43 = arith.constant 0 : index
    %c0_44 = arith.constant 0 : index
    %c1_45 = arith.constant 1 : index
    %c0_46 = arith.constant 0 : index
    %32 = vector.load %arg9[%c0_43, %c0_44, %c1_45, %c0_46] : memref<2x18x18x128xf32, #tpu.memory_space<vmem>>, vector<2x18x16x128xf32>
    %33 = vector.extract_strided_slice %32 {offsets = [0, 0, 0, 0], sizes = [2, 16, 16, 128], strides = [1, 1, 1, 1]} : vector<2x18x16x128xf32> to vector<2x16x16x128xf32>
    %34 = vector.shape_cast %33 : vector<2x16x16x128xf32> to vector<512x128xf32>
    %c1_47 = arith.constant 1 : index
    %c0_48 = arith.constant 0 : index
    %c0_49 = arith.constant 0 : index
    %35 = vector.load %arg2[%c1_47, %c0_48, %c0_49] : memref<9x128x128xf32, #tpu.memory_space<vmem>>, vector<1x128x128xf32>
    %36 = vector.shape_cast %35 : vector<1x128x128xf32> to vector<128x128xf32>
    %cst_50 = arith.constant dense<0.000000e+00> : vector<512x128xf32>
    %37 = tpu.matmul %34, %36, %cst_50 {dimension_numbers = #tpu.dot_dimension_numbers<[1], [0], [0], [1], [0, 0, 1, 1], [], []>} : vector<512x128xf32>, vector<128x128xf32>, vector<512x128xf32> -> vector<512x128xf32>
    %38 = arith.addf %31, %37 : vector<512x128xf32>
    %39 = vector.extract_strided_slice %32 {offsets = [0, 1, 0, 0], sizes = [2, 16, 16, 128], strides = [1, 1, 1, 1]} : vector<2x18x16x128xf32> to vector<2x16x16x128xf32>
    %40 = vector.shape_cast %39 : vector<2x16x16x128xf32> to vector<512x128xf32>
    %c4_51 = arith.constant 4 : index
    %c0_52 = arith.constant 0 : index
    %c0_53 = arith.constant 0 : index
    %41 = vector.load %arg2[%c4_51, %c0_52, %c0_53] : memref<9x128x128xf32, #tpu.memory_space<vmem>>, vector<1x128x128xf32>
    %42 = vector.shape_cast %41 : vector<1x128x128xf32> to vector<128x128xf32>
    %cst_54 = arith.constant dense<0.000000e+00> : vector<512x128xf32>
    %43 = tpu.matmul %40, %42, %cst_54 {dimension_numbers = #tpu.dot_dimension_numbers<[1], [0], [0], [1], [0, 0, 1, 1], [], []>} : vector<512x128xf32>, vector<128x128xf32>, vector<512x128xf32> -> vector<512x128xf32>
    %44 = arith.addf %38, %43 : vector<512x128xf32>
    %45 = vector.extract_strided_slice %32 {offsets = [0, 2, 0, 0], sizes = [2, 16, 16, 128], strides = [1, 1, 1, 1]} : vector<2x18x16x128xf32> to vector<2x16x16x128xf32>
    %46 = vector.shape_cast %45 : vector<2x16x16x128xf32> to vector<512x128xf32>
    %c7 = arith.constant 7 : index
    %c0_55 = arith.constant 0 : index
    %c0_56 = arith.constant 0 : index
    %47 = vector.load %arg2[%c7, %c0_55, %c0_56] : memref<9x128x128xf32, #tpu.memory_space<vmem>>, vector<1x128x128xf32>
    %48 = vector.shape_cast %47 : vector<1x128x128xf32> to vector<128x128xf32>
    %cst_57 = arith.constant dense<0.000000e+00> : vector<512x128xf32>
    %49 = tpu.matmul %46, %48, %cst_57 {dimension_numbers = #tpu.dot_dimension_numbers<[1], [0], [0], [1], [0, 0, 1, 1], [], []>} : vector<512x128xf32>, vector<128x128xf32>, vector<512x128xf32> -> vector<512x128xf32>
    %50 = arith.addf %44, %49 : vector<512x128xf32>
    %c0_58 = arith.constant 0 : index
    %c0_59 = arith.constant 0 : index
    %c2 = arith.constant 2 : index
    %c0_60 = arith.constant 0 : index
    %51 = vector.load %arg9[%c0_58, %c0_59, %c2, %c0_60] : memref<2x18x18x128xf32, #tpu.memory_space<vmem>>, vector<2x18x16x128xf32>
    %52 = vector.extract_strided_slice %51 {offsets = [0, 0, 0, 0], sizes = [2, 16, 16, 128], strides = [1, 1, 1, 1]} : vector<2x18x16x128xf32> to vector<2x16x16x128xf32>
    %53 = vector.shape_cast %52 : vector<2x16x16x128xf32> to vector<512x128xf32>
    %c2_61 = arith.constant 2 : index
    %c0_62 = arith.constant 0 : index
    %c0_63 = arith.constant 0 : index
    %54 = vector.load %arg2[%c2_61, %c0_62, %c0_63] : memref<9x128x128xf32, #tpu.memory_space<vmem>>, vector<1x128x128xf32>
    %55 = vector.shape_cast %54 : vector<1x128x128xf32> to vector<128x128xf32>
    %cst_64 = arith.constant dense<0.000000e+00> : vector<512x128xf32>
    %56 = tpu.matmul %53, %55, %cst_64 {dimension_numbers = #tpu.dot_dimension_numbers<[1], [0], [0], [1], [0, 0, 1, 1], [], []>} : vector<512x128xf32>, vector<128x128xf32>, vector<512x128xf32> -> vector<512x128xf32>
    %57 = arith.addf %50, %56 : vector<512x128xf32>
    %58 = vector.extract_strided_slice %51 {offsets = [0, 1, 0, 0], sizes = [2, 16, 16, 128], strides = [1, 1, 1, 1]} : vector<2x18x16x128xf32> to vector<2x16x16x128xf32>
    %59 = vector.shape_cast %58 : vector<2x16x16x128xf32> to vector<512x128xf32>
    %c5 = arith.constant 5 : index
    %c0_65 = arith.constant 0 : index
    %c0_66 = arith.constant 0 : index
    %60 = vector.load %arg2[%c5, %c0_65, %c0_66] : memref<9x128x128xf32, #tpu.memory_space<vmem>>, vector<1x128x128xf32>
    %61 = vector.shape_cast %60 : vector<1x128x128xf32> to vector<128x128xf32>
    %cst_67 = arith.constant dense<0.000000e+00> : vector<512x128xf32>
    %62 = tpu.matmul %59, %61, %cst_67 {dimension_numbers = #tpu.dot_dimension_numbers<[1], [0], [0], [1], [0, 0, 1, 1], [], []>} : vector<512x128xf32>, vector<128x128xf32>, vector<512x128xf32> -> vector<512x128xf32>
    %63 = arith.addf %57, %62 : vector<512x128xf32>
    %64 = vector.extract_strided_slice %51 {offsets = [0, 2, 0, 0], sizes = [2, 16, 16, 128], strides = [1, 1, 1, 1]} : vector<2x18x16x128xf32> to vector<2x16x16x128xf32>
    %65 = vector.shape_cast %64 : vector<2x16x16x128xf32> to vector<512x128xf32>
    %c8 = arith.constant 8 : index
    %c0_68 = arith.constant 0 : index
    %c0_69 = arith.constant 0 : index
    %66 = vector.load %arg2[%c8, %c0_68, %c0_69] : memref<9x128x128xf32, #tpu.memory_space<vmem>>, vector<1x128x128xf32>
    %67 = vector.shape_cast %66 : vector<1x128x128xf32> to vector<128x128xf32>
    %cst_70 = arith.constant dense<0.000000e+00> : vector<512x128xf32>
    %68 = tpu.matmul %65, %67, %cst_70 {dimension_numbers = #tpu.dot_dimension_numbers<[1], [0], [0], [1], [0, 0, 1, 1], [], []>} : vector<512x128xf32>, vector<128x128xf32>, vector<512x128xf32> -> vector<512x128xf32>
    %69 = arith.addf %63, %68 : vector<512x128xf32>
    %c0_71 = arith.constant 0 : index
    %c0_72 = arith.constant 0 : index
    %70 = vector.load %arg3[%c0_71, %c0_72] : memref<1x128xf32, #tpu.memory_space<vmem>>, vector<1x128xf32>
    %71 = vector.broadcast %70 : vector<1x128xf32> to vector<512x128xf32>
    %72 = arith.mulf %69, %71 : vector<512x128xf32>
    %c0_73 = arith.constant 0 : index
    %c0_74 = arith.constant 0 : index
    %73 = vector.load %arg4[%c0_73, %c0_74] : memref<1x128xf32, #tpu.memory_space<vmem>>, vector<1x128xf32>
    %74 = vector.broadcast %73 : vector<1x128xf32> to vector<512x128xf32>
    %75 = arith.addf %72, %74 : vector<512x128xf32>
    %cst_75 = arith.constant 0.000000e+00 : f32
    %76 = vector.broadcast %cst_75 : f32 to vector<2x1x18x128xf32>
    %c0_76 = arith.constant 0 : index
    %c0_77 = arith.constant 0 : index
    %c0_78 = arith.constant 0 : index
    %c0_79 = arith.constant 0 : index
    %77 = vector.load %arg10[%c0_76, %c0_77, %c0_78, %c0_79] : memref<2x18x18x128xf32, #tpu.memory_space<vmem>>, vector<2x1x18x128xf32>
    tpu.vector_store %arg10[%c0_76, %c0_77, %c0_78, %c0_79], %76 {strides = array<i32>} : memref<2x18x18x128xf32, #tpu.memory_space<vmem>>, vector<2x1x18x128xf32>,
    %cst_80 = arith.constant 0.000000e+00 : f32
    %78 = vector.broadcast %cst_80 : f32 to vector<2x1x18x128xf32>
    %c0_81 = arith.constant 0 : index
    %c17_82 = arith.constant 17 : index
    %c0_83 = arith.constant 0 : index
    %c0_84 = arith.constant 0 : index
    %79 = vector.load %arg10[%c0_81, %c17_82, %c0_83, %c0_84] : memref<2x18x18x128xf32, #tpu.memory_space<vmem>>, vector<2x1x18x128xf32>
    tpu.vector_store %arg10[%c0_81, %c17_82, %c0_83, %c0_84], %78 {strides = array<i32>} : memref<2x18x18x128xf32, #tpu.memory_space<vmem>>, vector<2x1x18x128xf32>,
    %cst_85 = arith.constant 0.000000e+00 : f32
    %80 = vector.broadcast %cst_85 : f32 to vector<2x16x1x128xf32>
    %c0_86 = arith.constant 0 : index
    %c1_87 = arith.constant 1 : index
    %c0_88 = arith.constant 0 : index
    %c0_89 = arith.constant 0 : index
    %81 = vector.load %arg10[%c0_86, %c1_87, %c0_88, %c0_89] : memref<2x18x18x128xf32, #tpu.memory_space<vmem>>, vector<2x16x1x128xf32>
    tpu.vector_store %arg10[%c0_86, %c1_87, %c0_88, %c0_89], %80 {strides = array<i32>} : memref<2x18x18x128xf32, #tpu.memory_space<vmem>>, vector<2x16x1x128xf32>,
    %cst_90 = arith.constant 0.000000e+00 : f32
    %82 = vector.broadcast %cst_90 : f32 to vector<2x16x1x128xf32>
    %c0_91 = arith.constant 0 : index
    %c1_92 = arith.constant 1 : index
    %c17_93 = arith.constant 17 : index
    %c0_94 = arith.constant 0 : index
    %83 = vector.load %arg10[%c0_91, %c1_92, %c17_93, %c0_94] : memref<2x18x18x128xf32, #tpu.memory_space<vmem>>, vector<2x16x1x128xf32>
    tpu.vector_store %arg10[%c0_91, %c1_92, %c17_93, %c0_94], %82 {strides = array<i32>} : memref<2x18x18x128xf32, #tpu.memory_space<vmem>>, vector<2x16x1x128xf32>,
    %cst_95 = arith.constant 0.000000e+00 : f32
    %84 = vector.broadcast %cst_95 : f32 to vector<512x128xf32>
    %85 = arith.maximumf %75, %84 : vector<512x128xf32>
    %86 = vector.shape_cast %85 : vector<512x128xf32> to vector<2x16x16x128xf32>
    %c0_96 = arith.constant 0 : index
    %c1_97 = arith.constant 1 : index
    %c1_98 = arith.constant 1 : index
    %c0_99 = arith.constant 0 : index
    %87 = vector.load %arg10[%c0_96, %c1_97, %c1_98, %c0_99] : memref<2x18x18x128xf32, #tpu.memory_space<vmem>>, vector<2x16x16x128xf32>
    tpu.vector_store %arg10[%c0_96, %c1_97, %c1_98, %c0_99], %86 {strides = array<i32>} : memref<2x18x18x128xf32, #tpu.memory_space<vmem>>, vector<2x16x16x128xf32>,
    %c0_100 = arith.constant 0 : index
    %c0_101 = arith.constant 0 : index
    %c0_102 = arith.constant 0 : index
    %c0_103 = arith.constant 0 : index
    %88 = vector.load %arg10[%c0_100, %c0_101, %c0_102, %c0_103] : memref<2x18x18x128xf32, #tpu.memory_space<vmem>>, vector<2x18x16x128xf32>
    %89 = vector.extract_strided_slice %88 {offsets = [0, 0, 0, 0], sizes = [2, 16, 16, 128], strides = [1, 1, 1, 1]} : vector<2x18x16x128xf32> to vector<2x16x16x128xf32>
    %90 = vector.shape_cast %89 : vector<2x16x16x128xf32> to vector<512x128xf32>
    %c0_104 = arith.constant 0 : index
    %c0_105 = arith.constant 0 : index
    %c0_106 = arith.constant 0 : index
    %91 = vector.load %arg5[%c0_104, %c0_105, %c0_106] : memref<9x128x128xf32, #tpu.memory_space<vmem>>, vector<1x128x128xf32>
    %92 = vector.shape_cast %91 : vector<1x128x128xf32> to vector<128x128xf32>
    %cst_107 = arith.constant dense<0.000000e+00> : vector<512x128xf32>
    %93 = tpu.matmul %90, %92, %cst_107 {dimension_numbers = #tpu.dot_dimension_numbers<[1], [0], [0], [1], [0, 0, 1, 1], [], []>} : vector<512x128xf32>, vector<128x128xf32>, vector<512x128xf32> -> vector<512x128xf32>
    %94 = vector.extract_strided_slice %88 {offsets = [0, 1, 0, 0], sizes = [2, 16, 16, 128], strides = [1, 1, 1, 1]} : vector<2x18x16x128xf32> to vector<2x16x16x128xf32>
    %95 = vector.shape_cast %94 : vector<2x16x16x128xf32> to vector<512x128xf32>
    %c3_108 = arith.constant 3 : index
    %c0_109 = arith.constant 0 : index
    %c0_110 = arith.constant 0 : index
    %96 = vector.load %arg5[%c3_108, %c0_109, %c0_110] : memref<9x128x128xf32, #tpu.memory_space<vmem>>, vector<1x128x128xf32>
    %97 = vector.shape_cast %96 : vector<1x128x128xf32> to vector<128x128xf32>
    %cst_111 = arith.constant dense<0.000000e+00> : vector<512x128xf32>
    %98 = tpu.matmul %95, %97, %cst_111 {dimension_numbers = #tpu.dot_dimension_numbers<[1], [0], [0], [1], [0, 0, 1, 1], [], []>} : vector<512x128xf32>, vector<128x128xf32>, vector<512x128xf32> -> vector<512x128xf32>
    %99 = arith.addf %93, %98 : vector<512x128xf32>
    %100 = vector.extract_strided_slice %88 {offsets = [0, 2, 0, 0], sizes = [2, 16, 16, 128], strides = [1, 1, 1, 1]} : vector<2x18x16x128xf32> to vector<2x16x16x128xf32>
    %101 = vector.shape_cast %100 : vector<2x16x16x128xf32> to vector<512x128xf32>
    %c6_112 = arith.constant 6 : index
    %c0_113 = arith.constant 0 : index
    %c0_114 = arith.constant 0 : index
    %102 = vector.load %arg5[%c6_112, %c0_113, %c0_114] : memref<9x128x128xf32, #tpu.memory_space<vmem>>, vector<1x128x128xf32>
    %103 = vector.shape_cast %102 : vector<1x128x128xf32> to vector<128x128xf32>
    %cst_115 = arith.constant dense<0.000000e+00> : vector<512x128xf32>
    %104 = tpu.matmul %101, %103, %cst_115 {dimension_numbers = #tpu.dot_dimension_numbers<[1], [0], [0], [1], [0, 0, 1, 1], [], []>} : vector<512x128xf32>, vector<128x128xf32>, vector<512x128xf32> -> vector<512x128xf32>
    %105 = arith.addf %99, %104 : vector<512x128xf32>
    %c0_116 = arith.constant 0 : index
    %c0_117 = arith.constant 0 : index
    %c1_118 = arith.constant 1 : index
    %c0_119 = arith.constant 0 : index
    %106 = vector.load %arg10[%c0_116, %c0_117, %c1_118, %c0_119] : memref<2x18x18x128xf32, #tpu.memory_space<vmem>>, vector<2x18x16x128xf32>
    %107 = vector.extract_strided_slice %106 {offsets = [0, 0, 0, 0], sizes = [2, 16, 16, 128], strides = [1, 1, 1, 1]} : vector<2x18x16x128xf32> to vector<2x16x16x128xf32>
    %108 = vector.shape_cast %107 : vector<2x16x16x128xf32> to vector<512x128xf32>
    %c1_120 = arith.constant 1 : index
    %c0_121 = arith.constant 0 : index
    %c0_122 = arith.constant 0 : index
    %109 = vector.load %arg5[%c1_120, %c0_121, %c0_122] : memref<9x128x128xf32, #tpu.memory_space<vmem>>, vector<1x128x128xf32>
    %110 = vector.shape_cast %109 : vector<1x128x128xf32> to vector<128x128xf32>
    %cst_123 = arith.constant dense<0.000000e+00> : vector<512x128xf32>
    %111 = tpu.matmul %108, %110, %cst_123 {dimension_numbers = #tpu.dot_dimension_numbers<[1], [0], [0], [1], [0, 0, 1, 1], [], []>} : vector<512x128xf32>, vector<128x128xf32>, vector<512x128xf32> -> vector<512x128xf32>
    %112 = arith.addf %105, %111 : vector<512x128xf32>
    %113 = vector.extract_strided_slice %106 {offsets = [0, 1, 0, 0], sizes = [2, 16, 16, 128], strides = [1, 1, 1, 1]} : vector<2x18x16x128xf32> to vector<2x16x16x128xf32>
    %114 = vector.shape_cast %113 : vector<2x16x16x128xf32> to vector<512x128xf32>
    %c4_124 = arith.constant 4 : index
    %c0_125 = arith.constant 0 : index
    %c0_126 = arith.constant 0 : index
    %115 = vector.load %arg5[%c4_124, %c0_125, %c0_126] : memref<9x128x128xf32, #tpu.memory_space<vmem>>, vector<1x128x128xf32>
    %116 = vector.shape_cast %115 : vector<1x128x128xf32> to vector<128x128xf32>
    %cst_127 = arith.constant dense<0.000000e+00> : vector<512x128xf32>
    %117 = tpu.matmul %114, %116, %cst_127 {dimension_numbers = #tpu.dot_dimension_numbers<[1], [0], [0], [1], [0, 0, 1, 1], [], []>} : vector<512x128xf32>, vector<128x128xf32>, vector<512x128xf32> -> vector<512x128xf32>
    %118 = arith.addf %112, %117 : vector<512x128xf32>
    %119 = vector.extract_strided_slice %106 {offsets = [0, 2, 0, 0], sizes = [2, 16, 16, 128], strides = [1, 1, 1, 1]} : vector<2x18x16x128xf32> to vector<2x16x16x128xf32>
    %120 = vector.shape_cast %119 : vector<2x16x16x128xf32> to vector<512x128xf32>
    %c7_128 = arith.constant 7 : index
    %c0_129 = arith.constant 0 : index
    %c0_130 = arith.constant 0 : index
    %121 = vector.load %arg5[%c7_128, %c0_129, %c0_130] : memref<9x128x128xf32, #tpu.memory_space<vmem>>, vector<1x128x128xf32>
    %122 = vector.shape_cast %121 : vector<1x128x128xf32> to vector<128x128xf32>
    %cst_131 = arith.constant dense<0.000000e+00> : vector<512x128xf32>
    %123 = tpu.matmul %120, %122, %cst_131 {dimension_numbers = #tpu.dot_dimension_numbers<[1], [0], [0], [1], [0, 0, 1, 1], [], []>} : vector<512x128xf32>, vector<128x128xf32>, vector<512x128xf32> -> vector<512x128xf32>
    %124 = arith.addf %118, %123 : vector<512x128xf32>
    %c0_132 = arith.constant 0 : index
    %c0_133 = arith.constant 0 : index
    %c2_134 = arith.constant 2 : index
    %c0_135 = arith.constant 0 : index
    %125 = vector.load %arg10[%c0_132, %c0_133, %c2_134, %c0_135] : memref<2x18x18x128xf32, #tpu.memory_space<vmem>>, vector<2x18x16x128xf32>
    %126 = vector.extract_strided_slice %125 {offsets = [0, 0, 0, 0], sizes = [2, 16, 16, 128], strides = [1, 1, 1, 1]} : vector<2x18x16x128xf32> to vector<2x16x16x128xf32>
    %127 = vector.shape_cast %126 : vector<2x16x16x128xf32> to vector<512x128xf32>
    %c2_136 = arith.constant 2 : index
    %c0_137 = arith.constant 0 : index
    %c0_138 = arith.constant 0 : index
    %128 = vector.load %arg5[%c2_136, %c0_137, %c0_138] : memref<9x128x128xf32, #tpu.memory_space<vmem>>, vector<1x128x128xf32>
    %129 = vector.shape_cast %128 : vector<1x128x128xf32> to vector<128x128xf32>
    %cst_139 = arith.constant dense<0.000000e+00> : vector<512x128xf32>
    %130 = tpu.matmul %127, %129, %cst_139 {dimension_numbers = #tpu.dot_dimension_numbers<[1], [0], [0], [1], [0, 0, 1, 1], [], []>} : vector<512x128xf32>, vector<128x128xf32>, vector<512x128xf32> -> vector<512x128xf32>
    %131 = arith.addf %124, %130 : vector<512x128xf32>
    %132 = vector.extract_strided_slice %125 {offsets = [0, 1, 0, 0], sizes = [2, 16, 16, 128], strides = [1, 1, 1, 1]} : vector<2x18x16x128xf32> to vector<2x16x16x128xf32>
    %133 = vector.shape_cast %132 : vector<2x16x16x128xf32> to vector<512x128xf32>
    %c5_140 = arith.constant 5 : index
    %c0_141 = arith.constant 0 : index
    %c0_142 = arith.constant 0 : index
    %134 = vector.load %arg5[%c5_140, %c0_141, %c0_142] : memref<9x128x128xf32, #tpu.memory_space<vmem>>, vector<1x128x128xf32>
    %135 = vector.shape_cast %134 : vector<1x128x128xf32> to vector<128x128xf32>
    %cst_143 = arith.constant dense<0.000000e+00> : vector<512x128xf32>
    %136 = tpu.matmul %133, %135, %cst_143 {dimension_numbers = #tpu.dot_dimension_numbers<[1], [0], [0], [1], [0, 0, 1, 1], [], []>} : vector<512x128xf32>, vector<128x128xf32>, vector<512x128xf32> -> vector<512x128xf32>
    %137 = arith.addf %131, %136 : vector<512x128xf32>
    %138 = vector.extract_strided_slice %125 {offsets = [0, 2, 0, 0], sizes = [2, 16, 16, 128], strides = [1, 1, 1, 1]} : vector<2x18x16x128xf32> to vector<2x16x16x128xf32>
    %139 = vector.shape_cast %138 : vector<2x16x16x128xf32> to vector<512x128xf32>
    %c8_144 = arith.constant 8 : index
    %c0_145 = arith.constant 0 : index
    %c0_146 = arith.constant 0 : index
    %140 = vector.load %arg5[%c8_144, %c0_145, %c0_146] : memref<9x128x128xf32, #tpu.memory_space<vmem>>, vector<1x128x128xf32>
    %141 = vector.shape_cast %140 : vector<1x128x128xf32> to vector<128x128xf32>
    %cst_147 = arith.constant dense<0.000000e+00> : vector<512x128xf32>
    %142 = tpu.matmul %139, %141, %cst_147 {dimension_numbers = #tpu.dot_dimension_numbers<[1], [0], [0], [1], [0, 0, 1, 1], [], []>} : vector<512x128xf32>, vector<128x128xf32>, vector<512x128xf32> -> vector<512x128xf32>
    %143 = arith.addf %137, %142 : vector<512x128xf32>
    %c0_148 = arith.constant 0 : index
    %c0_149 = arith.constant 0 : index
    %144 = vector.load %arg6[%c0_148, %c0_149] : memref<1x128xf32, #tpu.memory_space<vmem>>, vector<1x128xf32>
    %145 = vector.broadcast %144 : vector<1x128xf32> to vector<512x128xf32>
    %146 = arith.mulf %143, %145 : vector<512x128xf32>
    %c0_150 = arith.constant 0 : index
    %c0_151 = arith.constant 0 : index
    %147 = vector.load %arg7[%c0_150, %c0_151] : memref<1x128xf32, #tpu.memory_space<vmem>>, vector<1x128xf32>
    %148 = vector.broadcast %147 : vector<1x128xf32> to vector<512x128xf32>
    %149 = arith.addf %146, %148 : vector<512x128xf32>
    %150 = vector.shape_cast %149 : vector<512x128xf32> to vector<2x16x16x128xf32>
    %151 = vector.extract_strided_slice %150 {offsets = [0, 0, 0, 0], sizes = [2, 16, 16, 8], strides = [1, 1, 1, 1]} : vector<2x16x16x128xf32> to vector<2x16x16x8xf32>
    %c0_152 = arith.constant 0 : index
    %c0_153 = arith.constant 0 : index
    %c0_154 = arith.constant 0 : index
    %c0_155 = arith.constant 0 : index
    %152 = vector.load %arg8[%c0_152, %c0_153, %c0_154, %c0_155] : memref<2x16x16x8xf32, #tpu.memory_space<vmem>>, vector<2x16x16x8xf32>
    tpu.vector_store %arg8[%c0_152, %c0_153, %c0_154, %c0_155], %151 {strides = array<i32>} : memref<2x16x16x8xf32, #tpu.memory_space<vmem>>, vector<2x16x16x8xf32>,
    return
  }
  func.func @transform_0(%arg0: i32) -> (i32, i32, i32, i32) {
    %c0_i32 = arith.constant 0 : i32
    %c0_i32_0 = arith.constant 0 : i32
    %c0_i32_1 = arith.constant 0 : i32
    %c0_i32_2 = arith.constant 0 : i32
    return %arg0, %c0_i32, %c0_i32_0, %c0_i32_1 : i32, i32, i32, i32
  }
  func.func @transform_1(%arg0: i32) -> (i32, i32, i32) {
    %c0_i32 = arith.constant 0 : i32
    %c0_i32_0 = arith.constant 0 : i32
    %c0_i32_1 = arith.constant 0 : i32
    %c0_i32_2 = arith.constant 0 : i32
    return %c0_i32, %c0_i32_0, %c0_i32_1 : i32, i32, i32
  }
  func.func @transform_2(%arg0: i32) -> (i32, i32) {
    %c0_i32 = arith.constant 0 : i32
    %c0_i32_0 = arith.constant 0 : i32
    %c0_i32_1 = arith.constant 0 : i32
    return %c0_i32, %c0_i32_0 : i32, i32
  }
  func.func @transform_3(%arg0: i32) -> (i32, i32) {
    %c0_i32 = arith.constant 0 : i32
    %c0_i32_0 = arith.constant 0 : i32
    %c0_i32_1 = arith.constant 0 : i32
    return %c0_i32, %c0_i32_0 : i32, i32
  }
  func.func @transform_4(%arg0: i32) -> (i32, i32, i32) {
    %c0_i32 = arith.constant 0 : i32
    %c0_i32_0 = arith.constant 0 : i32
    %c0_i32_1 = arith.constant 0 : i32
    %c0_i32_2 = arith.constant 0 : i32
    return %c0_i32, %c0_i32_0, %c0_i32_1 : i32, i32, i32
  }
  func.func @transform_5(%arg0: i32) -> (i32, i32) {
    %c0_i32 = arith.constant 0 : i32
    %c0_i32_0 = arith.constant 0 : i32
    %c0_i32_1 = arith.constant 0 : i32
    return %c0_i32, %c0_i32_0 : i32, i32
  }
  func.func @transform_6(%arg0: i32) -> (i32, i32) {
    %c0_i32 = arith.constant 0 : i32
    %c0_i32_0 = arith.constant 0 : i32
    %c0_i32_1 = arith.constant 0 : i32
    return %c0_i32, %c0_i32_0 : i32, i32
  }
  func.func @transform_7(%arg0: i32) -> (i32, i32, i32, i32) {
    %c0_i32 = arith.constant 0 : i32
    %c0_i32_0 = arith.constant 0 : i32
    %c0_i32_1 = arith.constant 0 : i32
    %c0_i32_2 = arith.constant 0 : i32
    return %arg0, %c0_i32, %c0_i32_0, %c0_i32_1 : i32, i32, i32, i32
  }
}

</mosaic_0001>

<llo_original>
// kernel: tpu_custom_call.1
$region0: #{tpu_custom_call.1}
  #allocation0 [shape = 'u32[]', space=smem, size = 0x4, offset = 0x4, fixed_abs, tag = 'smem constant byte address 0x4 - core index']
  #allocation1 [shape = 'u32[72,128]{1,0:T(1,128)}', space=vmem, size = 0x9000, scoped, tag = 'internal scratch']
  #allocation2 [shape = 'f32[2,18,18,128]{3,2,1,0:T(8,128)}', space=vmem, size = 0x6c000, scoped, tag = 'scratch operand']
  #allocation3 [shape = 'f32[2,18,18,128]{3,2,1,0:T(8,128)}', space=vmem, size = 0x6c000, scoped, tag = 'scratch operand']
  %s0 = inlined_call_operand.vmem [shape: f32[2,16,16,4], index: 0, kind: input, shape index: {}]
  %s1 = inlined_call_operand.hbm [shape: f32[9,128,128], index: 1, kind: input, shape index: {}]
  %s2 = inlined_call_operand.vmem [shape: f32[1,128], index: 2, kind: input, shape index: {}]
  %s3 = inlined_call_operand.vmem [shape: f32[1,128], index: 3, kind: input, shape index: {}]
  %s4 = inlined_call_operand.hbm [shape: f32[9,128,128], index: 4, kind: input, shape index: {}]
  %s5 = inlined_call_operand.vmem [shape: f32[1,128], index: 5, kind: input, shape index: {}]
  %s6 = inlined_call_operand.vmem [shape: f32[1,128], index: 6, kind: input, shape index: {}]
  %s7 = inlined_call_operand.vmem [shape: f32[2,16,16,8], index: 7, kind: output, shape index: {}]
  %s8 = sld [smem:[#allocation0]]
  $region46: #{tpu_custom_call.1} parent=0
    _
  %s10 = ssub.s32 1, %s8
  %s11 = scalar_select 0, %s10, %s8
  $region1: #{tpu_custom_call.1} parent=0
    #allocation4 [shape = 'u8[589824]{0}', space=vmem, size = 0x90000, scoped, tag = 'input window, operand 1, single buffered']
    #allocation5 [shape = 's32[1]{0}', space=sflag, size = 0x4, scoped, tag = 'scoped memory for tpu_custom_call.1']
    #allocation6 [shape = 'u8[589824]{0}', space=vmem, size = 0x90000, scoped, tag = 'input window, operand 4, single buffered']
    #allocation7 [shape = 's32[1]{0}', space=sflag, size = 0x4, scoped, tag = 'scoped memory for tpu_custom_call.1']
    %12 = vsyncpa [#allocation5], 0
    %13 = vsyncpa [#allocation7], 0
    // Predicated region
    $region2: #{tpu_custom_call.1} parent=1 // pred_check
      _
    $region3: #{tpu_custom_call.1} parent=1 // pred_check_branch
      %15 = sbr.rel (0) target = $region5
    $region4: #{tpu_custom_call.1} parent=1 // pred_region
      _
    $region5: #{tpu_custom_call.1} parent=1 // pred_fallthru
      _
    // Predicated region
    $region6: #{tpu_custom_call.1} parent=1 // pred_check
      _
    $region7: #{tpu_custom_call.1} parent=1 // pred_check_branch
      %17 = sbr.rel (0) target = $region9
    $region8: #{tpu_custom_call.1} parent=1 // pred_region
      %19 = vsyncadd [#allocation5], 0
      %s20 = sshll.u32 %s1, 4
      %s21 = int_to_ptr.hbm [resolvable:$true] %s20
      %s22 = sshll.u32 [#allocation4], 4
      %s23 = int_to_ptr.vmem [resolvable:$true] %s22
      %28 = dma.hbm_to_vmem [thread:$0]  %s21, 18432, %s23, [#allocation5], 128, 128, 8
    $region9: #{tpu_custom_call.1} parent=1 // pred_fallthru
      _
    // Predicated region
    $region10: #{tpu_custom_call.1} parent=1 // pred_check
      _
    $region11: #{tpu_custom_call.1} parent=1 // pred_check_branch
      %30 = sbr.rel (0) target = $region13
    $region12: #{tpu_custom_call.1} parent=1 // pred_region
      _
    $region13: #{tpu_custom_call.1} parent=1 // pred_fallthru
      _
    // Predicated region
    $region14: #{tpu_custom_call.1} parent=1 // pred_check
      _
    $region15: #{tpu_custom_call.1} parent=1 // pred_check_branch
      %32 = sbr.rel (0) target = $region17
    $region16: #{tpu_custom_call.1} parent=1 // pred_region
      _
    $region17: #{tpu_custom_call.1} parent=1 // pred_fallthru
      _
    // Predicated region
    $region18: #{tpu_custom_call.1} parent=1 // pred_check
      _
    $region19: #{tpu_custom_call.1} parent=1 // pred_check_branch
      %34 = sbr.rel (0) target = $region21
    $region20: #{tpu_custom_call.1} parent=1 // pred_region
      %36 = vsyncadd [#allocation7], 0
      %s37 = sshll.u32 %s4, 4
      %s38 = int_to_ptr.hbm [resolvable:$true] %s37
      %s39 = sshll.u32 [#allocation6], 4
      %s40 = int_to_ptr.vmem [resolvable:$true] %s39
      %45 = dma.hbm_to_vmem [thread:$0]  %s38, 18432, %s40, [#allocation7], 128, 128, 8
    $region21: #{tpu_custom_call.1} parent=1 // pred_fallthru
      _
    // Predicated region
    $region22: #{tpu_custom_call.1} parent=1 // pred_check
      _
    $region23: #{tpu_custom_call.1} parent=1 // pred_check_branch
      %47 = sbr.rel (0) target = $region25
    $region24: #{tpu_custom_call.1} parent=1 // pred_region
      _
    $region25: #{tpu_custom_call.1} parent=1 // pred_fallthru
      _
    // Predicated region
    $region26: #{tpu_custom_call.1} parent=1 // pred_check
      _
    $region27: #{tpu_custom_call.1} parent=1 // pred_check_branch
      %49 = sbr.rel (0) target = $region29
    $region28: #{tpu_custom_call.1} parent=1 // pred_region
      _
    $region29: #{tpu_custom_call.1} parent=1 // pred_fallthru
      _
    // Predicated region
    $region30: #{tpu_custom_call.1} parent=1 // pred_check
      _
    $region31: #{tpu_custom_call.1} parent=1 // pred_check_branch
      %51 = sbr.rel (0) target = $region33
    $region32: #{tpu_custom_call.1} parent=1 // pred_region
      %53 = dma.done [#allocation5], 18432
    $region33: #{tpu_custom_call.1} parent=1 // pred_fallthru
      _
    // Predicated region
    $region34: #{tpu_custom_call.1} parent=1 // pred_check
      _
    $region35: #{tpu_custom_call.1} parent=1 // pred_check_branch
      %55 = sbr.rel (0) target = $region37
    $region36: #{tpu_custom_call.1} parent=1 // pred_region
      %57 = dma.done [#allocation7], 18432
    $region37: #{tpu_custom_call.1} parent=1 // pred_fallthru
      _
    %58 = vst [vmem:[#allocation2] sm:$0xff] 0.0
    %59 = vst [vmem:[#allocation2 + $0x8] sm:$0xff] 0.0
    %60 = vst [vmem:[#allocation2 + $0x10] sm:$0x3] 0.0
    %61 = vst [vmem:[#allocation2 + $0x1b0] sm:$0xff] 0.0
    %62 = vst [vmem:[#allocation2 + $0x1b8] sm:$0xff] 0.0
    %63 = vst [vmem:[#allocation2 + $0x1c0] sm:$0x3] 0.0
    %s64 = scalar_lea.vmem [#allocation2], 408
    %65 = vst [vmem:[%s64] sm:$0xff] 0.0
    %66 = vst [vmem:[%s64 + $0x8] sm:$0xff] 0.0
    %67 = vst [vmem:[%s64 + $0x10] sm:$0x3] 0.0
    %68 = vst [vmem:[%s64 + $0x1b0] sm:$0xff] 0.0
    %69 = vst [vmem:[%s64 + $0x1b8] sm:$0xff] 0.0
    %70 = vst [vmem:[%s64 + $0x1c0] sm:$0x3] 0.0
    %s71 = scalar_lea.vmem [#allocation2], 24
    %72 = vst [vmem:[%s71] sm:$0x1] 0.0
    %73 = vst [vmem:[%s71 + $0x18] sm:$0x1] 0.0
    %74 = vst [vmem:[%s71 + $0x30] sm:$0x1] 0.0
    %75 = vst [vmem:[%s71 + $0x48] sm:$0x1] 0.0
    %76 = vst [vmem:[%s71 + $0x60] sm:$0x1] 0.0
    %77 = vst [vmem:[%s71 + $0x78] sm:$0x1] 0.0
    %78 = vst [vmem:[%s71 + $0x90] sm:$0x1] 0.0
    %79 = vst [vmem:[%s71 + $0xa8] sm:$0x1] 0.0
    %80 = vst [vmem:[%s71 + $0xc0] sm:$0x1] 0.0
    %81 = vst [vmem:[%s71 + $0xd8] sm:$0x1] 0.0
    %82 = vst [vmem:[%s71 + $0xf0] sm:$0x1] 0.0
    %83 = vst [vmem:[%s71 + $0x108] sm:$0x1] 0.0
    %84 = vst [vmem:[%s71 + $0x120] sm:$0x1] 0.0
    %85 = vst [vmem:[%s71 + $0x138] sm:$0x1] 0.0
    %86 = vst [vmem:[%s71 + $0x150] sm:$0x1] 0.0
    %87 = vst [vmem:[%s71 + $0x168] sm:$0x1] 0.0
    %88 = vst [vmem:[%s71 + $0x1b0] sm:$0x1] 0.0
    %89 = vst [vmem:[%s71 + $0x1c8] sm:$0x1] 0.0
    %90 = vst [vmem:[%s71 + $0x1e0] sm:$0x1] 0.0
    %91 = vst [vmem:[%s71 + $0x1f8] sm:$0x1] 0.0
    %92 = vst [vmem:[%s71 + $0x210] sm:$0x1] 0.0
    %93 = vst [vmem:[%s71 + $0x228] sm:$0x1] 0.0
    %94 = vst [vmem:[%s71 + $0x240] sm:$0x1] 0.0
    %95 = vst [vmem:[%s71 + $0x258] sm:$0x1] 0.0
    %96 = vst [vmem:[%s71 + $0x270] sm:$0x1] 0.0
    %97 = vst [vmem:[%s71 + $0x288] sm:$0x1] 0.0
    %98 = vst [vmem:[%s71 + $0x2a0] sm:$0x1] 0.0
    %99 = vst [vmem:[%s71 + $0x2b8] sm:$0x1] 0.0
    %100 = vst [vmem:[%s71 + $0x2d0] sm:$0x1] 0.0
    %101 = vst [vmem:[%s71 + $0x2e8] sm:$0x1] 0.0
    %102 = vst [vmem:[%s71 + $0x300] sm:$0x1] 0.0
    %103 = vst [vmem:[%s71 + $0x318] sm:$0x1] 0.0
    %104 = vst [vmem:[%s71 + $0x11] sm:$0x1] 0.0
    %105 = vst [vmem:[%s71 + $0x29] sm:$0x1] 0.0
    %106 = vst [vmem:[%s71 + $0x41] sm:$0x1] 0.0
    %107 = vst [vmem:[%s71 + $0x59] sm:$0x1] 0.0
    %108 = vst [vmem:[%s71 + $0x71] sm:$0x1] 0.0
    %109 = vst [vmem:[%s71 + $0x89] sm:$0x1] 0.0
    %110 = vst [vmem:[%s71 + $0xa1] sm:$0x1] 0.0
    %111 = vst [vmem:[%s71 + $0xb9] sm:$0x1] 0.0
    %112 = vst [vmem:[%s71 + $0xd1] sm:$0x1] 0.0
    %113 = vst [vmem:[%s71 + $0xe9] sm:$0x1] 0.0
    %114 = vst [vmem:[%s71 + $0x101] sm:$0x1] 0.0
    %115 = vst [vmem:[%s71 + $0x119] sm:$0x1] 0.0
    %116 = vst [vmem:[%s71 + $0x131] sm:$0x1] 0.0
    %117 = vst [vmem:[%s71 + $0x149] sm:$0x1] 0.0
    %118 = vst [vmem:[%s71 + $0x161] sm:$0x1] 0.0
    %119 = vst [vmem:[%s71 + $0x179] sm:$0x1] 0.0
    %120 = vst [vmem:[%s71 + $0x1c1] sm:$0x1] 0.0
    %121 = vst [vmem:[%s71 + $0x1d9] sm:$0x1] 0.0
    %122 = vst [vmem:[%s71 + $0x1f1] sm:$0x1] 0.0
    %123 = vst [vmem:[%s71 + $0x209] sm:$0x1] 0.0
    %124 = vst [vmem:[%s71 + $0x221] sm:$0x1] 0.0
    %125 = vst [vmem:[%s71 + $0x239] sm:$0x1] 0.0
    %126 = vst [vmem:[%s71 + $0x251] sm:$0x1] 0.0
    %127 = vst [vmem:[%s71 + $0x269] sm:$0x1] 0.0
    %128 = vst [vmem:[%s71 + $0x281] sm:$0x1] 0.0
    %129 = vst [vmem:[%s71 + $0x299] sm:$0x1] 0.0
    %130 = vst [vmem:[%s71 + $0x2b1] sm:$0x1] 0.0
    %131 = vst [vmem:[%s71 + $0x2c9] sm:$0x1] 0.0
    %132 = vst [vmem:[%s71 + $0x2e1] sm:$0x1] 0.0
    %133 = vst [vmem:[%s71 + $0x2f9] sm:$0x1] 0.0
    %134 = vst [vmem:[%s71 + $0x311] sm:$0x1] 0.0
    %135 = vst [vmem:[%s71 + $0x329] sm:$0x1] 0.0
    %v136 = vld [vmem:[%s0] sm:$0xff]
    %v137 = vld [vmem:[%s0 + $0x8] sm:$0xff]
    %v138 = vld [vmem:[%s0 + $0x10] sm:$0xff]
    %v139 = vld [vmem:[%s0 + $0x18] sm:$0xff]
    %v140 = vld [vmem:[%s0 + $0x20] sm:$0xff]
    %v141 = vld [vmem:[%s0 + $0x28] sm:$0xff]
    %v142 = vld [vmem:[%s0 + $0x30] sm:$0xff]
    %v143 = vld [vmem:[%s0 + $0x38] sm:$0xff]
    %v144 = vld [vmem:[%s0 + $0x40] sm:$0xff]
    %v145 = vld [vmem:[%s0 + $0x48] sm:$0xff]
    %v146 = vld [vmem:[%s0 + $0x50] sm:$0xff]
    %v147 = vld [vmem:[%s0 + $0x58] sm:$0xff]
    %v148 = vld [vmem:[%s0 + $0x60] sm:$0xff]
    %v149 = vld [vmem:[%s0 + $0x68] sm:$0xff]
    %v150 = vld [vmem:[%s0 + $0x70] sm:$0xff]
    %v151 = vld [vmem:[%s0 + $0x78] sm:$0xff]
    %v152 = vld [vmem:[%s0 + $0x80] sm:$0xff]
    %v153 = vld [vmem:[%s0 + $0x88] sm:$0xff]
    %v154 = vld [vmem:[%s0 + $0x90] sm:$0xff]
    %v155 = vld [vmem:[%s0 + $0x98] sm:$0xff]
    %v156 = vld [vmem:[%s0 + $0xa0] sm:$0xff]
    %v157 = vld [vmem:[%s0 + $0xa8] sm:$0xff]
    %v158 = vld [vmem:[%s0 + $0xb0] sm:$0xff]
    %v159 = vld [vmem:[%s0 + $0xb8] sm:$0xff]
    %v160 = vld [vmem:[%s0 + $0xc0] sm:$0xff]
    %v161 = vld [vmem:[%s0 + $0xc8] sm:$0xff]
    %v162 = vld [vmem:[%s0 + $0xd0] sm:$0xff]
    %v163 = vld [vmem:[%s0 + $0xd8] sm:$0xff]
    %v164 = vld [vmem:[%s0 + $0xe0] sm:$0xff]
    %v165 = vld [vmem:[%s0 + $0xe8] sm:$0xff]
    %v166 = vld [vmem:[%s0 + $0xf0] sm:$0xff]
    %v167 = vld [vmem:[%s0 + $0xf8] sm:$0xff]
    %v168 = vld [vmem:[%s0 + $0x100] sm:$0xff]
    %v169 = vld [vmem:[%s0 + $0x108] sm:$0xff]
    %v170 = vld [vmem:[%s0 + $0x110] sm:$0xff]
    %v171 = vld [vmem:[%s0 + $0x118] sm:$0xff]
    %v172 = vld [vmem:[%s0 + $0x120] sm:$0xff]
    %v173 = vld [vmem:[%s0 + $0x128] sm:$0xff]
    %v174 = vld [vmem:[%s0 + $0x130] sm:$0xff]
    %v175 = vld [vmem:[%s0 + $0x138] sm:$0xff]
    %v176 = vld [vmem:[%s0 + $0x140] sm:$0xff]
    %v177 = vld [vmem:[%s0 + $0x148] sm:$0xff]
    %v178 = vld [vmem:[%s0 + $0x150] sm:$0xff]
    %v179 = vld [vmem:[%s0 + $0x158] sm:$0xff]
    %v180 = vld [vmem:[%s0 + $0x160] sm:$0xff]
    %v181 = vld [vmem:[%s0 + $0x168] sm:$0xff]
    %v182 = vld [vmem:[%s0 + $0x170] sm:$0xff]
    %v183 = vld [vmem:[%s0 + $0x178] sm:$0xff]
    %v184 = vld [vmem:[%s0 + $0x180] sm:$0xff]
    %v185 = vld [vmem:[%s0 + $0x188] sm:$0xff]
    %v186 = vld [vmem:[%s0 + $0x190] sm:$0xff]
    %v187 = vld [vmem:[%s0 + $0x198] sm:$0xff]
    %v188 = vld [vmem:[%s0 + $0x1a0] sm:$0xff]
    %v189 = vld [vmem:[%s0 + $0x1a8] sm:$0xff]
    %v190 = vld [vmem:[%s0 + $0x1b0] sm:$0xff]
    %v191 = vld [vmem:[%s0 + $0x1b8] sm:$0xff]
    %v192 = vld [vmem:[%s0 + $0x1c0] sm:$0xff]
    %v193 = vld [vmem:[%s0 + $0x1c8] sm:$0xff]
    %v194 = vld [vmem:[%s0 + $0x1d0] sm:$0xff]
    %v195 = vld [vmem:[%s0 + $0x1d8] sm:$0xff]
    %v196 = vld [vmem:[%s0 + $0x1e0] sm:$0xff]
    %v197 = vld [vmem:[%s0 + $0x1e8] sm:$0xff]
    %v198 = vld [vmem:[%s0 + $0x1f0] sm:$0xff]
    %v199 = vld [vmem:[%s0 + $0x1f8] sm:$0xff]
    %v200 = vmax.f32 %v136, 0.0
    %v201 = vmax.f32 %v137, 0.0
    %v202 = vmax.f32 %v138, 0.0
    %v203 = vmax.f32 %v139, 0.0
    %v204 = vmax.f32 %v140, 0.0
    %v205 = vmax.f32 %v141, 0.0
    %v206 = vmax.f32 %v142, 0.0
    %v207 = vmax.f32 %v143, 0.0
    %v208 = vmax.f32 %v144, 0.0
    %v209 = vmax.f32 %v145, 0.0
    %v210 = vmax.f32 %v146, 0.0
    %v211 = vmax.f32 %v147, 0.0
    %v212 = vmax.f32 %v148, 0.0
    %v213 = vmax.f32 %v149, 0.0
    %v214 = vmax.f32 %v150, 0.0
    %v215 = vmax.f32 %v151, 0.0
    %v216 = vmax.f32 %v152, 0.0
    %v217 = vmax.f32 %v153, 0.0
    %v218 = vmax.f32 %v154, 0.0
    %v219 = vmax.f32 %v155, 0.0
    %v220 = vmax.f32 %v156, 0.0
    %v221 = vmax.f32 %v157, 0.0
    %v222 = vmax.f32 %v158, 0.0
    %v223 = vmax.f32 %v159, 0.0
    %v224 = vmax.f32 %v160, 0.0
    %v225 = vmax.f32 %v161, 0.0
    %v226 = vmax.f32 %v162, 0.0
    %v227 = vmax.f32 %v163, 0.0
    %v228 = vmax.f32 %v164, 0.0
    %v229 = vmax.f32 %v165, 0.0
    %v230 = vmax.f32 %v166, 0.0
    %v231 = vmax.f32 %v167, 0.0
    %v232 = vmax.f32 %v168, 0.0
    %v233 = vmax.f32 %v169, 0.0
    %v234 = vmax.f32 %v170, 0.0
    %v235 = vmax.f32 %v171, 0.0
    %v236 = vmax.f32 %v172, 0.0
    %v237 = vmax.f32 %v173, 0.0
    %v238 = vmax.f32 %v174, 0.0
    %v239 = vmax.f32 %v175, 0.0
    %v240 = vmax.f32 %v176, 0.0
    %v241 = vmax.f32 %v177, 0.0
    %v242 = vmax.f32 %v178, 0.0
    %v243 = vmax.f32 %v179, 0.0
    %v244 = vmax.f32 %v180, 0.0
    %v245 = vmax.f32 %v181, 0.0
    %v246 = vmax.f32 %v182, 0.0
    %v247 = vmax.f32 %v183, 0.0
    %v248 = vmax.f32 %v184, 0.0
    %v249 = vmax.f32 %v185, 0.0
    %v250 = vmax.f32 %v186, 0.0
    %v251 = vmax.f32 %v187, 0.0
    %v252 = vmax.f32 %v188, 0.0
    %v253 = vmax.f32 %v189, 0.0
    %v254 = vmax.f32 %v190, 0.0
    %v255 = vmax.f32 %v191, 0.0
    %v256 = vmax.f32 %v192, 0.0
    %v257 = vmax.f32 %v193, 0.0
    %v258 = vmax.f32 %v194, 0.0
    %v259 = vmax.f32 %v195, 0.0
    %v260 = vmax.f32 %v196, 0.0
    %v261 = vmax.f32 %v197, 0.0
    %v262 = vmax.f32 %v198, 0.0
    %v263 = vmax.f32 %v199, 0.0
    %vm264 = vcmask 31744
    %265 = vst.msk [vmem:[%s71 + $0x1] sm:$0xff] %vm264, %v200
    %266 = vst.msk [vmem:[%s71 + $0x9] sm:$0xff] %vm264, %v201
    %267 = vst.msk [vmem:[%s71 + $0x19] sm:$0xff] %vm264, %v202
    %268 = vst.msk [vmem:[%s71 + $0x21] sm:$0xff] %vm264, %v203
    %269 = vst.msk [vmem:[%s71 + $0x31] sm:$0xff] %vm264, %v204
    %270 = vst.msk [vmem:[%s71 + $0x39] sm:$0xff] %vm264, %v205
    %271 = vst.msk [vmem:[%s71 + $0x49] sm:$0xff] %vm264, %v206
    %272 = vst.msk [vmem:[%s71 + $0x51] sm:$0xff] %vm264, %v207
    %273 = vst.msk [vmem:[%s71 + $0x61] sm:$0xff] %vm264, %v208
    %274 = vst.msk [vmem:[%s71 + $0x69] sm:$0xff] %vm264, %v209
    %275 = vst.msk [vmem:[%s71 + $0x79] sm:$0xff] %vm264, %v210
    %276 = vst.msk [vmem:[%s71 + $0x81] sm:$0xff] %vm264, %v211
    %277 = vst.msk [vmem:[%s71 + $0x91] sm:$0xff] %vm264, %v212
    %278 = vst.msk [vmem:[%s71 + $0x99] sm:$0xff] %vm264, %v213
    %279 = vst.msk [vmem:[%s71 + $0xa9] sm:$0xff] %vm264, %v214
    %280 = vst.msk [vmem:[%s71 + $0xb1] sm:$0xff] %vm264, %v215
    %281 = vst.msk [vmem:[%s71 + $0xc1] sm:$0xff] %vm264, %v216
    %282 = vst.msk [vmem:[%s71 + $0xc9] sm:$0xff] %vm264, %v217
    %283 = vst.msk [vmem:[%s71 + $0xd9] sm:$0xff] %vm264, %v218
    %284 = vst.msk [vmem:[%s71 + $0xe1] sm:$0xff] %vm264, %v219
    %285 = vst.msk [vmem:[%s71 + $0xf1] sm:$0xff] %vm264, %v220
    %286 = vst.msk [vmem:[%s71 + $0xf9] sm:$0xff] %vm264, %v221
    %287 = vst.msk [vmem:[%s71 + $0x109] sm:$0xff] %vm264, %v222
    %288 = vst.msk [vmem:[%s71 + $0x111] sm:$0xff] %vm264, %v223
    %289 = vst.msk [vmem:[%s71 + $0x121] sm:$0xff] %vm264, %v224
    %290 = vst.msk [vmem:[%s71 + $0x129] sm:$0xff] %vm264, %v225
    %291 = vst.msk [vmem:[%s71 + $0x139] sm:$0xff] %vm264, %v226
    %292 = vst.msk [vmem:[%s71 + $0x141] sm:$0xff] %vm264, %v227
    %293 = vst.msk [vmem:[%s71 + $0x151] sm:$0xff] %vm264, %v228
    %294 = vst.msk [vmem:[%s71 + $0x159] sm:$0xff] %vm264, %v229
    %295 = vst.msk [vmem:[%s71 + $0x169] sm:$0xff] %vm264, %v230
    %296 = vst.msk [vmem:[%s71 + $0x171] sm:$0xff] %vm264, %v231
    %297 = vst.msk [vmem:[%s71 + $0x1b1] sm:$0xff] %vm264, %v232
    %298 = vst.msk [vmem:[%s71 + $0x1b9] sm:$0xff] %vm264, %v233
    %299 = vst.msk [vmem:[%s71 + $0x1c9] sm:$0xff] %vm264, %v234
    %300 = vst.msk [vmem:[%s71 + $0x1d1] sm:$0xff] %vm264, %v235
    %301 = vst.msk [vmem:[%s71 + $0x1e1] sm:$0xff] %vm264, %v236
    %302 = vst.msk [vmem:[%s71 + $0x1e9] sm:$0xff] %vm264, %v237
    %303 = vst.msk [vmem:[%s71 + $0x1f9] sm:$0xff] %vm264, %v238
    %304 = vst.msk [vmem:[%s71 + $0x201] sm:$0xff] %vm264, %v239
    %305 = vst.msk [vmem:[%s71 + $0x211] sm:$0xff] %vm264, %v240
    %306 = vst.msk [vmem:[%s71 + $0x219] sm:$0xff] %vm264, %v241
    %307 = vst.msk [vmem:[%s71 + $0x229] sm:$0xff] %vm264, %v242
    %308 = vst.msk [vmem:[%s71 + $0x231] sm:$0xff] %vm264, %v243
    %309 = vst.msk [vmem:[%s71 + $0x241] sm:$0xff] %vm264, %v244
    %310 = vst.msk [vmem:[%s71 + $0x249] sm:$0xff] %vm264, %v245
    %311 = vst.msk [vmem:[%s71 + $0x259] sm:$0xff] %vm264, %v246
    %312 = vst.msk [vmem:[%s71 + $0x261] sm:$0xff] %vm264, %v247
    %313 = vst.msk [vmem:[%s71 + $0x271] sm:$0xff] %vm264, %v248
    %314 = vst.msk [vmem:[%s71 + $0x279] sm:$0xff] %vm264, %v249
    %315 = vst.msk [vmem:[%s71 + $0x289] sm:$0xff] %vm264, %v250
    %316 = vst.msk [vmem:[%s71 + $0x291] sm:$0xff] %vm264, %v251
    %317 = vst.msk [vmem:[%s71 + $0x2a1] sm:$0xff] %vm264, %v252
    %318 = vst.msk [vmem:[%s71 + $0x2a9] sm:$0xff] %vm264, %v253
    %319 = vst.msk [vmem:[%s71 + $0x2b9] sm:$0xff] %vm264, %v254
    %320 = vst.msk [vmem:[%s71 + $0x2c1] sm:$0xff] %vm264, %v255
    %321 = vst.msk [vmem:[%s71 + $0x2d1] sm:$0xff] %vm264, %v256
    %322 = vst.msk [vmem:[%s71 + $0x2d9] sm:$0xff] %vm264, %v257
    %323 = vst.msk [vmem:[%s71 + $0x2e9] sm:$0xff] %vm264, %v258
    %324 = vst.msk [vmem:[%s71 + $0x2f1] sm:$0xff] %vm264, %v259
    %325 = vst.msk [vmem:[%s71 + $0x301] sm:$0xff] %vm264, %v260
    %326 = vst.msk [vmem:[%s71 + $0x309] sm:$0xff] %vm264, %v261
    %327 = vst.msk [vmem:[%s71 + $0x319] sm:$0xff] %vm264, %v262
    %328 = vst.msk [vmem:[%s71 + $0x321] sm:$0xff] %vm264, %v263
    %vm329 = vcmask 1047584
    %330 = vst.msk [vmem:[%s71 + $0x1] sm:$0xff] %vm329, 0.0
    %331 = vst.msk [vmem:[%s71 + $0x9] sm:$0xff] %vm329, 0.0
    %332 = vst.msk [vmem:[%s71 + $0x19] sm:$0xff] %vm329, 0.0
    %333 = vst.msk [vmem:[%s71 + $0x21] sm:$0xff] %vm329, 0.0
    %334 = vst.msk [vmem:[%s71 + $0x31] sm:$0xff] %vm329, 0.0
    %335 = vst.msk [vmem:[%s71 + $0x39] sm:$0xff] %vm329, 0.0
    %336 = vst.msk [vmem:[%s71 + $0x49] sm:$0xff] %vm329, 0.0
    %337 = vst.msk [vmem:[%s71 + $0x51] sm:$0xff] %vm329, 0.0
    %338 = vst.msk [vmem:[%s71 + $0x61] sm:$0xff] %vm329, 0.0
    %339 = vst.msk [vmem:[%s71 + $0x69] sm:$0xff] %vm329, 0.0
    %340 = vst.msk [vmem:[%s71 + $0x79] sm:$0xff] %vm329, 0.0
    %341 = vst.msk [vmem:[%s71 + $0x81] sm:$0xff] %vm329, 0.0
    %342 = vst.msk [vmem:[%s71 + $0x91] sm:$0xff] %vm329, 0.0
    %343 = vst.msk [vmem:[%s71 + $0x99] sm:$0xff] %vm329, 0.0
    %344 = vst.msk [vmem:[%s71 + $0xa9] sm:$0xff] %vm329, 0.0
    %345 = vst.msk [vmem:[%s71 + $0xb1] sm:$0xff] %vm329, 0.0
    %346 = vst.msk [vmem:[%s71 + $0xc1] sm:$0xff] %vm329, 0.0
    %347 = vst.msk [vmem:[%s71 + $0xc9] sm:$0xff] %vm329, 0.0
    %348 = vst.msk [vmem:[%s71 + $0xd9] sm:$0xff] %vm329, 0.0
    %349 = vst.msk [vmem:[%s71 + $0xe1] sm:$0xff] %vm329, 0.0
    %350 = vst.msk [vmem:[%s71 + $0xf1] sm:$0xff] %vm329, 0.0
    %351 = vst.msk [vmem:[%s71 + $0xf9] sm:$0xff] %vm329, 0.0
    %352 = vst.msk [vmem:[%s71 + $0x109] sm:$0xff] %vm329, 0.0
    %353 = vst.msk [vmem:[%s71 + $0x111] sm:$0xff] %vm329, 0.0
    %354 = vst.msk [vmem:[%s71 + $0x121] sm:$0xff] %vm329, 0.0
    %355 = vst.msk [vmem:[%s71 + $0x129] sm:$0xff] %vm329, 0.0
    %356 = vst.msk [vmem:[%s71 + $0x139] sm:$0xff] %vm329, 0.0
    %357 = vst.msk [vmem:[%s71 + $0x141] sm:$0xff] %vm329, 0.0
    %358 = vst.msk [vmem:[%s71 + $0x151] sm:$0xff] %vm329, 0.0
    %359 = vst.msk [vmem:[%s71 + $0x159] sm:$0xff] %vm329, 0.0
    %360 = vst.msk [vmem:[%s71 + $0x169] sm:$0xff] %vm329, 0.0
    %361 = vst.msk [vmem:[%s71 + $0x171] sm:$0xff] %vm329, 0.0
    %362 = vst.msk [vmem:[%s71 + $0x1b1] sm:$0xff] %vm329, 0.0
    %363 = vst.msk [vmem:[%s71 + $0x1b9] sm:$0xff] %vm329, 0.0
    %364 = vst.msk [vmem:[%s71 + $0x1c9] sm:$0xff] %vm329, 0.0
    %365 = vst.msk [vmem:[%s71 + $0x1d1] sm:$0xff] %vm329, 0.0
    %366 = vst.msk [vmem:[%s71 + $0x1e1] sm:$0xff] %vm329, 0.0
    %367 = vst.msk [vmem:[%s71 + $0x1e9] sm:$0xff] %vm329, 0.0
    %368 = vst.msk [vmem:[%s71 + $0x1f9] sm:$0xff] %vm329, 0.0
    %369 = vst.msk [vmem:[%s71 + $0x201] sm:$0xff] %vm329, 0.0
    %370 = vst.msk [vmem:[%s71 + $0x211] sm:$0xff] %vm329, 0.0
    %371 = vst.msk [vmem:[%s71 + $0x219] sm:$0xff] %vm329, 0.0
    %372 = vst.msk [vmem:[%s71 + $0x229] sm:$0xff] %vm329, 0.0
    %373 = vst.msk [vmem:[%s71 + $0x231] sm:$0xff] %vm329, 0.0
    %374 = vst.msk [vmem:[%s71 + $0x241] sm:$0xff] %vm329, 0.0
    %375 = vst.msk [vmem:[%s71 + $0x249] sm:$0xff] %vm329, 0.0
    %376 = vst.msk [vmem:[%s71 + $0x259] sm:$0xff] %vm329, 0.0
    %377 = vst.msk [vmem:[%s71 + $0x261] sm:$0xff] %vm329, 0.0
    %378 = vst.msk [vmem:[%s71 + $0x271] sm:$0xff] %vm329, 0.0
    %379 = vst.msk [vmem:[%s71 + $0x279] sm:$0xff] %vm329, 0.0
    %380 = vst.msk [vmem:[%s71 + $0x289] sm:$0xff] %vm329, 0.0
    %381 = vst.msk [vmem:[%s71 + $0x291] sm:$0xff] %vm329, 0.0
    %382 = vst.msk [vmem:[%s71 + $0x2a1] sm:$0xff] %vm329, 0.0
    %383 = vst.msk [vmem:[%s71 + $0x2a9] sm:$0xff] %vm329, 0.0
    %384 = vst.msk [vmem:[%s71 + $0x2b9] sm:$0xff] %vm329, 0.0
    %385 = vst.msk [vmem:[%s71 + $0x2c1] sm:$0xff] %vm329, 0.0
    %386 = vst.msk [vmem:[%s71 + $0x2d1] sm:$0xff] %vm329, 0.0
    %387 = vst.msk [vmem:[%s71 + $0x2d9] sm:$0xff] %vm329, 0.0
    %388 = vst.msk [vmem:[%s71 + $0x2e9] sm:$0xff] %vm329, 0.0
    %389 = vst.msk [vmem:[%s71 + $0x2f1] sm:$0xff] %vm329, 0.0
    %390 = vst.msk [vmem:[%s71 + $0x301] sm:$0xff] %vm329, 0.0
    %391 = vst.msk [vmem:[%s71 + $0x309] sm:$0xff] %vm329, 0.0
    %392 = vst.msk [vmem:[%s71 + $0x319] sm:$0xff] %vm329, 0.0
    %393 = vst.msk [vmem:[%s71 + $0x321] sm:$0xff] %vm329, 0.0
    %v394 = vld [vmem:[#allocation2] sm:$0xff]
    %v395 = vld [vmem:[#allocation2 + $0x8] sm:$0xff]
    %v396 = vld [vmem:[#allocation2 + $0x18] sm:$0xff]
    %v397 = vld [vmem:[#allocation2 + $0x20] sm:$0xff]
    %v398 = vld [vmem:[#allocation2 + $0x30] sm:$0xff]
    %v399 = vld [vmem:[#allocation2 + $0x38] sm:$0xff]
    %v400 = vld [vmem:[#allocation2 + $0x48] sm:$0xff]
    %v401 = vld [vmem:[#allocation2 + $0x50] sm:$0xff]
    %v402 = vld [vmem:[#allocation2 + $0x60] sm:$0xff]
    %v403 = vld [vmem:[#allocation2 + $0x68] sm:$0xff]
    %v404 = vld [vmem:[#allocation2 + $0x78] sm:$0xff]
    %v405 = vld [vmem:[#allocation2 + $0x80] sm:$0xff]
    %v406 = vld [vmem:[#allocation2 + $0x90] sm:$0xff]
    %v407 = vld [vmem:[#allocation2 + $0x98] sm:$0xff]
    %v408 = vld [vmem:[#allocation2 + $0xa8] sm:$0xff]
    %v409 = vld [vmem:[#allocation2 + $0xb0] sm:$0xff]
    %v410 = vld [vmem:[#allocation2 + $0xc0] sm:$0xff]
    %v411 = vld [vmem:[#allocation2 + $0xc8] sm:$0xff]
    %v412 = vld [vmem:[#allocation2 + $0xd8] sm:$0xff]
    %v413 = vld [vmem:[#allocation2 + $0xe0] sm:$0xff]
    %v414 = vld [vmem:[#allocation2 + $0xf0] sm:$0xff]
    %v415 = vld [vmem:[#allocation2 + $0xf8] sm:$0xff]
    %v416 = vld [vmem:[#allocation2 + $0x108] sm:$0xff]
    %v417 = vld [vmem:[#allocation2 + $0x110] sm:$0xff]
    %v418 = vld [vmem:[#allocation2 + $0x120] sm:$0xff]
    %v419 = vld [vmem:[#allocation2 + $0x128] sm:$0xff]
    %v420 = vld [vmem:[#allocation2 + $0x138] sm:$0xff]
    %v421 = vld [vmem:[#allocation2 + $0x140] sm:$0xff]
    %v422 = vld [vmem:[#allocation2 + $0x150] sm:$0xff]
    %v423 = vld [vmem:[#allocation2 + $0x158] sm:$0xff]
    %v424 = vld [vmem:[#allocation2 + $0x168] sm:$0xff]
    %v425 = vld [vmem:[#allocation2 + $0x170] sm:$0xff]
    %v426 = vld [vmem:[#allocation2 + $0x180] sm:$0xff]
    %v427 = vld [vmem:[#allocation2 + $0x188] sm:$0xff]
    %v428 = vld [vmem:[#allocation2 + $0x198] sm:$0xff]
    %v429 = vld [vmem:[#allocation2 + $0x1a0] sm:$0xff]
    %v430 = vld [vmem:[#allocation2 + $0x1b0] sm:$0xff]
    %v431 = vld [vmem:[#allocation2 + $0x1b8] sm:$0xff]
    %v432 = vld [vmem:[#allocation2 + $0x1c8] sm:$0xff]
    %v433 = vld [vmem:[#allocation2 + $0x1d0] sm:$0xff]
    %v434 = vld [vmem:[#allocation2 + $0x1e0] sm:$0xff]
    %v435 = vld [vmem:[#allocation2 + $0x1e8] sm:$0xff]
    %v436 = vld [vmem:[#allocation2 + $0x1f8] sm:$0xff]
    %v437 = vld [vmem:[#allocation2 + $0x200] sm:$0xff]
    %v438 = vld [vmem:[#allocation2 + $0x210] sm:$0xff]
    %v439 = vld [vmem:[#allocation2 + $0x218] sm:$0xff]
    %v440 = vld [vmem:[#allocation2 + $0x228] sm:$0xff]
    %v441 = vld [vmem:[#allocation2 + $0x230] sm:$0xff]
    %v442 = vld [vmem:[#allocation2 + $0x240] sm:$0xff]
    %v443 = vld [vmem:[#allocation2 + $0x248] sm:$0xff]
    %v444 = vld [vmem:[#allocation2 + $0x258] sm:$0xff]
    %v445 = vld [vmem:[#allocation2 + $0x260] sm:$0xff]
    %v446 = vld [vmem:[#allocation2 + $0x270] sm:$0xff]
    %v447 = vld [vmem:[#allocation2 + $0x278] sm:$0xff]
    %v448 = vld [vmem:[#allocation2 + $0x288] sm:$0xff]
    %v449 = vld [vmem:[#allocation2 + $0x290] sm:$0xff]
    %v450 = vld [vmem:[#allocation2 + $0x2a0] sm:$0xff]
    %v451 = vld [vmem:[#allocation2 + $0x2a8] sm:$0xff]
    %v452 = vld [vmem:[#allocation2 + $0x2b8] sm:$0xff]
    %v453 = vld [vmem:[#allocation2 + $0x2c0] sm:$0xff]
    %v454 = vld [vmem:[#allocation2 + $0x2d0] sm:$0xff]
    %v455 = vld [vmem:[#allocation2 + $0x2d8] sm:$0xff]
    %v456 = vld [vmem:[#allocation2 + $0x2e8] sm:$0xff]
    %v457 = vld [vmem:[#allocation2 + $0x2f0] sm:$0xff]
    %v458 = vld [vmem:[#allocation2 + $0x300] sm:$0xff]
    %v459 = vld [vmem:[#allocation2 + $0x308] sm:$0xff]
    %v460 = vld [vmem:[#allocation2 + $0x318] sm:$0xff]
    %v461 = vld [vmem:[#allocation2 + $0x320] sm:$0xff]
    %v462 = vld [vmem:[#allocation2 + $0x330] sm:$0xff]
    %v463 = vld [vmem:[#allocation2 + $0x338] sm:$0xff]
    %v464 = vld [vmem:[#allocation2 + $0x348] sm:$0xff]
    %v465 = vld [vmem:[#allocation2 + $0x350] sm:$0xff]
    %v466 = vld [vmem:[#allocation4] sm:$0xff]
    %v467 = vld [vmem:[#allocation4 + $0x8] sm:$0xff]
    %v468 = vld [vmem:[#allocation4 + $0x10] sm:$0xff]
    %v469 = vld [vmem:[#allocation4 + $0x18] sm:$0xff]
    %v470 = vld [vmem:[#allocation4 + $0x20] sm:$0xff]
    %v471 = vld [vmem:[#allocation4 + $0x28] sm:$0xff]
    %v472 = vld [vmem:[#allocation4 + $0x30] sm:$0xff]
    %v473 = vld [vmem:[#allocation4 + $0x38] sm:$0xff]
    %v474 = vld [vmem:[#allocation4 + $0x40] sm:$0xff]
    %v475 = vld [vmem:[#allocation4 + $0x48] sm:$0xff]
    %v476 = vld [vmem:[#allocation4 + $0x50] sm:$0xff]
    %v477 = vld [vmem:[#allocation4 + $0x58] sm:$0xff]
    %v478 = vld [vmem:[#allocation4 + $0x60] sm:$0xff]
    %v479 = vld [vmem:[#allocation4 + $0x68] sm:$0xff]
    %v480 = vld [vmem:[#allocation4 + $0x70] sm:$0xff]
    %v481 = vld [vmem:[#allocation4 + $0x78] sm:$0xff]
    %s482 = scalar_lea.vmem [#allocation4], 384
    %v483 = vld [vmem:[%s482] sm:$0xff]
    %v484 = vld [vmem:[%s482 + $0x8] sm:$0xff]
    %v485 = vld [vmem:[%s482 + $0x10] sm:$0xff]
    %v486 = vld [vmem:[%s482 + $0x18] sm:$0xff]
    %v487 = vld [vmem:[%s482 + $0x20] sm:$0xff]
    %v488 = vld [vmem:[%s482 + $0x28] sm:$0xff]
    %v489 = vld [vmem:[%s482 + $0x30] sm:$0xff]
    %v490 = vld [vmem:[%s482 + $0x38] sm:$0xff]
    %v491 = vld [vmem:[%s482 + $0x40] sm:$0xff]
    %v492 = vld [vmem:[%s482 + $0x48] sm:$0xff]
    %v493 = vld [vmem:[%s482 + $0x50] sm:$0xff]
    %v494 = vld [vmem:[%s482 + $0x58] sm:$0xff]
    %v495 = vld [vmem:[%s482 + $0x60] sm:$0xff]
    %v496 = vld [vmem:[%s482 + $0x68] sm:$0xff]
    %v497 = vld [vmem:[%s482 + $0x70] sm:$0xff]
    %v498 = vld [vmem:[%s482 + $0x78] sm:$0xff]
    %499 = vmatpush.msra.mxu0 %v498
    %500 = vmatpush.msra.mxu0 %v497
    %501 = vmatpush.msra.mxu0 %v496
    %502 = vmatpush.msra.mxu0 %v495
    %503 = vmatpush.msra.mxu0 %v494
    %504 = vmatpush.msra.mxu0 %v493
    %505 = vmatpush.msra.mxu0 %v492
    %506 = vmatpush.msra.mxu0 %v491
    %507 = vmatpush.msra.mxu0 %v490
    %508 = vmatpush.msra.mxu0 %v489
    %509 = vmatpush.msra.mxu0 %v488
    %510 = vmatpush.msra.mxu0 %v487
    %511 = vmatpush.msra.mxu0 %v486
    %512 = vmatpush.msra.mxu0 %v485
    %513 = vmatpush.msra.mxu0 %v484
    %514 = vmatpush.msra.mxu0 %v483
    %515 = vmatmul.f32.gmra.mxu0 %v396
    %v516 = vpop.f32.mrf.mxu0
    %v517 = vadd.f32 0.0, %v516
    %518 = vmatmul.f32.gmra.mxu0 %v397
    %v519 = vpop.f32.mrf.mxu0
    %v520 = vadd.f32 0.0, %v519
    %521 = vmatmul.f32.gmra.mxu0 %v398
    %v522 = vpop.f32.mrf.mxu0
    %v523 = vadd.f32 0.0, %v522
    %524 = vmatmul.f32.gmra.mxu0 %v399
    %v525 = vpop.f32.mrf.mxu0
    %v526 = vadd.f32 0.0, %v525
    %527 = vmatmul.f32.gmra.mxu0 %v400
    %v528 = vpop.f32.mrf.mxu0
    %v529 = vadd.f32 0.0, %v528
    %530 = vmatmul.f32.gmra.mxu0 %v401
    %v531 = vpop.f32.mrf.mxu0
    %v532 = vadd.f32 0.0, %v531
    %533 = vmatmul.f32.gmra.mxu0 %v402
    %v534 = vpop.f32.mrf.mxu0
    %v535 = vadd.f32 0.0, %v534
    %536 = vmatmul.f32.gmra.mxu0 %v403
    %v537 = vpop.f32.mrf.mxu0
    %v538 = vadd.f32 0.0, %v537
    %539 = vmatmul.f32.gmra.mxu0 %v404
    %v540 = vpop.f32.mrf.mxu0
    %v541 = vadd.f32 0.0, %v540
    %542 = vmatmul.f32.gmra.mxu0 %v405
    %v543 = vpop.f32.mrf.mxu0
    %v544 = vadd.f32 0.0, %v543
    %545 = vmatmul.f32.gmra.mxu0 %v406
    %v546 = vpop.f32.mrf.mxu0
    %v547 = vadd.f32 0.0, %v546
    %548 = vmatmul.f32.gmra.mxu0 %v407
    %v549 = vpop.f32.mrf.mxu0
    %v550 = vadd.f32 0.0, %v549
    %551 = vmatmul.f32.gmra.mxu0 %v408
    %v552 = vpop.f32.mrf.mxu0
    %v553 = vadd.f32 0.0, %v552
    %554 = vmatmul.f32.gmra.mxu0 %v409
    %v555 = vpop.f32.mrf.mxu0
    %v556 = vadd.f32 0.0, %v555
    %557 = vmatmul.f32.gmra.mxu0 %v410
    %v558 = vpop.f32.mrf.mxu0
    %v559 = vadd.f32 0.0, %v558
    %560 = vmatmul.f32.gmra.mxu0 %v411
    %v561 = vpop.f32.mrf.mxu0
    %v562 = vadd.f32 0.0, %v561
    %563 = vmatmul.f32.gmra.mxu0 %v412
    %v564 = vpop.f32.mrf.mxu0
    %v565 = vadd.f32 0.0, %v564
    %566 = vmatmul.f32.gmra.mxu0 %v413
    %v567 = vpop.f32.mrf.mxu0
    %v568 = vadd.f32 0.0, %v567
    %569 = vmatmul.f32.gmra.mxu0 %v414
    %v570 = vpop.f32.mrf.mxu0
    %v571 = vadd.f32 0.0, %v570
    %572 = vmatmul.f32.gmra.mxu0 %v415
    %v573 = vpop.f32.mrf.mxu0
    %v574 = vadd.f32 0.0, %v573
    %575 = vmatmul.f32.gmra.mxu0 %v416
    %v576 = vpop.f32.mrf.mxu0
    %v577 = vadd.f32 0.0, %v576
    %578 = vmatmul.f32.gmra.mxu0 %v417
    %v579 = vpop.f32.mrf.mxu0
    %v580 = vadd.f32 0.0, %v579
    %581 = vmatmul.f32.gmra.mxu0 %v418
    %v582 = vpop.f32.mrf.mxu0
    %v583 = vadd.f32 0.0, %v582
    %584 = vmatmul.f32.gmra.mxu0 %v419
    %v585 = vpop.f32.mrf.mxu0
    %v586 = vadd.f32 0.0, %v585
    %587 = vmatmul.f32.gmra.mxu0 %v420
    %v588 = vpop.f32.mrf.mxu0
    %v589 = vadd.f32 0.0, %v588
    %590 = vmatmul.f32.gmra.mxu0 %v421
    %v591 = vpop.f32.mrf.mxu0
    %v592 = vadd.f32 0.0, %v591
    %593 = vmatmul.f32.gmra.mxu0 %v422
    %v594 = vpop.f32.mrf.mxu0
    %v595 = vadd.f32 0.0, %v594
    %596 = vmatmul.f32.gmra.mxu0 %v423
    %v597 = vpop.f32.mrf.mxu0
    %v598 = vadd.f32 0.0, %v597
    %599 = vmatmul.f32.gmra.mxu0 %v424
    %v600 = vpop.f32.mrf.mxu0
    %v601 = vadd.f32 0.0, %v600
    %602 = vmatmul.f32.gmra.mxu0 %v425
    %v603 = vpop.f32.mrf.mxu0
    %v604 = vadd.f32 0.0, %v603
    %605 = vmatmul.f32.gmra.mxu0 %v426
    %v606 = vpop.f32.mrf.mxu0
    %v607 = vadd.f32 0.0, %v606
    %608 = vmatmul.f32.gmra.mxu0 %v427
    %v609 = vpop.f32.mrf.mxu0
    %v610 = vadd.f32 0.0, %v609
    %611 = vmatmul.f32.gmra.mxu0 %v432
    %v612 = vpop.f32.mrf.mxu0
    %v613 = vadd.f32 0.0, %v612
    %614 = vmatmul.f32.gmra.mxu0 %v433
    %v615 = vpop.f32.mrf.mxu0
    %v616 = vadd.f32 0.0, %v615
    %617 = vmatmul.f32.gmra.mxu0 %v434
    %v618 = vpop.f32.mrf.mxu0
    %v619 = vadd.f32 0.0, %v618
    %620 = vmatmul.f32.gmra.mxu0 %v435
    %v621 = vpop.f32.mrf.mxu0
    %v622 = vadd.f32 0.0, %v621
    %623 = vmatmul.f32.gmra.mxu0 %v436
    %v624 = vpop.f32.mrf.mxu0
    %v625 = vadd.f32 0.0, %v624
    %626 = vmatmul.f32.gmra.mxu0 %v437
    %v627 = vpop.f32.mrf.mxu0
    %v628 = vadd.f32 0.0, %v627
    %629 = vmatmul.f32.gmra.mxu0 %v438
    %v630 = vpop.f32.mrf.mxu0
    %v631 = vadd.f32 0.0, %v630
    %632 = vmatmul.f32.gmra.mxu0 %v439
    %v633 = vpop.f32.mrf.mxu0
    %v634 = vadd.f32 0.0, %v633
    %635 = vmatmul.f32.gmra.mxu0 %v440
    %v636 = vpop.f32.mrf.mxu0
    %v637 = vadd.f32 0.0, %v636
    %638 = vmatmul.f32.gmra.mxu0 %v441
    %v639 = vpop.f32.mrf.mxu0
    %v640 = vadd.f32 0.0, %v639
    %641 = vmatmul.f32.gmra.mxu0 %v442
    %v642 = vpop.f32.mrf.mxu0
    %v643 = vadd.f32 0.0, %v642
    %644 = vmatmul.f32.gmra.mxu0 %v443
    %v645 = vpop.f32.mrf.mxu0
    %v646 = vadd.f32 0.0, %v645
    %647 = vmatmul.f32.gmra.mxu0 %v444
    %v648 = vpop.f32.mrf.mxu0
    %v649 = vadd.f32 0.0, %v648
    %650 = vmatmul.f32.gmra.mxu0 %v445
    %v651 = vpop.f32.mrf.mxu0
    %v652 = vadd.f32 0.0, %v651
    %653 = vmatmul.f32.gmra.mxu0 %v446
    %v654 = vpop.f32.mrf.mxu0
    %v655 = vadd.f32 0.0, %v654
    %656 = vmatmul.f32.gmra.mxu0 %v447
    %v657 = vpop.f32.mrf.mxu0
    %v658 = vadd.f32 0.0, %v657
    %659 = vmatmul.f32.gmra.mxu0 %v448
    %v660 = vpop.f32.mrf.mxu0
    %v661 = vadd.f32 0.0, %v660
    %662 = vmatmul.f32.gmra.mxu0 %v449
    %v663 = vpop.f32.mrf.mxu0
    %v664 = vadd.f32 0.0, %v663
    %665 = vmatmul.f32.gmra.mxu0 %v450
    %v666 = vpop.f32.mrf.mxu0
    %v667 = vadd.f32 0.0, %v666
    %668 = vmatmul.f32.gmra.mxu0 %v451
    %v669 = vpop.f32.mrf.mxu0
    %v670 = vadd.f32 0.0, %v669
    %671 = vmatmul.f32.gmra.mxu0 %v452
    %v672 = vpop.f32.mrf.mxu0
    %v673 = vadd.f32 0.0, %v672
    %674 = vmatmul.f32.gmra.mxu0 %v453
    %v675 = vpop.f32.mrf.mxu0
    %v676 = vadd.f32 0.0, %v675
    %677 = vmatmul.f32.gmra.mxu0 %v454
    %v678 = vpop.f32.mrf.mxu0
    %v679 = vadd.f32 0.0, %v678
    %680 = vmatmul.f32.gmra.mxu0 %v455
    %v681 = vpop.f32.mrf.mxu0
    %v682 = vadd.f32 0.0, %v681
    %683 = vmatmul.f32.gmra.mxu0 %v456
    %v684 = vpop.f32.mrf.mxu0
    %v685 = vadd.f32 0.0, %v684
    %686 = vmatmul.f32.gmra.mxu0 %v457
    %v687 = vpop.f32.mrf.mxu0
    %v688 = vadd.f32 0.0, %v687
    %689 = vmatmul.f32.gmra.mxu0 %v458
    %v690 = vpop.f32.mrf.mxu0
    %v691 = vadd.f32 0.0, %v690
    %692 = vmatmul.f32.gmra.mxu0 %v459
    %v693 = vpop.f32.mrf.mxu0
    %v694 = vadd.f32 0.0, %v693
    %695 = vmatmul.f32.gmra.mxu0 %v460
    %v696 = vpop.f32.mrf.mxu0
    %v697 = vadd.f32 0.0, %v696
    %698 = vmatmul.f32.gmra.mxu0 %v461
    %v699 = vpop.f32.mrf.mxu0
    %v700 = vadd.f32 0.0, %v699
    %701 = vmatmul.f32.gmra.mxu0 %v462
    %v702 = vpop.f32.mrf.mxu0
    %v703 = vadd.f32 0.0, %v702
    %704 = vmatmul.f32.gmra.mxu0 %v463
    %v705 = vpop.f32.mrf.mxu0
    %v706 = vadd.f32 0.0, %v705
    %707 = vdwg.mxu0
    %708 = vmatpush.msra.mxu0 %v481
    %709 = vmatpush.msra.mxu0 %v480
    %710 = vmatpush.msra.mxu0 %v479
    %711 = vmatpush.msra.mxu0 %v478
    %712 = vmatpush.msra.mxu0 %v477
    %713 = vmatpush.msra.mxu0 %v476
    %714 = vmatpush.msra.mxu0 %v475
    %715 = vmatpush.msra.mxu0 %v474
    %716 = vmatpush.msra.mxu0 %v473
    %717 = vmatpush.msra.mxu0 %v472
    %718 = vmatpush.msra.mxu0 %v471
    %719 = vmatpush.msra.mxu0 %v470
    %720 = vmatpush.msra.mxu0 %v469
    %721 = vmatpush.msra.mxu0 %v468
    %722 = vmatpush.msra.mxu0 %v467
    %723 = vmatpush.msra.mxu0 %v466
    %724 = vmatmul.f32.gmra.mxu0 %v394
    %v725 = vpop.f32.mrf.mxu0
    %v726 = vadd.f32 %v517, %v725
    %727 = vmatmul.f32.gmra.mxu0 %v395
    %v728 = vpop.f32.mrf.mxu0
    %v729 = vadd.f32 %v520, %v728
    %730 = vmatmul.f32.gmra.mxu0 %v396
    %v731 = vpop.f32.mrf.mxu0
    %v732 = vadd.f32 %v523, %v731
    %733 = vmatmul.f32.gmra.mxu0 %v397
    %v734 = vpop.f32.mrf.mxu0
    %v735 = vadd.f32 %v526, %v734
    %736 = vmatmul.f32.gmra.mxu0 %v398
    %v737 = vpop.f32.mrf.mxu0
    %v738 = vadd.f32 %v529, %v737
    %739 = vmatmul.f32.gmra.mxu0 %v399
    %v740 = vpop.f32.mrf.mxu0
    %v741 = vadd.f32 %v532, %v740
    %742 = vmatmul.f32.gmra.mxu0 %v400
    %v743 = vpop.f32.mrf.mxu0
    %v744 = vadd.f32 %v535, %v743
    %745 = vmatmul.f32.gmra.mxu0 %v401
    %v746 = vpop.f32.mrf.mxu0
    %v747 = vadd.f32 %v538, %v746
    %748 = vmatmul.f32.gmra.mxu0 %v402
    %v749 = vpop.f32.mrf.mxu0
    %v750 = vadd.f32 %v541, %v749
    %751 = vmatmul.f32.gmra.mxu0 %v403
    %v752 = vpop.f32.mrf.mxu0
    %v753 = vadd.f32 %v544, %v752
    %754 = vmatmul.f32.gmra.mxu0 %v404
    %v755 = vpop.f32.mrf.mxu0
    %v756 = vadd.f32 %v547, %v755
    %757 = vmatmul.f32.gmra.mxu0 %v405
    %v758 = vpop.f32.mrf.mxu0
    %v759 = vadd.f32 %v550, %v758
    %760 = vmatmul.f32.gmra.mxu0 %v406
    %v761 = vpop.f32.mrf.mxu0
    %v762 = vadd.f32 %v553, %v761
    %763 = vmatmul.f32.gmra.mxu0 %v407
    %v764 = vpop.f32.mrf.mxu0
    %v765 = vadd.f32 %v556, %v764
    %766 = vmatmul.f32.gmra.mxu0 %v408
    %v767 = vpop.f32.mrf.mxu0
    %v768 = vadd.f32 %v559, %v767
    %769 = vmatmul.f32.gmra.mxu0 %v409
    %v770 = vpop.f32.mrf.mxu0
    %v771 = vadd.f32 %v562, %v770
    %772 = vmatmul.f32.gmra.mxu0 %v410
    %v773 = vpop.f32.mrf.mxu0
    %v774 = vadd.f32 %v565, %v773
    %775 = vmatmul.f32.gmra.mxu0 %v411
    %v776 = vpop.f32.mrf.mxu0
    %v777 = vadd.f32 %v568, %v776
    %778 = vmatmul.f32.gmra.mxu0 %v412
    %v779 = vpop.f32.mrf.mxu0
    %v780 = vadd.f32 %v571, %v779
    %781 = vmatmul.f32.gmra.mxu0 %v413
    %v782 = vpop.f32.mrf.mxu0
    %v783 = vadd.f32 %v574, %v782
    %784 = vmatmul.f32.gmra.mxu0 %v414
    %v785 = vpop.f32.mrf.mxu0
    %v786 = vadd.f32 %v577, %v785
    %787 = vmatmul.f32.gmra.mxu0 %v415
    %v788 = vpop.f32.mrf.mxu0
    %v789 = vadd.f32 %v580, %v788
    %790 = vmatmul.f32.gmra.mxu0 %v416
    %v791 = vpop.f32.mrf.mxu0
    %v792 = vadd.f32 %v583, %v791
    %793 = vmatmul.f32.gmra.mxu0 %v417
    %v794 = vpop.f32.mrf.mxu0
    %v795 = vadd.f32 %v586, %v794
    %796 = vmatmul.f32.gmra.mxu0 %v418
    %v797 = vpop.f32.mrf.mxu0
    %v798 = vadd.f32 %v589, %v797
    %799 = vmatmul.f32.gmra.mxu0 %v419
    %v800 = vpop.f32.mrf.mxu0
    %v801 = vadd.f32 %v592, %v800
    %802 = vmatmul.f32.gmra.mxu0 %v420
    %v803 = vpop.f32.mrf.mxu0
    %v804 = vadd.f32 %v595, %v803
    %805 = vmatmul.f32.gmra.mxu0 %v421
    %v806 = vpop.f32.mrf.mxu0
    %v807 = vadd.f32 %v598, %v806
    %808 = vmatmul.f32.gmra.mxu0 %v422
    %v809 = vpop.f32.mrf.mxu0
    %v810 = vadd.f32 %v601, %v809
    %811 = vmatmul.f32.gmra.mxu0 %v423
    %v812 = vpop.f32.mrf.mxu0
    %v813 = vadd.f32 %v604, %v812
    %814 = vmatmul.f32.gmra.mxu0 %v424
    %v815 = vpop.f32.mrf.mxu0
    %v816 = vadd.f32 %v607, %v815
    %817 = vmatmul.f32.gmra.mxu0 %v425
    %v818 = vpop.f32.mrf.mxu0
    %v819 = vadd.f32 %v610, %v818
    %820 = vmatmul.f32.gmra.mxu0 %v430
    %v821 = vpop.f32.mrf.mxu0
    %v822 = vadd.f32 %v613, %v821
    %823 = vmatmul.f32.gmra.mxu0 %v431
    %v824 = vpop.f32.mrf.mxu0
    %v825 = vadd.f32 %v616, %v824
    %826 = vmatmul.f32.gmra.mxu0 %v432
    %v827 = vpop.f32.mrf.mxu0
    %v828 = vadd.f32 %v619, %v827
    %829 = vmatmul.f32.gmra.mxu0 %v433
    %v830 = vpop.f32.mrf.mxu0
    %v831 = vadd.f32 %v622, %v830
    %832 = vmatmul.f32.gmra.mxu0 %v434
    %v833 = vpop.f32.mrf.mxu0
    %v834 = vadd.f32 %v625, %v833
    %835 = vmatmul.f32.gmra.mxu0 %v435
    %v836 = vpop.f32.mrf.mxu0
    %v837 = vadd.f32 %v628, %v836
    %838 = vmatmul.f32.gmra.mxu0 %v436
    %v839 = vpop.f32.mrf.mxu0
    %v840 = vadd.f32 %v631, %v839
    %841 = vmatmul.f32.gmra.mxu0 %v437
    %v842 = vpop.f32.mrf.mxu0
    %v843 = vadd.f32 %v634, %v842
    %844 = vmatmul.f32.gmra.mxu0 %v438
    %v845 = vpop.f32.mrf.mxu0
    %v846 = vadd.f32 %v637, %v845
    %847 = vmatmul.f32.gmra.mxu0 %v439
    %v848 = vpop.f32.mrf.mxu0
    %v849 = vadd.f32 %v640, %v848
    %850 = vmatmul.f32.gmra.mxu0 %v440
    %v851 = vpop.f32.mrf.mxu0
    %v852 = vadd.f32 %v643, %v851
    %853 = vmatmul.f32.gmra.mxu0 %v441
    %v854 = vpop.f32.mrf.mxu0
    %v855 = vadd.f32 %v646, %v854
    %856 = vmatmul.f32.gmra.mxu0 %v442
    %v857 = vpop.f32.mrf.mxu0
    %v858 = vadd.f32 %v649, %v857
    %859 = vmatmul.f32.gmra.mxu0 %v443
    %v860 = vpop.f32.mrf.mxu0
    %v861 = vadd.f32 %v652, %v860
    %862 = vmatmul.f32.gmra.mxu0 %v444
    %v863 = vpop.f32.mrf.mxu0
    %v864 = vadd.f32 %v655, %v863
    %865 = vmatmul.f32.gmra.mxu0 %v445
    %v866 = vpop.f32.mrf.mxu0
    %v867 = vadd.f32 %v658, %v866
    %868 = vmatmul.f32.gmra.mxu0 %v446
    %v869 = vpop.f32.mrf.mxu0
    %v870 = vadd.f32 %v661, %v869
    %871 = vmatmul.f32.gmra.mxu0 %v447
    %v872 = vpop.f32.mrf.mxu0
    %v873 = vadd.f32 %v664, %v872
    %874 = vmatmul.f32.gmra.mxu0 %v448
    %v875 = vpop.f32.mrf.mxu0
    %v876 = vadd.f32 %v667, %v875
    %877 = vmatmul.f32.gmra.mxu0 %v449
    %v878 = vpop.f32.mrf.mxu0
    %v879 = vadd.f32 %v670, %v878
    %880 = vmatmul.f32.gmra.mxu0 %v450
    %v881 = vpop.f32.mrf.mxu0
    %v882 = vadd.f32 %v673, %v881
    %883 = vmatmul.f32.gmra.mxu0 %v451
    %v884 = vpop.f32.mrf.mxu0
    %v885 = vadd.f32 %v676, %v884
    %886 = vmatmul.f32.gmra.mxu0 %v452
    %v887 = vpop.f32.mrf.mxu0
    %v888 = vadd.f32 %v679, %v887
    %889 = vmatmul.f32.gmra.mxu0 %v453
    %v890 = vpop.f32.mrf.mxu0
    %v891 = vadd.f32 %v682, %v890
    %892 = vmatmul.f32.gmra.mxu0 %v454
    %v893 = vpop.f32.mrf.mxu0
    %v894 = vadd.f32 %v685, %v893
    %895 = vmatmul.f32.gmra.mxu0 %v455
    %v896 = vpop.f32.mrf.mxu0
    %v897 = vadd.f32 %v688, %v896
    %898 = vmatmul.f32.gmra.mxu0 %v456
    %v899 = vpop.f32.mrf.mxu0
    %v900 = vadd.f32 %v691, %v899
    %901 = vmatmul.f32.gmra.mxu0 %v457
    %v902 = vpop.f32.mrf.mxu0
    %v903 = vadd.f32 %v694, %v902
    %904 = vmatmul.f32.gmra.mxu0 %v458
    %v905 = vpop.f32.mrf.mxu0
    %v906 = vadd.f32 %v697, %v905
    %907 = vmatmul.f32.gmra.mxu0 %v459
    %v908 = vpop.f32.mrf.mxu0
    %v909 = vadd.f32 %v700, %v908
    %910 = vmatmul.f32.gmra.mxu0 %v460
    %v911 = vpop.f32.mrf.mxu0
    %v912 = vadd.f32 %v703, %v911
    %913 = vmatmul.f32.gmra.mxu0 %v461
    %v914 = vpop.f32.mrf.mxu0
    %v915 = vadd.f32 %v706, %v914
    %916 = vdwg.mxu0
    %s917 = scalar_lea.vmem [#allocation4], 768
    %v918 = vld [vmem:[%s917] sm:$0xff]
    %v919 = vld [vmem:[%s917 + $0x8] sm:$0xff]
    %v920 = vld [vmem:[%s917 + $0x10] sm:$0xff]
    %v921 = vld [vmem:[%s917 + $0x18] sm:$0xff]
    %v922 = vld [vmem:[%s917 + $0x20] sm:$0xff]
    %v923 = vld [vmem:[%s917 + $0x28] sm:$0xff]
    %v924 = vld [vmem:[%s917 + $0x30] sm:$0xff]
    %v925 = vld [vmem:[%s917 + $0x38] sm:$0xff]
    %v926 = vld [vmem:[%s917 + $0x40] sm:$0xff]
    %v927 = vld [vmem:[%s917 + $0x48] sm:$0xff]
    %v928 = vld [vmem:[%s917 + $0x50] sm:$0xff]
    %v929 = vld [vmem:[%s917 + $0x58] sm:$0xff]
    %v930 = vld [vmem:[%s917 + $0x60] sm:$0xff]
    %v931 = vld [vmem:[%s917 + $0x68] sm:$0xff]
    %v932 = vld [vmem:[%s917 + $0x70] sm:$0xff]
    %v933 = vld [vmem:[%s917 + $0x78] sm:$0xff]
    %934 = vmatpush.msra.mxu0 %v933
    %935 = vmatpush.msra.mxu0 %v932
    %936 = vmatpush.msra.mxu0 %v931
    %937 = vmatpush.msra.mxu0 %v930
    %938 = vmatpush.msra.mxu0 %v929
    %939 = vmatpush.msra.mxu0 %v928
    %940 = vmatpush.msra.mxu0 %v927
    %941 = vmatpush.msra.mxu0 %v926
    %942 = vmatpush.msra.mxu0 %v925
    %943 = vmatpush.msra.mxu0 %v924
    %944 = vmatpush.msra.mxu0 %v923
    %945 = vmatpush.msra.mxu0 %v922
    %946 = vmatpush.msra.mxu0 %v921
    %947 = vmatpush.msra.mxu0 %v920
    %948 = vmatpush.msra.mxu0 %v919
    %949 = vmatpush.msra.mxu0 %v918
    %950 = vmatmul.f32.gmra.mxu0 %v398
    %v951 = vpop.f32.mrf.mxu0
    %v952 = vadd.f32 0.0, %v951
    %953 = vmatmul.f32.gmra.mxu0 %v399
    %v954 = vpop.f32.mrf.mxu0
    %v955 = vadd.f32 0.0, %v954
    %956 = vmatmul.f32.gmra.mxu0 %v400
    %v957 = vpop.f32.mrf.mxu0
    %v958 = vadd.f32 0.0, %v957
    %959 = vmatmul.f32.gmra.mxu0 %v401
    %v960 = vpop.f32.mrf.mxu0
    %v961 = vadd.f32 0.0, %v960
    %962 = vmatmul.f32.gmra.mxu0 %v402
    %v963 = vpop.f32.mrf.mxu0
    %v964 = vadd.f32 0.0, %v963
    %965 = vmatmul.f32.gmra.mxu0 %v403
    %v966 = vpop.f32.mrf.mxu0
    %v967 = vadd.f32 0.0, %v966
    %968 = vmatmul.f32.gmra.mxu0 %v404
    %v969 = vpop.f32.mrf.mxu0
    %v970 = vadd.f32 0.0, %v969
    %971 = vmatmul.f32.gmra.mxu0 %v405
    %v972 = vpop.f32.mrf.mxu0
    %v973 = vadd.f32 0.0, %v972
    %974 = vmatmul.f32.gmra.mxu0 %v406
    %v975 = vpop.f32.mrf.mxu0
    %v976 = vadd.f32 0.0, %v975
    %977 = vmatmul.f32.gmra.mxu0 %v407
    %v978 = vpop.f32.mrf.mxu0
    %v979 = vadd.f32 0.0, %v978
    %980 = vmatmul.f32.gmra.mxu0 %v408
    %v981 = vpop.f32.mrf.mxu0
    %v982 = vadd.f32 0.0, %v981
    %983 = vmatmul.f32.gmra.mxu0 %v409
    %v984 = vpop.f32.mrf.mxu0
    %v985 = vadd.f32 0.0, %v984
    %986 = vmatmul.f32.gmra.mxu0 %v410
    %v987 = vpop.f32.mrf.mxu0
    %v988 = vadd.f32 0.0, %v987
    %989 = vmatmul.f32.gmra.mxu0 %v411
    %v990 = vpop.f32.mrf.mxu0
    %v991 = vadd.f32 0.0, %v990
    %992 = vmatmul.f32.gmra.mxu0 %v412
    %v993 = vpop.f32.mrf.mxu0
    %v994 = vadd.f32 0.0, %v993
    %995 = vmatmul.f32.gmra.mxu0 %v413
    %v996 = vpop.f32.mrf.mxu0
    %v997 = vadd.f32 0.0, %v996
    %998 = vmatmul.f32.gmra.mxu0 %v414
    %v999 = vpop.f32.mrf.mxu0
    %v1000 = vadd.f32 0.0, %v999
    %1001 = vmatmul.f32.gmra.mxu0 %v415
    %v1002 = vpop.f32.mrf.mxu0
    %v1003 = vadd.f32 0.0, %v1002
    %1004 = vmatmul.f32.gmra.mxu0 %v416
    %v1005 = vpop.f32.mrf.mxu0
    %v1006 = vadd.f32 0.0, %v1005
    %1007 = vmatmul.f32.gmra.mxu0 %v417
    %v1008 = vpop.f32.mrf.mxu0
    %v1009 = vadd.f32 0.0, %v1008
    %1010 = vmatmul.f32.gmra.mxu0 %v418
    %v1011 = vpop.f32.mrf.mxu0
    %v1012 = vadd.f32 0.0, %v1011
    %1013 = vmatmul.f32.gmra.mxu0 %v419
    %v1014 = vpop.f32.mrf.mxu0
    %v1015 = vadd.f32 0.0, %v1014
    %1016 = vmatmul.f32.gmra.mxu0 %v420
    %v1017 = vpop.f32.mrf.mxu0
    %v1018 = vadd.f32 0.0, %v1017
    %1019 = vmatmul.f32.gmra.mxu0 %v421
    %v1020 = vpop.f32.mrf.mxu0
    %v1021 = vadd.f32 0.0, %v1020
    %1022 = vmatmul.f32.gmra.mxu0 %v422
    %v1023 = vpop.f32.mrf.mxu0
    %v1024 = vadd.f32 0.0, %v1023
    %1025 = vmatmul.f32.gmra.mxu0 %v423
    %v1026 = vpop.f32.mrf.mxu0
    %v1027 = vadd.f32 0.0, %v1026
    %1028 = vmatmul.f32.gmra.mxu0 %v424
    %v1029 = vpop.f32.mrf.mxu0
    %v1030 = vadd.f32 0.0, %v1029
    %1031 = vmatmul.f32.gmra.mxu0 %v425
    %v1032 = vpop.f32.mrf.mxu0
    %v1033 = vadd.f32 0.0, %v1032
    %1034 = vmatmul.f32.gmra.mxu0 %v426
    %v1035 = vpop.f32.mrf.mxu0
    %v1036 = vadd.f32 0.0, %v1035
    %1037 = vmatmul.f32.gmra.mxu0 %v427
    %v1038 = vpop.f32.mrf.mxu0
    %v1039 = vadd.f32 0.0, %v1038
    %1040 = vmatmul.f32.gmra.mxu0 %v428
    %v1041 = vpop.f32.mrf.mxu0
    %v1042 = vadd.f32 0.0, %v1041
    %1043 = vmatmul.f32.gmra.mxu0 %v429
    %v1044 = vpop.f32.mrf.mxu0
    %v1045 = vadd.f32 0.0, %v1044
    %1046 = vmatmul.f32.gmra.mxu0 %v434
    %v1047 = vpop.f32.mrf.mxu0
    %v1048 = vadd.f32 0.0, %v1047
    %1049 = vmatmul.f32.gmra.mxu0 %v435
    %v1050 = vpop.f32.mrf.mxu0
    %v1051 = vadd.f32 0.0, %v1050
    %1052 = vmatmul.f32.gmra.mxu0 %v436
    %v1053 = vpop.f32.mrf.mxu0
    %v1054 = vadd.f32 0.0, %v1053
    %1055 = vmatmul.f32.gmra.mxu0 %v437
    %v1056 = vpop.f32.mrf.mxu0
    %v1057 = vadd.f32 0.0, %v1056
    %1058 = vmatmul.f32.gmra.mxu0 %v438
    %v1059 = vpop.f32.mrf.mxu0
    %v1060 = vadd.f32 0.0, %v1059
    %1061 = vmatmul.f32.gmra.mxu0 %v439
    %v1062 = vpop.f32.mrf.mxu0
    %v1063 = vadd.f32 0.0, %v1062
    %1064 = vmatmul.f32.gmra.mxu0 %v440
    %v1065 = vpop.f32.mrf.mxu0
    %v1066 = vadd.f32 0.0, %v1065
    %1067 = vmatmul.f32.gmra.mxu0 %v441
    %v1068 = vpop.f32.mrf.mxu0
    %v1069 = vadd.f32 0.0, %v1068
    %1070 = vmatmul.f32.gmra.mxu0 %v442
    %v1071 = vpop.f32.mrf.mxu0
    %v1072 = vadd.f32 0.0, %v1071
    %1073 = vmatmul.f32.gmra.mxu0 %v443
    %v1074 = vpop.f32.mrf.mxu0
    %v1075 = vadd.f32 0.0, %v1074
    %1076 = vmatmul.f32.gmra.mxu0 %v444
    %v1077 = vpop.f32.mrf.mxu0
    %v1078 = vadd.f32 0.0, %v1077
    %1079 = vmatmul.f32.gmra.mxu0 %v445
    %v1080 = vpop.f32.mrf.mxu0
    %v1081 = vadd.f32 0.0, %v1080
    %1082 = vmatmul.f32.gmra.mxu0 %v446
    %v1083 = vpop.f32.mrf.mxu0
    %v1084 = vadd.f32 0.0, %v1083
    %1085 = vmatmul.f32.gmra.mxu0 %v447
    %v1086 = vpop.f32.mrf.mxu0
    %v1087 = vadd.f32 0.0, %v1086
    %1088 = vmatmul.f32.gmra.mxu0 %v448
    %v1089 = vpop.f32.mrf.mxu0
    %v1090 = vadd.f32 0.0, %v1089
    %1091 = vmatmul.f32.gmra.mxu0 %v449
    %v1092 = vpop.f32.mrf.mxu0
    %v1093 = vadd.f32 0.0, %v1092
    %1094 = vmatmul.f32.gmra.mxu0 %v450
    %v1095 = vpop.f32.mrf.mxu0
    %v1096 = vadd.f32 0.0, %v1095
    %1097 = vmatmul.f32.gmra.mxu0 %v451
    %v1098 = vpop.f32.mrf.mxu0
    %v1099 = vadd.f32 0.0, %v1098
    %1100 = vmatmul.f32.gmra.mxu0 %v452
    %v1101 = vpop.f32.mrf.mxu0
    %v1102 = vadd.f32 0.0, %v1101
    %1103 = vmatmul.f32.gmra.mxu0 %v453
    %v1104 = vpop.f32.mrf.mxu0
    %v1105 = vadd.f32 0.0, %v1104
    %1106 = vmatmul.f32.gmra.mxu0 %v454
    %v1107 = vpop.f32.mrf.mxu0
    %v1108 = vadd.f32 0.0, %v1107
    %1109 = vmatmul.f32.gmra.mxu0 %v455
    %v1110 = vpop.f32.mrf.mxu0
    %v1111 = vadd.f32 0.0, %v1110
    %1112 = vmatmul.f32.gmra.mxu0 %v456
    %v1113 = vpop.f32.mrf.mxu0
    %v1114 = vadd.f32 0.0, %v1113
    %1115 = vmatmul.f32.gmra.mxu0 %v457
    %v1116 = vpop.f32.mrf.mxu0
    %v1117 = vadd.f32 0.0, %v1116
    %1118 = vmatmul.f32.gmra.mxu0 %v458
    %v1119 = vpop.f32.mrf.mxu0
    %v1120 = vadd.f32 0.0, %v1119
    %1121 = vmatmul.f32.gmra.mxu0 %v459
    %v1122 = vpop.f32.mrf.mxu0
    %v1123 = vadd.f32 0.0, %v1122
    %1124 = vmatmul.f32.gmra.mxu0 %v460
    %v1125 = vpop.f32.mrf.mxu0
    %v1126 = vadd.f32 0.0, %v1125
    %1127 = vmatmul.f32.gmra.mxu0 %v461
    %v1128 = vpop.f32.mrf.mxu0
    %v1129 = vadd.f32 0.0, %v1128
    %1130 = vmatmul.f32.gmra.mxu0 %v462
    %v1131 = vpop.f32.mrf.mxu0
    %v1132 = vadd.f32 0.0, %v1131
    %1133 = vmatmul.f32.gmra.mxu0 %v463
    %v1134 = vpop.f32.mrf.mxu0
    %v1135 = vadd.f32 0.0, %v1134
    %1136 = vmatmul.f32.gmra.mxu0 %v464
    %v1137 = vpop.f32.mrf.mxu0
    %v1138 = vadd.f32 0.0, %v1137
    %1139 = vmatmul.f32.gmra.mxu0 %v465
    %v1140 = vpop.f32.mrf.mxu0
    %v1141 = vadd.f32 0.0, %v1140
    %1142 = vdwg.mxu0
    %v1143 = vadd.f32 %v726, %v952
    %v1144 = vadd.f32 %v729, %v955
    %v1145 = vadd.f32 %v732, %v958
    %v1146 = vadd.f32 %v735, %v961
    %v1147 = vadd.f32 %v738, %v964
    %v1148 = vadd.f32 %v741, %v967
    %v1149 = vadd.f32 %v744, %v970
    %v1150 = vadd.f32 %v747, %v973
    %v1151 = vadd.f32 %v750, %v976
    %v1152 = vadd.f32 %v753, %v979
    %v1153 = vadd.f32 %v756, %v982
    %v1154 = vadd.f32 %v759, %v985
    %v1155 = vadd.f32 %v762, %v988
    %v1156 = vadd.f32 %v765, %v991
    %v1157 = vadd.f32 %v768, %v994
    %v1158 = vadd.f32 %v771, %v997
    %v1159 = vadd.f32 %v774, %v1000
    %v1160 = vadd.f32 %v777, %v1003
    %v1161 = vadd.f32 %v780, %v1006
    %v1162 = vadd.f32 %v783, %v1009
    %v1163 = vadd.f32 %v786, %v1012
    %v1164 = vadd.f32 %v789, %v1015
    %v1165 = vadd.f32 %v792, %v1018
    %v1166 = vadd.f32 %v795, %v1021
    %v1167 = vadd.f32 %v798, %v1024
    %v1168 = vadd.f32 %v801, %v1027
    %v1169 = vadd.f32 %v804, %v1030
    %v1170 = vadd.f32 %v807, %v1033
    %v1171 = vadd.f32 %v810, %v1036
    %v1172 = vadd.f32 %v813, %v1039
    %v1173 = vadd.f32 %v816, %v1042
    %v1174 = vadd.f32 %v819, %v1045
    %v1175 = vadd.f32 %v822, %v1048
    %v1176 = vadd.f32 %v825, %v1051
    %v1177 = vadd.f32 %v828, %v1054
    %v1178 = vadd.f32 %v831, %v1057
    %v1179 = vadd.f32 %v834, %v1060
    %v1180 = vadd.f32 %v837, %v1063
    %v1181 = vadd.f32 %v840, %v1066
    %v1182 = vadd.f32 %v843, %v1069
    %v1183 = vadd.f32 %v846, %v1072
    %v1184 = vadd.f32 %v849, %v1075
    %v1185 = vadd.f32 %v852, %v1078
    %v1186 = vadd.f32 %v855, %v1081
    %v1187 = vadd.f32 %v858, %v1084
    %v1188 = vadd.f32 %v861, %v1087
    %v1189 = vadd.f32 %v864, %v1090
    %v1190 = vadd.f32 %v867, %v1093
    %v1191 = vadd.f32 %v870, %v1096
    %v1192 = vadd.f32 %v873, %v1099
    %v1193 = vadd.f32 %v876, %v1102
    %v1194 = vadd.f32 %v879, %v1105
    %v1195 = vadd.f32 %v882, %v1108
    %v1196 = vadd.f32 %v885, %v1111
    %v1197 = vadd.f32 %v888, %v1114
    %v1198 = vadd.f32 %v891, %v1117
    %v1199 = vadd.f32 %v894, %v1120
    %v1200 = vadd.f32 %v897, %v1123
    %v1201 = vadd.f32 %v900, %v1126
    %v1202 = vadd.f32 %v903, %v1129
    %v1203 = vadd.f32 %v906, %v1132
    %v1204 = vadd.f32 %v909, %v1135
    %v1205 = vadd.f32 %v912, %v1138
    %v1206 = vadd.f32 %v915, %v1141
    %v1207 = vld [vmem:[#allocation2 + $0x1] sm:$0xff]
    %v1208 = vld [vmem:[#allocation2 + $0x9] sm:$0xff]
    %v1209 = vld [vmem:[#allocation2 + $0x19] sm:$0xff]
    %v1210 = vld [vmem:[#allocation2 + $0x21] sm:$0xff]
    %v1211 = vld [vmem:[#allocation2 + $0x31] sm:$0xff]
    %v1212 = vld [vmem:[#allocation2 + $0x39] sm:$0xff]
    %v1213 = vld [vmem:[#allocation2 + $0x49] sm:$0xff]
    %v1214 = vld [vmem:[#allocation2 + $0x51] sm:$0xff]
    %v1215 = vld [vmem:[#allocation2 + $0x61] sm:$0xff]
    %v1216 = vld [vmem:[#allocation2 + $0x69] sm:$0xff]
    %v1217 = vld [vmem:[#allocation2 + $0x79] sm:$0xff]
    %v1218 = vld [vmem:[#allocation2 + $0x81] sm:$0xff]
    %v1219 = vld [vmem:[#allocation2 + $0x91] sm:$0xff]
    %v1220 = vld [vmem:[#allocation2 + $0x99] sm:$0xff]
    %v1221 = vld [vmem:[#allocation2 + $0xa9] sm:$0xff]
    %v1222 = vld [vmem:[#allocation2 + $0xb1] sm:$0xff]
    %v1223 = vld [vmem:[#allocation2 + $0xc1] sm:$0xff]
    %v1224 = vld [vmem:[#allocation2 + $0xc9] sm:$0xff]
    %v1225 = vld [vmem:[#allocation2 + $0xd9] sm:$0xff]
    %v1226 = vld [vmem:[#allocation2 + $0xe1] sm:$0xff]
    %v1227 = vld [vmem:[#allocation2 + $0xf1] sm:$0xff]
    %v1228 = vld [vmem:[#allocation2 + $0xf9] sm:$0xff]
    %v1229 = vld [vmem:[#allocation2 + $0x109] sm:$0xff]
    %v1230 = vld [vmem:[#allocation2 + $0x111] sm:$0xff]
    %v1231 = vld [vmem:[#allocation2 + $0x121] sm:$0xff]
    %v1232 = vld [vmem:[#allocation2 + $0x129] sm:$0xff]
    %v1233 = vld [vmem:[#allocation2 + $0x139] sm:$0xff]
    %v1234 = vld [vmem:[#allocation2 + $0x141] sm:$0xff]
    %v1235 = vld [vmem:[#allocation2 + $0x151] sm:$0xff]
    %v1236 = vld [vmem:[#allocation2 + $0x159] sm:$0xff]
    %v1237 = vld [vmem:[#allocation2 + $0x169] sm:$0xff]
    %v1238 = vld [vmem:[#allocation2 + $0x171] sm:$0xff]
    %v1239 = vld [vmem:[#allocation2 + $0x181] sm:$0xff]
    %v1240 = vld [vmem:[#allocation2 + $0x189] sm:$0xff]
    %v1241 = vld [vmem:[#allocation2 + $0x199] sm:$0xff]
    %v1242 = vld [vmem:[#allocation2 + $0x1a1] sm:$0xff]
    %v1243 = vld [vmem:[#allocation2 + $0x1b1] sm:$0xff]
    %v1244 = vld [vmem:[#allocation2 + $0x1b9] sm:$0xff]
    %v1245 = vld [vmem:[#allocation2 + $0x1c9] sm:$0xff]
    %v1246 = vld [vmem:[#allocation2 + $0x1d1] sm:$0xff]
    %v1247 = vld [vmem:[#allocation2 + $0x1e1] sm:$0xff]
    %v1248 = vld [vmem:[#allocation2 + $0x1e9] sm:$0xff]
    %v1249 = vld [vmem:[#allocation2 + $0x1f9] sm:$0xff]
    %v1250 = vld [vmem:[#allocation2 + $0x201] sm:$0xff]
    %v1251 = vld [vmem:[#allocation2 + $0x211] sm:$0xff]
    %v1252 = vld [vmem:[#allocation2 + $0x219] sm:$0xff]
    %v1253 = vld [vmem:[#allocation2 + $0x229] sm:$0xff]
    %v1254 = vld [vmem:[#allocation2 + $0x231] sm:$0xff]
    %v1255 = vld [vmem:[#allocation2 + $0x241] sm:$0xff]
    %v1256 = vld [vmem:[#allocation2 + $0x249] sm:$0xff]
    %v1257 = vld [vmem:[#allocation2 + $0x259] sm:$0xff]
    %v1258 = vld [vmem:[#allocation2 + $0x261] sm:$0xff]
    %v1259 = vld [vmem:[#allocation2 + $0x271] sm:$0xff]
    %v1260 = vld [vmem:[#allocation2 + $0x279] sm:$0xff]
    %v1261 = vld [vmem:[#allocation2 + $0x289] sm:$0xff]
    %v1262 = vld [vmem:[#allocation2 + $0x291] sm:$0xff]
    %v1263 = vld [vmem:[#allocation2 + $0x2a1] sm:$0xff]
    %v1264 = vld [vmem:[#allocation2 + $0x2a9] sm:$0xff]
    %v1265 = vld [vmem:[#allocation2 + $0x2b9] sm:$0xff]
    %v1266 = vld [vmem:[#allocation2 + $0x2c1] sm:$0xff]
    %v1267 = vld [vmem:[#allocation2 + $0x2d1] sm:$0xff]
    %v1268 = vld [vmem:[#allocation2 + $0x2d9] sm:$0xff]
    %v1269 = vld [vmem:[#allocation2 + $0x2e9] sm:$0xff]
    %v1270 = vld [vmem:[#allocation2 + $0x2f1] sm:$0xff]
    %v1271 = vld [vmem:[#allocation2 + $0x301] sm:$0xff]
    %v1272 = vld [vmem:[#allocation2 + $0x309] sm:$0xff]
    %v1273 = vld [vmem:[#allocation2 + $0x319] sm:$0xff]
    %v1274 = vld [vmem:[#allocation2 + $0x321] sm:$0xff]
    %v1275 = vld [vmem:[#allocation2 + $0x331] sm:$0xff]
    %v1276 = vld [vmem:[#allocation2 + $0x339] sm:$0xff]
    %v1277 = vld [vmem:[#allocation2 + $0x349] sm:$0xff]
    %v1278 = vld [vmem:[#allocation2 + $0x351] sm:$0xff]
    %s1279 = scalar_lea.vmem [#allocation4], 128
    %v1280 = vld [vmem:[%s1279] sm:$0xff]
    %v1281 = vld [vmem:[%s1279 + $0x8] sm:$0xff]
    %v1282 = vld [vmem:[%s1279 + $0x10] sm:$0xff]
    %v1283 = vld [vmem:[%s1279 + $0x18] sm:$0xff]
    %v1284 = vld [vmem:[%s1279 + $0x20] sm:$0xff]
    %v1285 = vld [vmem:[%s1279 + $0x28] sm:$0xff]
    %v1286 = vld [vmem:[%s1279 + $0x30] sm:$0xff]
    %v1287 = vld [vmem:[%s1279 + $0x38] sm:$0xff]
    %v1288 = vld [vmem:[%s1279 + $0x40] sm:$0xff]
    %v1289 = vld [vmem:[%s1279 + $0x48] sm:$0xff]
    %v1290 = vld [vmem:[%s1279 + $0x50] sm:$0xff]
    %v1291 = vld [vmem:[%s1279 + $0x58] sm:$0xff]
    %v1292 = vld [vmem:[%s1279 + $0x60] sm:$0xff]
    %v1293 = vld [vmem:[%s1279 + $0x68] sm:$0xff]
    %v1294 = vld [vmem:[%s1279 + $0x70] sm:$0xff]
    %v1295 = vld [vmem:[%s1279 + $0x78] sm:$0xff]
    %1296 = vmatpush.msra.mxu0 %v1295
    %1297 = vmatpush.msra.mxu0 %v1294
    %1298 = vmatpush.msra.mxu0 %v1293
    %1299 = vmatpush.msra.mxu0 %v1292
    %1300 = vmatpush.msra.mxu0 %v1291
    %1301 = vmatpush.msra.mxu0 %v1290
    %1302 = vmatpush.msra.mxu0 %v1289
    %1303 = vmatpush.msra.mxu0 %v1288
    %1304 = vmatpush.msra.mxu0 %v1287
    %1305 = vmatpush.msra.mxu0 %v1286
    %1306 = vmatpush.msra.mxu0 %v1285
    %1307 = vmatpush.msra.mxu0 %v1284
    %1308 = vmatpush.msra.mxu0 %v1283
    %1309 = vmatpush.msra.mxu0 %v1282
    %1310 = vmatpush.msra.mxu0 %v1281
    %1311 = vmatpush.msra.mxu0 %v1280
    %1312 = vmatmul.f32.gmra.mxu0 %v1207
    %v1313 = vpop.f32.mrf.mxu0
    %v1314 = vadd.f32 0.0, %v1313
    %1315 = vmatmul.f32.gmra.mxu0 %v1208
    %v1316 = vpop.f32.mrf.mxu0
    %v1317 = vadd.f32 0.0, %v1316
    %1318 = vmatmul.f32.gmra.mxu0 %v1209
    %v1319 = vpop.f32.mrf.mxu0
    %v1320 = vadd.f32 0.0, %v1319
    %1321 = vmatmul.f32.gmra.mxu0 %v1210
    %v1322 = vpop.f32.mrf.mxu0
    %v1323 = vadd.f32 0.0, %v1322
    %1324 = vmatmul.f32.gmra.mxu0 %v1211
    %v1325 = vpop.f32.mrf.mxu0
    %v1326 = vadd.f32 0.0, %v1325
    %1327 = vmatmul.f32.gmra.mxu0 %v1212
    %v1328 = vpop.f32.mrf.mxu0
    %v1329 = vadd.f32 0.0, %v1328
    %1330 = vmatmul.f32.gmra.mxu0 %v1213
    %v1331 = vpop.f32.mrf.mxu0
    %v1332 = vadd.f32 0.0, %v1331
    %1333 = vmatmul.f32.gmra.mxu0 %v1214
    %v1334 = vpop.f32.mrf.mxu0
    %v1335 = vadd.f32 0.0, %v1334
    %1336 = vmatmul.f32.gmra.mxu0 %v1215
    %v1337 = vpop.f32.mrf.mxu0
    %v1338 = vadd.f32 0.0, %v1337
    %1339 = vmatmul.f32.gmra.mxu0 %v1216
    %v1340 = vpop.f32.mrf.mxu0
    %v1341 = vadd.f32 0.0, %v1340
    %1342 = vmatmul.f32.gmra.mxu0 %v1217
    %v1343 = vpop.f32.mrf.mxu0
    %v1344 = vadd.f32 0.0, %v1343
    %1345 = vmatmul.f32.gmra.mxu0 %v1218
    %v1346 = vpop.f32.mrf.mxu0
    %v1347 = vadd.f32 0.0, %v1346
    %1348 = vmatmul.f32.gmra.mxu0 %v1219
    %v1349 = vpop.f32.mrf.mxu0
    %v1350 = vadd.f32 0.0, %v1349
    %1351 = vmatmul.f32.gmra.mxu0 %v1220
    %v1352 = vpop.f32.mrf.mxu0
    %v1353 = vadd.f32 0.0, %v1352
    %1354 = vmatmul.f32.gmra.mxu0 %v1221
    %v1355 = vpop.f32.mrf.mxu0
    %v1356 = vadd.f32 0.0, %v1355
    %1357 = vmatmul.f32.gmra.mxu0 %v1222
    %v1358 = vpop.f32.mrf.mxu0
    %v1359 = vadd.f32 0.0, %v1358
    %1360 = vmatmul.f32.gmra.mxu0 %v1223
    %v1361 = vpop.f32.mrf.mxu0
    %v1362 = vadd.f32 0.0, %v1361
    %1363 = vmatmul.f32.gmra.mxu0 %v1224
    %v1364 = vpop.f32.mrf.mxu0
    %v1365 = vadd.f32 0.0, %v1364
    %1366 = vmatmul.f32.gmra.mxu0 %v1225
    %v1367 = vpop.f32.mrf.mxu0
    %v1368 = vadd.f32 0.0, %v1367
    %1369 = vmatmul.f32.gmra.mxu0 %v1226
    %v1370 = vpop.f32.mrf.mxu0
    %v1371 = vadd.f32 0.0, %v1370
    %1372 = vmatmul.f32.gmra.mxu0 %v1227
    %v1373 = vpop.f32.mrf.mxu0
    %v1374 = vadd.f32 0.0, %v1373
    %1375 = vmatmul.f32.gmra.mxu0 %v1228
    %v1376 = vpop.f32.mrf.mxu0
    %v1377 = vadd.f32 0.0, %v1376
    %1378 = vmatmul.f32.gmra.mxu0 %v1229
    %v1379 = vpop.f32.mrf.mxu0
    %v1380 = vadd.f32 0.0, %v1379
    %1381 = vmatmul.f32.gmra.mxu0 %v1230
    %v1382 = vpop.f32.mrf.mxu0
    %v1383 = vadd.f32 0.0, %v1382
    %1384 = vmatmul.f32.gmra.mxu0 %v1231
    %v1385 = vpop.f32.mrf.mxu0
    %v1386 = vadd.f32 0.0, %v1385
    %1387 = vmatmul.f32.gmra.mxu0 %v1232
    %v1388 = vpop.f32.mrf.mxu0
    %v1389 = vadd.f32 0.0, %v1388
    %1390 = vmatmul.f32.gmra.mxu0 %v1233
    %v1391 = vpop.f32.mrf.mxu0
    %v1392 = vadd.f32 0.0, %v1391
    %1393 = vmatmul.f32.gmra.mxu0 %v1234
    %v1394 = vpop.f32.mrf.mxu0
    %v1395 = vadd.f32 0.0, %v1394
    %1396 = vmatmul.f32.gmra.mxu0 %v1235
    %v1397 = vpop.f32.mrf.mxu0
    %v1398 = vadd.f32 0.0, %v1397
    %1399 = vmatmul.f32.gmra.mxu0 %v1236
    %v1400 = vpop.f32.mrf.mxu0
    %v1401 = vadd.f32 0.0, %v1400
    %1402 = vmatmul.f32.gmra.mxu0 %v1237
    %v1403 = vpop.f32.mrf.mxu0
    %v1404 = vadd.f32 0.0, %v1403
    %1405 = vmatmul.f32.gmra.mxu0 %v1238
    %v1406 = vpop.f32.mrf.mxu0
    %v1407 = vadd.f32 0.0, %v1406
    %1408 = vmatmul.f32.gmra.mxu0 %v1243
    %v1409 = vpop.f32.mrf.mxu0
    %v1410 = vadd.f32 0.0, %v1409
    %1411 = vmatmul.f32.gmra.mxu0 %v1244
    %v1412 = vpop.f32.mrf.mxu0
    %v1413 = vadd.f32 0.0, %v1412
    %1414 = vmatmul.f32.gmra.mxu0 %v1245
    %v1415 = vpop.f32.mrf.mxu0
    %v1416 = vadd.f32 0.0, %v1415
    %1417 = vmatmul.f32.gmra.mxu0 %v1246
    %v1418 = vpop.f32.mrf.mxu0
    %v1419 = vadd.f32 0.0, %v1418
    %1420 = vmatmul.f32.gmra.mxu0 %v1247
    %v1421 = vpop.f32.mrf.mxu0
    %v1422 = vadd.f32 0.0, %v1421
    %1423 = vmatmul.f32.gmra.mxu0 %v1248
    %v1424 = vpop.f32.mrf.mxu0
    %v1425 = vadd.f32 0.0, %v1424
    %1426 = vmatmul.f32.gmra.mxu0 %v1249
    %v1427 = vpop.f32.mrf.mxu0
    %v1428 = vadd.f32 0.0, %v1427
    %1429 = vmatmul.f32.gmra.mxu0 %v1250
    %v1430 = vpop.f32.mrf.mxu0
    %v1431 = vadd.f32 0.0, %v1430
    %1432 = vmatmul.f32.gmra.mxu0 %v1251
    %v1433 = vpop.f32.mrf.mxu0
    %v1434 = vadd.f32 0.0, %v1433
    %1435 = vmatmul.f32.gmra.mxu0 %v1252
    %v1436 = vpop.f32.mrf.mxu0
    %v1437 = vadd.f32 0.0, %v1436
    %1438 = vmatmul.f32.gmra.mxu0 %v1253
    %v1439 = vpop.f32.mrf.mxu0
    %v1440 = vadd.f32 0.0, %v1439
    %1441 = vmatmul.f32.gmra.mxu0 %v1254
    %v1442 = vpop.f32.mrf.mxu0
    %v1443 = vadd.f32 0.0, %v1442
    %1444 = vmatmul.f32.gmra.mxu0 %v1255
    %v1445 = vpop.f32.mrf.mxu0
    %v1446 = vadd.f32 0.0, %v1445
    %1447 = vmatmul.f32.gmra.mxu0 %v1256
    %v1448 = vpop.f32.mrf.mxu0
    %v1449 = vadd.f32 0.0, %v1448
    %1450 = vmatmul.f32.gmra.mxu0 %v1257
    %v1451 = vpop.f32.mrf.mxu0
    %v1452 = vadd.f32 0.0, %v1451
    %1453 = vmatmul.f32.gmra.mxu0 %v1258
    %v1454 = vpop.f32.mrf.mxu0
    %v1455 = vadd.f32 0.0, %v1454
    %1456 = vmatmul.f32.gmra.mxu0 %v1259
    %v1457 = vpop.f32.mrf.mxu0
    %v1458 = vadd.f32 0.0, %v1457
    %1459 = vmatmul.f32.gmra.mxu0 %v1260
    %v1460 = vpop.f32.mrf.mxu0
    %v1461 = vadd.f32 0.0, %v1460
    %1462 = vmatmul.f32.gmra.mxu0 %v1261
    %v1463 = vpop.f32.mrf.mxu0
    %v1464 = vadd.f32 0.0, %v1463
    %1465 = vmatmul.f32.gmra.mxu0 %v1262
    %v1466 = vpop.f32.mrf.mxu0
    %v1467 = vadd.f32 0.0, %v1466
    %1468 = vmatmul.f32.gmra.mxu0 %v1263
    %v1469 = vpop.f32.mrf.mxu0
    %v1470 = vadd.f32 0.0, %v1469
    %1471 = vmatmul.f32.gmra.mxu0 %v1264
    %v1472 = vpop.f32.mrf.mxu0
    %v1473 = vadd.f32 0.0, %v1472
    %1474 = vmatmul.f32.gmra.mxu0 %v1265
    %v1475 = vpop.f32.mrf.mxu0
    %v1476 = vadd.f32 0.0, %v1475
    %1477 = vmatmul.f32.gmra.mxu0 %v1266
    %v1478 = vpop.f32.mrf.mxu0
    %v1479 = vadd.f32 0.0, %v1478
    %1480 = vmatmul.f32.gmra.mxu0 %v1267
    %v1481 = vpop.f32.mrf.mxu0
    %v1482 = vadd.f32 0.0, %v1481
    %1483 = vmatmul.f32.gmra.mxu0 %v1268
    %v1484 = vpop.f32.mrf.mxu0
    %v1485 = vadd.f32 0.0, %v1484
    %1486 = vmatmul.f32.gmra.mxu0 %v1269
    %v1487 = vpop.f32.mrf.mxu0
    %v1488 = vadd.f32 0.0, %v1487
    %1489 = vmatmul.f32.gmra.mxu0 %v1270
    %v1490 = vpop.f32.mrf.mxu0
    %v1491 = vadd.f32 0.0, %v1490
    %1492 = vmatmul.f32.gmra.mxu0 %v1271
    %v1493 = vpop.f32.mrf.mxu0
    %v1494 = vadd.f32 0.0, %v1493
    %1495 = vmatmul.f32.gmra.mxu0 %v1272
    %v1496 = vpop.f32.mrf.mxu0
    %v1497 = vadd.f32 0.0, %v1496
    %1498 = vmatmul.f32.gmra.mxu0 %v1273
    %v1499 = vpop.f32.mrf.mxu0
    %v1500 = vadd.f32 0.0, %v1499
    %1501 = vmatmul.f32.gmra.mxu0 %v1274
    %v1502 = vpop.f32.mrf.mxu0
    %v1503 = vadd.f32 0.0, %v1502
    %1504 = vdwg.mxu0
    %v1505 = vadd.f32 %v1143, %v1314
    %v1506 = vadd.f32 %v1144, %v1317
    %v1507 = vadd.f32 %v1145, %v1320
    %v1508 = vadd.f32 %v1146, %v1323
    %v1509 = vadd.f32 %v1147, %v1326
    %v1510 = vadd.f32 %v1148, %v1329
    %v1511 = vadd.f32 %v1149, %v1332
    %v1512 = vadd.f32 %v1150, %v1335
    %v1513 = vadd.f32 %v1151, %v1338
    %v1514 = vadd.f32 %v1152, %v1341
    %v1515 = vadd.f32 %v1153, %v1344
    %v1516 = vadd.f32 %v1154, %v1347
    %v1517 = vadd.f32 %v1155, %v1350
    %v1518 = vadd.f32 %v1156, %v1353
    %v1519 = vadd.f32 %v1157, %v1356
    %v1520 = vadd.f32 %v1158, %v1359
    %v1521 = vadd.f32 %v1159, %v1362
    %v1522 = vadd.f32 %v1160, %v1365
    %v1523 = vadd.f32 %v1161, %v1368
    %v1524 = vadd.f32 %v1162, %v1371
    %v1525 = vadd.f32 %v1163, %v1374
    %v1526 = vadd.f32 %v1164, %v1377
    %v1527 = vadd.f32 %v1165, %v1380
    %v1528 = vadd.f32 %v1166, %v1383
    %v1529 = vadd.f32 %v1167, %v1386
    %v1530 = vadd.f32 %v1168, %v1389
    %v1531 = vadd.f32 %v1169, %v1392
    %v1532 = vadd.f32 %v1170, %v1395
    %v1533 = vadd.f32 %v1171, %v1398
    %v1534 = vadd.f32 %v1172, %v1401
    %v1535 = vadd.f32 %v1173, %v1404
    %v1536 = vadd.f32 %v1174, %v1407
    %v1537 = vadd.f32 %v1175, %v1410
    %v1538 = vadd.f32 %v1176, %v1413
    %v1539 = vadd.f32 %v1177, %v1416
    %v1540 = vadd.f32 %v1178, %v1419
    %v1541 = vadd.f32 %v1179, %v1422
    %v1542 = vadd.f32 %v1180, %v1425
    %v1543 = vadd.f32 %v1181, %v1428
    %v1544 = vadd.f32 %v1182, %v1431
    %v1545 = vadd.f32 %v1183, %v1434
    %v1546 = vadd.f32 %v1184, %v1437
    %v1547 = vadd.f32 %v1185, %v1440
    %v1548 = vadd.f32 %v1186, %v1443
    %v1549 = vadd.f32 %v1187, %v1446
    %v1550 = vadd.f32 %v1188, %v1449
    %v1551 = vadd.f32 %v1189, %v1452
    %v1552 = vadd.f32 %v1190, %v1455
    %v1553 = vadd.f32 %v1191, %v1458
    %v1554 = vadd.f32 %v1192, %v1461
    %v1555 = vadd.f32 %v1193, %v1464
    %v1556 = vadd.f32 %v1194, %v1467
    %v1557 = vadd.f32 %v1195, %v1470
    %v1558 = vadd.f32 %v1196, %v1473
    %v1559 = vadd.f32 %v1197, %v1476
    %v1560 = vadd.f32 %v1198, %v1479
    %v1561 = vadd.f32 %v1199, %v1482
    %v1562 = vadd.f32 %v1200, %v1485
    %v1563 = vadd.f32 %v1201, %v1488
    %v1564 = vadd.f32 %v1202, %v1491
    %v1565 = vadd.f32 %v1203, %v1494
    %v1566 = vadd.f32 %v1204, %v1497
    %v1567 = vadd.f32 %v1205, %v1500
    %v1568 = vadd.f32 %v1206, %v1503
    %s1569 = scalar_lea.vmem [#allocation4], 512
    %v1570 = vld [vmem:[%s1569] sm:$0xff]
    %v1571 = vld [vmem:[%s1569 + $0x8] sm:$0xff]
    %v1572 = vld [vmem:[%s1569 + $0x10] sm:$0xff]
    %v1573 = vld [vmem:[%s1569 + $0x18] sm:$0xff]
    %v1574 = vld [vmem:[%s1569 + $0x20] sm:$0xff]
    %v1575 = vld [vmem:[%s1569 + $0x28] sm:$0xff]
    %v1576 = vld [vmem:[%s1569 + $0x30] sm:$0xff]
    %v1577 = vld [vmem:[%s1569 + $0x38] sm:$0xff]
    %v1578 = vld [vmem:[%s1569 + $0x40] sm:$0xff]
    %v1579 = vld [vmem:[%s1569 + $0x48] sm:$0xff]
    %v1580 = vld [vmem:[%s1569 + $0x50] sm:$0xff]
    %v1581 = vld [vmem:[%s1569 + $0x58] sm:$0xff]
    %v1582 = vld [vmem:[%s1569 + $0x60] sm:$0xff]
    %v1583 = vld [vmem:[%s1569 + $0x68] sm:$0xff]
    %v1584 = vld [vmem:[%s1569 + $0x70] sm:$0xff]
    %v1585 = vld [vmem:[%s1569 + $0x78] sm:$0xff]
    %1586 = vmatpush.msra.mxu0 %v1585
    %1587 = vmatpush.msra.mxu0 %v1584
    %1588 = vmatpush.msra.mxu0 %v1583
    %1589 = vmatpush.msra.mxu0 %v1582
    %1590 = vmatpush.msra.mxu0 %v1581
    %1591 = vmatpush.msra.mxu0 %v1580
    %1592 = vmatpush.msra.mxu0 %v1579
    %1593 = vmatpush.msra.mxu0 %v1578
    %1594 = vmatpush.msra.mxu0 %v1577
    %1595 = vmatpush.msra.mxu0 %v1576
    %1596 = vmatpush.msra.mxu0 %v1575
    %1597 = vmatpush.msra.mxu0 %v1574
    %1598 = vmatpush.msra.mxu0 %v1573
    %1599 = vmatpush.msra.mxu0 %v1572
    %1600 = vmatpush.msra.mxu0 %v1571
    %1601 = vmatpush.msra.mxu0 %v1570
    %1602 = vmatmul.f32.gmra.mxu0 %v1209
    %v1603 = vpop.f32.mrf.mxu0
    %v1604 = vadd.f32 0.0, %v1603
    %1605 = vmatmul.f32.gmra.mxu0 %v1210
    %v1606 = vpop.f32.mrf.mxu0
    %v1607 = vadd.f32 0.0, %v1606
    %1608 = vmatmul.f32.gmra.mxu0 %v1211
    %v1609 = vpop.f32.mrf.mxu0
    %v1610 = vadd.f32 0.0, %v1609
    %1611 = vmatmul.f32.gmra.mxu0 %v1212
    %v1612 = vpop.f32.mrf.mxu0
    %v1613 = vadd.f32 0.0, %v1612
    %1614 = vmatmul.f32.gmra.mxu0 %v1213
    %v1615 = vpop.f32.mrf.mxu0
    %v1616 = vadd.f32 0.0, %v1615
    %1617 = vmatmul.f32.gmra.mxu0 %v1214
    %v1618 = vpop.f32.mrf.mxu0
    %v1619 = vadd.f32 0.0, %v1618
    %1620 = vmatmul.f32.gmra.mxu0 %v1215
    %v1621 = vpop.f32.mrf.mxu0
    %v1622 = vadd.f32 0.0, %v1621
    %1623 = vmatmul.f32.gmra.mxu0 %v1216
    %v1624 = vpop.f32.mrf.mxu0
    %v1625 = vadd.f32 0.0, %v1624
    %1626 = vmatmul.f32.gmra.mxu0 %v1217
    %v1627 = vpop.f32.mrf.mxu0
    %v1628 = vadd.f32 0.0, %v1627
    %1629 = vmatmul.f32.gmra.mxu0 %v1218
    %v1630 = vpop.f32.mrf.mxu0
    %v1631 = vadd.f32 0.0, %v1630
    %1632 = vmatmul.f32.gmra.mxu0 %v1219
    %v1633 = vpop.f32.mrf.mxu0
    %v1634 = vadd.f32 0.0, %v1633
    %1635 = vmatmul.f32.gmra.mxu0 %v1220
    %v1636 = vpop.f32.mrf.mxu0
    %v1637 = vadd.f32 0.0, %v1636
    %1638 = vmatmul.f32.gmra.mxu0 %v1221
    %v1639 = vpop.f32.mrf.mxu0
    %v1640 = vadd.f32 0.0, %v1639
    %1641 = vmatmul.f32.gmra.mxu0 %v1222
    %v1642 = vpop.f32.mrf.mxu0
    %v1643 = vadd.f32 0.0, %v1642
    %1644 = vmatmul.f32.gmra.mxu0 %v1223
    %v1645 = vpop.f32.mrf.mxu0
    %v1646 = vadd.f32 0.0, %v1645
    %1647 = vmatmul.f32.gmra.mxu0 %v1224
    %v1648 = vpop.f32.mrf.mxu0
    %v1649 = vadd.f32 0.0, %v1648
    %1650 = vmatmul.f32.gmra.mxu0 %v1225
    %v1651 = vpop.f32.mrf.mxu0
    %v1652 = vadd.f32 0.0, %v1651
    %1653 = vmatmul.f32.gmra.mxu0 %v1226
    %v1654 = vpop.f32.mrf.mxu0
    %v1655 = vadd.f32 0.0, %v1654
    %1656 = vmatmul.f32.gmra.mxu0 %v1227
    %v1657 = vpop.f32.mrf.mxu0
    %v1658 = vadd.f32 0.0, %v1657
    %1659 = vmatmul.f32.gmra.mxu0 %v1228
    %v1660 = vpop.f32.mrf.mxu0
    %v1661 = vadd.f32 0.0, %v1660
    %1662 = vmatmul.f32.gmra.mxu0 %v1229
    %v1663 = vpop.f32.mrf.mxu0
    %v1664 = vadd.f32 0.0, %v1663
    %1665 = vmatmul.f32.gmra.mxu0 %v1230
    %v1666 = vpop.f32.mrf.mxu0
    %v1667 = vadd.f32 0.0, %v1666
    %1668 = vmatmul.f32.gmra.mxu0 %v1231
    %v1669 = vpop.f32.mrf.mxu0
    %v1670 = vadd.f32 0.0, %v1669
    %1671 = vmatmul.f32.gmra.mxu0 %v1232
    %v1672 = vpop.f32.mrf.mxu0
    %v1673 = vadd.f32 0.0, %v1672
    %1674 = vmatmul.f32.gmra.mxu0 %v1233
    %v1675 = vpop.f32.mrf.mxu0
    %v1676 = vadd.f32 0.0, %v1675
    %1677 = vmatmul.f32.gmra.mxu0 %v1234
    %v1678 = vpop.f32.mrf.mxu0
    %v1679 = vadd.f32 0.0, %v1678
    %1680 = vmatmul.f32.gmra.mxu0 %v1235
    %v1681 = vpop.f32.mrf.mxu0
    %v1682 = vadd.f32 0.0, %v1681
    %1683 = vmatmul.f32.gmra.mxu0 %v1236
    %v1684 = vpop.f32.mrf.mxu0
    %v1685 = vadd.f32 0.0, %v1684
    %1686 = vmatmul.f32.gmra.mxu0 %v1237
    %v1687 = vpop.f32.mrf.mxu0
    %v1688 = vadd.f32 0.0, %v1687
    %1689 = vmatmul.f32.gmra.mxu0 %v1238
    %v1690 = vpop.f32.mrf.mxu0
    %v1691 = vadd.f32 0.0, %v1690
    %1692 = vmatmul.f32.gmra.mxu0 %v1239
    %v1693 = vpop.f32.mrf.mxu0
    %v1694 = vadd.f32 0.0, %v1693
    %1695 = vmatmul.f32.gmra.mxu0 %v1240
    %v1696 = vpop.f32.mrf.mxu0
    %v1697 = vadd.f32 0.0, %v1696
    %1698 = vmatmul.f32.gmra.mxu0 %v1245
    %v1699 = vpop.f32.mrf.mxu0
    %v1700 = vadd.f32 0.0, %v1699
    %1701 = vmatmul.f32.gmra.mxu0 %v1246
    %v1702 = vpop.f32.mrf.mxu0
    %v1703 = vadd.f32 0.0, %v1702
    %1704 = vmatmul.f32.gmra.mxu0 %v1247
    %v1705 = vpop.f32.mrf.mxu0
    %v1706 = vadd.f32 0.0, %v1705
    %1707 = vmatmul.f32.gmra.mxu0 %v1248
    %v1708 = vpop.f32.mrf.mxu0
    %v1709 = vadd.f32 0.0, %v1708
    %1710 = vmatmul.f32.gmra.mxu0 %v1249
    %v1711 = vpop.f32.mrf.mxu0
    %v1712 = vadd.f32 0.0, %v1711
    %1713 = vmatmul.f32.gmra.mxu0 %v1250
    %v1714 = vpop.f32.mrf.mxu0
    %v1715 = vadd.f32 0.0, %v1714
    %1716 = vmatmul.f32.gmra.mxu0 %v1251
    %v1717 = vpop.f32.mrf.mxu0
    %v1718 = vadd.f32 0.0, %v1717
    %1719 = vmatmul.f32.gmra.mxu0 %v1252
    %v1720 = vpop.f32.mrf.mxu0
    %v1721 = vadd.f32 0.0, %v1720
    %1722 = vmatmul.f32.gmra.mxu0 %v1253
    %v1723 = vpop.f32.mrf.mxu0
    %v1724 = vadd.f32 0.0, %v1723
    %1725 = vmatmul.f32.gmra.mxu0 %v1254
    %v1726 = vpop.f32.mrf.mxu0
    %v1727 = vadd.f32 0.0, %v1726
    %1728 = vmatmul.f32.gmra.mxu0 %v1255
    %v1729 = vpop.f32.mrf.mxu0
    %v1730 = vadd.f32 0.0, %v1729
    %1731 = vmatmul.f32.gmra.mxu0 %v1256
    %v1732 = vpop.f32.mrf.mxu0
    %v1733 = vadd.f32 0.0, %v1732
    %1734 = vmatmul.f32.gmra.mxu0 %v1257
    %v1735 = vpop.f32.mrf.mxu0
    %v1736 = vadd.f32 0.0, %v1735
    %1737 = vmatmul.f32.gmra.mxu0 %v1258
    %v1738 = vpop.f32.mrf.mxu0
    %v1739 = vadd.f32 0.0, %v1738
    %1740 = vmatmul.f32.gmra.mxu0 %v1259
    %v1741 = vpop.f32.mrf.mxu0
    %v1742 = vadd.f32 0.0, %v1741
    %1743 = vmatmul.f32.gmra.mxu0 %v1260
    %v1744 = vpop.f32.mrf.mxu0
    %v1745 = vadd.f32 0.0, %v1744
    %1746 = vmatmul.f32.gmra.mxu0 %v1261
    %v1747 = vpop.f32.mrf.mxu0
    %v1748 = vadd.f32 0.0, %v1747
    %1749 = vmatmul.f32.gmra.mxu0 %v1262
    %v1750 = vpop.f32.mrf.mxu0
    %v1751 = vadd.f32 0.0, %v1750
    %1752 = vmatmul.f32.gmra.mxu0 %v1263
    %v1753 = vpop.f32.mrf.mxu0
    %v1754 = vadd.f32 0.0, %v1753
    %1755 = vmatmul.f32.gmra.mxu0 %v1264
    %v1756 = vpop.f32.mrf.mxu0
    %v1757 = vadd.f32 0.0, %v1756
    %1758 = vmatmul.f32.gmra.mxu0 %v1265
    %v1759 = vpop.f32.mrf.mxu0
    %v1760 = vadd.f32 0.0, %v1759
    %1761 = vmatmul.f32.gmra.mxu0 %v1266
    %v1762 = vpop.f32.mrf.mxu0
    %v1763 = vadd.f32 0.0, %v1762
    %1764 = vmatmul.f32.gmra.mxu0 %v1267
    %v1765 = vpop.f32.mrf.mxu0
    %v1766 = vadd.f32 0.0, %v1765
    %1767 = vmatmul.f32.gmra.mxu0 %v1268
    %v1768 = vpop.f32.mrf.mxu0
    %v1769 = vadd.f32 0.0, %v1768
    %1770 = vmatmul.f32.gmra.mxu0 %v1269
    %v1771 = vpop.f32.mrf.mxu0
    %v1772 = vadd.f32 0.0, %v1771
    %1773 = vmatmul.f32.gmra.mxu0 %v1270
    %v1774 = vpop.f32.mrf.mxu0
    %v1775 = vadd.f32 0.0, %v1774
    %1776 = vmatmul.f32.gmra.mxu0 %v1271
    %v1777 = vpop.f32.mrf.mxu0
    %v1778 = vadd.f32 0.0, %v1777
    %1779 = vmatmul.f32.gmra.mxu0 %v1272
    %v1780 = vpop.f32.mrf.mxu0
    %v1781 = vadd.f32 0.0, %v1780
    %1782 = vmatmul.f32.gmra.mxu0 %v1273
    %v1783 = vpop.f32.mrf.mxu0
    %v1784 = vadd.f32 0.0, %v1783
    %1785 = vmatmul.f32.gmra.mxu0 %v1274
    %v1786 = vpop.f32.mrf.mxu0
    %v1787 = vadd.f32 0.0, %v1786
    %1788 = vmatmul.f32.gmra.mxu0 %v1275
    %v1789 = vpop.f32.mrf.mxu0
    %v1790 = vadd.f32 0.0, %v1789
    %1791 = vmatmul.f32.gmra.mxu0 %v1276
    %v1792 = vpop.f32.mrf.mxu0
    %v1793 = vadd.f32 0.0, %v1792
    %1794 = vdwg.mxu0
    %v1795 = vadd.f32 %v1505, %v1604
    %v1796 = vadd.f32 %v1506, %v1607
    %v1797 = vadd.f32 %v1507, %v1610
    %v1798 = vadd.f32 %v1508, %v1613
    %v1799 = vadd.f32 %v1509, %v1616
    %v1800 = vadd.f32 %v1510, %v1619
    %v1801 = vadd.f32 %v1511, %v1622
    %v1802 = vadd.f32 %v1512, %v1625
    %v1803 = vadd.f32 %v1513, %v1628
    %v1804 = vadd.f32 %v1514, %v1631
    %v1805 = vadd.f32 %v1515, %v1634
    %v1806 = vadd.f32 %v1516, %v1637
    %v1807 = vadd.f32 %v1517, %v1640
    %v1808 = vadd.f32 %v1518, %v1643
    %v1809 = vadd.f32 %v1519, %v1646
    %v1810 = vadd.f32 %v1520, %v1649
    %v1811 = vadd.f32 %v1521, %v1652
    %v1812 = vadd.f32 %v1522, %v1655
    %v1813 = vadd.f32 %v1523, %v1658
    %v1814 = vadd.f32 %v1524, %v1661
    %v1815 = vadd.f32 %v1525, %v1664
    %v1816 = vadd.f32 %v1526, %v1667
    %v1817 = vadd.f32 %v1527, %v1670
    %v1818 = vadd.f32 %v1528, %v1673
    %v1819 = vadd.f32 %v1529, %v1676
    %v1820 = vadd.f32 %v1530, %v1679
    %v1821 = vadd.f32 %v1531, %v1682
    %v1822 = vadd.f32 %v1532, %v1685
    %v1823 = vadd.f32 %v1533, %v1688
    %v1824 = vadd.f32 %v1534, %v1691
    %v1825 = vadd.f32 %v1535, %v1694
    %v1826 = vadd.f32 %v1536, %v1697
    %v1827 = vadd.f32 %v1537, %v1700
    %v1828 = vadd.f32 %v1538, %v1703
    %v1829 = vadd.f32 %v1539, %v1706
    %v1830 = vadd.f32 %v1540, %v1709
    %v1831 = vadd.f32 %v1541, %v1712
    %v1832 = vadd.f32 %v1542, %v1715
    %v1833 = vadd.f32 %v1543, %v1718
    %v1834 = vadd.f32 %v1544, %v1721
    %v1835 = vadd.f32 %v1545, %v1724
    %v1836 = vadd.f32 %v1546, %v1727
    %v1837 = vadd.f32 %v1547, %v1730
    %v1838 = vadd.f32 %v1548, %v1733
    %v1839 = vadd.f32 %v1549, %v1736
    %v1840 = vadd.f32 %v1550, %v1739
    %v1841 = vadd.f32 %v1551, %v1742
    %v1842 = vadd.f32 %v1552, %v1745
    %v1843 = vadd.f32 %v1553, %v1748
    %v1844 = vadd.f32 %v1554, %v1751
    %v1845 = vadd.f32 %v1555, %v1754
    %v1846 = vadd.f32 %v1556, %v1757
    %v1847 = vadd.f32 %v1557, %v1760
    %v1848 = vadd.f32 %v1558, %v1763
    %v1849 = vadd.f32 %v1559, %v1766
    %v1850 = vadd.f32 %v1560, %v1769
    %v1851 = vadd.f32 %v1561, %v1772
    %v1852 = vadd.f32 %v1562, %v1775
    %v1853 = vadd.f32 %v1563, %v1778
    %v1854 = vadd.f32 %v1564, %v1781
    %v1855 = vadd.f32 %v1565, %v1784
    %v1856 = vadd.f32 %v1566, %v1787
    %v1857 = vadd.f32 %v1567, %v1790
    %v1858 = vadd.f32 %v1568, %v1793
    %s1859 = scalar_lea.vmem [#allocation4], 896
    %v1860 = vld [vmem:[%s1859] sm:$0xff]
    %v1861 = vld [vmem:[%s1859 + $0x8] sm:$0xff]
    %v1862 = vld [vmem:[%s1859 + $0x10] sm:$0xff]
    %v1863 = vld [vmem:[%s1859 + $0x18] sm:$0xff]
    %v1864 = vld [vmem:[%s1859 + $0x20] sm:$0xff]
    %v1865 = vld [vmem:[%s1859 + $0x28] sm:$0xff]
    %v1866 = vld [vmem:[%s1859 + $0x30] sm:$0xff]
    %v1867 = vld [vmem:[%s1859 + $0x38] sm:$0xff]
    %v1868 = vld [vmem:[%s1859 + $0x40] sm:$0xff]
    %v1869 = vld [vmem:[%s1859 + $0x48] sm:$0xff]
    %v1870 = vld [vmem:[%s1859 + $0x50] sm:$0xff]
    %v1871 = vld [vmem:[%s1859 + $0x58] sm:$0xff]
    %v1872 = vld [vmem:[%s1859 + $0x60] sm:$0xff]
    %v1873 = vld [vmem:[%s1859 + $0x68] sm:$0xff]
    %v1874 = vld [vmem:[%s1859 + $0x70] sm:$0xff]
    %v1875 = vld [vmem:[%s1859 + $0x78] sm:$0xff]
    %1876 = vmatpush.msra.mxu0 %v1875
    %1877 = vmatpush.msra.mxu0 %v1874
    %1878 = vmatpush.msra.mxu0 %v1873
    %1879 = vmatpush.msra.mxu0 %v1872
    %1880 = vmatpush.msra.mxu0 %v1871
    %1881 = vmatpush.msra.mxu0 %v1870
    %1882 = vmatpush.msra.mxu0 %v1869
    %1883 = vmatpush.msra.mxu0 %v1868
    %1884 = vmatpush.msra.mxu0 %v1867
    %1885 = vmatpush.msra.mxu0 %v1866
    %1886 = vmatpush.msra.mxu0 %v1865
    %1887 = vmatpush.msra.mxu0 %v1864
    %1888 = vmatpush.msra.mxu0 %v1863
    %1889 = vmatpush.msra.mxu0 %v1862
    %1890 = vmatpush.msra.mxu0 %v1861
    %1891 = vmatpush.msra.mxu0 %v1860
    %1892 = vmatmul.f32.gmra.mxu0 %v1211
    %v1893 = vpop.f32.mrf.mxu0
    %v1894 = vadd.f32 0.0, %v1893
    %1895 = vmatmul.f32.gmra.mxu0 %v1212
    %v1896 = vpop.f32.mrf.mxu0
    %v1897 = vadd.f32 0.0, %v1896
    %1898 = vmatmul.f32.gmra.mxu0 %v1213
    %v1899 = vpop.f32.mrf.mxu0
    %v1900 = vadd.f32 0.0, %v1899
    %1901 = vmatmul.f32.gmra.mxu0 %v1214
    %v1902 = vpop.f32.mrf.mxu0
    %v1903 = vadd.f32 0.0, %v1902
    %1904 = vmatmul.f32.gmra.mxu0 %v1215
    %v1905 = vpop.f32.mrf.mxu0
    %v1906 = vadd.f32 0.0, %v1905
    %1907 = vmatmul.f32.gmra.mxu0 %v1216
    %v1908 = vpop.f32.mrf.mxu0
    %v1909 = vadd.f32 0.0, %v1908
    %1910 = vmatmul.f32.gmra.mxu0 %v1217
    %v1911 = vpop.f32.mrf.mxu0
    %v1912 = vadd.f32 0.0, %v1911
    %1913 = vmatmul.f32.gmra.mxu0 %v1218
    %v1914 = vpop.f32.mrf.mxu0
    %v1915 = vadd.f32 0.0, %v1914
    %1916 = vmatmul.f32.gmra.mxu0 %v1219
    %v1917 = vpop.f32.mrf.mxu0
    %v1918 = vadd.f32 0.0, %v1917
    %1919 = vmatmul.f32.gmra.mxu0 %v1220
    %v1920 = vpop.f32.mrf.mxu0
    %v1921 = vadd.f32 0.0, %v1920
    %1922 = vmatmul.f32.gmra.mxu0 %v1221
    %v1923 = vpop.f32.mrf.mxu0
    %v1924 = vadd.f32 0.0, %v1923
    %1925 = vmatmul.f32.gmra.mxu0 %v1222
    %v1926 = vpop.f32.mrf.mxu0
    %v1927 = vadd.f32 0.0, %v1926
    %1928 = vmatmul.f32.gmra.mxu0 %v1223
    %v1929 = vpop.f32.mrf.mxu0
    %v1930 = vadd.f32 0.0, %v1929
    %1931 = vmatmul.f32.gmra.mxu0 %v1224
    %v1932 = vpop.f32.mrf.mxu0
    %v1933 = vadd.f32 0.0, %v1932
    %1934 = vmatmul.f32.gmra.mxu0 %v1225
    %v1935 = vpop.f32.mrf.mxu0
    %v1936 = vadd.f32 0.0, %v1935
    %1937 = vmatmul.f32.gmra.mxu0 %v1226
    %v1938 = vpop.f32.mrf.mxu0
    %v1939 = vadd.f32 0.0, %v1938
    %1940 = vmatmul.f32.gmra.mxu0 %v1227
    %v1941 = vpop.f32.mrf.mxu0
    %v1942 = vadd.f32 0.0, %v1941
    %1943 = vmatmul.f32.gmra.mxu0 %v1228
    %v1944 = vpop.f32.mrf.mxu0
    %v1945 = vadd.f32 0.0, %v1944
    %1946 = vmatmul.f32.gmra.mxu0 %v1229
    %v1947 = vpop.f32.mrf.mxu0
    %v1948 = vadd.f32 0.0, %v1947
    %1949 = vmatmul.f32.gmra.mxu0 %v1230
    %v1950 = vpop.f32.mrf.mxu0
    %v1951 = vadd.f32 0.0, %v1950
    %1952 = vmatmul.f32.gmra.mxu0 %v1231
    %v1953 = vpop.f32.mrf.mxu0
    %v1954 = vadd.f32 0.0, %v1953
    %1955 = vmatmul.f32.gmra.mxu0 %v1232
    %v1956 = vpop.f32.mrf.mxu0
    %v1957 = vadd.f32 0.0, %v1956
    %1958 = vmatmul.f32.gmra.mxu0 %v1233
    %v1959 = vpop.f32.mrf.mxu0
    %v1960 = vadd.f32 0.0, %v1959
    %1961 = vmatmul.f32.gmra.mxu0 %v1234
    %v1962 = vpop.f32.mrf.mxu0
    %v1963 = vadd.f32 0.0, %v1962
    %1964 = vmatmul.f32.gmra.mxu0 %v1235
    %v1965 = vpop.f32.mrf.mxu0
    %v1966 = vadd.f32 0.0, %v1965
    %1967 = vmatmul.f32.gmra.mxu0 %v1236
    %v1968 = vpop.f32.mrf.mxu0
    %v1969 = vadd.f32 0.0, %v1968
    %1970 = vmatmul.f32.gmra.mxu0 %v1237
    %v1971 = vpop.f32.mrf.mxu0
    %v1972 = vadd.f32 0.0, %v1971
    %1973 = vmatmul.f32.gmra.mxu0 %v1238
    %v1974 = vpop.f32.mrf.mxu0
    %v1975 = vadd.f32 0.0, %v1974
    %1976 = vmatmul.f32.gmra.mxu0 %v1239
    %v1977 = vpop.f32.mrf.mxu0
    %v1978 = vadd.f32 0.0, %v1977
    %1979 = vmatmul.f32.gmra.mxu0 %v1240
    %v1980 = vpop.f32.mrf.mxu0
    %v1981 = vadd.f32 0.0, %v1980
    %1982 = vmatmul.f32.gmra.mxu0 %v1241
    %v1983 = vpop.f32.mrf.mxu0
    %v1984 = vadd.f32 0.0, %v1983
    %1985 = vmatmul.f32.gmra.mxu0 %v1242
    %v1986 = vpop.f32.mrf.mxu0
    %v1987 = vadd.f32 0.0, %v1986
    %1988 = vmatmul.f32.gmra.mxu0 %v1247
    %v1989 = vpop.f32.mrf.mxu0
    %v1990 = vadd.f32 0.0, %v1989
    %1991 = vmatmul.f32.gmra.mxu0 %v1248
    %v1992 = vpop.f32.mrf.mxu0
    %v1993 = vadd.f32 0.0, %v1992
    %1994 = vmatmul.f32.gmra.mxu0 %v1249
    %v1995 = vpop.f32.mrf.mxu0
    %v1996 = vadd.f32 0.0, %v1995
    %1997 = vmatmul.f32.gmra.mxu0 %v1250
    %v1998 = vpop.f32.mrf.mxu0
    %v1999 = vadd.f32 0.0, %v1998
    %2000 = vmatmul.f32.gmra.mxu0 %v1251
    %v2001 = vpop.f32.mrf.mxu0
    %v2002 = vadd.f32 0.0, %v2001
    %2003 = vmatmul.f32.gmra.mxu0 %v1252
    %v2004 = vpop.f32.mrf.mxu0
    %v2005 = vadd.f32 0.0, %v2004
    %2006 = vmatmul.f32.gmra.mxu0 %v1253
    %v2007 = vpop.f32.mrf.mxu0
    %v2008 = vadd.f32 0.0, %v2007
    %2009 = vmatmul.f32.gmra.mxu0 %v1254
    %v2010 = vpop.f32.mrf.mxu0
    %v2011 = vadd.f32 0.0, %v2010
    %2012 = vmatmul.f32.gmra.mxu0 %v1255
    %v2013 = vpop.f32.mrf.mxu0
    %v2014 = vadd.f32 0.0, %v2013
    %2015 = vmatmul.f32.gmra.mxu0 %v1256
    %v2016 = vpop.f32.mrf.mxu0
    %v2017 = vadd.f32 0.0, %v2016
    %2018 = vmatmul.f32.gmra.mxu0 %v1257
    %v2019 = vpop.f32.mrf.mxu0
    %v2020 = vadd.f32 0.0, %v2019
    %2021 = vmatmul.f32.gmra.mxu0 %v1258
    %v2022 = vpop.f32.mrf.mxu0
    %v2023 = vadd.f32 0.0, %v2022
    %2024 = vmatmul.f32.gmra.mxu0 %v1259
    %v2025 = vpop.f32.mrf.mxu0
    %v2026 = vadd.f32 0.0, %v2025
    %2027 = vmatmul.f32.gmra.mxu0 %v1260
    %v2028 = vpop.f32.mrf.mxu0
    %v2029 = vadd.f32 0.0, %v2028
    %2030 = vmatmul.f32.gmra.mxu0 %v1261
    %v2031 = vpop.f32.mrf.mxu0
    %v2032 = vadd.f32 0.0, %v2031
    %2033 = vmatmul.f32.gmra.mxu0 %v1262
    %v2034 = vpop.f32.mrf.mxu0
    %v2035 = vadd.f32 0.0, %v2034
    %2036 = vmatmul.f32.gmra.mxu0 %v1263
    %v2037 = vpop.f32.mrf.mxu0
    %v2038 = vadd.f32 0.0, %v2037
    %2039 = vmatmul.f32.gmra.mxu0 %v1264
    %v2040 = vpop.f32.mrf.mxu0
    %v2041 = vadd.f32 0.0, %v2040
    %2042 = vmatmul.f32.gmra.mxu0 %v1265
    %v2043 = vpop.f32.mrf.mxu0
    %v2044 = vadd.f32 0.0, %v2043
    %2045 = vmatmul.f32.gmra.mxu0 %v1266
    %v2046 = vpop.f32.mrf.mxu0
    %v2047 = vadd.f32 0.0, %v2046
    %2048 = vmatmul.f32.gmra.mxu0 %v1267
    %v2049 = vpop.f32.mrf.mxu0
    %v2050 = vadd.f32 0.0, %v2049
    %2051 = vmatmul.f32.gmra.mxu0 %v1268
    %v2052 = vpop.f32.mrf.mxu0
    %v2053 = vadd.f32 0.0, %v2052
    %2054 = vmatmul.f32.gmra.mxu0 %v1269
    %v2055 = vpop.f32.mrf.mxu0
    %v2056 = vadd.f32 0.0, %v2055
    %2057 = vmatmul.f32.gmra.mxu0 %v1270
    %v2058 = vpop.f32.mrf.mxu0
    %v2059 = vadd.f32 0.0, %v2058
    %2060 = vmatmul.f32.gmra.mxu0 %v1271
    %v2061 = vpop.f32.mrf.mxu0
    %v2062 = vadd.f32 0.0, %v2061
    %2063 = vmatmul.f32.gmra.mxu0 %v1272
    %v2064 = vpop.f32.mrf.mxu0
    %v2065 = vadd.f32 0.0, %v2064
    %2066 = vmatmul.f32.gmra.mxu0 %v1273
    %v2067 = vpop.f32.mrf.mxu0
    %v2068 = vadd.f32 0.0, %v2067
    %2069 = vmatmul.f32.gmra.mxu0 %v1274
    %v2070 = vpop.f32.mrf.mxu0
    %v2071 = vadd.f32 0.0, %v2070
    %2072 = vmatmul.f32.gmra.mxu0 %v1275
    %v2073 = vpop.f32.mrf.mxu0
    %v2074 = vadd.f32 0.0, %v2073
    %2075 = vmatmul.f32.gmra.mxu0 %v1276
    %v2076 = vpop.f32.mrf.mxu0
    %v2077 = vadd.f32 0.0, %v2076
    %2078 = vmatmul.f32.gmra.mxu0 %v1277
    %v2079 = vpop.f32.mrf.mxu0
    %v2080 = vadd.f32 0.0, %v2079
    %2081 = vmatmul.f32.gmra.mxu0 %v1278
    %v2082 = vpop.f32.mrf.mxu0
    %v2083 = vadd.f32 0.0, %v2082
    %2084 = vdwg.mxu0
    %v2085 = vadd.f32 %v1795, %v1894
    %v2086 = vadd.f32 %v1796, %v1897
    %v2087 = vadd.f32 %v1797, %v1900
    %v2088 = vadd.f32 %v1798, %v1903
    %v2089 = vadd.f32 %v1799, %v1906
    %v2090 = vadd.f32 %v1800, %v1909
    %v2091 = vadd.f32 %v1801, %v1912
    %v2092 = vadd.f32 %v1802, %v1915
    %v2093 = vadd.f32 %v1803, %v1918
    %v2094 = vadd.f32 %v1804, %v1921
    %v2095 = vadd.f32 %v1805, %v1924
    %v2096 = vadd.f32 %v1806, %v1927
    %v2097 = vadd.f32 %v1807, %v1930
    %v2098 = vadd.f32 %v1808, %v1933
    %v2099 = vadd.f32 %v1809, %v1936
    %v2100 = vadd.f32 %v1810, %v1939
    %v2101 = vadd.f32 %v1811, %v1942
    %v2102 = vadd.f32 %v1812, %v1945
    %v2103 = vadd.f32 %v1813, %v1948
    %v2104 = vadd.f32 %v1814, %v1951
    %v2105 = vadd.f32 %v1815, %v1954
    %v2106 = vadd.f32 %v1816, %v1957
    %v2107 = vadd.f32 %v1817, %v1960
    %v2108 = vadd.f32 %v1818, %v1963
    %v2109 = vadd.f32 %v1819, %v1966
    %v2110 = vadd.f32 %v1820, %v1969
    %v2111 = vadd.f32 %v1821, %v1972
    %v2112 = vadd.f32 %v1822, %v1975
    %v2113 = vadd.f32 %v1823, %v1978
    %v2114 = vadd.f32 %v1824, %v1981
    %v2115 = vadd.f32 %v1825, %v1984
    %v2116 = vadd.f32 %v1826, %v1987
    %v2117 = vadd.f32 %v1827, %v1990
    %v2118 = vadd.f32 %v1828, %v1993
    %v2119 = vadd.f32 %v1829, %v1996
    %v2120 = vadd.f32 %v1830, %v1999
    %v2121 = vadd.f32 %v1831, %v2002
    %v2122 = vadd.f32 %v1832, %v2005
    %v2123 = vadd.f32 %v1833, %v2008
    %v2124 = vadd.f32 %v1834, %v2011
    %v2125 = vadd.f32 %v1835, %v2014
    %v2126 = vadd.f32 %v1836, %v2017
    %v2127 = vadd.f32 %v1837, %v2020
    %v2128 = vadd.f32 %v1838, %v2023
    %v2129 = vadd.f32 %v1839, %v2026
    %v2130 = vadd.f32 %v1840, %v2029
    %v2131 = vadd.f32 %v1841, %v2032
    %v2132 = vadd.f32 %v1842, %v2035
    %v2133 = vadd.f32 %v1843, %v2038
    %v2134 = vadd.f32 %v1844, %v2041
    %v2135 = vadd.f32 %v1845, %v2044
    %v2136 = vadd.f32 %v1846, %v2047
    %v2137 = vadd.f32 %v1847, %v2050
    %v2138 = vadd.f32 %v1848, %v2053
    %v2139 = vadd.f32 %v1849, %v2056
    %v2140 = vadd.f32 %v1850, %v2059
    %v2141 = vadd.f32 %v1851, %v2062
    %v2142 = vadd.f32 %v1852, %v2065
    %v2143 = vadd.f32 %v1853, %v2068
    %v2144 = vadd.f32 %v1854, %v2071
    %v2145 = vadd.f32 %v1855, %v2074
    %v2146 = vadd.f32 %v1856, %v2077
    %v2147 = vadd.f32 %v1857, %v2080
    %v2148 = vadd.f32 %v1858, %v2083
    %v2149 = vld [vmem:[#allocation2 + $0x2] sm:$0xff]
    %v2150 = vld [vmem:[#allocation2 + $0xa] sm:$0xff]
    %v2151 = vld [vmem:[#allocation2 + $0x1a] sm:$0xff]
    %v2152 = vld [vmem:[#allocation2 + $0x22] sm:$0xff]
    %v2153 = vld [vmem:[#allocation2 + $0x32] sm:$0xff]
    %v2154 = vld [vmem:[#allocation2 + $0x3a] sm:$0xff]
    %v2155 = vld [vmem:[#allocation2 + $0x4a] sm:$0xff]
    %v2156 = vld [vmem:[#allocation2 + $0x52] sm:$0xff]
    %v2157 = vld [vmem:[#allocation2 + $0x62] sm:$0xff]
    %v2158 = vld [vmem:[#allocation2 + $0x6a] sm:$0xff]
    %v2159 = vld [vmem:[#allocation2 + $0x7a] sm:$0xff]
    %v2160 = vld [vmem:[#allocation2 + $0x82] sm:$0xff]
    %v2161 = vld [vmem:[#allocation2 + $0x92] sm:$0xff]
    %v2162 = vld [vmem:[#allocation2 + $0x9a] sm:$0xff]
    %v2163 = vld [vmem:[#allocation2 + $0xaa] sm:$0xff]
    %v2164 = vld [vmem:[#allocation2 + $0xb2] sm:$0xff]
    %v2165 = vld [vmem:[#allocation2 + $0xc2] sm:$0xff]
    %v2166 = vld [vmem:[#allocation2 + $0xca] sm:$0xff]
    %v2167 = vld [vmem:[#allocation2 + $0xda] sm:$0xff]
    %v2168 = vld [vmem:[#allocation2 + $0xe2] sm:$0xff]
    %v2169 = vld [vmem:[#allocation2 + $0xf2] sm:$0xff]
    %v2170 = vld [vmem:[#allocation2 + $0xfa] sm:$0xff]
    %v2171 = vld [vmem:[#allocation2 + $0x10a] sm:$0xff]
    %v2172 = vld [vmem:[#allocation2 + $0x112] sm:$0xff]
    %v2173 = vld [vmem:[#allocation2 + $0x122] sm:$0xff]
    %v2174 = vld [vmem:[#allocation2 + $0x12a] sm:$0xff]
    %v2175 = vld [vmem:[#allocation2 + $0x13a] sm:$0xff]
    %v2176 = vld [vmem:[#allocation2 + $0x142] sm:$0xff]
    %v2177 = vld [vmem:[#allocation2 + $0x152] sm:$0xff]
    %v2178 = vld [vmem:[#allocation2 + $0x15a] sm:$0xff]
    %v2179 = vld [vmem:[#allocation2 + $0x16a] sm:$0xff]
    %v2180 = vld [vmem:[#allocation2 + $0x172] sm:$0xff]
    %v2181 = vld [vmem:[#allocation2 + $0x182] sm:$0xff]
    %v2182 = vld [vmem:[#allocation2 + $0x18a] sm:$0xff]
    %v2183 = vld [vmem:[#allocation2 + $0x19a] sm:$0xff]
    %v2184 = vld [vmem:[#allocation2 + $0x1a2] sm:$0xff]
    %v2185 = vld [vmem:[#allocation2 + $0x1b2] sm:$0xff]
    %v2186 = vld [vmem:[#allocation2 + $0x1ba] sm:$0xff]
    %v2187 = vld [vmem:[#allocation2 + $0x1ca] sm:$0xff]
    %v2188 = vld [vmem:[#allocation2 + $0x1d2] sm:$0xff]
    %v2189 = vld [vmem:[#allocation2 + $0x1e2] sm:$0xff]
    %v2190 = vld [vmem:[#allocation2 + $0x1ea] sm:$0xff]
    %v2191 = vld [vmem:[#allocation2 + $0x1fa] sm:$0xff]
    %v2192 = vld [vmem:[#allocation2 + $0x202] sm:$0xff]
    %v2193 = vld [vmem:[#allocation2 + $0x212] sm:$0xff]
    %v2194 = vld [vmem:[#allocation2 + $0x21a] sm:$0xff]
    %v2195 = vld [vmem:[#allocation2 + $0x22a] sm:$0xff]
    %v2196 = vld [vmem:[#allocation2 + $0x232] sm:$0xff]
    %v2197 = vld [vmem:[#allocation2 + $0x242] sm:$0xff]
    %v2198 = vld [vmem:[#allocation2 + $0x24a] sm:$0xff]
    %v2199 = vld [vmem:[#allocation2 + $0x25a] sm:$0xff]
    %v2200 = vld [vmem:[#allocation2 + $0x262] sm:$0xff]
    %v2201 = vld [vmem:[#allocation2 + $0x272] sm:$0xff]
    %v2202 = vld [vmem:[#allocation2 + $0x27a] sm:$0xff]
    %v2203 = vld [vmem:[#allocation2 + $0x28a] sm:$0xff]
    %v2204 = vld [vmem:[#allocation2 + $0x292] sm:$0xff]
    %v2205 = vld [vmem:[#allocation2 + $0x2a2] sm:$0xff]
    %v2206 = vld [vmem:[#allocation2 + $0x2aa] sm:$0xff]
    %v2207 = vld [vmem:[#allocation2 + $0x2ba] sm:$0xff]
    %v2208 = vld [vmem:[#allocation2 + $0x2c2] sm:$0xff]
    %v2209 = vld [vmem:[#allocation2 + $0x2d2] sm:$0xff]
    %v2210 = vld [vmem:[#allocation2 + $0x2da] sm:$0xff]
    %v2211 = vld [vmem:[#allocation2 + $0x2ea] sm:$0xff]
    %v2212 = vld [vmem:[#allocation2 + $0x2f2] sm:$0xff]
    %v2213 = vld [vmem:[#allocation2 + $0x302] sm:$0xff]
    %v2214 = vld [vmem:[#allocation2 + $0x30a] sm:$0xff]
    %v2215 = vld [vmem:[#allocation2 + $0x31a] sm:$0xff]
    %v2216 = vld [vmem:[#allocation2 + $0x322] sm:$0xff]
    %v2217 = vld [vmem:[#allocation2 + $0x332] sm:$0xff]
    %v2218 = vld [vmem:[#allocation2 + $0x33a] sm:$0xff]
    %v2219 = vld [vmem:[#allocation2 + $0x34a] sm:$0xff]
    %v2220 = vld [vmem:[#allocation2 + $0x352] sm:$0xff]
    %s2221 = scalar_lea.vmem [#allocation4], 256
    %v2222 = vld [vmem:[%s2221] sm:$0xff]
    %v2223 = vld [vmem:[%s2221 + $0x8] sm:$0xff]
    %v2224 = vld [vmem:[%s2221 + $0x10] sm:$0xff]
    %v2225 = vld [vmem:[%s2221 + $0x18] sm:$0xff]
    %v2226 = vld [vmem:[%s2221 + $0x20] sm:$0xff]
    %v2227 = vld [vmem:[%s2221 + $0x28] sm:$0xff]
    %v2228 = vld [vmem:[%s2221 + $0x30] sm:$0xff]
    %v2229 = vld [vmem:[%s2221 + $0x38] sm:$0xff]
    %v2230 = vld [vmem:[%s2221 + $0x40] sm:$0xff]
    %v2231 = vld [vmem:[%s2221 + $0x48] sm:$0xff]
    %v2232 = vld [vmem:[%s2221 + $0x50] sm:$0xff]
    %v2233 = vld [vmem:[%s2221 + $0x58] sm:$0xff]
    %v2234 = vld [vmem:[%s2221 + $0x60] sm:$0xff]
    %v2235 = vld [vmem:[%s2221 + $0x68] sm:$0xff]
    %v2236 = vld [vmem:[%s2221 + $0x70] sm:$0xff]
    %v2237 = vld [vmem:[%s2221 + $0x78] sm:$0xff]
    %2238 = vmatpush.msra.mxu0 %v2237
    %2239 = vmatpush.msra.mxu0 %v2236
    %2240 = vmatpush.msra.mxu0 %v2235
    %2241 = vmatpush.msra.mxu0 %v2234
    %2242 = vmatpush.msra.mxu0 %v2233
    %2243 = vmatpush.msra.mxu0 %v2232
    %2244 = vmatpush.msra.mxu0 %v2231
    %2245 = vmatpush.msra.mxu0 %v2230
    %2246 = vmatpush.msra.mxu0 %v2229
    %2247 = vmatpush.msra.mxu0 %v2228
    %2248 = vmatpush.msra.mxu0 %v2227
    %2249 = vmatpush.msra.mxu0 %v2226
    %2250 = vmatpush.msra.mxu0 %v2225
    %2251 = vmatpush.msra.mxu0 %v2224
    %2252 = vmatpush.msra.mxu0 %v2223
    %2253 = vmatpush.msra.mxu0 %v2222
    %2254 = vmatmul.f32.gmra.mxu0 %v2149
    %v2255 = vpop.f32.mrf.mxu0
    %v2256 = vadd.f32 0.0, %v2255
    %2257 = vmatmul.f32.gmra.mxu0 %v2150
    %v2258 = vpop.f32.mrf.mxu0
    %v2259 = vadd.f32 0.0, %v2258
    %2260 = vmatmul.f32.gmra.mxu0 %v2151
    %v2261 = vpop.f32.mrf.mxu0
    %v2262 = vadd.f32 0.0, %v2261
    %2263 = vmatmul.f32.gmra.mxu0 %v2152
    %v2264 = vpop.f32.mrf.mxu0
    %v2265 = vadd.f32 0.0, %v2264
    %2266 = vmatmul.f32.gmra.mxu0 %v2153
    %v2267 = vpop.f32.mrf.mxu0
    %v2268 = vadd.f32 0.0, %v2267
    %2269 = vmatmul.f32.gmra.mxu0 %v2154
    %v2270 = vpop.f32.mrf.mxu0
    %v2271 = vadd.f32 0.0, %v2270
    %2272 = vmatmul.f32.gmra.mxu0 %v2155
    %v2273 = vpop.f32.mrf.mxu0
    %v2274 = vadd.f32 0.0, %v2273
    %2275 = vmatmul.f32.gmra.mxu0 %v2156
    %v2276 = vpop.f32.mrf.mxu0
    %v2277 = vadd.f32 0.0, %v2276
    %2278 = vmatmul.f32.gmra.mxu0 %v2157
    %v2279 = vpop.f32.mrf.mxu0
    %v2280 = vadd.f32 0.0, %v2279
    %2281 = vmatmul.f32.gmra.mxu0 %v2158
    %v2282 = vpop.f32.mrf.mxu0
    %v2283 = vadd.f32 0.0, %v2282
    %2284 = vmatmul.f32.gmra.mxu0 %v2159
    %v2285 = vpop.f32.mrf.mxu0
    %v2286 = vadd.f32 0.0, %v2285
    %2287 = vmatmul.f32.gmra.mxu0 %v2160
    %v2288 = vpop.f32.mrf.mxu0
    %v2289 = vadd.f32 0.0, %v2288
    %2290 = vmatmul.f32.gmra.mxu0 %v2161
    %v2291 = vpop.f32.mrf.mxu0
    %v2292 = vadd.f32 0.0, %v2291
    %2293 = vmatmul.f32.gmra.mxu0 %v2162
    %v2294 = vpop.f32.mrf.mxu0
    %v2295 = vadd.f32 0.0, %v2294
    %2296 = vmatmul.f32.gmra.mxu0 %v2163
    %v2297 = vpop.f32.mrf.mxu0
    %v2298 = vadd.f32 0.0, %v2297
    %2299 = vmatmul.f32.gmra.mxu0 %v2164
    %v2300 = vpop.f32.mrf.mxu0
    %v2301 = vadd.f32 0.0, %v2300
    %2302 = vmatmul.f32.gmra.mxu0 %v2165
    %v2303 = vpop.f32.mrf.mxu0
    %v2304 = vadd.f32 0.0, %v2303
    %2305 = vmatmul.f32.gmra.mxu0 %v2166
    %v2306 = vpop.f32.mrf.mxu0
    %v2307 = vadd.f32 0.0, %v2306
    %2308 = vmatmul.f32.gmra.mxu0 %v2167
    %v2309 = vpop.f32.mrf.mxu0
    %v2310 = vadd.f32 0.0, %v2309
    %2311 = vmatmul.f32.gmra.mxu0 %v2168
    %v2312 = vpop.f32.mrf.mxu0
    %v2313 = vadd.f32 0.0, %v2312
    %2314 = vmatmul.f32.gmra.mxu0 %v2169
    %v2315 = vpop.f32.mrf.mxu0
    %v2316 = vadd.f32 0.0, %v2315
    %2317 = vmatmul.f32.gmra.mxu0 %v2170
    %v2318 = vpop.f32.mrf.mxu0
    %v2319 = vadd.f32 0.0, %v2318
    %2320 = vmatmul.f32.gmra.mxu0 %v2171
    %v2321 = vpop.f32.mrf.mxu0
    %v2322 = vadd.f32 0.0, %v2321
    %2323 = vmatmul.f32.gmra.mxu0 %v2172
    %v2324 = vpop.f32.mrf.mxu0
    %v2325 = vadd.f32 0.0, %v2324
    %2326 = vmatmul.f32.gmra.mxu0 %v2173
    %v2327 = vpop.f32.mrf.mxu0
    %v2328 = vadd.f32 0.0, %v2327
    %2329 = vmatmul.f32.gmra.mxu0 %v2174
    %v2330 = vpop.f32.mrf.mxu0
    %v2331 = vadd.f32 0.0, %v2330
    %2332 = vmatmul.f32.gmra.mxu0 %v2175
    %v2333 = vpop.f32.mrf.mxu0
    %v2334 = vadd.f32 0.0, %v2333
    %2335 = vmatmul.f32.gmra.mxu0 %v2176
    %v2336 = vpop.f32.mrf.mxu0
    %v2337 = vadd.f32 0.0, %v2336
    %2338 = vmatmul.f32.gmra.mxu0 %v2177
    %v2339 = vpop.f32.mrf.mxu0
    %v2340 = vadd.f32 0.0, %v2339
    %2341 = vmatmul.f32.gmra.mxu0 %v2178
    %v2342 = vpop.f32.mrf.mxu0
    %v2343 = vadd.f32 0.0, %v2342
    %2344 = vmatmul.f32.gmra.mxu0 %v2179
    %v2345 = vpop.f32.mrf.mxu0
    %v2346 = vadd.f32 0.0, %v2345
    %2347 = vmatmul.f32.gmra.mxu0 %v2180
    %v2348 = vpop.f32.mrf.mxu0
    %v2349 = vadd.f32 0.0, %v2348
    %2350 = vmatmul.f32.gmra.mxu0 %v2185
    %v2351 = vpop.f32.mrf.mxu0
    %v2352 = vadd.f32 0.0, %v2351
    %2353 = vmatmul.f32.gmra.mxu0 %v2186
    %v2354 = vpop.f32.mrf.mxu0
    %v2355 = vadd.f32 0.0, %v2354
    %2356 = vmatmul.f32.gmra.mxu0 %v2187
    %v2357 = vpop.f32.mrf.mxu0
    %v2358 = vadd.f32 0.0, %v2357
    %2359 = vmatmul.f32.gmra.mxu0 %v2188
    %v2360 = vpop.f32.mrf.mxu0
    %v2361 = vadd.f32 0.0, %v2360
    %2362 = vmatmul.f32.gmra.mxu0 %v2189
    %v2363 = vpop.f32.mrf.mxu0
    %v2364 = vadd.f32 0.0, %v2363
    %2365 = vmatmul.f32.gmra.mxu0 %v2190
    %v2366 = vpop.f32.mrf.mxu0
    %v2367 = vadd.f32 0.0, %v2366
    %2368 = vmatmul.f32.gmra.mxu0 %v2191
    %v2369 = vpop.f32.mrf.mxu0
    %v2370 = vadd.f32 0.0, %v2369
    %2371 = vmatmul.f32.gmra.mxu0 %v2192
    %v2372 = vpop.f32.mrf.mxu0
    %v2373 = vadd.f32 0.0, %v2372
    %2374 = vmatmul.f32.gmra.mxu0 %v2193
    %v2375 = vpop.f32.mrf.mxu0
    %v2376 = vadd.f32 0.0, %v2375
    %2377 = vmatmul.f32.gmra.mxu0 %v2194
    %v2378 = vpop.f32.mrf.mxu0
    %v2379 = vadd.f32 0.0, %v2378
    %2380 = vmatmul.f32.gmra.mxu0 %v2195
    %v2381 = vpop.f32.mrf.mxu0
    %v2382 = vadd.f32 0.0, %v2381
    %2383 = vmatmul.f32.gmra.mxu0 %v2196
    %v2384 = vpop.f32.mrf.mxu0
    %v2385 = vadd.f32 0.0, %v2384
    %2386 = vmatmul.f32.gmra.mxu0 %v2197
    %v2387 = vpop.f32.mrf.mxu0
    %v2388 = vadd.f32 0.0, %v2387
    %2389 = vmatmul.f32.gmra.mxu0 %v2198
    %v2390 = vpop.f32.mrf.mxu0
    %v2391 = vadd.f32 0.0, %v2390
    %2392 = vmatmul.f32.gmra.mxu0 %v2199
    %v2393 = vpop.f32.mrf.mxu0
    %v2394 = vadd.f32 0.0, %v2393
    %2395 = vmatmul.f32.gmra.mxu0 %v2200
    %v2396 = vpop.f32.mrf.mxu0
    %v2397 = vadd.f32 0.0, %v2396
    %2398 = vmatmul.f32.gmra.mxu0 %v2201
    %v2399 = vpop.f32.mrf.mxu0
    %v2400 = vadd.f32 0.0, %v2399
    %2401 = vmatmul.f32.gmra.mxu0 %v2202
    %v2402 = vpop.f32.mrf.mxu0
    %v2403 = vadd.f32 0.0, %v2402
    %2404 = vmatmul.f32.gmra.mxu0 %v2203
    %v2405 = vpop.f32.mrf.mxu0
    %v2406 = vadd.f32 0.0, %v2405
    %2407 = vmatmul.f32.gmra.mxu0 %v2204
    %v2408 = vpop.f32.mrf.mxu0
    %v2409 = vadd.f32 0.0, %v2408
    %2410 = vmatmul.f32.gmra.mxu0 %v2205
    %v2411 = vpop.f32.mrf.mxu0
    %v2412 = vadd.f32 0.0, %v2411
    %2413 = vmatmul.f32.gmra.mxu0 %v2206
    %v2414 = vpop.f32.mrf.mxu0
    %v2415 = vadd.f32 0.0, %v2414
    %2416 = vmatmul.f32.gmra.mxu0 %v2207
    %v2417 = vpop.f32.mrf.mxu0
    %v2418 = vadd.f32 0.0, %v2417
    %2419 = vmatmul.f32.gmra.mxu0 %v2208
    %v2420 = vpop.f32.mrf.mxu0
    %v2421 = vadd.f32 0.0, %v2420
    %2422 = vmatmul.f32.gmra.mxu0 %v2209
    %v2423 = vpop.f32.mrf.mxu0
    %v2424 = vadd.f32 0.0, %v2423
    %2425 = vmatmul.f32.gmra.mxu0 %v2210
    %v2426 = vpop.f32.mrf.mxu0
    %v2427 = vadd.f32 0.0, %v2426
    %2428 = vmatmul.f32.gmra.mxu0 %v2211
    %v2429 = vpop.f32.mrf.mxu0
    %v2430 = vadd.f32 0.0, %v2429
    %2431 = vmatmul.f32.gmra.mxu0 %v2212
    %v2432 = vpop.f32.mrf.mxu0
    %v2433 = vadd.f32 0.0, %v2432
    %2434 = vmatmul.f32.gmra.mxu0 %v2213
    %v2435 = vpop.f32.mrf.mxu0
    %v2436 = vadd.f32 0.0, %v2435
    %2437 = vmatmul.f32.gmra.mxu0 %v2214
    %v2438 = vpop.f32.mrf.mxu0
    %v2439 = vadd.f32 0.0, %v2438
    %2440 = vmatmul.f32.gmra.mxu0 %v2215
    %v2441 = vpop.f32.mrf.mxu0
    %v2442 = vadd.f32 0.0, %v2441
    %2443 = vmatmul.f32.gmra.mxu0 %v2216
    %v2444 = vpop.f32.mrf.mxu0
    %v2445 = vadd.f32 0.0, %v2444
    %2446 = vdwg.mxu0
    %v2447 = vadd.f32 %v2085, %v2256
    %v2448 = vadd.f32 %v2086, %v2259
    %v2449 = vadd.f32 %v2087, %v2262
    %v2450 = vadd.f32 %v2088, %v2265
    %v2451 = vadd.f32 %v2089, %v2268
    %v2452 = vadd.f32 %v2090, %v2271
    %v2453 = vadd.f32 %v2091, %v2274
    %v2454 = vadd.f32 %v2092, %v2277
    %v2455 = vadd.f32 %v2093, %v2280
    %v2456 = vadd.f32 %v2094, %v2283
    %v2457 = vadd.f32 %v2095, %v2286
    %v2458 = vadd.f32 %v2096, %v2289
    %v2459 = vadd.f32 %v2097, %v2292
    %v2460 = vadd.f32 %v2098, %v2295
    %v2461 = vadd.f32 %v2099, %v2298
    %v2462 = vadd.f32 %v2100, %v2301
    %v2463 = vadd.f32 %v2101, %v2304
    %v2464 = vadd.f32 %v2102, %v2307
    %v2465 = vadd.f32 %v2103, %v2310
    %v2466 = vadd.f32 %v2104, %v2313
    %v2467 = vadd.f32 %v2105, %v2316
    %v2468 = vadd.f32 %v2106, %v2319
    %v2469 = vadd.f32 %v2107, %v2322
    %v2470 = vadd.f32 %v2108, %v2325
    %v2471 = vadd.f32 %v2109, %v2328
    %v2472 = vadd.f32 %v2110, %v2331
    %v2473 = vadd.f32 %v2111, %v2334
    %v2474 = vadd.f32 %v2112, %v2337
    %v2475 = vadd.f32 %v2113, %v2340
    %v2476 = vadd.f32 %v2114, %v2343
    %v2477 = vadd.f32 %v2115, %v2346
    %v2478 = vadd.f32 %v2116, %v2349
    %v2479 = vadd.f32 %v2117, %v2352
    %v2480 = vadd.f32 %v2118, %v2355
    %v2481 = vadd.f32 %v2119, %v2358
    %v2482 = vadd.f32 %v2120, %v2361
    %v2483 = vadd.f32 %v2121, %v2364
    %v2484 = vadd.f32 %v2122, %v2367
    %v2485 = vadd.f32 %v2123, %v2370
    %v2486 = vadd.f32 %v2124, %v2373
    %v2487 = vadd.f32 %v2125, %v2376
    %v2488 = vadd.f32 %v2126, %v2379
    %v2489 = vadd.f32 %v2127, %v2382
    %v2490 = vadd.f32 %v2128, %v2385
    %v2491 = vadd.f32 %v2129, %v2388
    %v2492 = vadd.f32 %v2130, %v2391
    %v2493 = vadd.f32 %v2131, %v2394
    %v2494 = vadd.f32 %v2132, %v2397
    %v2495 = vadd.f32 %v2133, %v2400
    %v2496 = vadd.f32 %v2134, %v2403
    %v2497 = vadd.f32 %v2135, %v2406
    %v2498 = vadd.f32 %v2136, %v2409
    %v2499 = vadd.f32 %v2137, %v2412
    %v2500 = vadd.f32 %v2138, %v2415
    %v2501 = vadd.f32 %v2139, %v2418
    %v2502 = vadd.f32 %v2140, %v2421
    %v2503 = vadd.f32 %v2141, %v2424
    %v2504 = vadd.f32 %v2142, %v2427
    %v2505 = vadd.f32 %v2143, %v2430
    %v2506 = vadd.f32 %v2144, %v2433
    %v2507 = vadd.f32 %v2145, %v2436
    %v2508 = vadd.f32 %v2146, %v2439
    %v2509 = vadd.f32 %v2147, %v2442
    %v2510 = vadd.f32 %v2148, %v2445
    %s2511 = scalar_lea.vmem [#allocation4], 640
    %v2512 = vld [vmem:[%s2511] sm:$0xff]
    %v2513 = vld [vmem:[%s2511 + $0x8] sm:$0xff]
    %v2514 = vld [vmem:[%s2511 + $0x10] sm:$0xff]
    %v2515 = vld [vmem:[%s2511 + $0x18] sm:$0xff]
    %v2516 = vld [vmem:[%s2511 + $0x20] sm:$0xff]
    %v2517 = vld [vmem:[%s2511 + $0x28] sm:$0xff]
    %v2518 = vld [vmem:[%s2511 + $0x30] sm:$0xff]
    %v2519 = vld [vmem:[%s2511 + $0x38] sm:$0xff]
    %v2520 = vld [vmem:[%s2511 + $0x40] sm:$0xff]
    %v2521 = vld [vmem:[%s2511 + $0x48] sm:$0xff]
    %v2522 = vld [vmem:[%s2511 + $0x50] sm:$0xff]
    %v2523 = vld [vmem:[%s2511 + $0x58] sm:$0xff]
    %v2524 = vld [vmem:[%s2511 + $0x60] sm:$0xff]
    %v2525 = vld [vmem:[%s2511 + $0x68] sm:$0xff]
    %v2526 = vld [vmem:[%s2511 + $0x70] sm:$0xff]
    %v2527 = vld [vmem:[%s2511 + $0x78] sm:$0xff]
    %2528 = vmatpush.msra.mxu0 %v2527
    %2529 = vmatpush.msra.mxu0 %v2526
    %2530 = vmatpush.msra.mxu0 %v2525
    %2531 = vmatpush.msra.mxu0 %v2524
    %2532 = vmatpush.msra.mxu0 %v2523
    %2533 = vmatpush.msra.mxu0 %v2522
    %2534 = vmatpush.msra.mxu0 %v2521
    %2535 = vmatpush.msra.mxu0 %v2520
    %2536 = vmatpush.msra.mxu0 %v2519
    %2537 = vmatpush.msra.mxu0 %v2518
    %2538 = vmatpush.msra.mxu0 %v2517
    %2539 = vmatpush.msra.mxu0 %v2516
    %2540 = vmatpush.msra.mxu0 %v2515
    %2541 = vmatpush.msra.mxu0 %v2514
    %2542 = vmatpush.msra.mxu0 %v2513
    %2543 = vmatpush.msra.mxu0 %v2512
    %2544 = vmatmul.f32.gmra.mxu0 %v2151
    %v2545 = vpop.f32.mrf.mxu0
    %v2546 = vadd.f32 0.0, %v2545
    %2547 = vmatmul.f32.gmra.mxu0 %v2152
    %v2548 = vpop.f32.mrf.mxu0
    %v2549 = vadd.f32 0.0, %v2548
    %2550 = vmatmul.f32.gmra.mxu0 %v2153
    %v2551 = vpop.f32.mrf.mxu0
    %v2552 = vadd.f32 0.0, %v2551
    %2553 = vmatmul.f32.gmra.mxu0 %v2154
    %v2554 = vpop.f32.mrf.mxu0
    %v2555 = vadd.f32 0.0, %v2554
    %2556 = vmatmul.f32.gmra.mxu0 %v2155
    %v2557 = vpop.f32.mrf.mxu0
    %v2558 = vadd.f32 0.0, %v2557
    %2559 = vmatmul.f32.gmra.mxu0 %v2156
    %v2560 = vpop.f32.mrf.mxu0
    %v2561 = vadd.f32 0.0, %v2560
    %2562 = vmatmul.f32.gmra.mxu0 %v2157
    %v2563 = vpop.f32.mrf.mxu0
    %v2564 = vadd.f32 0.0, %v2563
    %2565 = vmatmul.f32.gmra.mxu0 %v2158
    %v2566 = vpop.f32.mrf.mxu0
    %v2567 = vadd.f32 0.0, %v2566
    %2568 = vmatmul.f32.gmra.mxu0 %v2159
    %v2569 = vpop.f32.mrf.mxu0
    %v2570 = vadd.f32 0.0, %v2569
    %2571 = vmatmul.f32.gmra.mxu0 %v2160
    %v2572 = vpop.f32.mrf.mxu0
    %v2573 = vadd.f32 0.0, %v2572
    %2574 = vmatmul.f32.gmra.mxu0 %v2161
    %v2575 = vpop.f32.mrf.mxu0
    %v2576 = vadd.f32 0.0, %v2575
    %2577 = vmatmul.f32.gmra.mxu0 %v2162
    %v2578 = vpop.f32.mrf.mxu0
    %v2579 = vadd.f32 0.0, %v2578
    %2580 = vmatmul.f32.gmra.mxu0 %v2163
    %v2581 = vpop.f32.mrf.mxu0
    %v2582 = vadd.f32 0.0, %v2581
    %2583 = vmatmul.f32.gmra.mxu0 %v2164
    %v2584 = vpop.f32.mrf.mxu0
    %v2585 = vadd.f32 0.0, %v2584
    %2586 = vmatmul.f32.gmra.mxu0 %v2165
    %v2587 = vpop.f32.mrf.mxu0
    %v2588 = vadd.f32 0.0, %v2587
    %2589 = vmatmul.f32.gmra.mxu0 %v2166
    %v2590 = vpop.f32.mrf.mxu0
    %v2591 = vadd.f32 0.0, %v2590
    %2592 = vmatmul.f32.gmra.mxu0 %v2167
    %v2593 = vpop.f32.mrf.mxu0
    %v2594 = vadd.f32 0.0, %v2593
    %2595 = vmatmul.f32.gmra.mxu0 %v2168
    %v2596 = vpop.f32.mrf.mxu0
    %v2597 = vadd.f32 0.0, %v2596
    %2598 = vmatmul.f32.gmra.mxu0 %v2169
    %v2599 = vpop.f32.mrf.mxu0
    %v2600 = vadd.f32 0.0, %v2599
    %2601 = vmatmul.f32.gmra.mxu0 %v2170
    %v2602 = vpop.f32.mrf.mxu0
    %v2603 = vadd.f32 0.0, %v2602
    %2604 = vmatmul.f32.gmra.mxu0 %v2171
    %v2605 = vpop.f32.mrf.mxu0
    %v2606 = vadd.f32 0.0, %v2605
    %2607 = vmatmul.f32.gmra.mxu0 %v2172
    %v2608 = vpop.f32.mrf.mxu0
    %v2609 = vadd.f32 0.0, %v2608
    %2610 = vmatmul.f32.gmra.mxu0 %v2173
    %v2611 = vpop.f32.mrf.mxu0
    %v2612 = vadd.f32 0.0, %v2611
    %2613 = vmatmul.f32.gmra.mxu0 %v2174
    %v2614 = vpop.f32.mrf.mxu0
    %v2615 = vadd.f32 0.0, %v2614
    %2616 = vmatmul.f32.gmra.mxu0 %v2175
    %v2617 = vpop.f32.mrf.mxu0
    %v2618 = vadd.f32 0.0, %v2617
    %2619 = vmatmul.f32.gmra.mxu0 %v2176
    %v2620 = vpop.f32.mrf.mxu0
    %v2621 = vadd.f32 0.0, %v2620
    %2622 = vmatmul.f32.gmra.mxu0 %v2177
    %v2623 = vpop.f32.mrf.mxu0
    %v2624 = vadd.f32 0.0, %v2623
    %2625 = vmatmul.f32.gmra.mxu0 %v2178
    %v2626 = vpop.f32.mrf.mxu0
    %v2627 = vadd.f32 0.0, %v2626
    %2628 = vmatmul.f32.gmra.mxu0 %v2179
    %v2629 = vpop.f32.mrf.mxu0
    %v2630 = vadd.f32 0.0, %v2629
    %2631 = vmatmul.f32.gmra.mxu0 %v2180
    %v2632 = vpop.f32.mrf.mxu0
    %v2633 = vadd.f32 0.0, %v2632
    %2634 = vmatmul.f32.gmra.mxu0 %v2181
    %v2635 = vpop.f32.mrf.mxu0
    %v2636 = vadd.f32 0.0, %v2635
    %2637 = vmatmul.f32.gmra.mxu0 %v2182
    %v2638 = vpop.f32.mrf.mxu0
    %v2639 = vadd.f32 0.0, %v2638
    %2640 = vmatmul.f32.gmra.mxu0 %v2187
    %v2641 = vpop.f32.mrf.mxu0
    %v2642 = vadd.f32 0.0, %v2641
    %2643 = vmatmul.f32.gmra.mxu0 %v2188
    %v2644 = vpop.f32.mrf.mxu0
    %v2645 = vadd.f32 0.0, %v2644
    %2646 = vmatmul.f32.gmra.mxu0 %v2189
    %v2647 = vpop.f32.mrf.mxu0
    %v2648 = vadd.f32 0.0, %v2647
    %2649 = vmatmul.f32.gmra.mxu0 %v2190
    %v2650 = vpop.f32.mrf.mxu0
    %v2651 = vadd.f32 0.0, %v2650
    %2652 = vmatmul.f32.gmra.mxu0 %v2191
    %v2653 = vpop.f32.mrf.mxu0
    %v2654 = vadd.f32 0.0, %v2653
    %2655 = vmatmul.f32.gmra.mxu0 %v2192
    %v2656 = vpop.f32.mrf.mxu0
    %v2657 = vadd.f32 0.0, %v2656
    %2658 = vmatmul.f32.gmra.mxu0 %v2193
    %v2659 = vpop.f32.mrf.mxu0
    %v2660 = vadd.f32 0.0, %v2659
    %2661 = vmatmul.f32.gmra.mxu0 %v2194
    %v2662 = vpop.f32.mrf.mxu0
    %v2663 = vadd.f32 0.0, %v2662
    %2664 = vmatmul.f32.gmra.mxu0 %v2195
    %v2665 = vpop.f32.mrf.mxu0
    %v2666 = vadd.f32 0.0, %v2665
    %2667 = vmatmul.f32.gmra.mxu0 %v2196
    %v2668 = vpop.f32.mrf.mxu0
    %v2669 = vadd.f32 0.0, %v2668
    %2670 = vmatmul.f32.gmra.mxu0 %v2197
    %v2671 = vpop.f32.mrf.mxu0
    %v2672 = vadd.f32 0.0, %v2671
    %2673 = vmatmul.f32.gmra.mxu0 %v2198
    %v2674 = vpop.f32.mrf.mxu0
    %v2675 = vadd.f32 0.0, %v2674
    %2676 = vmatmul.f32.gmra.mxu0 %v2199
    %v2677 = vpop.f32.mrf.mxu0
    %v2678 = vadd.f32 0.0, %v2677
    %2679 = vmatmul.f32.gmra.mxu0 %v2200
    %v2680 = vpop.f32.mrf.mxu0
    %v2681 = vadd.f32 0.0, %v2680
    %2682 = vmatmul.f32.gmra.mxu0 %v2201
    %v2683 = vpop.f32.mrf.mxu0
    %v2684 = vadd.f32 0.0, %v2683
    %2685 = vmatmul.f32.gmra.mxu0 %v2202
    %v2686 = vpop.f32.mrf.mxu0
    %v2687 = vadd.f32 0.0, %v2686
    %2688 = vmatmul.f32.gmra.mxu0 %v2203
    %v2689 = vpop.f32.mrf.mxu0
    %v2690 = vadd.f32 0.0, %v2689
    %2691 = vmatmul.f32.gmra.mxu0 %v2204
    %v2692 = vpop.f32.mrf.mxu0
    %v2693 = vadd.f32 0.0, %v2692
    %2694 = vmatmul.f32.gmra.mxu0 %v2205
    %v2695 = vpop.f32.mrf.mxu0
    %v2696 = vadd.f32 0.0, %v2695
    %2697 = vmatmul.f32.gmra.mxu0 %v2206
    %v2698 = vpop.f32.mrf.mxu0
    %v2699 = vadd.f32 0.0, %v2698
    %2700 = vmatmul.f32.gmra.mxu0 %v2207
    %v2701 = vpop.f32.mrf.mxu0
    %v2702 = vadd.f32 0.0, %v2701
    %2703 = vmatmul.f32.gmra.mxu0 %v2208
    %v2704 = vpop.f32.mrf.mxu0
    %v2705 = vadd.f32 0.0, %v2704
    %2706 = vmatmul.f32.gmra.mxu0 %v2209
    %v2707 = vpop.f32.mrf.mxu0
    %v2708 = vadd.f32 0.0, %v2707
    %2709 = vmatmul.f32.gmra.mxu0 %v2210
    %v2710 = vpop.f32.mrf.mxu0
    %v2711 = vadd.f32 0.0, %v2710
    %2712 = vmatmul.f32.gmra.mxu0 %v2211
    %v2713 = vpop.f32.mrf.mxu0
    %v2714 = vadd.f32 0.0, %v2713
    %2715 = vmatmul.f32.gmra.mxu0 %v2212
    %v2716 = vpop.f32.mrf.mxu0
    %v2717 = vadd.f32 0.0, %v2716
    %2718 = vmatmul.f32.gmra.mxu0 %v2213
    %v2719 = vpop.f32.mrf.mxu0
    %v2720 = vadd.f32 0.0, %v2719
    %2721 = vmatmul.f32.gmra.mxu0 %v2214
    %v2722 = vpop.f32.mrf.mxu0
    %v2723 = vadd.f32 0.0, %v2722
    %2724 = vmatmul.f32.gmra.mxu0 %v2215
    %v2725 = vpop.f32.mrf.mxu0
    %v2726 = vadd.f32 0.0, %v2725
    %2727 = vmatmul.f32.gmra.mxu0 %v2216
    %v2728 = vpop.f32.mrf.mxu0
    %v2729 = vadd.f32 0.0, %v2728
    %2730 = vmatmul.f32.gmra.mxu0 %v2217
    %v2731 = vpop.f32.mrf.mxu0
    %v2732 = vadd.f32 0.0, %v2731
    %2733 = vmatmul.f32.gmra.mxu0 %v2218
    %v2734 = vpop.f32.mrf.mxu0
    %v2735 = vadd.f32 0.0, %v2734
    %2736 = vdwg.mxu0
    %v2737 = vadd.f32 %v2447, %v2546
    %v2738 = vadd.f32 %v2448, %v2549
    %v2739 = vadd.f32 %v2449, %v2552
    %v2740 = vadd.f32 %v2450, %v2555
    %v2741 = vadd.f32 %v2451, %v2558
    %v2742 = vadd.f32 %v2452, %v2561
    %v2743 = vadd.f32 %v2453, %v2564
    %v2744 = vadd.f32 %v2454, %v2567
    %v2745 = vadd.f32 %v2455, %v2570
    %v2746 = vadd.f32 %v2456, %v2573
    %v2747 = vadd.f32 %v2457, %v2576
    %v2748 = vadd.f32 %v2458, %v2579
    %v2749 = vadd.f32 %v2459, %v2582
    %v2750 = vadd.f32 %v2460, %v2585
    %v2751 = vadd.f32 %v2461, %v2588
    %v2752 = vadd.f32 %v2462, %v2591
    %v2753 = vadd.f32 %v2463, %v2594
    %v2754 = vadd.f32 %v2464, %v2597
    %v2755 = vadd.f32 %v2465, %v2600
    %v2756 = vadd.f32 %v2466, %v2603
    %v2757 = vadd.f32 %v2467, %v2606
    %v2758 = vadd.f32 %v2468, %v2609
    %v2759 = vadd.f32 %v2469, %v2612
    %v2760 = vadd.f32 %v2470, %v2615
    %v2761 = vadd.f32 %v2471, %v2618
    %v2762 = vadd.f32 %v2472, %v2621
    %v2763 = vadd.f32 %v2473, %v2624
    %v2764 = vadd.f32 %v2474, %v2627
    %v2765 = vadd.f32 %v2475, %v2630
    %v2766 = vadd.f32 %v2476, %v2633
    %v2767 = vadd.f32 %v2477, %v2636
    %v2768 = vadd.f32 %v2478, %v2639
    %v2769 = vadd.f32 %v2479, %v2642
    %v2770 = vadd.f32 %v2480, %v2645
    %v2771 = vadd.f32 %v2481, %v2648
    %v2772 = vadd.f32 %v2482, %v2651
    %v2773 = vadd.f32 %v2483, %v2654
    %v2774 = vadd.f32 %v2484, %v2657
    %v2775 = vadd.f32 %v2485, %v2660
    %v2776 = vadd.f32 %v2486, %v2663
    %v2777 = vadd.f32 %v2487, %v2666
    %v2778 = vadd.f32 %v2488, %v2669
    %v2779 = vadd.f32 %v2489, %v2672
    %v2780 = vadd.f32 %v2490, %v2675
    %v2781 = vadd.f32 %v2491, %v2678
    %v2782 = vadd.f32 %v2492, %v2681
    %v2783 = vadd.f32 %v2493, %v2684
    %v2784 = vadd.f32 %v2494, %v2687
    %v2785 = vadd.f32 %v2495, %v2690
    %v2786 = vadd.f32 %v2496, %v2693
    %v2787 = vadd.f32 %v2497, %v2696
    %v2788 = vadd.f32 %v2498, %v2699
    %v2789 = vadd.f32 %v2499, %v2702
    %v2790 = vadd.f32 %v2500, %v2705
    %v2791 = vadd.f32 %v2501, %v2708
    %v2792 = vadd.f32 %v2502, %v2711
    %v2793 = vadd.f32 %v2503, %v2714
    %v2794 = vadd.f32 %v2504, %v2717
    %v2795 = vadd.f32 %v2505, %v2720
    %v2796 = vadd.f32 %v2506, %v2723
    %v2797 = vadd.f32 %v2507, %v2726
    %v2798 = vadd.f32 %v2508, %v2729
    %v2799 = vadd.f32 %v2509, %v2732
    %v2800 = vadd.f32 %v2510, %v2735
    %s2801 = scalar_lea.vmem [#allocation4], 1024
    %v2802 = vld [vmem:[%s2801] sm:$0xff]
    %v2803 = vld [vmem:[%s2801 + $0x8] sm:$0xff]
    %v2804 = vld [vmem:[%s2801 + $0x10] sm:$0xff]
    %v2805 = vld [vmem:[%s2801 + $0x18] sm:$0xff]
    %v2806 = vld [vmem:[%s2801 + $0x20] sm:$0xff]
    %v2807 = vld [vmem:[%s2801 + $0x28] sm:$0xff]
    %v2808 = vld [vmem:[%s2801 + $0x30] sm:$0xff]
    %v2809 = vld [vmem:[%s2801 + $0x38] sm:$0xff]
    %v2810 = vld [vmem:[%s2801 + $0x40] sm:$0xff]
    %v2811 = vld [vmem:[%s2801 + $0x48] sm:$0xff]
    %v2812 = vld [vmem:[%s2801 + $0x50] sm:$0xff]
    %v2813 = vld [vmem:[%s2801 + $0x58] sm:$0xff]
    %v2814 = vld [vmem:[%s2801 + $0x60] sm:$0xff]
    %v2815 = vld [vmem:[%s2801 + $0x68] sm:$0xff]
    %v2816 = vld [vmem:[%s2801 + $0x70] sm:$0xff]
    %v2817 = vld [vmem:[%s2801 + $0x78] sm:$0xff]
    %2818 = vmatpush.msra.mxu0 %v2817
    %2819 = vmatpush.msra.mxu0 %v2816
    %2820 = vmatpush.msra.mxu0 %v2815
    %2821 = vmatpush.msra.mxu0 %v2814
    %2822 = vmatpush.msra.mxu0 %v2813
    %2823 = vmatpush.msra.mxu0 %v2812
    %2824 = vmatpush.msra.mxu0 %v2811
    %2825 = vmatpush.msra.mxu0 %v2810
    %2826 = vmatpush.msra.mxu0 %v2809
    %2827 = vmatpush.msra.mxu0 %v2808
    %2828 = vmatpush.msra.mxu0 %v2807
    %2829 = vmatpush.msra.mxu0 %v2806
    %2830 = vmatpush.msra.mxu0 %v2805
    %2831 = vmatpush.msra.mxu0 %v2804
    %2832 = vmatpush.msra.mxu0 %v2803
    %2833 = vmatpush.msra.mxu0 %v2802
    %2834 = vmatmul.f32.gmra.mxu0 %v2153
    %v2835 = vpop.f32.mrf.mxu0
    %v2836 = vadd.f32 0.0, %v2835
    %2837 = vmatmul.f32.gmra.mxu0 %v2154
    %v2838 = vpop.f32.mrf.mxu0
    %v2839 = vadd.f32 0.0, %v2838
    %2840 = vmatmul.f32.gmra.mxu0 %v2155
    %v2841 = vpop.f32.mrf.mxu0
    %v2842 = vadd.f32 0.0, %v2841
    %2843 = vmatmul.f32.gmra.mxu0 %v2156
    %v2844 = vpop.f32.mrf.mxu0
    %v2845 = vadd.f32 0.0, %v2844
    %2846 = vmatmul.f32.gmra.mxu0 %v2157
    %v2847 = vpop.f32.mrf.mxu0
    %v2848 = vadd.f32 0.0, %v2847
    %2849 = vmatmul.f32.gmra.mxu0 %v2158
    %v2850 = vpop.f32.mrf.mxu0
    %v2851 = vadd.f32 0.0, %v2850
    %2852 = vmatmul.f32.gmra.mxu0 %v2159
    %v2853 = vpop.f32.mrf.mxu0
    %v2854 = vadd.f32 0.0, %v2853
    %2855 = vmatmul.f32.gmra.mxu0 %v2160
    %v2856 = vpop.f32.mrf.mxu0
    %v2857 = vadd.f32 0.0, %v2856
    %2858 = vmatmul.f32.gmra.mxu0 %v2161
    %v2859 = vpop.f32.mrf.mxu0
    %v2860 = vadd.f32 0.0, %v2859
    %2861 = vmatmul.f32.gmra.mxu0 %v2162
    %v2862 = vpop.f32.mrf.mxu0
    %v2863 = vadd.f32 0.0, %v2862
    %2864 = vmatmul.f32.gmra.mxu0 %v2163
    %v2865 = vpop.f32.mrf.mxu0
    %v2866 = vadd.f32 0.0, %v2865
    %2867 = vmatmul.f32.gmra.mxu0 %v2164
    %v2868 = vpop.f32.mrf.mxu0
    %v2869 = vadd.f32 0.0, %v2868
    %2870 = vmatmul.f32.gmra.mxu0 %v2165
    %v2871 = vpop.f32.mrf.mxu0
    %v2872 = vadd.f32 0.0, %v2871
    %2873 = vmatmul.f32.gmra.mxu0 %v2166
    %v2874 = vpop.f32.mrf.mxu0
    %v2875 = vadd.f32 0.0, %v2874
    %2876 = vmatmul.f32.gmra.mxu0 %v2167
    %v2877 = vpop.f32.mrf.mxu0
    %v2878 = vadd.f32 0.0, %v2877
    %2879 = vmatmul.f32.gmra.mxu0 %v2168
    %v2880 = vpop.f32.mrf.mxu0
    %v2881 = vadd.f32 0.0, %v2880
    %2882 = vmatmul.f32.gmra.mxu0 %v2169
    %v2883 = vpop.f32.mrf.mxu0
    %v2884 = vadd.f32 0.0, %v2883
    %2885 = vmatmul.f32.gmra.mxu0 %v2170
    %v2886 = vpop.f32.mrf.mxu0
    %v2887 = vadd.f32 0.0, %v2886
    %2888 = vmatmul.f32.gmra.mxu0 %v2171
    %v2889 = vpop.f32.mrf.mxu0
    %v2890 = vadd.f32 0.0, %v2889
    %2891 = vmatmul.f32.gmra.mxu0 %v2172
    %v2892 = vpop.f32.mrf.mxu0
    %v2893 = vadd.f32 0.0, %v2892
    %2894 = vmatmul.f32.gmra.mxu0 %v2173
    %v2895 = vpop.f32.mrf.mxu0
    %v2896 = vadd.f32 0.0, %v2895
    %2897 = vmatmul.f32.gmra.mxu0 %v2174
    %v2898 = vpop.f32.mrf.mxu0
    %v2899 = vadd.f32 0.0, %v2898
    %2900 = vmatmul.f32.gmra.mxu0 %v2175
    %v2901 = vpop.f32.mrf.mxu0
    %v2902 = vadd.f32 0.0, %v2901
    %2903 = vmatmul.f32.gmra.mxu0 %v2176
    %v2904 = vpop.f32.mrf.mxu0
    %v2905 = vadd.f32 0.0, %v2904
    %2906 = vmatmul.f32.gmra.mxu0 %v2177
    %v2907 = vpop.f32.mrf.mxu0
    %v2908 = vadd.f32 0.0, %v2907
    %2909 = vmatmul.f32.gmra.mxu0 %v2178
    %v2910 = vpop.f32.mrf.mxu0
    %v2911 = vadd.f32 0.0, %v2910
    %2912 = vmatmul.f32.gmra.mxu0 %v2179
    %v2913 = vpop.f32.mrf.mxu0
    %v2914 = vadd.f32 0.0, %v2913
    %2915 = vmatmul.f32.gmra.mxu0 %v2180
    %v2916 = vpop.f32.mrf.mxu0
    %v2917 = vadd.f32 0.0, %v2916
    %2918 = vmatmul.f32.gmra.mxu0 %v2181
    %v2919 = vpop.f32.mrf.mxu0
    %v2920 = vadd.f32 0.0, %v2919
    %2921 = vmatmul.f32.gmra.mxu0 %v2182
    %v2922 = vpop.f32.mrf.mxu0
    %v2923 = vadd.f32 0.0, %v2922
    %2924 = vmatmul.f32.gmra.mxu0 %v2183
    %v2925 = vpop.f32.mrf.mxu0
    %v2926 = vadd.f32 0.0, %v2925
    %2927 = vmatmul.f32.gmra.mxu0 %v2184
    %v2928 = vpop.f32.mrf.mxu0
    %v2929 = vadd.f32 0.0, %v2928
    %2930 = vmatmul.f32.gmra.mxu0 %v2189
    %v2931 = vpop.f32.mrf.mxu0
    %v2932 = vadd.f32 0.0, %v2931
    %2933 = vmatmul.f32.gmra.mxu0 %v2190
    %v2934 = vpop.f32.mrf.mxu0
    %v2935 = vadd.f32 0.0, %v2934
    %2936 = vmatmul.f32.gmra.mxu0 %v2191
    %v2937 = vpop.f32.mrf.mxu0
    %v2938 = vadd.f32 0.0, %v2937
    %2939 = vmatmul.f32.gmra.mxu0 %v2192
    %v2940 = vpop.f32.mrf.mxu0
    %v2941 = vadd.f32 0.0, %v2940
    %2942 = vmatmul.f32.gmra.mxu0 %v2193
    %v2943 = vpop.f32.mrf.mxu0
    %v2944 = vadd.f32 0.0, %v2943
    %2945 = vmatmul.f32.gmra.mxu0 %v2194
    %v2946 = vpop.f32.mrf.mxu0
    %v2947 = vadd.f32 0.0, %v2946
    %2948 = vmatmul.f32.gmra.mxu0 %v2195
    %v2949 = vpop.f32.mrf.mxu0
    %v2950 = vadd.f32 0.0, %v2949
    %2951 = vmatmul.f32.gmra.mxu0 %v2196
    %v2952 = vpop.f32.mrf.mxu0
    %v2953 = vadd.f32 0.0, %v2952
    %2954 = vmatmul.f32.gmra.mxu0 %v2197
    %v2955 = vpop.f32.mrf.mxu0
    %v2956 = vadd.f32 0.0, %v2955
    %2957 = vmatmul.f32.gmra.mxu0 %v2198
    %v2958 = vpop.f32.mrf.mxu0
    %v2959 = vadd.f32 0.0, %v2958
    %2960 = vmatmul.f32.gmra.mxu0 %v2199
    %v2961 = vpop.f32.mrf.mxu0
    %v2962 = vadd.f32 0.0, %v2961
    %2963 = vmatmul.f32.gmra.mxu0 %v2200
    %v2964 = vpop.f32.mrf.mxu0
    %v2965 = vadd.f32 0.0, %v2964
    %2966 = vmatmul.f32.gmra.mxu0 %v2201
    %v2967 = vpop.f32.mrf.mxu0
    %v2968 = vadd.f32 0.0, %v2967
    %2969 = vmatmul.f32.gmra.mxu0 %v2202
    %v2970 = vpop.f32.mrf.mxu0
    %v2971 = vadd.f32 0.0, %v2970
    %2972 = vmatmul.f32.gmra.mxu0 %v2203
    %v2973 = vpop.f32.mrf.mxu0
    %v2974 = vadd.f32 0.0, %v2973
    %2975 = vmatmul.f32.gmra.mxu0 %v2204
    %v2976 = vpop.f32.mrf.mxu0
    %v2977 = vadd.f32 0.0, %v2976
    %2978 = vmatmul.f32.gmra.mxu0 %v2205
    %v2979 = vpop.f32.mrf.mxu0
    %v2980 = vadd.f32 0.0, %v2979
    %2981 = vmatmul.f32.gmra.mxu0 %v2206
    %v2982 = vpop.f32.mrf.mxu0
    %v2983 = vadd.f32 0.0, %v2982
    %2984 = vmatmul.f32.gmra.mxu0 %v2207
    %v2985 = vpop.f32.mrf.mxu0
    %v2986 = vadd.f32 0.0, %v2985
    %2987 = vmatmul.f32.gmra.mxu0 %v2208
    %v2988 = vpop.f32.mrf.mxu0
    %v2989 = vadd.f32 0.0, %v2988
    %2990 = vmatmul.f32.gmra.mxu0 %v2209
    %v2991 = vpop.f32.mrf.mxu0
    %v2992 = vadd.f32 0.0, %v2991
    %2993 = vmatmul.f32.gmra.mxu0 %v2210
    %v2994 = vpop.f32.mrf.mxu0
    %v2995 = vadd.f32 0.0, %v2994
    %2996 = vmatmul.f32.gmra.mxu0 %v2211
    %v2997 = vpop.f32.mrf.mxu0
    %v2998 = vadd.f32 0.0, %v2997
    %2999 = vmatmul.f32.gmra.mxu0 %v2212
    %v3000 = vpop.f32.mrf.mxu0
    %v3001 = vadd.f32 0.0, %v3000
    %3002 = vmatmul.f32.gmra.mxu0 %v2213
    %v3003 = vpop.f32.mrf.mxu0
    %v3004 = vadd.f32 0.0, %v3003
    %3005 = vmatmul.f32.gmra.mxu0 %v2214
    %v3006 = vpop.f32.mrf.mxu0
    %v3007 = vadd.f32 0.0, %v3006
    %3008 = vmatmul.f32.gmra.mxu0 %v2215
    %v3009 = vpop.f32.mrf.mxu0
    %v3010 = vadd.f32 0.0, %v3009
    %3011 = vmatmul.f32.gmra.mxu0 %v2216
    %v3012 = vpop.f32.mrf.mxu0
    %v3013 = vadd.f32 0.0, %v3012
    %3014 = vmatmul.f32.gmra.mxu0 %v2217
    %v3015 = vpop.f32.mrf.mxu0
    %v3016 = vadd.f32 0.0, %v3015
    %3017 = vmatmul.f32.gmra.mxu0 %v2218
    %v3018 = vpop.f32.mrf.mxu0
    %v3019 = vadd.f32 0.0, %v3018
    %3020 = vmatmul.f32.gmra.mxu0 %v2219
    %v3021 = vpop.f32.mrf.mxu0
    %v3022 = vadd.f32 0.0, %v3021
    %3023 = vmatmul.f32.gmra.mxu0 %v2220
    %v3024 = vpop.f32.mrf.mxu0
    %v3025 = vadd.f32 0.0, %v3024
    %3026 = vdwg.mxu0
    %v3027 = vadd.f32 %v2737, %v2836
    %v3028 = vadd.f32 %v2738, %v2839
    %v3029 = vadd.f32 %v2739, %v2842
    %v3030 = vadd.f32 %v2740, %v2845
    %v3031 = vadd.f32 %v2741, %v2848
    %v3032 = vadd.f32 %v2742, %v2851
    %v3033 = vadd.f32 %v2743, %v2854
    %v3034 = vadd.f32 %v2744, %v2857
    %v3035 = vadd.f32 %v2745, %v2860
    %v3036 = vadd.f32 %v2746, %v2863
    %v3037 = vadd.f32 %v2747, %v2866
    %v3038 = vadd.f32 %v2748, %v2869
    %v3039 = vadd.f32 %v2749, %v2872
    %v3040 = vadd.f32 %v2750, %v2875
    %v3041 = vadd.f32 %v2751, %v2878
    %v3042 = vadd.f32 %v2752, %v2881
    %v3043 = vadd.f32 %v2753, %v2884
    %v3044 = vadd.f32 %v2754, %v2887
    %v3045 = vadd.f32 %v2755, %v2890
    %v3046 = vadd.f32 %v2756, %v2893
    %v3047 = vadd.f32 %v2757, %v2896
    %v3048 = vadd.f32 %v2758, %v2899
    %v3049 = vadd.f32 %v2759, %v2902
    %v3050 = vadd.f32 %v2760, %v2905
    %v3051 = vadd.f32 %v2761, %v2908
    %v3052 = vadd.f32 %v2762, %v2911
    %v3053 = vadd.f32 %v2763, %v2914
    %v3054 = vadd.f32 %v2764, %v2917
    %v3055 = vadd.f32 %v2765, %v2920
    %v3056 = vadd.f32 %v2766, %v2923
    %v3057 = vadd.f32 %v2767, %v2926
    %v3058 = vadd.f32 %v2768, %v2929
    %v3059 = vadd.f32 %v2769, %v2932
    %v3060 = vadd.f32 %v2770, %v2935
    %v3061 = vadd.f32 %v2771, %v2938
    %v3062 = vadd.f32 %v2772, %v2941
    %v3063 = vadd.f32 %v2773, %v2944
    %v3064 = vadd.f32 %v2774, %v2947
    %v3065 = vadd.f32 %v2775, %v2950
    %v3066 = vadd.f32 %v2776, %v2953
    %v3067 = vadd.f32 %v2777, %v2956
    %v3068 = vadd.f32 %v2778, %v2959
    %v3069 = vadd.f32 %v2779, %v2962
    %v3070 = vadd.f32 %v2780, %v2965
    %v3071 = vadd.f32 %v2781, %v2968
    %v3072 = vadd.f32 %v2782, %v2971
    %v3073 = vadd.f32 %v2783, %v2974
    %v3074 = vadd.f32 %v2784, %v2977
    %v3075 = vadd.f32 %v2785, %v2980
    %v3076 = vadd.f32 %v2786, %v2983
    %v3077 = vadd.f32 %v2787, %v2986
    %v3078 = vadd.f32 %v2788, %v2989
    %v3079 = vadd.f32 %v2789, %v2992
    %v3080 = vadd.f32 %v2790, %v2995
    %v3081 = vadd.f32 %v2791, %v2998
    %v3082 = vadd.f32 %v2792, %v3001
    %v3083 = vadd.f32 %v2793, %v3004
    %v3084 = vadd.f32 %v2794, %v3007
    %v3085 = vadd.f32 %v2795, %v3010
    %v3086 = vadd.f32 %v2796, %v3013
    %v3087 = vadd.f32 %v2797, %v3016
    %v3088 = vadd.f32 %v2798, %v3019
    %v3089 = vadd.f32 %v2799, %v3022
    %v3090 = vadd.f32 %v2800, %v3025
    %v3091 = vld [vmem:[%s2] sm:$0x1]
    %v3093 = vperm.slane %v3091, 0
    %v3095 = vmul.f32 %v3027, %v3093
    %v3096 = vmul.f32 %v3028, %v3093
    %v3097 = vmul.f32 %v3029, %v3093
    %v3098 = vmul.f32 %v3030, %v3093
    %v3099 = vmul.f32 %v3031, %v3093
    %v3100 = vmul.f32 %v3032, %v3093
    %v3101 = vmul.f32 %v3033, %v3093
    %v3102 = vmul.f32 %v3034, %v3093
    %v3103 = vmul.f32 %v3035, %v3093
    %v3104 = vmul.f32 %v3036, %v3093
    %v3105 = vmul.f32 %v3037, %v3093
    %v3106 = vmul.f32 %v3038, %v3093
    %v3107 = vmul.f32 %v3039, %v3093
    %v3108 = vmul.f32 %v3040, %v3093
    %v3109 = vmul.f32 %v3041, %v3093
    %v3110 = vmul.f32 %v3042, %v3093
    %v3111 = vmul.f32 %v3043, %v3093
    %v3112 = vmul.f32 %v3044, %v3093
    %v3113 = vmul.f32 %v3045, %v3093
    %v3114 = vmul.f32 %v3046, %v3093
    %v3115 = vmul.f32 %v3047, %v3093
    %v3116 = vmul.f32 %v3048, %v3093
    %v3117 = vmul.f32 %v3049, %v3093
    %v3118 = vmul.f32 %v3050, %v3093
    %v3119 = vmul.f32 %v3051, %v3093
    %v3120 = vmul.f32 %v3052, %v3093
    %v3121 = vmul.f32 %v3053, %v3093
    %v3122 = vmul.f32 %v3054, %v3093
    %v3123 = vmul.f32 %v3055, %v3093
    %v3124 = vmul.f32 %v3056, %v3093
    %v3125 = vmul.f32 %v3057, %v3093
    %v3126 = vmul.f32 %v3058, %v3093
    %v3127 = vmul.f32 %v3059, %v3093
    %v3128 = vmul.f32 %v3060, %v3093
    %v3129 = vmul.f32 %v3061, %v3093
    %v3130 = vmul.f32 %v3062, %v3093
    %v3131 = vmul.f32 %v3063, %v3093
    %v3132 = vmul.f32 %v3064, %v3093
    %v3133 = vmul.f32 %v3065, %v3093
    %v3134 = vmul.f32 %v3066, %v3093
    %v3135 = vmul.f32 %v3067, %v3093
    %v3136 = vmul.f32 %v3068, %v3093
    %v3137 = vmul.f32 %v3069, %v3093
    %v3138 = vmul.f32 %v3070, %v3093
    %v3139 = vmul.f32 %v3071, %v3093
    %v3140 = vmul.f32 %v3072, %v3093
    %v3141 = vmul.f32 %v3073, %v3093
    %v3142 = vmul.f32 %v3074, %v3093
    %v3143 = vmul.f32 %v3075, %v3093
    %v3144 = vmul.f32 %v3076, %v3093
    %v3145 = vmul.f32 %v3077, %v3093
    %v3146 = vmul.f32 %v3078, %v3093
    %v3147 = vmul.f32 %v3079, %v3093
    %v3148 = vmul.f32 %v3080, %v3093
    %v3149 = vmul.f32 %v3081, %v3093
    %v3150 = vmul.f32 %v3082, %v3093
    %v3151 = vmul.f32 %v3083, %v3093
    %v3152 = vmul.f32 %v3084, %v3093
    %v3153 = vmul.f32 %v3085, %v3093
    %v3154 = vmul.f32 %v3086, %v3093
    %v3155 = vmul.f32 %v3087, %v3093
    %v3156 = vmul.f32 %v3088, %v3093
    %v3157 = vmul.f32 %v3089, %v3093
    %v3158 = vmul.f32 %v3090, %v3093
    %v3159 = vld [vmem:[%s3] sm:$0x1]
    %v3161 = vperm.slane %v3159, 0
    %v3163 = vadd.f32 %v3095, %v3161
    %v3164 = vadd.f32 %v3096, %v3161
    %v3165 = vadd.f32 %v3097, %v3161
    %v3166 = vadd.f32 %v3098, %v3161
    %v3167 = vadd.f32 %v3099, %v3161
    %v3168 = vadd.f32 %v3100, %v3161
    %v3169 = vadd.f32 %v3101, %v3161
    %v3170 = vadd.f32 %v3102, %v3161
    %v3171 = vadd.f32 %v3103, %v3161
    %v3172 = vadd.f32 %v3104, %v3161
    %v3173 = vadd.f32 %v3105, %v3161
    %v3174 = vadd.f32 %v3106, %v3161
    %v3175 = vadd.f32 %v3107, %v3161
    %v3176 = vadd.f32 %v3108, %v3161
    %v3177 = vadd.f32 %v3109, %v3161
    %v3178 = vadd.f32 %v3110, %v3161
    %v3179 = vadd.f32 %v3111, %v3161
    %v3180 = vadd.f32 %v3112, %v3161
    %v3181 = vadd.f32 %v3113, %v3161
    %v3182 = vadd.f32 %v3114, %v3161
    %v3183 = vadd.f32 %v3115, %v3161
    %v3184 = vadd.f32 %v3116, %v3161
    %v3185 = vadd.f32 %v3117, %v3161
    %v3186 = vadd.f32 %v3118, %v3161
    %v3187 = vadd.f32 %v3119, %v3161
    %v3188 = vadd.f32 %v3120, %v3161
    %v3189 = vadd.f32 %v3121, %v3161
    %v3190 = vadd.f32 %v3122, %v3161
    %v3191 = vadd.f32 %v3123, %v3161
    %v3192 = vadd.f32 %v3124, %v3161
    %v3193 = vadd.f32 %v3125, %v3161
    %v3194 = vadd.f32 %v3126, %v3161
    %v3195 = vadd.f32 %v3127, %v3161
    %v3196 = vadd.f32 %v3128, %v3161
    %v3197 = vadd.f32 %v3129, %v3161
    %v3198 = vadd.f32 %v3130, %v3161
    %v3199 = vadd.f32 %v3131, %v3161
    %v3200 = vadd.f32 %v3132, %v3161
    %v3201 = vadd.f32 %v3133, %v3161
    %v3202 = vadd.f32 %v3134, %v3161
    %v3203 = vadd.f32 %v3135, %v3161
    %v3204 = vadd.f32 %v3136, %v3161
    %v3205 = vadd.f32 %v3137, %v3161
    %v3206 = vadd.f32 %v3138, %v3161
    %v3207 = vadd.f32 %v3139, %v3161
    %v3208 = vadd.f32 %v3140, %v3161
    %v3209 = vadd.f32 %v3141, %v3161
    %v3210 = vadd.f32 %v3142, %v3161
    %v3211 = vadd.f32 %v3143, %v3161
    %v3212 = vadd.f32 %v3144, %v3161
    %v3213 = vadd.f32 %v3145, %v3161
    %v3214 = vadd.f32 %v3146, %v3161
    %v3215 = vadd.f32 %v3147, %v3161
    %v3216 = vadd.f32 %v3148, %v3161
    %v3217 = vadd.f32 %v3149, %v3161
    %v3218 = vadd.f32 %v3150, %v3161
    %v3219 = vadd.f32 %v3151, %v3161
    %v3220 = vadd.f32 %v3152, %v3161
    %v3221 = vadd.f32 %v3153, %v3161
    %v3222 = vadd.f32 %v3154, %v3161
    %v3223 = vadd.f32 %v3155, %v3161
    %v3224 = vadd.f32 %v3156, %v3161
    %v3225 = vadd.f32 %v3157, %v3161
    %v3226 = vadd.f32 %v3158, %v3161
    %3227 = vst [vmem:[#allocation3] sm:$0xff] 0.0
    %3228 = vst [vmem:[#allocation3 + $0x8] sm:$0xff] 0.0
    %3229 = vst [vmem:[#allocation3 + $0x10] sm:$0x3] 0.0
    %3230 = vst [vmem:[#allocation3 + $0x1b0] sm:$0xff] 0.0
    %3231 = vst [vmem:[#allocation3 + $0x1b8] sm:$0xff] 0.0
    %3232 = vst [vmem:[#allocation3 + $0x1c0] sm:$0x3] 0.0
    %s3233 = scalar_lea.vmem [#allocation3], 408
    %3234 = vst [vmem:[%s3233] sm:$0xff] 0.0
    %3235 = vst [vmem:[%s3233 + $0x8] sm:$0xff] 0.0
    %3236 = vst [vmem:[%s3233 + $0x10] sm:$0x3] 0.0
    %3237 = vst [vmem:[%s3233 + $0x1b0] sm:$0xff] 0.0
    %3238 = vst [vmem:[%s3233 + $0x1b8] sm:$0xff] 0.0
    %3239 = vst [vmem:[%s3233 + $0x1c0] sm:$0x3] 0.0
    %s3240 = scalar_lea.vmem [#allocation3], 24
    %3241 = vst [vmem:[%s3240] sm:$0x1] 0.0
    %3242 = vst [vmem:[%s3240 + $0x18] sm:$0x1] 0.0
    %3243 = vst [vmem:[%s3240 + $0x30] sm:$0x1] 0.0
    %3244 = vst [vmem:[%s3240 + $0x48] sm:$0x1] 0.0
    %3245 = vst [vmem:[%s3240 + $0x60] sm:$0x1] 0.0
    %3246 = vst [vmem:[%s3240 + $0x78] sm:$0x1] 0.0
    %3247 = vst [vmem:[%s3240 + $0x90] sm:$0x1] 0.0
    %3248 = vst [vmem:[%s3240 + $0xa8] sm:$0x1] 0.0
    %3249 = vst [vmem:[%s3240 + $0xc0] sm:$0x1] 0.0
    %3250 = vst [vmem:[%s3240 + $0xd8] sm:$0x1] 0.0
    %3251 = vst [vmem:[%s3240 + $0xf0] sm:$0x1] 0.0
    %3252 = vst [vmem:[%s3240 + $0x108] sm:$0x1] 0.0
    %3253 = vst [vmem:[%s3240 + $0x120] sm:$0x1] 0.0
    %3254 = vst [vmem:[%s3240 + $0x138] sm:$0x1] 0.0
    %3255 = vst [vmem:[%s3240 + $0x150] sm:$0x1] 0.0
    %3256 = vst [vmem:[%s3240 + $0x168] sm:$0x1] 0.0
    %3257 = vst [vmem:[%s3240 + $0x1b0] sm:$0x1] 0.0
    %3258 = vst [vmem:[%s3240 + $0x1c8] sm:$0x1] 0.0
    %3259 = vst [vmem:[%s3240 + $0x1e0] sm:$0x1] 0.0
    %3260 = vst [vmem:[%s3240 + $0x1f8] sm:$0x1] 0.0
    %3261 = vst [vmem:[%s3240 + $0x210] sm:$0x1] 0.0
    %3262 = vst [vmem:[%s3240 + $0x228] sm:$0x1] 0.0
    %3263 = vst [vmem:[%s3240 + $0x240] sm:$0x1] 0.0
    %3264 = vst [vmem:[%s3240 + $0x258] sm:$0x1] 0.0
    %3265 = vst [vmem:[%s3240 + $0x270] sm:$0x1] 0.0
    %3266 = vst [vmem:[%s3240 + $0x288] sm:$0x1] 0.0
    %3267 = vst [vmem:[%s3240 + $0x2a0] sm:$0x1] 0.0
    %3268 = vst [vmem:[%s3240 + $0x2b8] sm:$0x1] 0.0
    %3269 = vst [vmem:[%s3240 + $0x2d0] sm:$0x1] 0.0
    %3270 = vst [vmem:[%s3240 + $0x2e8] sm:$0x1] 0.0
    %3271 = vst [vmem:[%s3240 + $0x300] sm:$0x1] 0.0
    %3272 = vst [vmem:[%s3240 + $0x318] sm:$0x1] 0.0
    %3273 = vst [vmem:[%s3240 + $0x11] sm:$0x1] 0.0
    %3274 = vst [vmem:[%s3240 + $0x29] sm:$0x1] 0.0
    %3275 = vst [vmem:[%s3240 + $0x41] sm:$0x1] 0.0
    %3276 = vst [vmem:[%s3240 + $0x59] sm:$0x1] 0.0
    %3277 = vst [vmem:[%s3240 + $0x71] sm:$0x1] 0.0
    %3278 = vst [vmem:[%s3240 + $0x89] sm:$0x1] 0.0
    %3279 = vst [vmem:[%s3240 + $0xa1] sm:$0x1] 0.0
    %3280 = vst [vmem:[%s3240 + $0xb9] sm:$0x1] 0.0
    %3281 = vst [vmem:[%s3240 + $0xd1] sm:$0x1] 0.0
    %3282 = vst [vmem:[%s3240 + $0xe9] sm:$0x1] 0.0
    %3283 = vst [vmem:[%s3240 + $0x101] sm:$0x1] 0.0
    %3284 = vst [vmem:[%s3240 + $0x119] sm:$0x1] 0.0
    %3285 = vst [vmem:[%s3240 + $0x131] sm:$0x1] 0.0
    %3286 = vst [vmem:[%s3240 + $0x149] sm:$0x1] 0.0
    %3287 = vst [vmem:[%s3240 + $0x161] sm:$0x1] 0.0
    %3288 = vst [vmem:[%s3240 + $0x179] sm:$0x1] 0.0
    %3289 = vst [vmem:[%s3240 + $0x1c1] sm:$0x1] 0.0
    %3290 = vst [vmem:[%s3240 + $0x1d9] sm:$0x1] 0.0
    %3291 = vst [vmem:[%s3240 + $0x1f1] sm:$0x1] 0.0
    %3292 = vst [vmem:[%s3240 + $0x209] sm:$0x1] 0.0
    %3293 = vst [vmem:[%s3240 + $0x221] sm:$0x1] 0.0
    %3294 = vst [vmem:[%s3240 + $0x239] sm:$0x1] 0.0
    %3295 = vst [vmem:[%s3240 + $0x251] sm:$0x1] 0.0
    %3296 = vst [vmem:[%s3240 + $0x269] sm:$0x1] 0.0
    %3297 = vst [vmem:[%s3240 + $0x281] sm:$0x1] 0.0
    %3298 = vst [vmem:[%s3240 + $0x299] sm:$0x1] 0.0
    %3299 = vst [vmem:[%s3240 + $0x2b1] sm:$0x1] 0.0
    %3300 = vst [vmem:[%s3240 + $0x2c9] sm:$0x1] 0.0
    %3301 = vst [vmem:[%s3240 + $0x2e1] sm:$0x1] 0.0
    %3302 = vst [vmem:[%s3240 + $0x2f9] sm:$0x1] 0.0
    %3303 = vst [vmem:[%s3240 + $0x311] sm:$0x1] 0.0
    %3304 = vst [vmem:[%s3240 + $0x329] sm:$0x1] 0.0
    %v3305 = vmax.f32 %v3163, 0.0
    %v3306 = vmax.f32 %v3164, 0.0
    %v3307 = vmax.f32 %v3165, 0.0
    %v3308 = vmax.f32 %v3166, 0.0
    %v3309 = vmax.f32 %v3167, 0.0
    %v3310 = vmax.f32 %v3168, 0.0
    %v3311 = vmax.f32 %v3169, 0.0
    %v3312 = vmax.f32 %v3170, 0.0
    %v3313 = vmax.f32 %v3171, 0.0
    %v3314 = vmax.f32 %v3172, 0.0
    %v3315 = vmax.f32 %v3173, 0.0
    %v3316 = vmax.f32 %v3174, 0.0
    %v3317 = vmax.f32 %v3175, 0.0
    %v3318 = vmax.f32 %v3176, 0.0
    %v3319 = vmax.f32 %v3177, 0.0
    %v3320 = vmax.f32 %v3178, 0.0
    %v3321 = vmax.f32 %v3179, 0.0
    %v3322 = vmax.f32 %v3180, 0.0
    %v3323 = vmax.f32 %v3181, 0.0
    %v3324 = vmax.f32 %v3182, 0.0
    %v3325 = vmax.f32 %v3183, 0.0
    %v3326 = vmax.f32 %v3184, 0.0
    %v3327 = vmax.f32 %v3185, 0.0
    %v3328 = vmax.f32 %v3186, 0.0
    %v3329 = vmax.f32 %v3187, 0.0
    %v3330 = vmax.f32 %v3188, 0.0
    %v3331 = vmax.f32 %v3189, 0.0
    %v3332 = vmax.f32 %v3190, 0.0
    %v3333 = vmax.f32 %v3191, 0.0
    %v3334 = vmax.f32 %v3192, 0.0
    %v3335 = vmax.f32 %v3193, 0.0
    %v3336 = vmax.f32 %v3194, 0.0
    %v3337 = vmax.f32 %v3195, 0.0
    %v3338 = vmax.f32 %v3196, 0.0
    %v3339 = vmax.f32 %v3197, 0.0
    %v3340 = vmax.f32 %v3198, 0.0
    %v3341 = vmax.f32 %v3199, 0.0
    %v3342 = vmax.f32 %v3200, 0.0
    %v3343 = vmax.f32 %v3201, 0.0
    %v3344 = vmax.f32 %v3202, 0.0
    %v3345 = vmax.f32 %v3203, 0.0
    %v3346 = vmax.f32 %v3204, 0.0
    %v3347 = vmax.f32 %v3205, 0.0
    %v3348 = vmax.f32 %v3206, 0.0
    %v3349 = vmax.f32 %v3207, 0.0
    %v3350 = vmax.f32 %v3208, 0.0
    %v3351 = vmax.f32 %v3209, 0.0
    %v3352 = vmax.f32 %v3210, 0.0
    %v3353 = vmax.f32 %v3211, 0.0
    %v3354 = vmax.f32 %v3212, 0.0
    %v3355 = vmax.f32 %v3213, 0.0
    %v3356 = vmax.f32 %v3214, 0.0
    %v3357 = vmax.f32 %v3215, 0.0
    %v3358 = vmax.f32 %v3216, 0.0
    %v3359 = vmax.f32 %v3217, 0.0
    %v3360 = vmax.f32 %v3218, 0.0
    %v3361 = vmax.f32 %v3219, 0.0
    %v3362 = vmax.f32 %v3220, 0.0
    %v3363 = vmax.f32 %v3221, 0.0
    %v3364 = vmax.f32 %v3222, 0.0
    %v3365 = vmax.f32 %v3223, 0.0
    %v3366 = vmax.f32 %v3224, 0.0
    %v3367 = vmax.f32 %v3225, 0.0
    %v3368 = vmax.f32 %v3226, 0.0
    %3369 = vst [vmem:[%s3240 + $0x1] sm:$0xff] %v3305
    %3370 = vst [vmem:[%s3240 + $0x9] sm:$0xff] %v3306
    %3371 = vst [vmem:[%s3240 + $0x19] sm:$0xff] %v3307
    %3372 = vst [vmem:[%s3240 + $0x21] sm:$0xff] %v3308
    %3373 = vst [vmem:[%s3240 + $0x31] sm:$0xff] %v3309
    %3374 = vst [vmem:[%s3240 + $0x39] sm:$0xff] %v3310
    %3375 = vst [vmem:[%s3240 + $0x49] sm:$0xff] %v3311
    %3376 = vst [vmem:[%s3240 + $0x51] sm:$0xff] %v3312
    %3377 = vst [vmem:[%s3240 + $0x61] sm:$0xff] %v3313
    %3378 = vst [vmem:[%s3240 + $0x69] sm:$0xff] %v3314
    %3379 = vst [vmem:[%s3240 + $0x79] sm:$0xff] %v3315
    %3380 = vst [vmem:[%s3240 + $0x81] sm:$0xff] %v3316
    %3381 = vst [vmem:[%s3240 + $0x91] sm:$0xff] %v3317
    %3382 = vst [vmem:[%s3240 + $0x99] sm:$0xff] %v3318
    %3383 = vst [vmem:[%s3240 + $0xa9] sm:$0xff] %v3319
    %3384 = vst [vmem:[%s3240 + $0xb1] sm:$0xff] %v3320
    %3385 = vst [vmem:[%s3240 + $0xc1] sm:$0xff] %v3321
    %3386 = vst [vmem:[%s3240 + $0xc9] sm:$0xff] %v3322
    %3387 = vst [vmem:[%s3240 + $0xd9] sm:$0xff] %v3323
    %3388 = vst [vmem:[%s3240 + $0xe1] sm:$0xff] %v3324
    %3389 = vst [vmem:[%s3240 + $0xf1] sm:$0xff] %v3325
    %3390 = vst [vmem:[%s3240 + $0xf9] sm:$0xff] %v3326
    %3391 = vst [vmem:[%s3240 + $0x109] sm:$0xff] %v3327
    %3392 = vst [vmem:[%s3240 + $0x111] sm:$0xff] %v3328
    %3393 = vst [vmem:[%s3240 + $0x121] sm:$0xff] %v3329
    %3394 = vst [vmem:[%s3240 + $0x129] sm:$0xff] %v3330
    %3395 = vst [vmem:[%s3240 + $0x139] sm:$0xff] %v3331
    %3396 = vst [vmem:[%s3240 + $0x141] sm:$0xff] %v3332
    %3397 = vst [vmem:[%s3240 + $0x151] sm:$0xff] %v3333
    %3398 = vst [vmem:[%s3240 + $0x159] sm:$0xff] %v3334
    %3399 = vst [vmem:[%s3240 + $0x169] sm:$0xff] %v3335
    %3400 = vst [vmem:[%s3240 + $0x171] sm:$0xff] %v3336
    %3401 = vst [vmem:[%s3240 + $0x1b1] sm:$0xff] %v3337
    %3402 = vst [vmem:[%s3240 + $0x1b9] sm:$0xff] %v3338
    %3403 = vst [vmem:[%s3240 + $0x1c9] sm:$0xff] %v3339
    %3404 = vst [vmem:[%s3240 + $0x1d1] sm:$0xff] %v3340
    %3405 = vst [vmem:[%s3240 + $0x1e1] sm:$0xff] %v3341
    %3406 = vst [vmem:[%s3240 + $0x1e9] sm:$0xff] %v3342
    %3407 = vst [vmem:[%s3240 + $0x1f9] sm:$0xff] %v3343
    %3408 = vst [vmem:[%s3240 + $0x201] sm:$0xff] %v3344
    %3409 = vst [vmem:[%s3240 + $0x211] sm:$0xff] %v3345
    %3410 = vst [vmem:[%s3240 + $0x219] sm:$0xff] %v3346
    %3411 = vst [vmem:[%s3240 + $0x229] sm:$0xff] %v3347
    %3412 = vst [vmem:[%s3240 + $0x231] sm:$0xff] %v3348
    %3413 = vst [vmem:[%s3240 + $0x241] sm:$0xff] %v3349
    %3414 = vst [vmem:[%s3240 + $0x249] sm:$0xff] %v3350
    %3415 = vst [vmem:[%s3240 + $0x259] sm:$0xff] %v3351
    %3416 = vst [vmem:[%s3240 + $0x261] sm:$0xff] %v3352
    %3417 = vst [vmem:[%s3240 + $0x271] sm:$0xff] %v3353
    %3418 = vst [vmem:[%s3240 + $0x279] sm:$0xff] %v3354
    %3419 = vst [vmem:[%s3240 + $0x289] sm:$0xff] %v3355
    %3420 = vst [vmem:[%s3240 + $0x291] sm:$0xff] %v3356
    %3421 = vst [vmem:[%s3240 + $0x2a1] sm:$0xff] %v3357
    %3422 = vst [vmem:[%s3240 + $0x2a9] sm:$0xff] %v3358
    %3423 = vst [vmem:[%s3240 + $0x2b9] sm:$0xff] %v3359
    %3424 = vst [vmem:[%s3240 + $0x2c1] sm:$0xff] %v3360
    %3425 = vst [vmem:[%s3240 + $0x2d1] sm:$0xff] %v3361
    %3426 = vst [vmem:[%s3240 + $0x2d9] sm:$0xff] %v3362
    %3427 = vst [vmem:[%s3240 + $0x2e9] sm:$0xff] %v3363
    %3428 = vst [vmem:[%s3240 + $0x2f1] sm:$0xff] %v3364
    %3429 = vst [vmem:[%s3240 + $0x301] sm:$0xff] %v3365
    %3430 = vst [vmem:[%s3240 + $0x309] sm:$0xff] %v3366
    %3431 = vst [vmem:[%s3240 + $0x319] sm:$0xff] %v3367
    %3432 = vst [vmem:[%s3240 + $0x321] sm:$0xff] %v3368
    %v3433 = vld [vmem:[#allocation3] sm:$0xff]
    %v3434 = vld [vmem:[#allocation3 + $0x8] sm:$0xff]
    %v3435 = vld [vmem:[#allocation3 + $0x18] sm:$0xff]
    %v3436 = vld [vmem:[#allocation3 + $0x20] sm:$0xff]
    %v3437 = vld [vmem:[#allocation3 + $0x30] sm:$0xff]
    %v3438 = vld [vmem:[#allocation3 + $0x38] sm:$0xff]
    %v3439 = vld [vmem:[#allocation3 + $0x48] sm:$0xff]
    %v3440 = vld [vmem:[#allocation3 + $0x50] sm:$0xff]
    %v3441 = vld [vmem:[#allocation3 + $0x60] sm:$0xff]
    %v3442 = vld [vmem:[#allocation3 + $0x68] sm:$0xff]
    %v3443 = vld [vmem:[#allocation3 + $0x78] sm:$0xff]
    %v3444 = vld [vmem:[#allocation3 + $0x80] sm:$0xff]
    %v3445 = vld [vmem:[#allocation3 + $0x90] sm:$0xff]
    %v3446 = vld [vmem:[#allocation3 + $0x98] sm:$0xff]
    %v3447 = vld [vmem:[#allocation3 + $0xa8] sm:$0xff]
    %v3448 = vld [vmem:[#allocation3 + $0xb0] sm:$0xff]
    %v3449 = vld [vmem:[#allocation3 + $0xc0] sm:$0xff]
    %v3450 = vld [vmem:[#allocation3 + $0xc8] sm:$0xff]
    %v3451 = vld [vmem:[#allocation3 + $0xd8] sm:$0xff]
    %v3452 = vld [vmem:[#allocation3 + $0xe0] sm:$0xff]
    %v3453 = vld [vmem:[#allocation3 + $0xf0] sm:$0xff]
    %v3454 = vld [vmem:[#allocation3 + $0xf8] sm:$0xff]
    %v3455 = vld [vmem:[#allocation3 + $0x108] sm:$0xff]
    %v3456 = vld [vmem:[#allocation3 + $0x110] sm:$0xff]
    %v3457 = vld [vmem:[#allocation3 + $0x120] sm:$0xff]
    %v3458 = vld [vmem:[#allocation3 + $0x128] sm:$0xff]
    %v3459 = vld [vmem:[#allocation3 + $0x138] sm:$0xff]
    %v3460 = vld [vmem:[#allocation3 + $0x140] sm:$0xff]
    %v3461 = vld [vmem:[#allocation3 + $0x150] sm:$0xff]
    %v3462 = vld [vmem:[#allocation3 + $0x158] sm:$0xff]
    %v3463 = vld [vmem:[#allocation3 + $0x168] sm:$0xff]
    %v3464 = vld [vmem:[#allocation3 + $0x170] sm:$0xff]
    %v3465 = vld [vmem:[#allocation3 + $0x180] sm:$0xff]
    %v3466 = vld [vmem:[#allocation3 + $0x188] sm:$0xff]
    %v3467 = vld [vmem:[#allocation3 + $0x198] sm:$0xff]
    %v3468 = vld [vmem:[#allocation3 + $0x1a0] sm:$0xff]
    %v3469 = vld [vmem:[#allocation3 + $0x1b0] sm:$0xff]
    %v3470 = vld [vmem:[#allocation3 + $0x1b8] sm:$0xff]
    %v3471 = vld [vmem:[#allocation3 + $0x1c8] sm:$0xff]
    %v3472 = vld [vmem:[#allocation3 + $0x1d0] sm:$0xff]
    %v3473 = vld [vmem:[#allocation3 + $0x1e0] sm:$0xff]
    %v3474 = vld [vmem:[#allocation3 + $0x1e8] sm:$0xff]
    %v3475 = vld [vmem:[#allocation3 + $0x1f8] sm:$0xff]
    %v3476 = vld [vmem:[#allocation3 + $0x200] sm:$0xff]
    %v3477 = vld [vmem:[#allocation3 + $0x210] sm:$0xff]
    %v3478 = vld [vmem:[#allocation3 + $0x218] sm:$0xff]
    %v3479 = vld [vmem:[#allocation3 + $0x228] sm:$0xff]
    %v3480 = vld [vmem:[#allocation3 + $0x230] sm:$0xff]
    %v3481 = vld [vmem:[#allocation3 + $0x240] sm:$0xff]
    %v3482 = vld [vmem:[#allocation3 + $0x248] sm:$0xff]
    %v3483 = vld [vmem:[#allocation3 + $0x258] sm:$0xff]
    %v3484 = vld [vmem:[#allocation3 + $0x260] sm:$0xff]
    %v3485 = vld [vmem:[#allocation3 + $0x270] sm:$0xff]
    %v3486 = vld [vmem:[#allocation3 + $0x278] sm:$0xff]
    %v3487 = vld [vmem:[#allocation3 + $0x288] sm:$0xff]
    %v3488 = vld [vmem:[#allocation3 + $0x290] sm:$0xff]
    %v3489 = vld [vmem:[#allocation3 + $0x2a0] sm:$0xff]
    %v3490 = vld [vmem:[#allocation3 + $0x2a8] sm:$0xff]
    %v3491 = vld [vmem:[#allocation3 + $0x2b8] sm:$0xff]
    %v3492 = vld [vmem:[#allocation3 + $0x2c0] sm:$0xff]
    %v3493 = vld [vmem:[#allocation3 + $0x2d0] sm:$0xff]
    %v3494 = vld [vmem:[#allocation3 + $0x2d8] sm:$0xff]
    %v3495 = vld [vmem:[#allocation3 + $0x2e8] sm:$0xff]
    %v3496 = vld [vmem:[#allocation3 + $0x2f0] sm:$0xff]
    %v3497 = vld [vmem:[#allocation3 + $0x300] sm:$0xff]
    %v3498 = vld [vmem:[#allocation3 + $0x308] sm:$0xff]
    %v3499 = vld [vmem:[#allocation3 + $0x318] sm:$0xff]
    %v3500 = vld [vmem:[#allocation3 + $0x320] sm:$0xff]
    %v3501 = vld [vmem:[#allocation3 + $0x330] sm:$0xff]
    %v3502 = vld [vmem:[#allocation3 + $0x338] sm:$0xff]
    %v3503 = vld [vmem:[#allocation3 + $0x348] sm:$0xff]
    %v3504 = vld [vmem:[#allocation3 + $0x350] sm:$0xff]
    %v3505 = vld [vmem:[#allocation6] sm:$0xff]
    %v3506 = vld [vmem:[#allocation6 + $0x8] sm:$0xff]
    %v3507 = vld [vmem:[#allocation6 + $0x10] sm:$0xff]
    %v3508 = vld [vmem:[#allocation6 + $0x18] sm:$0xff]
    %v3509 = vld [vmem:[#allocation6 + $0x20] sm:$0xff]
    %v3510 = vld [vmem:[#allocation6 + $0x28] sm:$0xff]
    %v3511 = vld [vmem:[#allocation6 + $0x30] sm:$0xff]
    %v3512 = vld [vmem:[#allocation6 + $0x38] sm:$0xff]
    %v3513 = vld [vmem:[#allocation6 + $0x40] sm:$0xff]
    %v3514 = vld [vmem:[#allocation6 + $0x48] sm:$0xff]
    %v3515 = vld [vmem:[#allocation6 + $0x50] sm:$0xff]
    %v3516 = vld [vmem:[#allocation6 + $0x58] sm:$0xff]
    %v3517 = vld [vmem:[#allocation6 + $0x60] sm:$0xff]
    %v3518 = vld [vmem:[#allocation6 + $0x68] sm:$0xff]
    %v3519 = vld [vmem:[#allocation6 + $0x70] sm:$0xff]
    %v3520 = vld [vmem:[#allocation6 + $0x78] sm:$0xff]
    %s3521 = scalar_lea.vmem [#allocation6], 384
    %v3522 = vld [vmem:[%s3521] sm:$0xff]
    %v3523 = vld [vmem:[%s3521 + $0x8] sm:$0xff]
    %v3524 = vld [vmem:[%s3521 + $0x10] sm:$0xff]
    %v3525 = vld [vmem:[%s3521 + $0x18] sm:$0xff]
    %v3526 = vld [vmem:[%s3521 + $0x20] sm:$0xff]
    %v3527 = vld [vmem:[%s3521 + $0x28] sm:$0xff]
    %v3528 = vld [vmem:[%s3521 + $0x30] sm:$0xff]
    %v3529 = vld [vmem:[%s3521 + $0x38] sm:$0xff]
    %v3530 = vld [vmem:[%s3521 + $0x40] sm:$0xff]
    %v3531 = vld [vmem:[%s3521 + $0x48] sm:$0xff]
    %v3532 = vld [vmem:[%s3521 + $0x50] sm:$0xff]
    %v3533 = vld [vmem:[%s3521 + $0x58] sm:$0xff]
    %v3534 = vld [vmem:[%s3521 + $0x60] sm:$0xff]
    %v3535 = vld [vmem:[%s3521 + $0x68] sm:$0xff]
    %v3536 = vld [vmem:[%s3521 + $0x70] sm:$0xff]
    %v3537 = vld [vmem:[%s3521 + $0x78] sm:$0xff]
    %3538 = vmatpush.msra.mxu0 %v3537
    %3539 = vmatpush.msra.mxu0 %v3536
    %3540 = vmatpush.msra.mxu0 %v3535
    %3541 = vmatpush.msra.mxu0 %v3534
    %3542 = vmatpush.msra.mxu0 %v3533
    %3543 = vmatpush.msra.mxu0 %v3532
    %3544 = vmatpush.msra.mxu0 %v3531
    %3545 = vmatpush.msra.mxu0 %v3530
    %3546 = vmatpush.msra.mxu0 %v3529
    %3547 = vmatpush.msra.mxu0 %v3528
    %3548 = vmatpush.msra.mxu0 %v3527
    %3549 = vmatpush.msra.mxu0 %v3526
    %3550 = vmatpush.msra.mxu0 %v3525
    %3551 = vmatpush.msra.mxu0 %v3524
    %3552 = vmatpush.msra.mxu0 %v3523
    %3553 = vmatpush.msra.mxu0 %v3522
    %3554 = vmatmul.f32.gmra.mxu0 %v3435
    %v3555 = vpop.f32.mrf.mxu0
    %v3556 = vadd.f32 0.0, %v3555
    %3557 = vmatmul.f32.gmra.mxu0 %v3436
    %v3558 = vpop.f32.mrf.mxu0
    %v3559 = vadd.f32 0.0, %v3558
    %3560 = vmatmul.f32.gmra.mxu0 %v3437
    %v3561 = vpop.f32.mrf.mxu0
    %v3562 = vadd.f32 0.0, %v3561
    %3563 = vmatmul.f32.gmra.mxu0 %v3438
    %v3564 = vpop.f32.mrf.mxu0
    %v3565 = vadd.f32 0.0, %v3564
    %3566 = vmatmul.f32.gmra.mxu0 %v3439
    %v3567 = vpop.f32.mrf.mxu0
    %v3568 = vadd.f32 0.0, %v3567
    %3569 = vmatmul.f32.gmra.mxu0 %v3440
    %v3570 = vpop.f32.mrf.mxu0
    %v3571 = vadd.f32 0.0, %v3570
    %3572 = vmatmul.f32.gmra.mxu0 %v3441
    %v3573 = vpop.f32.mrf.mxu0
    %v3574 = vadd.f32 0.0, %v3573
    %3575 = vmatmul.f32.gmra.mxu0 %v3442
    %v3576 = vpop.f32.mrf.mxu0
    %v3577 = vadd.f32 0.0, %v3576
    %3578 = vmatmul.f32.gmra.mxu0 %v3443
    %v3579 = vpop.f32.mrf.mxu0
    %v3580 = vadd.f32 0.0, %v3579
    %3581 = vmatmul.f32.gmra.mxu0 %v3444
    %v3582 = vpop.f32.mrf.mxu0
    %v3583 = vadd.f32 0.0, %v3582
    %3584 = vmatmul.f32.gmra.mxu0 %v3445
    %v3585 = vpop.f32.mrf.mxu0
    %v3586 = vadd.f32 0.0, %v3585
    %3587 = vmatmul.f32.gmra.mxu0 %v3446
    %v3588 = vpop.f32.mrf.mxu0
    %v3589 = vadd.f32 0.0, %v3588
    %3590 = vmatmul.f32.gmra.mxu0 %v3447
    %v3591 = vpop.f32.mrf.mxu0
    %v3592 = vadd.f32 0.0, %v3591
    %3593 = vmatmul.f32.gmra.mxu0 %v3448
    %v3594 = vpop.f32.mrf.mxu0
    %v3595 = vadd.f32 0.0, %v3594
    %3596 = vmatmul.f32.gmra.mxu0 %v3449
    %v3597 = vpop.f32.mrf.mxu0
    %v3598 = vadd.f32 0.0, %v3597
    %3599 = vmatmul.f32.gmra.mxu0 %v3450
    %v3600 = vpop.f32.mrf.mxu0
    %v3601 = vadd.f32 0.0, %v3600
    %3602 = vmatmul.f32.gmra.mxu0 %v3451
    %v3603 = vpop.f32.mrf.mxu0
    %v3604 = vadd.f32 0.0, %v3603
    %3605 = vmatmul.f32.gmra.mxu0 %v3452
    %v3606 = vpop.f32.mrf.mxu0
    %v3607 = vadd.f32 0.0, %v3606
    %3608 = vmatmul.f32.gmra.mxu0 %v3453
    %v3609 = vpop.f32.mrf.mxu0
    %v3610 = vadd.f32 0.0, %v3609
    %3611 = vmatmul.f32.gmra.mxu0 %v3454
    %v3612 = vpop.f32.mrf.mxu0
    %v3613 = vadd.f32 0.0, %v3612
    %3614 = vmatmul.f32.gmra.mxu0 %v3455
    %v3615 = vpop.f32.mrf.mxu0
    %v3616 = vadd.f32 0.0, %v3615
    %3617 = vmatmul.f32.gmra.mxu0 %v3456
    %v3618 = vpop.f32.mrf.mxu0
    %v3619 = vadd.f32 0.0, %v3618
    %3620 = vmatmul.f32.gmra.mxu0 %v3457
    %v3621 = vpop.f32.mrf.mxu0
    %v3622 = vadd.f32 0.0, %v3621
    %3623 = vmatmul.f32.gmra.mxu0 %v3458
    %v3624 = vpop.f32.mrf.mxu0
    %v3625 = vadd.f32 0.0, %v3624
    %3626 = vmatmul.f32.gmra.mxu0 %v3459
    %v3627 = vpop.f32.mrf.mxu0
    %v3628 = vadd.f32 0.0, %v3627
    %3629 = vmatmul.f32.gmra.mxu0 %v3460
    %v3630 = vpop.f32.mrf.mxu0
    %v3631 = vadd.f32 0.0, %v3630
    %3632 = vmatmul.f32.gmra.mxu0 %v3461
    %v3633 = vpop.f32.mrf.mxu0
    %v3634 = vadd.f32 0.0, %v3633
    %3635 = vmatmul.f32.gmra.mxu0 %v3462
    %v3636 = vpop.f32.mrf.mxu0
    %v3637 = vadd.f32 0.0, %v3636
    %3638 = vmatmul.f32.gmra.mxu0 %v3463
    %v3639 = vpop.f32.mrf.mxu0
    %v3640 = vadd.f32 0.0, %v3639
    %3641 = vmatmul.f32.gmra.mxu0 %v3464
    %v3642 = vpop.f32.mrf.mxu0
    %v3643 = vadd.f32 0.0, %v3642
    %3644 = vmatmul.f32.gmra.mxu0 %v3465
    %v3645 = vpop.f32.mrf.mxu0
    %v3646 = vadd.f32 0.0, %v3645
    %3647 = vmatmul.f32.gmra.mxu0 %v3466
    %v3648 = vpop.f32.mrf.mxu0
    %v3649 = vadd.f32 0.0, %v3648
    %3650 = vmatmul.f32.gmra.mxu0 %v3471
    %v3651 = vpop.f32.mrf.mxu0
    %v3652 = vadd.f32 0.0, %v3651
    %3653 = vmatmul.f32.gmra.mxu0 %v3472
    %v3654 = vpop.f32.mrf.mxu0
    %v3655 = vadd.f32 0.0, %v3654
    %3656 = vmatmul.f32.gmra.mxu0 %v3473
    %v3657 = vpop.f32.mrf.mxu0
    %v3658 = vadd.f32 0.0, %v3657
    %3659 = vmatmul.f32.gmra.mxu0 %v3474
    %v3660 = vpop.f32.mrf.mxu0
    %v3661 = vadd.f32 0.0, %v3660
    %3662 = vmatmul.f32.gmra.mxu0 %v3475
    %v3663 = vpop.f32.mrf.mxu0
    %v3664 = vadd.f32 0.0, %v3663
    %3665 = vmatmul.f32.gmra.mxu0 %v3476
    %v3666 = vpop.f32.mrf.mxu0
    %v3667 = vadd.f32 0.0, %v3666
    %3668 = vmatmul.f32.gmra.mxu0 %v3477
    %v3669 = vpop.f32.mrf.mxu0
    %v3670 = vadd.f32 0.0, %v3669
    %3671 = vmatmul.f32.gmra.mxu0 %v3478
    %v3672 = vpop.f32.mrf.mxu0
    %v3673 = vadd.f32 0.0, %v3672
    %3674 = vmatmul.f32.gmra.mxu0 %v3479
    %v3675 = vpop.f32.mrf.mxu0
    %v3676 = vadd.f32 0.0, %v3675
    %3677 = vmatmul.f32.gmra.mxu0 %v3480
    %v3678 = vpop.f32.mrf.mxu0
    %v3679 = vadd.f32 0.0, %v3678
    %3680 = vmatmul.f32.gmra.mxu0 %v3481
    %v3681 = vpop.f32.mrf.mxu0
    %v3682 = vadd.f32 0.0, %v3681
    %3683 = vmatmul.f32.gmra.mxu0 %v3482
    %v3684 = vpop.f32.mrf.mxu0
    %v3685 = vadd.f32 0.0, %v3684
    %3686 = vmatmul.f32.gmra.mxu0 %v3483
    %v3687 = vpop.f32.mrf.mxu0
    %v3688 = vadd.f32 0.0, %v3687
    %3689 = vmatmul.f32.gmra.mxu0 %v3484
    %v3690 = vpop.f32.mrf.mxu0
    %v3691 = vadd.f32 0.0, %v3690
    %3692 = vmatmul.f32.gmra.mxu0 %v3485
    %v3693 = vpop.f32.mrf.mxu0
    %v3694 = vadd.f32 0.0, %v3693
    %3695 = vmatmul.f32.gmra.mxu0 %v3486
    %v3696 = vpop.f32.mrf.mxu0
    %v3697 = vadd.f32 0.0, %v3696
    %3698 = vmatmul.f32.gmra.mxu0 %v3487
    %v3699 = vpop.f32.mrf.mxu0
    %v3700 = vadd.f32 0.0, %v3699
    %3701 = vmatmul.f32.gmra.mxu0 %v3488
    %v3702 = vpop.f32.mrf.mxu0
    %v3703 = vadd.f32 0.0, %v3702
    %3704 = vmatmul.f32.gmra.mxu0 %v3489
    %v3705 = vpop.f32.mrf.mxu0
    %v3706 = vadd.f32 0.0, %v3705
    %3707 = vmatmul.f32.gmra.mxu0 %v3490
    %v3708 = vpop.f32.mrf.mxu0
    %v3709 = vadd.f32 0.0, %v3708
    %3710 = vmatmul.f32.gmra.mxu0 %v3491
    %v3711 = vpop.f32.mrf.mxu0
    %v3712 = vadd.f32 0.0, %v3711
    %3713 = vmatmul.f32.gmra.mxu0 %v3492
    %v3714 = vpop.f32.mrf.mxu0
    %v3715 = vadd.f32 0.0, %v3714
    %3716 = vmatmul.f32.gmra.mxu0 %v3493
    %v3717 = vpop.f32.mrf.mxu0
    %v3718 = vadd.f32 0.0, %v3717
    %3719 = vmatmul.f32.gmra.mxu0 %v3494
    %v3720 = vpop.f32.mrf.mxu0
    %v3721 = vadd.f32 0.0, %v3720
    %3722 = vmatmul.f32.gmra.mxu0 %v3495
    %v3723 = vpop.f32.mrf.mxu0
    %v3724 = vadd.f32 0.0, %v3723
    %3725 = vmatmul.f32.gmra.mxu0 %v3496
    %v3726 = vpop.f32.mrf.mxu0
    %v3727 = vadd.f32 0.0, %v3726
    %3728 = vmatmul.f32.gmra.mxu0 %v3497
    %v3729 = vpop.f32.mrf.mxu0
    %v3730 = vadd.f32 0.0, %v3729
    %3731 = vmatmul.f32.gmra.mxu0 %v3498
    %v3732 = vpop.f32.mrf.mxu0
    %v3733 = vadd.f32 0.0, %v3732
    %3734 = vmatmul.f32.gmra.mxu0 %v3499
    %v3735 = vpop.f32.mrf.mxu0
    %v3736 = vadd.f32 0.0, %v3735
    %3737 = vmatmul.f32.gmra.mxu0 %v3500
    %v3738 = vpop.f32.mrf.mxu0
    %v3739 = vadd.f32 0.0, %v3738
    %3740 = vmatmul.f32.gmra.mxu0 %v3501
    %v3741 = vpop.f32.mrf.mxu0
    %v3742 = vadd.f32 0.0, %v3741
    %3743 = vmatmul.f32.gmra.mxu0 %v3502
    %v3744 = vpop.f32.mrf.mxu0
    %v3745 = vadd.f32 0.0, %v3744
    %3746 = vdwg.mxu0
    %3747 = vmatpush.msra.mxu0 %v3520
    %3748 = vmatpush.msra.mxu0 %v3519
    %3749 = vmatpush.msra.mxu0 %v3518
    %3750 = vmatpush.msra.mxu0 %v3517
    %3751 = vmatpush.msra.mxu0 %v3516
    %3752 = vmatpush.msra.mxu0 %v3515
    %3753 = vmatpush.msra.mxu0 %v3514
    %3754 = vmatpush.msra.mxu0 %v3513
    %3755 = vmatpush.msra.mxu0 %v3512
    %3756 = vmatpush.msra.mxu0 %v3511
    %3757 = vmatpush.msra.mxu0 %v3510
    %3758 = vmatpush.msra.mxu0 %v3509
    %3759 = vmatpush.msra.mxu0 %v3508
    %3760 = vmatpush.msra.mxu0 %v3507
    %3761 = vmatpush.msra.mxu0 %v3506
    %3762 = vmatpush.msra.mxu0 %v3505
    %3763 = vmatmul.f32.gmra.mxu0 %v3433
    %v3764 = vpop.f32.mrf.mxu0
    %v3765 = vadd.f32 %v3556, %v3764
    %3766 = vmatmul.f32.gmra.mxu0 %v3434
    %v3767 = vpop.f32.mrf.mxu0
    %v3768 = vadd.f32 %v3559, %v3767
    %3769 = vmatmul.f32.gmra.mxu0 %v3435
    %v3770 = vpop.f32.mrf.mxu0
    %v3771 = vadd.f32 %v3562, %v3770
    %3772 = vmatmul.f32.gmra.mxu0 %v3436
    %v3773 = vpop.f32.mrf.mxu0
    %v3774 = vadd.f32 %v3565, %v3773
    %3775 = vmatmul.f32.gmra.mxu0 %v3437
    %v3776 = vpop.f32.mrf.mxu0
    %v3777 = vadd.f32 %v3568, %v3776
    %3778 = vmatmul.f32.gmra.mxu0 %v3438
    %v3779 = vpop.f32.mrf.mxu0
    %v3780 = vadd.f32 %v3571, %v3779
    %3781 = vmatmul.f32.gmra.mxu0 %v3439
    %v3782 = vpop.f32.mrf.mxu0
    %v3783 = vadd.f32 %v3574, %v3782
    %3784 = vmatmul.f32.gmra.mxu0 %v3440
    %v3785 = vpop.f32.mrf.mxu0
    %v3786 = vadd.f32 %v3577, %v3785
    %3787 = vmatmul.f32.gmra.mxu0 %v3441
    %v3788 = vpop.f32.mrf.mxu0
    %v3789 = vadd.f32 %v3580, %v3788
    %3790 = vmatmul.f32.gmra.mxu0 %v3442
    %v3791 = vpop.f32.mrf.mxu0
    %v3792 = vadd.f32 %v3583, %v3791
    %3793 = vmatmul.f32.gmra.mxu0 %v3443
    %v3794 = vpop.f32.mrf.mxu0
    %v3795 = vadd.f32 %v3586, %v3794
    %3796 = vmatmul.f32.gmra.mxu0 %v3444
    %v3797 = vpop.f32.mrf.mxu0
    %v3798 = vadd.f32 %v3589, %v3797
    %3799 = vmatmul.f32.gmra.mxu0 %v3445
    %v3800 = vpop.f32.mrf.mxu0
    %v3801 = vadd.f32 %v3592, %v3800
    %3802 = vmatmul.f32.gmra.mxu0 %v3446
    %v3803 = vpop.f32.mrf.mxu0
    %v3804 = vadd.f32 %v3595, %v3803
    %3805 = vmatmul.f32.gmra.mxu0 %v3447
    %v3806 = vpop.f32.mrf.mxu0
    %v3807 = vadd.f32 %v3598, %v3806
    %3808 = vmatmul.f32.gmra.mxu0 %v3448
    %v3809 = vpop.f32.mrf.mxu0
    %v3810 = vadd.f32 %v3601, %v3809
    %3811 = vmatmul.f32.gmra.mxu0 %v3449
    %v3812 = vpop.f32.mrf.mxu0
    %v3813 = vadd.f32 %v3604, %v3812
    %3814 = vmatmul.f32.gmra.mxu0 %v3450
    %v3815 = vpop.f32.mrf.mxu0
    %v3816 = vadd.f32 %v3607, %v3815
    %3817 = vmatmul.f32.gmra.mxu0 %v3451
    %v3818 = vpop.f32.mrf.mxu0
    %v3819 = vadd.f32 %v3610, %v3818
    %3820 = vmatmul.f32.gmra.mxu0 %v3452
    %v3821 = vpop.f32.mrf.mxu0
    %v3822 = vadd.f32 %v3613, %v3821
    %3823 = vmatmul.f32.gmra.mxu0 %v3453
    %v3824 = vpop.f32.mrf.mxu0
    %v3825 = vadd.f32 %v3616, %v3824
    %3826 = vmatmul.f32.gmra.mxu0 %v3454
    %v3827 = vpop.f32.mrf.mxu0
    %v3828 = vadd.f32 %v3619, %v3827
    %3829 = vmatmul.f32.gmra.mxu0 %v3455
    %v3830 = vpop.f32.mrf.mxu0
    %v3831 = vadd.f32 %v3622, %v3830
    %3832 = vmatmul.f32.gmra.mxu0 %v3456
    %v3833 = vpop.f32.mrf.mxu0
    %v3834 = vadd.f32 %v3625, %v3833
    %3835 = vmatmul.f32.gmra.mxu0 %v3457
    %v3836 = vpop.f32.mrf.mxu0
    %v3837 = vadd.f32 %v3628, %v3836
    %3838 = vmatmul.f32.gmra.mxu0 %v3458
    %v3839 = vpop.f32.mrf.mxu0
    %v3840 = vadd.f32 %v3631, %v3839
    %3841 = vmatmul.f32.gmra.mxu0 %v3459
    %v3842 = vpop.f32.mrf.mxu0
    %v3843 = vadd.f32 %v3634, %v3842
    %3844 = vmatmul.f32.gmra.mxu0 %v3460
    %v3845 = vpop.f32.mrf.mxu0
    %v3846 = vadd.f32 %v3637, %v3845
    %3847 = vmatmul.f32.gmra.mxu0 %v3461
    %v3848 = vpop.f32.mrf.mxu0
    %v3849 = vadd.f32 %v3640, %v3848
    %3850 = vmatmul.f32.gmra.mxu0 %v3462
    %v3851 = vpop.f32.mrf.mxu0
    %v3852 = vadd.f32 %v3643, %v3851
    %3853 = vmatmul.f32.gmra.mxu0 %v3463
    %v3854 = vpop.f32.mrf.mxu0
    %v3855 = vadd.f32 %v3646, %v3854
    %3856 = vmatmul.f32.gmra.mxu0 %v3464
    %v3857 = vpop.f32.mrf.mxu0
    %v3858 = vadd.f32 %v3649, %v3857
    %3859 = vmatmul.f32.gmra.mxu0 %v3469
    %v3860 = vpop.f32.mrf.mxu0
    %v3861 = vadd.f32 %v3652, %v3860
    %3862 = vmatmul.f32.gmra.mxu0 %v3470
    %v3863 = vpop.f32.mrf.mxu0
    %v3864 = vadd.f32 %v3655, %v3863
    %3865 = vmatmul.f32.gmra.mxu0 %v3471
    %v3866 = vpop.f32.mrf.mxu0
    %v3867 = vadd.f32 %v3658, %v3866
    %3868 = vmatmul.f32.gmra.mxu0 %v3472
    %v3869 = vpop.f32.mrf.mxu0
    %v3870 = vadd.f32 %v3661, %v3869
    %3871 = vmatmul.f32.gmra.mxu0 %v3473
    %v3872 = vpop.f32.mrf.mxu0
    %v3873 = vadd.f32 %v3664, %v3872
    %3874 = vmatmul.f32.gmra.mxu0 %v3474
    %v3875 = vpop.f32.mrf.mxu0
    %v3876 = vadd.f32 %v3667, %v3875
    %3877 = vmatmul.f32.gmra.mxu0 %v3475
    %v3878 = vpop.f32.mrf.mxu0
    %v3879 = vadd.f32 %v3670, %v3878
    %3880 = vmatmul.f32.gmra.mxu0 %v3476
    %v3881 = vpop.f32.mrf.mxu0
    %v3882 = vadd.f32 %v3673, %v3881
    %3883 = vmatmul.f32.gmra.mxu0 %v3477
    %v3884 = vpop.f32.mrf.mxu0
    %v3885 = vadd.f32 %v3676, %v3884
    %3886 = vmatmul.f32.gmra.mxu0 %v3478
    %v3887 = vpop.f32.mrf.mxu0
    %v3888 = vadd.f32 %v3679, %v3887
    %3889 = vmatmul.f32.gmra.mxu0 %v3479
    %v3890 = vpop.f32.mrf.mxu0
    %v3891 = vadd.f32 %v3682, %v3890
    %3892 = vmatmul.f32.gmra.mxu0 %v3480
    %v3893 = vpop.f32.mrf.mxu0
    %v3894 = vadd.f32 %v3685, %v3893
    %3895 = vmatmul.f32.gmra.mxu0 %v3481
    %v3896 = vpop.f32.mrf.mxu0
    %v3897 = vadd.f32 %v3688, %v3896
    %3898 = vmatmul.f32.gmra.mxu0 %v3482
    %v3899 = vpop.f32.mrf.mxu0
    %v3900 = vadd.f32 %v3691, %v3899
    %3901 = vmatmul.f32.gmra.mxu0 %v3483
    %v3902 = vpop.f32.mrf.mxu0
    %v3903 = vadd.f32 %v3694, %v3902
    %3904 = vmatmul.f32.gmra.mxu0 %v3484
    %v3905 = vpop.f32.mrf.mxu0
    %v3906 = vadd.f32 %v3697, %v3905
    %3907 = vmatmul.f32.gmra.mxu0 %v3485
    %v3908 = vpop.f32.mrf.mxu0
    %v3909 = vadd.f32 %v3700, %v3908
    %3910 = vmatmul.f32.gmra.mxu0 %v3486
    %v3911 = vpop.f32.mrf.mxu0
    %v3912 = vadd.f32 %v3703, %v3911
    %3913 = vmatmul.f32.gmra.mxu0 %v3487
    %v3914 = vpop.f32.mrf.mxu0
    %v3915 = vadd.f32 %v3706, %v3914
    %3916 = vmatmul.f32.gmra.mxu0 %v3488
    %v3917 = vpop.f32.mrf.mxu0
    %v3918 = vadd.f32 %v3709, %v3917
    %3919 = vmatmul.f32.gmra.mxu0 %v3489
    %v3920 = vpop.f32.mrf.mxu0
    %v3921 = vadd.f32 %v3712, %v3920
    %3922 = vmatmul.f32.gmra.mxu0 %v3490
    %v3923 = vpop.f32.mrf.mxu0
    %v3924 = vadd.f32 %v3715, %v3923
    %3925 = vmatmul.f32.gmra.mxu0 %v3491
    %v3926 = vpop.f32.mrf.mxu0
    %v3927 = vadd.f32 %v3718, %v3926
    %3928 = vmatmul.f32.gmra.mxu0 %v3492
    %v3929 = vpop.f32.mrf.mxu0
    %v3930 = vadd.f32 %v3721, %v3929
    %3931 = vmatmul.f32.gmra.mxu0 %v3493
    %v3932 = vpop.f32.mrf.mxu0
    %v3933 = vadd.f32 %v3724, %v3932
    %3934 = vmatmul.f32.gmra.mxu0 %v3494
    %v3935 = vpop.f32.mrf.mxu0
    %v3936 = vadd.f32 %v3727, %v3935
    %3937 = vmatmul.f32.gmra.mxu0 %v3495
    %v3938 = vpop.f32.mrf.mxu0
    %v3939 = vadd.f32 %v3730, %v3938
    %3940 = vmatmul.f32.gmra.mxu0 %v3496
    %v3941 = vpop.f32.mrf.mxu0
    %v3942 = vadd.f32 %v3733, %v3941
    %3943 = vmatmul.f32.gmra.mxu0 %v3497
    %v3944 = vpop.f32.mrf.mxu0
    %v3945 = vadd.f32 %v3736, %v3944
    %3946 = vmatmul.f32.gmra.mxu0 %v3498
    %v3947 = vpop.f32.mrf.mxu0
    %v3948 = vadd.f32 %v3739, %v3947
    %3949 = vmatmul.f32.gmra.mxu0 %v3499
    %v3950 = vpop.f32.mrf.mxu0
    %v3951 = vadd.f32 %v3742, %v3950
    %3952 = vmatmul.f32.gmra.mxu0 %v3500
    %v3953 = vpop.f32.mrf.mxu0
    %v3954 = vadd.f32 %v3745, %v3953
    %3955 = vdwg.mxu0
    %s3956 = scalar_lea.vmem [#allocation6], 768
    %v3957 = vld [vmem:[%s3956] sm:$0xff]
    %v3958 = vld [vmem:[%s3956 + $0x8] sm:$0xff]
    %v3959 = vld [vmem:[%s3956 + $0x10] sm:$0xff]
    %v3960 = vld [vmem:[%s3956 + $0x18] sm:$0xff]
    %v3961 = vld [vmem:[%s3956 + $0x20] sm:$0xff]
    %v3962 = vld [vmem:[%s3956 + $0x28] sm:$0xff]
    %v3963 = vld [vmem:[%s3956 + $0x30] sm:$0xff]
    %v3964 = vld [vmem:[%s3956 + $0x38] sm:$0xff]
    %v3965 = vld [vmem:[%s3956 + $0x40] sm:$0xff]
    %v3966 = vld [vmem:[%s3956 + $0x48] sm:$0xff]
    %v3967 = vld [vmem:[%s3956 + $0x50] sm:$0xff]
    %v3968 = vld [vmem:[%s3956 + $0x58] sm:$0xff]
    %v3969 = vld [vmem:[%s3956 + $0x60] sm:$0xff]
    %v3970 = vld [vmem:[%s3956 + $0x68] sm:$0xff]
    %v3971 = vld [vmem:[%s3956 + $0x70] sm:$0xff]
    %v3972 = vld [vmem:[%s3956 + $0x78] sm:$0xff]
    %3973 = vmatpush.msra.mxu0 %v3972
    %3974 = vmatpush.msra.mxu0 %v3971
    %3975 = vmatpush.msra.mxu0 %v3970
    %3976 = vmatpush.msra.mxu0 %v3969
    %3977 = vmatpush.msra.mxu0 %v3968
    %3978 = vmatpush.msra.mxu0 %v3967
    %3979 = vmatpush.msra.mxu0 %v3966
    %3980 = vmatpush.msra.mxu0 %v3965
    %3981 = vmatpush.msra.mxu0 %v3964
    %3982 = vmatpush.msra.mxu0 %v3963
    %3983 = vmatpush.msra.mxu0 %v3962
    %3984 = vmatpush.msra.mxu0 %v3961
    %3985 = vmatpush.msra.mxu0 %v3960
    %3986 = vmatpush.msra.mxu0 %v3959
    %3987 = vmatpush.msra.mxu0 %v3958
    %3988 = vmatpush.msra.mxu0 %v3957
    %3989 = vmatmul.f32.gmra.mxu0 %v3437
    %v3990 = vpop.f32.mrf.mxu0
    %v3991 = vadd.f32 0.0, %v3990
    %3992 = vmatmul.f32.gmra.mxu0 %v3438
    %v3993 = vpop.f32.mrf.mxu0
    %v3994 = vadd.f32 0.0, %v3993
    %3995 = vmatmul.f32.gmra.mxu0 %v3439
    %v3996 = vpop.f32.mrf.mxu0
    %v3997 = vadd.f32 0.0, %v3996
    %3998 = vmatmul.f32.gmra.mxu0 %v3440
    %v3999 = vpop.f32.mrf.mxu0
    %v4000 = vadd.f32 0.0, %v3999
    %4001 = vmatmul.f32.gmra.mxu0 %v3441
    %v4002 = vpop.f32.mrf.mxu0
    %v4003 = vadd.f32 0.0, %v4002
    %4004 = vmatmul.f32.gmra.mxu0 %v3442
    %v4005 = vpop.f32.mrf.mxu0
    %v4006 = vadd.f32 0.0, %v4005
    %4007 = vmatmul.f32.gmra.mxu0 %v3443
    %v4008 = vpop.f32.mrf.mxu0
    %v4009 = vadd.f32 0.0, %v4008
    %4010 = vmatmul.f32.gmra.mxu0 %v3444
    %v4011 = vpop.f32.mrf.mxu0
    %v4012 = vadd.f32 0.0, %v4011
    %4013 = vmatmul.f32.gmra.mxu0 %v3445
    %v4014 = vpop.f32.mrf.mxu0
    %v4015 = vadd.f32 0.0, %v4014
    %4016 = vmatmul.f32.gmra.mxu0 %v3446
    %v4017 = vpop.f32.mrf.mxu0
    %v4018 = vadd.f32 0.0, %v4017
    %4019 = vmatmul.f32.gmra.mxu0 %v3447
    %v4020 = vpop.f32.mrf.mxu0
    %v4021 = vadd.f32 0.0, %v4020
    %4022 = vmatmul.f32.gmra.mxu0 %v3448
    %v4023 = vpop.f32.mrf.mxu0
    %v4024 = vadd.f32 0.0, %v4023
    %4025 = vmatmul.f32.gmra.mxu0 %v3449
    %v4026 = vpop.f32.mrf.mxu0
    %v4027 = vadd.f32 0.0, %v4026
    %4028 = vmatmul.f32.gmra.mxu0 %v3450
    %v4029 = vpop.f32.mrf.mxu0
    %v4030 = vadd.f32 0.0, %v4029
    %4031 = vmatmul.f32.gmra.mxu0 %v3451
    %v4032 = vpop.f32.mrf.mxu0
    %v4033 = vadd.f32 0.0, %v4032
    %4034 = vmatmul.f32.gmra.mxu0 %v3452
    %v4035 = vpop.f32.mrf.mxu0
    %v4036 = vadd.f32 0.0, %v4035
    %4037 = vmatmul.f32.gmra.mxu0 %v3453
    %v4038 = vpop.f32.mrf.mxu0
    %v4039 = vadd.f32 0.0, %v4038
    %4040 = vmatmul.f32.gmra.mxu0 %v3454
    %v4041 = vpop.f32.mrf.mxu0
    %v4042 = vadd.f32 0.0, %v4041
    %4043 = vmatmul.f32.gmra.mxu0 %v3455
    %v4044 = vpop.f32.mrf.mxu0
    %v4045 = vadd.f32 0.0, %v4044
    %4046 = vmatmul.f32.gmra.mxu0 %v3456
    %v4047 = vpop.f32.mrf.mxu0
    %v4048 = vadd.f32 0.0, %v4047
    %4049 = vmatmul.f32.gmra.mxu0 %v3457
    %v4050 = vpop.f32.mrf.mxu0
    %v4051 = vadd.f32 0.0, %v4050
    %4052 = vmatmul.f32.gmra.mxu0 %v3458
    %v4053 = vpop.f32.mrf.mxu0
    %v4054 = vadd.f32 0.0, %v4053
    %4055 = vmatmul.f32.gmra.mxu0 %v3459
    %v4056 = vpop.f32.mrf.mxu0
    %v4057 = vadd.f32 0.0, %v4056
    %4058 = vmatmul.f32.gmra.mxu0 %v3460
    %v4059 = vpop.f32.mrf.mxu0
    %v4060 = vadd.f32 0.0, %v4059
    %4061 = vmatmul.f32.gmra.mxu0 %v3461
    %v4062 = vpop.f32.mrf.mxu0
    %v4063 = vadd.f32 0.0, %v4062
    %4064 = vmatmul.f32.gmra.mxu0 %v3462
    %v4065 = vpop.f32.mrf.mxu0
    %v4066 = vadd.f32 0.0, %v4065
    %4067 = vmatmul.f32.gmra.mxu0 %v3463
    %v4068 = vpop.f32.mrf.mxu0
    %v4069 = vadd.f32 0.0, %v4068
    %4070 = vmatmul.f32.gmra.mxu0 %v3464
    %v4071 = vpop.f32.mrf.mxu0
    %v4072 = vadd.f32 0.0, %v4071
    %4073 = vmatmul.f32.gmra.mxu0 %v3465
    %v4074 = vpop.f32.mrf.mxu0
    %v4075 = vadd.f32 0.0, %v4074
    %4076 = vmatmul.f32.gmra.mxu0 %v3466
    %v4077 = vpop.f32.mrf.mxu0
    %v4078 = vadd.f32 0.0, %v4077
    %4079 = vmatmul.f32.gmra.mxu0 %v3467
    %v4080 = vpop.f32.mrf.mxu0
    %v4081 = vadd.f32 0.0, %v4080
    %4082 = vmatmul.f32.gmra.mxu0 %v3468
    %v4083 = vpop.f32.mrf.mxu0
    %v4084 = vadd.f32 0.0, %v4083
    %4085 = vmatmul.f32.gmra.mxu0 %v3473
    %v4086 = vpop.f32.mrf.mxu0
    %v4087 = vadd.f32 0.0, %v4086
    %4088 = vmatmul.f32.gmra.mxu0 %v3474
    %v4089 = vpop.f32.mrf.mxu0
    %v4090 = vadd.f32 0.0, %v4089
    %4091 = vmatmul.f32.gmra.mxu0 %v3475
    %v4092 = vpop.f32.mrf.mxu0
    %v4093 = vadd.f32 0.0, %v4092
    %4094 = vmatmul.f32.gmra.mxu0 %v3476
    %v4095 = vpop.f32.mrf.mxu0
    %v4096 = vadd.f32 0.0, %v4095
    %4097 = vmatmul.f32.gmra.mxu0 %v3477
    %v4098 = vpop.f32.mrf.mxu0
    %v4099 = vadd.f32 0.0, %v4098
    %4100 = vmatmul.f32.gmra.mxu0 %v3478
    %v4101 = vpop.f32.mrf.mxu0
    %v4102 = vadd.f32 0.0, %v4101
    %4103 = vmatmul.f32.gmra.mxu0 %v3479
    %v4104 = vpop.f32.mrf.mxu0
    %v4105 = vadd.f32 0.0, %v4104
    %4106 = vmatmul.f32.gmra.mxu0 %v3480
    %v4107 = vpop.f32.mrf.mxu0
    %v4108 = vadd.f32 0.0, %v4107
    %4109 = vmatmul.f32.gmra.mxu0 %v3481
    %v4110 = vpop.f32.mrf.mxu0
    %v4111 = vadd.f32 0.0, %v4110
    %4112 = vmatmul.f32.gmra.mxu0 %v3482
    %v4113 = vpop.f32.mrf.mxu0
    %v4114 = vadd.f32 0.0, %v4113
    %4115 = vmatmul.f32.gmra.mxu0 %v3483
    %v4116 = vpop.f32.mrf.mxu0
    %v4117 = vadd.f32 0.0, %v4116
    %4118 = vmatmul.f32.gmra.mxu0 %v3484
    %v4119 = vpop.f32.mrf.mxu0
    %v4120 = vadd.f32 0.0, %v4119
    %4121 = vmatmul.f32.gmra.mxu0 %v3485
    %v4122 = vpop.f32.mrf.mxu0
    %v4123 = vadd.f32 0.0, %v4122
    %4124 = vmatmul.f32.gmra.mxu0 %v3486
    %v4125 = vpop.f32.mrf.mxu0
    %v4126 = vadd.f32 0.0, %v4125
    %4127 = vmatmul.f32.gmra.mxu0 %v3487
    %v4128 = vpop.f32.mrf.mxu0
    %v4129 = vadd.f32 0.0, %v4128
    %4130 = vmatmul.f32.gmra.mxu0 %v3488
    %v4131 = vpop.f32.mrf.mxu0
    %v4132 = vadd.f32 0.0, %v4131
    %4133 = vmatmul.f32.gmra.mxu0 %v3489
    %v4134 = vpop.f32.mrf.mxu0
    %v4135 = vadd.f32 0.0, %v4134
    %4136 = vmatmul.f32.gmra.mxu0 %v3490
    %v4137 = vpop.f32.mrf.mxu0
    %v4138 = vadd.f32 0.0, %v4137
    %4139 = vmatmul.f32.gmra.mxu0 %v3491
    %v4140 = vpop.f32.mrf.mxu0
    %v4141 = vadd.f32 0.0, %v4140
    %4142 = vmatmul.f32.gmra.mxu0 %v3492
    %v4143 = vpop.f32.mrf.mxu0
    %v4144 = vadd.f32 0.0, %v4143
    %4145 = vmatmul.f32.gmra.mxu0 %v3493
    %v4146 = vpop.f32.mrf.mxu0
    %v4147 = vadd.f32 0.0, %v4146
    %4148 = vmatmul.f32.gmra.mxu0 %v3494
    %v4149 = vpop.f32.mrf.mxu0
    %v4150 = vadd.f32 0.0, %v4149
    %4151 = vmatmul.f32.gmra.mxu0 %v3495
    %v4152 = vpop.f32.mrf.mxu0
    %v4153 = vadd.f32 0.0, %v4152
    %4154 = vmatmul.f32.gmra.mxu0 %v3496
    %v4155 = vpop.f32.mrf.mxu0
    %v4156 = vadd.f32 0.0, %v4155
    %4157 = vmatmul.f32.gmra.mxu0 %v3497
    %v4158 = vpop.f32.mrf.mxu0
    %v4159 = vadd.f32 0.0, %v4158
    %4160 = vmatmul.f32.gmra.mxu0 %v3498
    %v4161 = vpop.f32.mrf.mxu0
    %v4162 = vadd.f32 0.0, %v4161
    %4163 = vmatmul.f32.gmra.mxu0 %v3499
    %v4164 = vpop.f32.mrf.mxu0
    %v4165 = vadd.f32 0.0, %v4164
    %4166 = vmatmul.f32.gmra.mxu0 %v3500
    %v4167 = vpop.f32.mrf.mxu0
    %v4168 = vadd.f32 0.0, %v4167
    %4169 = vmatmul.f32.gmra.mxu0 %v3501
    %v4170 = vpop.f32.mrf.mxu0
    %v4171 = vadd.f32 0.0, %v4170
    %4172 = vmatmul.f32.gmra.mxu0 %v3502
    %v4173 = vpop.f32.mrf.mxu0
    %v4174 = vadd.f32 0.0, %v4173
    %4175 = vmatmul.f32.gmra.mxu0 %v3503
    %v4176 = vpop.f32.mrf.mxu0
    %v4177 = vadd.f32 0.0, %v4176
    %4178 = vmatmul.f32.gmra.mxu0 %v3504
    %v4179 = vpop.f32.mrf.mxu0
    %v4180 = vadd.f32 0.0, %v4179
    %4181 = vdwg.mxu0
    %v4182 = vadd.f32 %v3765, %v3991
    %v4183 = vadd.f32 %v3768, %v3994
    %v4184 = vadd.f32 %v3771, %v3997
    %v4185 = vadd.f32 %v3774, %v4000
    %v4186 = vadd.f32 %v3777, %v4003
    %v4187 = vadd.f32 %v3780, %v4006
    %v4188 = vadd.f32 %v3783, %v4009
    %v4189 = vadd.f32 %v3786, %v4012
    %v4190 = vadd.f32 %v3789, %v4015
    %v4191 = vadd.f32 %v3792, %v4018
    %v4192 = vadd.f32 %v3795, %v4021
    %v4193 = vadd.f32 %v3798, %v4024
    %v4194 = vadd.f32 %v3801, %v4027
    %v4195 = vadd.f32 %v3804, %v4030
    %v4196 = vadd.f32 %v3807, %v4033
    %v4197 = vadd.f32 %v3810, %v4036
    %v4198 = vadd.f32 %v3813, %v4039
    %v4199 = vadd.f32 %v3816, %v4042
    %v4200 = vadd.f32 %v3819, %v4045
    %v4201 = vadd.f32 %v3822, %v4048
    %v4202 = vadd.f32 %v3825, %v4051
    %v4203 = vadd.f32 %v3828, %v4054
    %v4204 = vadd.f32 %v3831, %v4057
    %v4205 = vadd.f32 %v3834, %v4060
    %v4206 = vadd.f32 %v3837, %v4063
    %v4207 = vadd.f32 %v3840, %v4066
    %v4208 = vadd.f32 %v3843, %v4069
    %v4209 = vadd.f32 %v3846, %v4072
    %v4210 = vadd.f32 %v3849, %v4075
    %v4211 = vadd.f32 %v3852, %v4078
    %v4212 = vadd.f32 %v3855, %v4081
    %v4213 = vadd.f32 %v3858, %v4084
    %v4214 = vadd.f32 %v3861, %v4087
    %v4215 = vadd.f32 %v3864, %v4090
    %v4216 = vadd.f32 %v3867, %v4093
    %v4217 = vadd.f32 %v3870, %v4096
    %v4218 = vadd.f32 %v3873, %v4099
    %v4219 = vadd.f32 %v3876, %v4102
    %v4220 = vadd.f32 %v3879, %v4105
    %v4221 = vadd.f32 %v3882, %v4108
    %v4222 = vadd.f32 %v3885, %v4111
    %v4223 = vadd.f32 %v3888, %v4114
    %v4224 = vadd.f32 %v3891, %v4117
    %v4225 = vadd.f32 %v3894, %v4120
    %v4226 = vadd.f32 %v3897, %v4123
    %v4227 = vadd.f32 %v3900, %v4126
    %v4228 = vadd.f32 %v3903, %v4129
    %v4229 = vadd.f32 %v3906, %v4132
    %v4230 = vadd.f32 %v3909, %v4135
    %v4231 = vadd.f32 %v3912, %v4138
    %v4232 = vadd.f32 %v3915, %v4141
    %v4233 = vadd.f32 %v3918, %v4144
    %v4234 = vadd.f32 %v3921, %v4147
    %v4235 = vadd.f32 %v3924, %v4150
    %v4236 = vadd.f32 %v3927, %v4153
    %v4237 = vadd.f32 %v3930, %v4156
    %v4238 = vadd.f32 %v3933, %v4159
    %v4239 = vadd.f32 %v3936, %v4162
    %v4240 = vadd.f32 %v3939, %v4165
    %v4241 = vadd.f32 %v3942, %v4168
    %v4242 = vadd.f32 %v3945, %v4171
    %v4243 = vadd.f32 %v3948, %v4174
    %v4244 = vadd.f32 %v3951, %v4177
    %v4245 = vadd.f32 %v3954, %v4180
    %v4246 = vld [vmem:[#allocation3 + $0x1] sm:$0xff]
    %v4247 = vld [vmem:[#allocation3 + $0x9] sm:$0xff]
    %v4248 = vld [vmem:[#allocation3 + $0x19] sm:$0xff]
    %v4249 = vld [vmem:[#allocation3 + $0x21] sm:$0xff]
    %v4250 = vld [vmem:[#allocation3 + $0x31] sm:$0xff]
    %v4251 = vld [vmem:[#allocation3 + $0x39] sm:$0xff]
    %v4252 = vld [vmem:[#allocation3 + $0x49] sm:$0xff]
    %v4253 = vld [vmem:[#allocation3 + $0x51] sm:$0xff]
    %v4254 = vld [vmem:[#allocation3 + $0x61] sm:$0xff]
    %v4255 = vld [vmem:[#allocation3 + $0x69] sm:$0xff]
    %v4256 = vld [vmem:[#allocation3 + $0x79] sm:$0xff]
    %v4257 = vld [vmem:[#allocation3 + $0x81] sm:$0xff]
    %v4258 = vld [vmem:[#allocation3 + $0x91] sm:$0xff]
    %v4259 = vld [vmem:[#allocation3 + $0x99] sm:$0xff]
    %v4260 = vld [vmem:[#allocation3 + $0xa9] sm:$0xff]
    %v4261 = vld [vmem:[#allocation3 + $0xb1] sm:$0xff]
    %v4262 = vld [vmem:[#allocation3 + $0xc1] sm:$0xff]
    %v4263 = vld [vmem:[#allocation3 + $0xc9] sm:$0xff]
    %v4264 = vld [vmem:[#allocation3 + $0xd9] sm:$0xff]
    %v4265 = vld [vmem:[#allocation3 + $0xe1] sm:$0xff]
    %v4266 = vld [vmem:[#allocation3 + $0xf1] sm:$0xff]
    %v4267 = vld [vmem:[#allocation3 + $0xf9] sm:$0xff]
    %v4268 = vld [vmem:[#allocation3 + $0x109] sm:$0xff]
    %v4269 = vld [vmem:[#allocation3 + $0x111] sm:$0xff]
    %v4270 = vld [vmem:[#allocation3 + $0x121] sm:$0xff]
    %v4271 = vld [vmem:[#allocation3 + $0x129] sm:$0xff]
    %v4272 = vld [vmem:[#allocation3 + $0x139] sm:$0xff]
    %v4273 = vld [vmem:[#allocation3 + $0x141] sm:$0xff]
    %v4274 = vld [vmem:[#allocation3 + $0x151] sm:$0xff]
    %v4275 = vld [vmem:[#allocation3 + $0x159] sm:$0xff]
    %v4276 = vld [vmem:[#allocation3 + $0x169] sm:$0xff]
    %v4277 = vld [vmem:[#allocation3 + $0x171] sm:$0xff]
    %v4278 = vld [vmem:[#allocation3 + $0x181] sm:$0xff]
    %v4279 = vld [vmem:[#allocation3 + $0x189] sm:$0xff]
    %v4280 = vld [vmem:[#allocation3 + $0x199] sm:$0xff]
    %v4281 = vld [vmem:[#allocation3 + $0x1a1] sm:$0xff]
    %v4282 = vld [vmem:[#allocation3 + $0x1b1] sm:$0xff]
    %v4283 = vld [vmem:[#allocation3 + $0x1b9] sm:$0xff]
    %v4284 = vld [vmem:[#allocation3 + $0x1c9] sm:$0xff]
    %v4285 = vld [vmem:[#allocation3 + $0x1d1] sm:$0xff]
    %v4286 = vld [vmem:[#allocation3 + $0x1e1] sm:$0xff]
    %v4287 = vld [vmem:[#allocation3 + $0x1e9] sm:$0xff]
    %v4288 = vld [vmem:[#allocation3 + $0x1f9] sm:$0xff]
    %v4289 = vld [vmem:[#allocation3 + $0x201] sm:$0xff]
    %v4290 = vld [vmem:[#allocation3 + $0x211] sm:$0xff]
    %v4291 = vld [vmem:[#allocation3 + $0x219] sm:$0xff]
    %v4292 = vld [vmem:[#allocation3 + $0x229] sm:$0xff]
    %v4293 = vld [vmem:[#allocation3 + $0x231] sm:$0xff]
    %v4294 = vld [vmem:[#allocation3 + $0x241] sm:$0xff]
    %v4295 = vld [vmem:[#allocation3 + $0x249] sm:$0xff]
    %v4296 = vld [vmem:[#allocation3 + $0x259] sm:$0xff]
    %v4297 = vld [vmem:[#allocation3 + $0x261] sm:$0xff]
    %v4298 = vld [vmem:[#allocation3 + $0x271] sm:$0xff]
    %v4299 = vld [vmem:[#allocation3 + $0x279] sm:$0xff]
    %v4300 = vld [vmem:[#allocation3 + $0x289] sm:$0xff]
    %v4301 = vld [vmem:[#allocation3 + $0x291] sm:$0xff]
    %v4302 = vld [vmem:[#allocation3 + $0x2a1] sm:$0xff]
    %v4303 = vld [vmem:[#allocation3 + $0x2a9] sm:$0xff]
    %v4304 = vld [vmem:[#allocation3 + $0x2b9] sm:$0xff]
    %v4305 = vld [vmem:[#allocation3 + $0x2c1] sm:$0xff]
    %v4306 = vld [vmem:[#allocation3 + $0x2d1] sm:$0xff]
    %v4307 = vld [vmem:[#allocation3 + $0x2d9] sm:$0xff]
    %v4308 = vld [vmem:[#allocation3 + $0x2e9] sm:$0xff]
    %v4309 = vld [vmem:[#allocation3 + $0x2f1] sm:$0xff]
    %v4310 = vld [vmem:[#allocation3 + $0x301] sm:$0xff]
    %v4311 = vld [vmem:[#allocation3 + $0x309] sm:$0xff]
    %v4312 = vld [vmem:[#allocation3 + $0x319] sm:$0xff]
    %v4313 = vld [vmem:[#allocation3 + $0x321] sm:$0xff]
    %v4314 = vld [vmem:[#allocation3 + $0x331] sm:$0xff]
    %v4315 = vld [vmem:[#allocation3 + $0x339] sm:$0xff]
    %v4316 = vld [vmem:[#allocation3 + $0x349] sm:$0xff]
    %v4317 = vld [vmem:[#allocation3 + $0x351] sm:$0xff]
    %s4318 = scalar_lea.vmem [#allocation6], 128
    %v4319 = vld [vmem:[%s4318] sm:$0xff]
    %v4320 = vld [vmem:[%s4318 + $0x8] sm:$0xff]
    %v4321 = vld [vmem:[%s4318 + $0x10] sm:$0xff]
    %v4322 = vld [vmem:[%s4318 + $0x18] sm:$0xff]
    %v4323 = vld [vmem:[%s4318 + $0x20] sm:$0xff]
    %v4324 = vld [vmem:[%s4318 + $0x28] sm:$0xff]
    %v4325 = vld [vmem:[%s4318 + $0x30] sm:$0xff]
    %v4326 = vld [vmem:[%s4318 + $0x38] sm:$0xff]
    %v4327 = vld [vmem:[%s4318 + $0x40] sm:$0xff]
    %v4328 = vld [vmem:[%s4318 + $0x48] sm:$0xff]
    %v4329 = vld [vmem:[%s4318 + $0x50] sm:$0xff]
    %v4330 = vld [vmem:[%s4318 + $0x58] sm:$0xff]
    %v4331 = vld [vmem:[%s4318 + $0x60] sm:$0xff]
    %v4332 = vld [vmem:[%s4318 + $0x68] sm:$0xff]
    %v4333 = vld [vmem:[%s4318 + $0x70] sm:$0xff]
    %v4334 = vld [vmem:[%s4318 + $0x78] sm:$0xff]
    %4335 = vmatpush.msra.mxu0 %v4334
    %4336 = vmatpush.msra.mxu0 %v4333
    %4337 = vmatpush.msra.mxu0 %v4332
    %4338 = vmatpush.msra.mxu0 %v4331
    %4339 = vmatpush.msra.mxu0 %v4330
    %4340 = vmatpush.msra.mxu0 %v4329
    %4341 = vmatpush.msra.mxu0 %v4328
    %4342 = vmatpush.msra.mxu0 %v4327
    %4343 = vmatpush.msra.mxu0 %v4326
    %4344 = vmatpush.msra.mxu0 %v4325
    %4345 = vmatpush.msra.mxu0 %v4324
    %4346 = vmatpush.msra.mxu0 %v4323
    %4347 = vmatpush.msra.mxu0 %v4322
    %4348 = vmatpush.msra.mxu0 %v4321
    %4349 = vmatpush.msra.mxu0 %v4320
    %4350 = vmatpush.msra.mxu0 %v4319
    %4351 = vmatmul.f32.gmra.mxu0 %v4246
    %v4352 = vpop.f32.mrf.mxu0
    %v4353 = vadd.f32 0.0, %v4352
    %4354 = vmatmul.f32.gmra.mxu0 %v4247
    %v4355 = vpop.f32.mrf.mxu0
    %v4356 = vadd.f32 0.0, %v4355
    %4357 = vmatmul.f32.gmra.mxu0 %v4248
    %v4358 = vpop.f32.mrf.mxu0
    %v4359 = vadd.f32 0.0, %v4358
    %4360 = vmatmul.f32.gmra.mxu0 %v4249
    %v4361 = vpop.f32.mrf.mxu0
    %v4362 = vadd.f32 0.0, %v4361
    %4363 = vmatmul.f32.gmra.mxu0 %v4250
    %v4364 = vpop.f32.mrf.mxu0
    %v4365 = vadd.f32 0.0, %v4364
    %4366 = vmatmul.f32.gmra.mxu0 %v4251
    %v4367 = vpop.f32.mrf.mxu0
    %v4368 = vadd.f32 0.0, %v4367
    %4369 = vmatmul.f32.gmra.mxu0 %v4252
    %v4370 = vpop.f32.mrf.mxu0
    %v4371 = vadd.f32 0.0, %v4370
    %4372 = vmatmul.f32.gmra.mxu0 %v4253
    %v4373 = vpop.f32.mrf.mxu0
    %v4374 = vadd.f32 0.0, %v4373
    %4375 = vmatmul.f32.gmra.mxu0 %v4254
    %v4376 = vpop.f32.mrf.mxu0
    %v4377 = vadd.f32 0.0, %v4376
    %4378 = vmatmul.f32.gmra.mxu0 %v4255
    %v4379 = vpop.f32.mrf.mxu0
    %v4380 = vadd.f32 0.0, %v4379
    %4381 = vmatmul.f32.gmra.mxu0 %v4256
    %v4382 = vpop.f32.mrf.mxu0
    %v4383 = vadd.f32 0.0, %v4382
    %4384 = vmatmul.f32.gmra.mxu0 %v4257
    %v4385 = vpop.f32.mrf.mxu0
    %v4386 = vadd.f32 0.0, %v4385
    %4387 = vmatmul.f32.gmra.mxu0 %v4258
    %v4388 = vpop.f32.mrf.mxu0
    %v4389 = vadd.f32 0.0, %v4388
    %4390 = vmatmul.f32.gmra.mxu0 %v4259
    %v4391 = vpop.f32.mrf.mxu0
    %v4392 = vadd.f32 0.0, %v4391
    %4393 = vmatmul.f32.gmra.mxu0 %v4260
    %v4394 = vpop.f32.mrf.mxu0
    %v4395 = vadd.f32 0.0, %v4394
    %4396 = vmatmul.f32.gmra.mxu0 %v4261
    %v4397 = vpop.f32.mrf.mxu0
    %v4398 = vadd.f32 0.0, %v4397
    %4399 = vmatmul.f32.gmra.mxu0 %v4262
    %v4400 = vpop.f32.mrf.mxu0
    %v4401 = vadd.f32 0.0, %v4400
    %4402 = vmatmul.f32.gmra.mxu0 %v4263
    %v4403 = vpop.f32.mrf.mxu0
    %v4404 = vadd.f32 0.0, %v4403
    %4405 = vmatmul.f32.gmra.mxu0 %v4264
    %v4406 = vpop.f32.mrf.mxu0
    %v4407 = vadd.f32 0.0, %v4406
    %4408 = vmatmul.f32.gmra.mxu0 %v4265
    %v4409 = vpop.f32.mrf.mxu0
    %v4410 = vadd.f32 0.0, %v4409
    %4411 = vmatmul.f32.gmra.mxu0 %v4266
    %v4412 = vpop.f32.mrf.mxu0
    %v4413 = vadd.f32 0.0, %v4412
    %4414 = vmatmul.f32.gmra.mxu0 %v4267
    %v4415 = vpop.f32.mrf.mxu0
    %v4416 = vadd.f32 0.0, %v4415
    %4417 = vmatmul.f32.gmra.mxu0 %v4268
    %v4418 = vpop.f32.mrf.mxu0
    %v4419 = vadd.f32 0.0, %v4418
    %4420 = vmatmul.f32.gmra.mxu0 %v4269
    %v4421 = vpop.f32.mrf.mxu0
    %v4422 = vadd.f32 0.0, %v4421
    %4423 = vmatmul.f32.gmra.mxu0 %v4270
    %v4424 = vpop.f32.mrf.mxu0
    %v4425 = vadd.f32 0.0, %v4424
    %4426 = vmatmul.f32.gmra.mxu0 %v4271
    %v4427 = vpop.f32.mrf.mxu0
    %v4428 = vadd.f32 0.0, %v4427
    %4429 = vmatmul.f32.gmra.mxu0 %v4272
    %v4430 = vpop.f32.mrf.mxu0
    %v4431 = vadd.f32 0.0, %v4430
    %4432 = vmatmul.f32.gmra.mxu0 %v4273
    %v4433 = vpop.f32.mrf.mxu0
    %v4434 = vadd.f32 0.0, %v4433
    %4435 = vmatmul.f32.gmra.mxu0 %v4274
    %v4436 = vpop.f32.mrf.mxu0
    %v4437 = vadd.f32 0.0, %v4436
    %4438 = vmatmul.f32.gmra.mxu0 %v4275
    %v4439 = vpop.f32.mrf.mxu0
    %v4440 = vadd.f32 0.0, %v4439
    %4441 = vmatmul.f32.gmra.mxu0 %v4276
    %v4442 = vpop.f32.mrf.mxu0
    %v4443 = vadd.f32 0.0, %v4442
    %4444 = vmatmul.f32.gmra.mxu0 %v4277
    %v4445 = vpop.f32.mrf.mxu0
    %v4446 = vadd.f32 0.0, %v4445
    %4447 = vmatmul.f32.gmra.mxu0 %v4282
    %v4448 = vpop.f32.mrf.mxu0
    %v4449 = vadd.f32 0.0, %v4448
    %4450 = vmatmul.f32.gmra.mxu0 %v4283
    %v4451 = vpop.f32.mrf.mxu0
    %v4452 = vadd.f32 0.0, %v4451
    %4453 = vmatmul.f32.gmra.mxu0 %v4284
    %v4454 = vpop.f32.mrf.mxu0
    %v4455 = vadd.f32 0.0, %v4454
    %4456 = vmatmul.f32.gmra.mxu0 %v4285
    %v4457 = vpop.f32.mrf.mxu0
    %v4458 = vadd.f32 0.0, %v4457
    %4459 = vmatmul.f32.gmra.mxu0 %v4286
    %v4460 = vpop.f32.mrf.mxu0
    %v4461 = vadd.f32 0.0, %v4460
    %4462 = vmatmul.f32.gmra.mxu0 %v4287
    %v4463 = vpop.f32.mrf.mxu0
    %v4464 = vadd.f32 0.0, %v4463
    %4465 = vmatmul.f32.gmra.mxu0 %v4288
    %v4466 = vpop.f32.mrf.mxu0
    %v4467 = vadd.f32 0.0, %v4466
    %4468 = vmatmul.f32.gmra.mxu0 %v4289
    %v4469 = vpop.f32.mrf.mxu0
    %v4470 = vadd.f32 0.0, %v4469
    %4471 = vmatmul.f32.gmra.mxu0 %v4290
    %v4472 = vpop.f32.mrf.mxu0
    %v4473 = vadd.f32 0.0, %v4472
    %4474 = vmatmul.f32.gmra.mxu0 %v4291
    %v4475 = vpop.f32.mrf.mxu0
    %v4476 = vadd.f32 0.0, %v4475
    %4477 = vmatmul.f32.gmra.mxu0 %v4292
    %v4478 = vpop.f32.mrf.mxu0
    %v4479 = vadd.f32 0.0, %v4478
    %4480 = vmatmul.f32.gmra.mxu0 %v4293
    %v4481 = vpop.f32.mrf.mxu0
    %v4482 = vadd.f32 0.0, %v4481
    %4483 = vmatmul.f32.gmra.mxu0 %v4294
    %v4484 = vpop.f32.mrf.mxu0
    %v4485 = vadd.f32 0.0, %v4484
    %4486 = vmatmul.f32.gmra.mxu0 %v4295
    %v4487 = vpop.f32.mrf.mxu0
    %v4488 = vadd.f32 0.0, %v4487
    %4489 = vmatmul.f32.gmra.mxu0 %v4296
    %v4490 = vpop.f32.mrf.mxu0
    %v4491 = vadd.f32 0.0, %v4490
    %4492 = vmatmul.f32.gmra.mxu0 %v4297
    %v4493 = vpop.f32.mrf.mxu0
    %v4494 = vadd.f32 0.0, %v4493
    %4495 = vmatmul.f32.gmra.mxu0 %v4298
    %v4496 = vpop.f32.mrf.mxu0
    %v4497 = vadd.f32 0.0, %v4496
    %4498 = vmatmul.f32.gmra.mxu0 %v4299
    %v4499 = vpop.f32.mrf.mxu0
    %v4500 = vadd.f32 0.0, %v4499
    %4501 = vmatmul.f32.gmra.mxu0 %v4300
    %v4502 = vpop.f32.mrf.mxu0
    %v4503 = vadd.f32 0.0, %v4502
    %4504 = vmatmul.f32.gmra.mxu0 %v4301
    %v4505 = vpop.f32.mrf.mxu0
    %v4506 = vadd.f32 0.0, %v4505
    %4507 = vmatmul.f32.gmra.mxu0 %v4302
    %v4508 = vpop.f32.mrf.mxu0
    %v4509 = vadd.f32 0.0, %v4508
    %4510 = vmatmul.f32.gmra.mxu0 %v4303
    %v4511 = vpop.f32.mrf.mxu0
    %v4512 = vadd.f32 0.0, %v4511
    %4513 = vmatmul.f32.gmra.mxu0 %v4304
    %v4514 = vpop.f32.mrf.mxu0
    %v4515 = vadd.f32 0.0, %v4514
    %4516 = vmatmul.f32.gmra.mxu0 %v4305
    %v4517 = vpop.f32.mrf.mxu0
    %v4518 = vadd.f32 0.0, %v4517
    %4519 = vmatmul.f32.gmra.mxu0 %v4306
    %v4520 = vpop.f32.mrf.mxu0
    %v4521 = vadd.f32 0.0, %v4520
    %4522 = vmatmul.f32.gmra.mxu0 %v4307
    %v4523 = vpop.f32.mrf.mxu0
    %v4524 = vadd.f32 0.0, %v4523
    %4525 = vmatmul.f32.gmra.mxu0 %v4308
    %v4526 = vpop.f32.mrf.mxu0
    %v4527 = vadd.f32 0.0, %v4526
    %4528 = vmatmul.f32.gmra.mxu0 %v4309
    %v4529 = vpop.f32.mrf.mxu0
    %v4530 = vadd.f32 0.0, %v4529
    %4531 = vmatmul.f32.gmra.mxu0 %v4310
    %v4532 = vpop.f32.mrf.mxu0
    %v4533 = vadd.f32 0.0, %v4532
    %4534 = vmatmul.f32.gmra.mxu0 %v4311
    %v4535 = vpop.f32.mrf.mxu0
    %v4536 = vadd.f32 0.0, %v4535
    %4537 = vmatmul.f32.gmra.mxu0 %v4312
    %v4538 = vpop.f32.mrf.mxu0
    %v4539 = vadd.f32 0.0, %v4538
    %4540 = vmatmul.f32.gmra.mxu0 %v4313
    %v4541 = vpop.f32.mrf.mxu0
    %v4542 = vadd.f32 0.0, %v4541
    %4543 = vdwg.mxu0
    %v4544 = vadd.f32 %v4182, %v4353
    %v4545 = vadd.f32 %v4183, %v4356
    %v4546 = vadd.f32 %v4184, %v4359
    %v4547 = vadd.f32 %v4185, %v4362
    %v4548 = vadd.f32 %v4186, %v4365
    %v4549 = vadd.f32 %v4187, %v4368
    %v4550 = vadd.f32 %v4188, %v4371
    %v4551 = vadd.f32 %v4189, %v4374
    %v4552 = vadd.f32 %v4190, %v4377
    %v4553 = vadd.f32 %v4191, %v4380
    %v4554 = vadd.f32 %v4192, %v4383
    %v4555 = vadd.f32 %v4193, %v4386
    %v4556 = vadd.f32 %v4194, %v4389
    %v4557 = vadd.f32 %v4195, %v4392
    %v4558 = vadd.f32 %v4196, %v4395
    %v4559 = vadd.f32 %v4197, %v4398
    %v4560 = vadd.f32 %v4198, %v4401
    %v4561 = vadd.f32 %v4199, %v4404
    %v4562 = vadd.f32 %v4200, %v4407
    %v4563 = vadd.f32 %v4201, %v4410
    %v4564 = vadd.f32 %v4202, %v4413
    %v4565 = vadd.f32 %v4203, %v4416
    %v4566 = vadd.f32 %v4204, %v4419
    %v4567 = vadd.f32 %v4205, %v4422
    %v4568 = vadd.f32 %v4206, %v4425
    %v4569 = vadd.f32 %v4207, %v4428
    %v4570 = vadd.f32 %v4208, %v4431
    %v4571 = vadd.f32 %v4209, %v4434
    %v4572 = vadd.f32 %v4210, %v4437
    %v4573 = vadd.f32 %v4211, %v4440
    %v4574 = vadd.f32 %v4212, %v4443
    %v4575 = vadd.f32 %v4213, %v4446
    %v4576 = vadd.f32 %v4214, %v4449
    %v4577 = vadd.f32 %v4215, %v4452
    %v4578 = vadd.f32 %v4216, %v4455
    %v4579 = vadd.f32 %v4217, %v4458
    %v4580 = vadd.f32 %v4218, %v4461
    %v4581 = vadd.f32 %v4219, %v4464
    %v4582 = vadd.f32 %v4220, %v4467
    %v4583 = vadd.f32 %v4221, %v4470
    %v4584 = vadd.f32 %v4222, %v4473
    %v4585 = vadd.f32 %v4223, %v4476
    %v4586 = vadd.f32 %v4224, %v4479
    %v4587 = vadd.f32 %v4225, %v4482
    %v4588 = vadd.f32 %v4226, %v4485
    %v4589 = vadd.f32 %v4227, %v4488
    %v4590 = vadd.f32 %v4228, %v4491
    %v4591 = vadd.f32 %v4229, %v4494
    %v4592 = vadd.f32 %v4230, %v4497
    %v4593 = vadd.f32 %v4231, %v4500
    %v4594 = vadd.f32 %v4232, %v4503
    %v4595 = vadd.f32 %v4233, %v4506
    %v4596 = vadd.f32 %v4234, %v4509
    %v4597 = vadd.f32 %v4235, %v4512
    %v4598 = vadd.f32 %v4236, %v4515
    %v4599 = vadd.f32 %v4237, %v4518
    %v4600 = vadd.f32 %v4238, %v4521
    %v4601 = vadd.f32 %v4239, %v4524
    %v4602 = vadd.f32 %v4240, %v4527
    %v4603 = vadd.f32 %v4241, %v4530
    %v4604 = vadd.f32 %v4242, %v4533
    %v4605 = vadd.f32 %v4243, %v4536
    %v4606 = vadd.f32 %v4244, %v4539
    %v4607 = vadd.f32 %v4245, %v4542
    %s4608 = scalar_lea.vmem [#allocation6], 512
    %v4609 = vld [vmem:[%s4608] sm:$0xff]
    %v4610 = vld [vmem:[%s4608 + $0x8] sm:$0xff]
    %v4611 = vld [vmem:[%s4608 + $0x10] sm:$0xff]
    %v4612 = vld [vmem:[%s4608 + $0x18] sm:$0xff]
    %v4613 = vld [vmem:[%s4608 + $0x20] sm:$0xff]
    %v4614 = vld [vmem:[%s4608 + $0x28] sm:$0xff]
    %v4615 = vld [vmem:[%s4608 + $0x30] sm:$0xff]
    %v4616 = vld [vmem:[%s4608 + $0x38] sm:$0xff]
    %v4617 = vld [vmem:[%s4608 + $0x40] sm:$0xff]
    %v4618 = vld [vmem:[%s4608 + $0x48] sm:$0xff]
    %v4619 = vld [vmem:[%s4608 + $0x50] sm:$0xff]
    %v4620 = vld [vmem:[%s4608 + $0x58] sm:$0xff]
    %v4621 = vld [vmem:[%s4608 + $0x60] sm:$0xff]
    %v4622 = vld [vmem:[%s4608 + $0x68] sm:$0xff]
    %v4623 = vld [vmem:[%s4608 + $0x70] sm:$0xff]
    %v4624 = vld [vmem:[%s4608 + $0x78] sm:$0xff]
    %4625 = vmatpush.msra.mxu0 %v4624
    %4626 = vmatpush.msra.mxu0 %v4623
    %4627 = vmatpush.msra.mxu0 %v4622
    %4628 = vmatpush.msra.mxu0 %v4621
    %4629 = vmatpush.msra.mxu0 %v4620
    %4630 = vmatpush.msra.mxu0 %v4619
    %4631 = vmatpush.msra.mxu0 %v4618
    %4632 = vmatpush.msra.mxu0 %v4617
    %4633 = vmatpush.msra.mxu0 %v4616
    %4634 = vmatpush.msra.mxu0 %v4615
    %4635 = vmatpush.msra.mxu0 %v4614
    %4636 = vmatpush.msra.mxu0 %v4613
    %4637 = vmatpush.msra.mxu0 %v4612
    %4638 = vmatpush.msra.mxu0 %v4611
    %4639 = vmatpush.msra.mxu0 %v4610
    %4640 = vmatpush.msra.mxu0 %v4609
    %4641 = vmatmul.f32.gmra.mxu0 %v4248
    %v4642 = vpop.f32.mrf.mxu0
    %v4643 = vadd.f32 0.0, %v4642
    %4644 = vmatmul.f32.gmra.mxu0 %v4249
    %v4645 = vpop.f32.mrf.mxu0
    %v4646 = vadd.f32 0.0, %v4645
    %4647 = vmatmul.f32.gmra.mxu0 %v4250
    %v4648 = vpop.f32.mrf.mxu0
    %v4649 = vadd.f32 0.0, %v4648
    %4650 = vmatmul.f32.gmra.mxu0 %v4251
    %v4651 = vpop.f32.mrf.mxu0
    %v4652 = vadd.f32 0.0, %v4651
    %4653 = vmatmul.f32.gmra.mxu0 %v4252
    %v4654 = vpop.f32.mrf.mxu0
    %v4655 = vadd.f32 0.0, %v4654
    %4656 = vmatmul.f32.gmra.mxu0 %v4253
    %v4657 = vpop.f32.mrf.mxu0
    %v4658 = vadd.f32 0.0, %v4657
    %4659 = vmatmul.f32.gmra.mxu0 %v4254
    %v4660 = vpop.f32.mrf.mxu0
    %v4661 = vadd.f32 0.0, %v4660
    %4662 = vmatmul.f32.gmra.mxu0 %v4255
    %v4663 = vpop.f32.mrf.mxu0
    %v4664 = vadd.f32 0.0, %v4663
    %4665 = vmatmul.f32.gmra.mxu0 %v4256
    %v4666 = vpop.f32.mrf.mxu0
    %v4667 = vadd.f32 0.0, %v4666
    %4668 = vmatmul.f32.gmra.mxu0 %v4257
    %v4669 = vpop.f32.mrf.mxu0
    %v4670 = vadd.f32 0.0, %v4669
    %4671 = vmatmul.f32.gmra.mxu0 %v4258
    %v4672 = vpop.f32.mrf.mxu0
    %v4673 = vadd.f32 0.0, %v4672
    %4674 = vmatmul.f32.gmra.mxu0 %v4259
    %v4675 = vpop.f32.mrf.mxu0
    %v4676 = vadd.f32 0.0, %v4675
    %4677 = vmatmul.f32.gmra.mxu0 %v4260
    %v4678 = vpop.f32.mrf.mxu0
    %v4679 = vadd.f32 0.0, %v4678
    %4680 = vmatmul.f32.gmra.mxu0 %v4261
    %v4681 = vpop.f32.mrf.mxu0
    %v4682 = vadd.f32 0.0, %v4681
    %4683 = vmatmul.f32.gmra.mxu0 %v4262
    %v4684 = vpop.f32.mrf.mxu0
    %v4685 = vadd.f32 0.0, %v4684
    %4686 = vmatmul.f32.gmra.mxu0 %v4263
    %v4687 = vpop.f32.mrf.mxu0
    %v4688 = vadd.f32 0.0, %v4687
    %4689 = vmatmul.f32.gmra.mxu0 %v4264
    %v4690 = vpop.f32.mrf.mxu0
    %v4691 = vadd.f32 0.0, %v4690
    %4692 = vmatmul.f32.gmra.mxu0 %v4265
    %v4693 = vpop.f32.mrf.mxu0
    %v4694 = vadd.f32 0.0, %v4693
    %4695 = vmatmul.f32.gmra.mxu0 %v4266
    %v4696 = vpop.f32.mrf.mxu0
    %v4697 = vadd.f32 0.0, %v4696
    %4698 = vmatmul.f32.gmra.mxu0 %v4267
    %v4699 = vpop.f32.mrf.mxu0
    %v4700 = vadd.f32 0.0, %v4699
    %4701 = vmatmul.f32.gmra.mxu0 %v4268
    %v4702 = vpop.f32.mrf.mxu0
    %v4703 = vadd.f32 0.0, %v4702
    %4704 = vmatmul.f32.gmra.mxu0 %v4269
    %v4705 = vpop.f32.mrf.mxu0
    %v4706 = vadd.f32 0.0, %v4705
    %4707 = vmatmul.f32.gmra.mxu0 %v4270
    %v4708 = vpop.f32.mrf.mxu0
    %v4709 = vadd.f32 0.0, %v4708
    %4710 = vmatmul.f32.gmra.mxu0 %v4271
    %v4711 = vpop.f32.mrf.mxu0
    %v4712 = vadd.f32 0.0, %v4711
    %4713 = vmatmul.f32.gmra.mxu0 %v4272
    %v4714 = vpop.f32.mrf.mxu0
    %v4715 = vadd.f32 0.0, %v4714
    %4716 = vmatmul.f32.gmra.mxu0 %v4273
    %v4717 = vpop.f32.mrf.mxu0
    %v4718 = vadd.f32 0.0, %v4717
    %4719 = vmatmul.f32.gmra.mxu0 %v4274
    %v4720 = vpop.f32.mrf.mxu0
    %v4721 = vadd.f32 0.0, %v4720
    %4722 = vmatmul.f32.gmra.mxu0 %v4275
    %v4723 = vpop.f32.mrf.mxu0
    %v4724 = vadd.f32 0.0, %v4723
    %4725 = vmatmul.f32.gmra.mxu0 %v4276
    %v4726 = vpop.f32.mrf.mxu0
    %v4727 = vadd.f32 0.0, %v4726
    %4728 = vmatmul.f32.gmra.mxu0 %v4277
    %v4729 = vpop.f32.mrf.mxu0
    %v4730 = vadd.f32 0.0, %v4729
    %4731 = vmatmul.f32.gmra.mxu0 %v4278
    %v4732 = vpop.f32.mrf.mxu0
    %v4733 = vadd.f32 0.0, %v4732
    %4734 = vmatmul.f32.gmra.mxu0 %v4279
    %v4735 = vpop.f32.mrf.mxu0
    %v4736 = vadd.f32 0.0, %v4735
    %4737 = vmatmul.f32.gmra.mxu0 %v4284
    %v4738 = vpop.f32.mrf.mxu0
    %v4739 = vadd.f32 0.0, %v4738
    %4740 = vmatmul.f32.gmra.mxu0 %v4285
    %v4741 = vpop.f32.mrf.mxu0
    %v4742 = vadd.f32 0.0, %v4741
    %4743 = vmatmul.f32.gmra.mxu0 %v4286
    %v4744 = vpop.f32.mrf.mxu0
    %v4745 = vadd.f32 0.0, %v4744
    %4746 = vmatmul.f32.gmra.mxu0 %v4287
    %v4747 = vpop.f32.mrf.mxu0
    %v4748 = vadd.f32 0.0, %v4747
    %4749 = vmatmul.f32.gmra.mxu0 %v4288
    %v4750 = vpop.f32.mrf.mxu0
    %v4751 = vadd.f32 0.0, %v4750
    %4752 = vmatmul.f32.gmra.mxu0 %v4289
    %v4753 = vpop.f32.mrf.mxu0
    %v4754 = vadd.f32 0.0, %v4753
    %4755 = vmatmul.f32.gmra.mxu0 %v4290
    %v4756 = vpop.f32.mrf.mxu0
    %v4757 = vadd.f32 0.0, %v4756
    %4758 = vmatmul.f32.gmra.mxu0 %v4291
    %v4759 = vpop.f32.mrf.mxu0
    %v4760 = vadd.f32 0.0, %v4759
    %4761 = vmatmul.f32.gmra.mxu0 %v4292
    %v4762 = vpop.f32.mrf.mxu0
    %v4763 = vadd.f32 0.0, %v4762
    %4764 = vmatmul.f32.gmra.mxu0 %v4293
    %v4765 = vpop.f32.mrf.mxu0
    %v4766 = vadd.f32 0.0, %v4765
    %4767 = vmatmul.f32.gmra.mxu0 %v4294
    %v4768 = vpop.f32.mrf.mxu0
    %v4769 = vadd.f32 0.0, %v4768
    %4770 = vmatmul.f32.gmra.mxu0 %v4295
    %v4771 = vpop.f32.mrf.mxu0
    %v4772 = vadd.f32 0.0, %v4771
    %4773 = vmatmul.f32.gmra.mxu0 %v4296
    %v4774 = vpop.f32.mrf.mxu0
    %v4775 = vadd.f32 0.0, %v4774
    %4776 = vmatmul.f32.gmra.mxu0 %v4297
    %v4777 = vpop.f32.mrf.mxu0
    %v4778 = vadd.f32 0.0, %v4777
    %4779 = vmatmul.f32.gmra.mxu0 %v4298
    %v4780 = vpop.f32.mrf.mxu0
    %v4781 = vadd.f32 0.0, %v4780
    %4782 = vmatmul.f32.gmra.mxu0 %v4299
    %v4783 = vpop.f32.mrf.mxu0
    %v4784 = vadd.f32 0.0, %v4783
    %4785 = vmatmul.f32.gmra.mxu0 %v4300
    %v4786 = vpop.f32.mrf.mxu0
    %v4787 = vadd.f32 0.0, %v4786
    %4788 = vmatmul.f32.gmra.mxu0 %v4301
    %v4789 = vpop.f32.mrf.mxu0
    %v4790 = vadd.f32 0.0, %v4789
    %4791 = vmatmul.f32.gmra.mxu0 %v4302
    %v4792 = vpop.f32.mrf.mxu0
    %v4793 = vadd.f32 0.0, %v4792
    %4794 = vmatmul.f32.gmra.mxu0 %v4303
    %v4795 = vpop.f32.mrf.mxu0
    %v4796 = vadd.f32 0.0, %v4795
    %4797 = vmatmul.f32.gmra.mxu0 %v4304
    %v4798 = vpop.f32.mrf.mxu0
    %v4799 = vadd.f32 0.0, %v4798
    %4800 = vmatmul.f32.gmra.mxu0 %v4305
    %v4801 = vpop.f32.mrf.mxu0
    %v4802 = vadd.f32 0.0, %v4801
    %4803 = vmatmul.f32.gmra.mxu0 %v4306
    %v4804 = vpop.f32.mrf.mxu0
    %v4805 = vadd.f32 0.0, %v4804
    %4806 = vmatmul.f32.gmra.mxu0 %v4307
    %v4807 = vpop.f32.mrf.mxu0
    %v4808 = vadd.f32 0.0, %v4807
    %4809 = vmatmul.f32.gmra.mxu0 %v4308
    %v4810 = vpop.f32.mrf.mxu0
    %v4811 = vadd.f32 0.0, %v4810
    %4812 = vmatmul.f32.gmra.mxu0 %v4309
    %v4813 = vpop.f32.mrf.mxu0
    %v4814 = vadd.f32 0.0, %v4813
    %4815 = vmatmul.f32.gmra.mxu0 %v4310
    %v4816 = vpop.f32.mrf.mxu0
    %v4817 = vadd.f32 0.0, %v4816
    %4818 = vmatmul.f32.gmra.mxu0 %v4311
    %v4819 = vpop.f32.mrf.mxu0
    %v4820 = vadd.f32 0.0, %v4819
    %4821 = vmatmul.f32.gmra.mxu0 %v4312
    %v4822 = vpop.f32.mrf.mxu0
    %v4823 = vadd.f32 0.0, %v4822
    %4824 = vmatmul.f32.gmra.mxu0 %v4313
    %v4825 = vpop.f32.mrf.mxu0
    %v4826 = vadd.f32 0.0, %v4825
    %4827 = vmatmul.f32.gmra.mxu0 %v4314
    %v4828 = vpop.f32.mrf.mxu0
    %v4829 = vadd.f32 0.0, %v4828
    %4830 = vmatmul.f32.gmra.mxu0 %v4315
    %v4831 = vpop.f32.mrf.mxu0
    %v4832 = vadd.f32 0.0, %v4831
    %4833 = vdwg.mxu0
    %v4834 = vadd.f32 %v4544, %v4643
    %v4835 = vadd.f32 %v4545, %v4646
    %v4836 = vadd.f32 %v4546, %v4649
    %v4837 = vadd.f32 %v4547, %v4652
    %v4838 = vadd.f32 %v4548, %v4655
    %v4839 = vadd.f32 %v4549, %v4658
    %v4840 = vadd.f32 %v4550, %v4661
    %v4841 = vadd.f32 %v4551, %v4664
    %v4842 = vadd.f32 %v4552, %v4667
    %v4843 = vadd.f32 %v4553, %v4670
    %v4844 = vadd.f32 %v4554, %v4673
    %v4845 = vadd.f32 %v4555, %v4676
    %v4846 = vadd.f32 %v4556, %v4679
    %v4847 = vadd.f32 %v4557, %v4682
    %v4848 = vadd.f32 %v4558, %v4685
    %v4849 = vadd.f32 %v4559, %v4688
    %v4850 = vadd.f32 %v4560, %v4691
    %v4851 = vadd.f32 %v4561, %v4694
    %v4852 = vadd.f32 %v4562, %v4697
    %v4853 = vadd.f32 %v4563, %v4700
    %v4854 = vadd.f32 %v4564, %v4703
    %v4855 = vadd.f32 %v4565, %v4706
    %v4856 = vadd.f32 %v4566, %v4709
    %v4857 = vadd.f32 %v4567, %v4712
    %v4858 = vadd.f32 %v4568, %v4715
    %v4859 = vadd.f32 %v4569, %v4718
    %v4860 = vadd.f32 %v4570, %v4721
    %v4861 = vadd.f32 %v4571, %v4724
    %v4862 = vadd.f32 %v4572, %v4727
    %v4863 = vadd.f32 %v4573, %v4730
    %v4864 = vadd.f32 %v4574, %v4733
    %v4865 = vadd.f32 %v4575, %v4736
    %v4866 = vadd.f32 %v4576, %v4739
    %v4867 = vadd.f32 %v4577, %v4742
    %v4868 = vadd.f32 %v4578, %v4745
    %v4869 = vadd.f32 %v4579, %v4748
    %v4870 = vadd.f32 %v4580, %v4751
    %v4871 = vadd.f32 %v4581, %v4754
    %v4872 = vadd.f32 %v4582, %v4757
    %v4873 = vadd.f32 %v4583, %v4760
    %v4874 = vadd.f32 %v4584, %v4763
    %v4875 = vadd.f32 %v4585, %v4766
    %v4876 = vadd.f32 %v4586, %v4769
    %v4877 = vadd.f32 %v4587, %v4772
    %v4878 = vadd.f32 %v4588, %v4775
    %v4879 = vadd.f32 %v4589, %v4778
    %v4880 = vadd.f32 %v4590, %v4781
    %v4881 = vadd.f32 %v4591, %v4784
    %v4882 = vadd.f32 %v4592, %v4787
    %v4883 = vadd.f32 %v4593, %v4790
    %v4884 = vadd.f32 %v4594, %v4793
    %v4885 = vadd.f32 %v4595, %v4796
    %v4886 = vadd.f32 %v4596, %v4799
    %v4887 = vadd.f32 %v4597, %v4802
    %v4888 = vadd.f32 %v4598, %v4805
    %v4889 = vadd.f32 %v4599, %v4808
    %v4890 = vadd.f32 %v4600, %v4811
    %v4891 = vadd.f32 %v4601, %v4814
    %v4892 = vadd.f32 %v4602, %v4817
    %v4893 = vadd.f32 %v4603, %v4820
    %v4894 = vadd.f32 %v4604, %v4823
    %v4895 = vadd.f32 %v4605, %v4826
    %v4896 = vadd.f32 %v4606, %v4829
    %v4897 = vadd.f32 %v4607, %v4832
    %s4898 = scalar_lea.vmem [#allocation6], 896
    %v4899 = vld [vmem:[%s4898] sm:$0xff]
    %v4900 = vld [vmem:[%s4898 + $0x8] sm:$0xff]
    %v4901 = vld [vmem:[%s4898 + $0x10] sm:$0xff]
    %v4902 = vld [vmem:[%s4898 + $0x18] sm:$0xff]
    %v4903 = vld [vmem:[%s4898 + $0x20] sm:$0xff]
    %v4904 = vld [vmem:[%s4898 + $0x28] sm:$0xff]
    %v4905 = vld [vmem:[%s4898 + $0x30] sm:$0xff]
    %v4906 = vld [vmem:[%s4898 + $0x38] sm:$0xff]
    %v4907 = vld [vmem:[%s4898 + $0x40] sm:$0xff]
    %v4908 = vld [vmem:[%s4898 + $0x48] sm:$0xff]
    %v4909 = vld [vmem:[%s4898 + $0x50] sm:$0xff]
    %v4910 = vld [vmem:[%s4898 + $0x58] sm:$0xff]
    %v4911 = vld [vmem:[%s4898 + $0x60] sm:$0xff]
    %v4912 = vld [vmem:[%s4898 + $0x68] sm:$0xff]
    %v4913 = vld [vmem:[%s4898 + $0x70] sm:$0xff]
    %v4914 = vld [vmem:[%s4898 + $0x78] sm:$0xff]
    %4915 = vmatpush.msra.mxu0 %v4914
    %4916 = vmatpush.msra.mxu0 %v4913
    %4917 = vmatpush.msra.mxu0 %v4912
    %4918 = vmatpush.msra.mxu0 %v4911
    %4919 = vmatpush.msra.mxu0 %v4910
    %4920 = vmatpush.msra.mxu0 %v4909
    %4921 = vmatpush.msra.mxu0 %v4908
    %4922 = vmatpush.msra.mxu0 %v4907
    %4923 = vmatpush.msra.mxu0 %v4906
    %4924 = vmatpush.msra.mxu0 %v4905
    %4925 = vmatpush.msra.mxu0 %v4904
    %4926 = vmatpush.msra.mxu0 %v4903
    %4927 = vmatpush.msra.mxu0 %v4902
    %4928 = vmatpush.msra.mxu0 %v4901
    %4929 = vmatpush.msra.mxu0 %v4900
    %4930 = vmatpush.msra.mxu0 %v4899
    %4931 = vmatmul.f32.gmra.mxu0 %v4250
    %v4932 = vpop.f32.mrf.mxu0
    %v4933 = vadd.f32 0.0, %v4932
    %4934 = vmatmul.f32.gmra.mxu0 %v4251
    %v4935 = vpop.f32.mrf.mxu0
    %v4936 = vadd.f32 0.0, %v4935
    %4937 = vmatmul.f32.gmra.mxu0 %v4252
    %v4938 = vpop.f32.mrf.mxu0
    %v4939 = vadd.f32 0.0, %v4938
    %4940 = vmatmul.f32.gmra.mxu0 %v4253
    %v4941 = vpop.f32.mrf.mxu0
    %v4942 = vadd.f32 0.0, %v4941
    %4943 = vmatmul.f32.gmra.mxu0 %v4254
    %v4944 = vpop.f32.mrf.mxu0
    %v4945 = vadd.f32 0.0, %v4944
    %4946 = vmatmul.f32.gmra.mxu0 %v4255
    %v4947 = vpop.f32.mrf.mxu0
    %v4948 = vadd.f32 0.0, %v4947
    %4949 = vmatmul.f32.gmra.mxu0 %v4256
    %v4950 = vpop.f32.mrf.mxu0
    %v4951 = vadd.f32 0.0, %v4950
    %4952 = vmatmul.f32.gmra.mxu0 %v4257
    %v4953 = vpop.f32.mrf.mxu0
    %v4954 = vadd.f32 0.0, %v4953
    %4955 = vmatmul.f32.gmra.mxu0 %v4258
    %v4956 = vpop.f32.mrf.mxu0
    %v4957 = vadd.f32 0.0, %v4956
    %4958 = vmatmul.f32.gmra.mxu0 %v4259
    %v4959 = vpop.f32.mrf.mxu0
    %v4960 = vadd.f32 0.0, %v4959
    %4961 = vmatmul.f32.gmra.mxu0 %v4260
    %v4962 = vpop.f32.mrf.mxu0
    %v4963 = vadd.f32 0.0, %v4962
    %4964 = vmatmul.f32.gmra.mxu0 %v4261
    %v4965 = vpop.f32.mrf.mxu0
    %v4966 = vadd.f32 0.0, %v4965
    %4967 = vmatmul.f32.gmra.mxu0 %v4262
    %v4968 = vpop.f32.mrf.mxu0
    %v4969 = vadd.f32 0.0, %v4968
    %4970 = vmatmul.f32.gmra.mxu0 %v4263
    %v4971 = vpop.f32.mrf.mxu0
    %v4972 = vadd.f32 0.0, %v4971
    %4973 = vmatmul.f32.gmra.mxu0 %v4264
    %v4974 = vpop.f32.mrf.mxu0
    %v4975 = vadd.f32 0.0, %v4974
    %4976 = vmatmul.f32.gmra.mxu0 %v4265
    %v4977 = vpop.f32.mrf.mxu0
    %v4978 = vadd.f32 0.0, %v4977
    %4979 = vmatmul.f32.gmra.mxu0 %v4266
    %v4980 = vpop.f32.mrf.mxu0
    %v4981 = vadd.f32 0.0, %v4980
    %4982 = vmatmul.f32.gmra.mxu0 %v4267
    %v4983 = vpop.f32.mrf.mxu0
    %v4984 = vadd.f32 0.0, %v4983
    %4985 = vmatmul.f32.gmra.mxu0 %v4268
    %v4986 = vpop.f32.mrf.mxu0
    %v4987 = vadd.f32 0.0, %v4986
    %4988 = vmatmul.f32.gmra.mxu0 %v4269
    %v4989 = vpop.f32.mrf.mxu0
    %v4990 = vadd.f32 0.0, %v4989
    %4991 = vmatmul.f32.gmra.mxu0 %v4270
    %v4992 = vpop.f32.mrf.mxu0
    %v4993 = vadd.f32 0.0, %v4992
    %4994 = vmatmul.f32.gmra.mxu0 %v4271
    %v4995 = vpop.f32.mrf.mxu0
    %v4996 = vadd.f32 0.0, %v4995
    %4997 = vmatmul.f32.gmra.mxu0 %v4272
    %v4998 = vpop.f32.mrf.mxu0
    %v4999 = vadd.f32 0.0, %v4998
    %5000 = vmatmul.f32.gmra.mxu0 %v4273
    %v5001 = vpop.f32.mrf.mxu0
    %v5002 = vadd.f32 0.0, %v5001
    %5003 = vmatmul.f32.gmra.mxu0 %v4274
    %v5004 = vpop.f32.mrf.mxu0
    %v5005 = vadd.f32 0.0, %v5004
    %5006 = vmatmul.f32.gmra.mxu0 %v4275
    %v5007 = vpop.f32.mrf.mxu0
    %v5008 = vadd.f32 0.0, %v5007
    %5009 = vmatmul.f32.gmra.mxu0 %v4276
    %v5010 = vpop.f32.mrf.mxu0
    %v5011 = vadd.f32 0.0, %v5010
    %5012 = vmatmul.f32.gmra.mxu0 %v4277
    %v5013 = vpop.f32.mrf.mxu0
    %v5014 = vadd.f32 0.0, %v5013
    %5015 = vmatmul.f32.gmra.mxu0 %v4278
    %v5016 = vpop.f32.mrf.mxu0
    %v5017 = vadd.f32 0.0, %v5016
    %5018 = vmatmul.f32.gmra.mxu0 %v4279
    %v5019 = vpop.f32.mrf.mxu0
    %v5020 = vadd.f32 0.0, %v5019
    %5021 = vmatmul.f32.gmra.mxu0 %v4280
    %v5022 = vpop.f32.mrf.mxu0
    %v5023 = vadd.f32 0.0, %v5022
    %5024 = vmatmul.f32.gmra.mxu0 %v4281
    %v5025 = vpop.f32.mrf.mxu0
    %v5026 = vadd.f32 0.0, %v5025
    %5027 = vmatmul.f32.gmra.mxu0 %v4286
    %v5028 = vpop.f32.mrf.mxu0
    %v5029 = vadd.f32 0.0, %v5028
    %5030 = vmatmul.f32.gmra.mxu0 %v4287
    %v5031 = vpop.f32.mrf.mxu0
    %v5032 = vadd.f32 0.0, %v5031
    %5033 = vmatmul.f32.gmra.mxu0 %v4288
    %v5034 = vpop.f32.mrf.mxu0
    %v5035 = vadd.f32 0.0, %v5034
    %5036 = vmatmul.f32.gmra.mxu0 %v4289
    %v5037 = vpop.f32.mrf.mxu0
    %v5038 = vadd.f32 0.0, %v5037
    %5039 = vmatmul.f32.gmra.mxu0 %v4290
    %v5040 = vpop.f32.mrf.mxu0
    %v5041 = vadd.f32 0.0, %v5040
    %5042 = vmatmul.f32.gmra.mxu0 %v4291
    %v5043 = vpop.f32.mrf.mxu0
    %v5044 = vadd.f32 0.0, %v5043
    %5045 = vmatmul.f32.gmra.mxu0 %v4292
    %v5046 = vpop.f32.mrf.mxu0
    %v5047 = vadd.f32 0.0, %v5046
    %5048 = vmatmul.f32.gmra.mxu0 %v4293
    %v5049 = vpop.f32.mrf.mxu0
    %v5050 = vadd.f32 0.0, %v5049
    %5051 = vmatmul.f32.gmra.mxu0 %v4294
    %v5052 = vpop.f32.mrf.mxu0
    %v5053 = vadd.f32 0.0, %v5052
    %5054 = vmatmul.f32.gmra.mxu0 %v4295
    %v5055 = vpop.f32.mrf.mxu0
    %v5056 = vadd.f32 0.0, %v5055
    %5057 = vmatmul.f32.gmra.mxu0 %v4296
    %v5058 = vpop.f32.mrf.mxu0
    %v5059 = vadd.f32 0.0, %v5058
    %5060 = vmatmul.f32.gmra.mxu0 %v4297
    %v5061 = vpop.f32.mrf.mxu0
    %v5062 = vadd.f32 0.0, %v5061
    %5063 = vmatmul.f32.gmra.mxu0 %v4298
    %v5064 = vpop.f32.mrf.mxu0
    %v5065 = vadd.f32 0.0, %v5064
    %5066 = vmatmul.f32.gmra.mxu0 %v4299
    %v5067 = vpop.f32.mrf.mxu0
    %v5068 = vadd.f32 0.0, %v5067
    %5069 = vmatmul.f32.gmra.mxu0 %v4300
    %v5070 = vpop.f32.mrf.mxu0
    %v5071 = vadd.f32 0.0, %v5070
    %5072 = vmatmul.f32.gmra.mxu0 %v4301
    %v5073 = vpop.f32.mrf.mxu0
    %v5074 = vadd.f32 0.0, %v5073
    %5075 = vmatmul.f32.gmra.mxu0 %v4302
    %v5076 = vpop.f32.mrf.mxu0
    %v5077 = vadd.f32 0.0, %v5076
    %5078 = vmatmul.f32.gmra.mxu0 %v4303
    %v5079 = vpop.f32.mrf.mxu0
    %v5080 = vadd.f32 0.0, %v5079
    %5081 = vmatmul.f32.gmra.mxu0 %v4304
    %v5082 = vpop.f32.mrf.mxu0
    %v5083 = vadd.f32 0.0, %v5082
    %5084 = vmatmul.f32.gmra.mxu0 %v4305
    %v5085 = vpop.f32.mrf.mxu0
    %v5086 = vadd.f32 0.0, %v5085
    %5087 = vmatmul.f32.gmra.mxu0 %v4306
    %v5088 = vpop.f32.mrf.mxu0
    %v5089 = vadd.f32 0.0, %v5088
    %5090 = vmatmul.f32.gmra.mxu0 %v4307
    %v5091 = vpop.f32.mrf.mxu0
    %v5092 = vadd.f32 0.0, %v5091
    %5093 = vmatmul.f32.gmra.mxu0 %v4308
    %v5094 = vpop.f32.mrf.mxu0
    %v5095 = vadd.f32 0.0, %v5094
    %5096 = vmatmul.f32.gmra.mxu0 %v4309
    %v5097 = vpop.f32.mrf.mxu0
    %v5098 = vadd.f32 0.0, %v5097
    %5099 = vmatmul.f32.gmra.mxu0 %v4310
    %v5100 = vpop.f32.mrf.mxu0
    %v5101 = vadd.f32 0.0, %v5100
    %5102 = vmatmul.f32.gmra.mxu0 %v4311
    %v5103 = vpop.f32.mrf.mxu0
    %v5104 = vadd.f32 0.0, %v5103
    %5105 = vmatmul.f32.gmra.mxu0 %v4312
    %v5106 = vpop.f32.mrf.mxu0
    %v5107 = vadd.f32 0.0, %v5106
    %5108 = vmatmul.f32.gmra.mxu0 %v4313
    %v5109 = vpop.f32.mrf.mxu0
    %v5110 = vadd.f32 0.0, %v5109
    %5111 = vmatmul.f32.gmra.mxu0 %v4314
    %v5112 = vpop.f32.mrf.mxu0
    %v5113 = vadd.f32 0.0, %v5112
    %5114 = vmatmul.f32.gmra.mxu0 %v4315
    %v5115 = vpop.f32.mrf.mxu0
    %v5116 = vadd.f32 0.0, %v5115
    %5117 = vmatmul.f32.gmra.mxu0 %v4316
    %v5118 = vpop.f32.mrf.mxu0
    %v5119 = vadd.f32 0.0, %v5118
    %5120 = vmatmul.f32.gmra.mxu0 %v4317
    %v5121 = vpop.f32.mrf.mxu0
    %v5122 = vadd.f32 0.0, %v5121
    %5123 = vdwg.mxu0
    %v5124 = vadd.f32 %v4834, %v4933
    %v5125 = vadd.f32 %v4835, %v4936
    %v5126 = vadd.f32 %v4836, %v4939
    %v5127 = vadd.f32 %v4837, %v4942
    %v5128 = vadd.f32 %v4838, %v4945
    %v5129 = vadd.f32 %v4839, %v4948
    %v5130 = vadd.f32 %v4840, %v4951
    %v5131 = vadd.f32 %v4841, %v4954
    %v5132 = vadd.f32 %v4842, %v4957
    %v5133 = vadd.f32 %v4843, %v4960
    %v5134 = vadd.f32 %v4844, %v4963
    %v5135 = vadd.f32 %v4845, %v4966
    %v5136 = vadd.f32 %v4846, %v4969
    %v5137 = vadd.f32 %v4847, %v4972
    %v5138 = vadd.f32 %v4848, %v4975
    %v5139 = vadd.f32 %v4849, %v4978
    %v5140 = vadd.f32 %v4850, %v4981
    %v5141 = vadd.f32 %v4851, %v4984
    %v5142 = vadd.f32 %v4852, %v4987
    %v5143 = vadd.f32 %v4853, %v4990
    %v5144 = vadd.f32 %v4854, %v4993
    %v5145 = vadd.f32 %v4855, %v4996
    %v5146 = vadd.f32 %v4856, %v4999
    %v5147 = vadd.f32 %v4857, %v5002
    %v5148 = vadd.f32 %v4858, %v5005
    %v5149 = vadd.f32 %v4859, %v5008
    %v5150 = vadd.f32 %v4860, %v5011
    %v5151 = vadd.f32 %v4861, %v5014
    %v5152 = vadd.f32 %v4862, %v5017
    %v5153 = vadd.f32 %v4863, %v5020
    %v5154 = vadd.f32 %v4864, %v5023
    %v5155 = vadd.f32 %v4865, %v5026
    %v5156 = vadd.f32 %v4866, %v5029
    %v5157 = vadd.f32 %v4867, %v5032
    %v5158 = vadd.f32 %v4868, %v5035
    %v5159 = vadd.f32 %v4869, %v5038
    %v5160 = vadd.f32 %v4870, %v5041
    %v5161 = vadd.f32 %v4871, %v5044
    %v5162 = vadd.f32 %v4872, %v5047
    %v5163 = vadd.f32 %v4873, %v5050
    %v5164 = vadd.f32 %v4874, %v5053
    %v5165 = vadd.f32 %v4875, %v5056
    %v5166 = vadd.f32 %v4876, %v5059
    %v5167 = vadd.f32 %v4877, %v5062
    %v5168 = vadd.f32 %v4878, %v5065
    %v5169 = vadd.f32 %v4879, %v5068
    %v5170 = vadd.f32 %v4880, %v5071
    %v5171 = vadd.f32 %v4881, %v5074
    %v5172 = vadd.f32 %v4882, %v5077
    %v5173 = vadd.f32 %v4883, %v5080
    %v5174 = vadd.f32 %v4884, %v5083
    %v5175 = vadd.f32 %v4885, %v5086
    %v5176 = vadd.f32 %v4886, %v5089
    %v5177 = vadd.f32 %v4887, %v5092
    %v5178 = vadd.f32 %v4888, %v5095
    %v5179 = vadd.f32 %v4889, %v5098
    %v5180 = vadd.f32 %v4890, %v5101
    %v5181 = vadd.f32 %v4891, %v5104
    %v5182 = vadd.f32 %v4892, %v5107
    %v5183 = vadd.f32 %v4893, %v5110
    %v5184 = vadd.f32 %v4894, %v5113
    %v5185 = vadd.f32 %v4895, %v5116
    %v5186 = vadd.f32 %v4896, %v5119
    %v5187 = vadd.f32 %v4897, %v5122
    %v5188 = vld [vmem:[#allocation3 + $0x2] sm:$0xff]
    %v5189 = vld [vmem:[#allocation3 + $0xa] sm:$0xff]
    %v5190 = vld [vmem:[#allocation3 + $0x1a] sm:$0xff]
    %v5191 = vld [vmem:[#allocation3 + $0x22] sm:$0xff]
    %v5192 = vld [vmem:[#allocation3 + $0x32] sm:$0xff]
    %v5193 = vld [vmem:[#allocation3 + $0x3a] sm:$0xff]
    %v5194 = vld [vmem:[#allocation3 + $0x4a] sm:$0xff]
    %v5195 = vld [vmem:[#allocation3 + $0x52] sm:$0xff]
    %v5196 = vld [vmem:[#allocation3 + $0x62] sm:$0xff]
    %v5197 = vld [vmem:[#allocation3 + $0x6a] sm:$0xff]
    %v5198 = vld [vmem:[#allocation3 + $0x7a] sm:$0xff]
    %v5199 = vld [vmem:[#allocation3 + $0x82] sm:$0xff]
    %v5200 = vld [vmem:[#allocation3 + $0x92] sm:$0xff]
    %v5201 = vld [vmem:[#allocation3 + $0x9a] sm:$0xff]
    %v5202 = vld [vmem:[#allocation3 + $0xaa] sm:$0xff]
    %v5203 = vld [vmem:[#allocation3 + $0xb2] sm:$0xff]
    %v5204 = vld [vmem:[#allocation3 + $0xc2] sm:$0xff]
    %v5205 = vld [vmem:[#allocation3 + $0xca] sm:$0xff]
    %v5206 = vld [vmem:[#allocation3 + $0xda] sm:$0xff]
    %v5207 = vld [vmem:[#allocation3 + $0xe2] sm:$0xff]
    %v5208 = vld [vmem:[#allocation3 + $0xf2] sm:$0xff]
    %v5209 = vld [vmem:[#allocation3 + $0xfa] sm:$0xff]
    %v5210 = vld [vmem:[#allocation3 + $0x10a] sm:$0xff]
    %v5211 = vld [vmem:[#allocation3 + $0x112] sm:$0xff]
    %v5212 = vld [vmem:[#allocation3 + $0x122] sm:$0xff]
    %v5213 = vld [vmem:[#allocation3 + $0x12a] sm:$0xff]
    %v5214 = vld [vmem:[#allocation3 + $0x13a] sm:$0xff]
    %v5215 = vld [vmem:[#allocation3 + $0x142] sm:$0xff]
    %v5216 = vld [vmem:[#allocation3 + $0x152] sm:$0xff]
    %v5217 = vld [vmem:[#allocation3 + $0x15a] sm:$0xff]
    %v5218 = vld [vmem:[#allocation3 + $0x16a] sm:$0xff]
    %v5219 = vld [vmem:[#allocation3 + $0x172] sm:$0xff]
    %v5220 = vld [vmem:[#allocation3 + $0x182] sm:$0xff]
    %v5221 = vld [vmem:[#allocation3 + $0x18a] sm:$0xff]
    %v5222 = vld [vmem:[#allocation3 + $0x19a] sm:$0xff]
    %v5223 = vld [vmem:[#allocation3 + $0x1a2] sm:$0xff]
    %v5224 = vld [vmem:[#allocation3 + $0x1b2] sm:$0xff]
    %v5225 = vld [vmem:[#allocation3 + $0x1ba] sm:$0xff]
    %v5226 = vld [vmem:[#allocation3 + $0x1ca] sm:$0xff]
    %v5227 = vld [vmem:[#allocation3 + $0x1d2] sm:$0xff]
    %v5228 = vld [vmem:[#allocation3 + $0x1e2] sm:$0xff]
    %v5229 = vld [vmem:[#allocation3 + $0x1ea] sm:$0xff]
    %v5230 = vld [vmem:[#allocation3 + $0x1fa] sm:$0xff]
    %v5231 = vld [vmem:[#allocation3 + $0x202] sm:$0xff]
    %v5232 = vld [vmem:[#allocation3 + $0x212] sm:$0xff]
    %v5233 = vld [vmem:[#allocation3 + $0x21a] sm:$0xff]
    %v5234 = vld [vmem:[#allocation3 + $0x22a] sm:$0xff]
    %v5235 = vld [vmem:[#allocation3 + $0x232] sm:$0xff]
    %v5236 = vld [vmem:[#allocation3 + $0x242] sm:$0xff]
    %v5237 = vld [vmem:[#allocation3 + $0x24a] sm:$0xff]
    %v5238 = vld [vmem:[#allocation3 + $0x25a] sm:$0xff]
    %v5239 = vld [vmem:[#allocation3 + $0x262] sm:$0xff]
    %v5240 = vld [vmem:[#allocation3 + $0x272] sm:$0xff]
    %v5241 = vld [vmem:[#allocation3 + $0x27a] sm:$0xff]
    %v5242 = vld [vmem:[#allocation3 + $0x28a] sm:$0xff]
    %v5243 = vld [vmem:[#allocation3 + $0x292] sm:$0xff]
    %v5244 = vld [vmem:[#allocation3 + $0x2a2] sm:$0xff]
    %v5245 = vld [vmem:[#allocation3 + $0x2aa] sm:$0xff]
    %v5246 = vld [vmem:[#allocation3 + $0x2ba] sm:$0xff]
    %v5247 = vld [vmem:[#allocation3 + $0x2c2] sm:$0xff]
    %v5248 = vld [vmem:[#allocation3 + $0x2d2] sm:$0xff]
    %v5249 = vld [vmem:[#allocation3 + $0x2da] sm:$0xff]
    %v5250 = vld [vmem:[#allocation3 + $0x2ea] sm:$0xff]
    %v5251 = vld [vmem:[#allocation3 + $0x2f2] sm:$0xff]
    %v5252 = vld [vmem:[#allocation3 + $0x302] sm:$0xff]
    %v5253 = vld [vmem:[#allocation3 + $0x30a] sm:$0xff]
    %v5254 = vld [vmem:[#allocation3 + $0x31a] sm:$0xff]
    %v5255 = vld [vmem:[#allocation3 + $0x322] sm:$0xff]
    %v5256 = vld [vmem:[#allocation3 + $0x332] sm:$0xff]
    %v5257 = vld [vmem:[#allocation3 + $0x33a] sm:$0xff]
    %v5258 = vld [vmem:[#allocation3 + $0x34a] sm:$0xff]
    %v5259 = vld [vmem:[#allocation3 + $0x352] sm:$0xff]
    %s5260 = scalar_lea.vmem [#allocation6], 256
    %v5261 = vld [vmem:[%s5260] sm:$0xff]
    %v5262 = vld [vmem:[%s5260 + $0x8] sm:$0xff]
    %v5263 = vld [vmem:[%s5260 + $0x10] sm:$0xff]
    %v5264 = vld [vmem:[%s5260 + $0x18] sm:$0xff]
    %v5265 = vld [vmem:[%s5260 + $0x20] sm:$0xff]
    %v5266 = vld [vmem:[%s5260 + $0x28] sm:$0xff]
    %v5267 = vld [vmem:[%s5260 + $0x30] sm:$0xff]
    %v5268 = vld [vmem:[%s5260 + $0x38] sm:$0xff]
    %v5269 = vld [vmem:[%s5260 + $0x40] sm:$0xff]
    %v5270 = vld [vmem:[%s5260 + $0x48] sm:$0xff]
    %v5271 = vld [vmem:[%s5260 + $0x50] sm:$0xff]
    %v5272 = vld [vmem:[%s5260 + $0x58] sm:$0xff]
    %v5273 = vld [vmem:[%s5260 + $0x60] sm:$0xff]
    %v5274 = vld [vmem:[%s5260 + $0x68] sm:$0xff]
    %v5275 = vld [vmem:[%s5260 + $0x70] sm:$0xff]
    %v5276 = vld [vmem:[%s5260 + $0x78] sm:$0xff]
    %5277 = vmatpush.msra.mxu0 %v5276
    %5278 = vmatpush.msra.mxu0 %v5275
    %5279 = vmatpush.msra.mxu0 %v5274
    %5280 = vmatpush.msra.mxu0 %v5273
    %5281 = vmatpush.msra.mxu0 %v5272
    %5282 = vmatpush.msra.mxu0 %v5271
    %5283 = vmatpush.msra.mxu0 %v5270
    %5284 = vmatpush.msra.mxu0 %v5269
    %5285 = vmatpush.msra.mxu0 %v5268
    %5286 = vmatpush.msra.mxu0 %v5267
    %5287 = vmatpush.msra.mxu0 %v5266
    %5288 = vmatpush.msra.mxu0 %v5265
    %5289 = vmatpush.msra.mxu0 %v5264
    %5290 = vmatpush.msra.mxu0 %v5263
    %5291 = vmatpush.msra.mxu0 %v5262
    %5292 = vmatpush.msra.mxu0 %v5261
    %5293 = vmatmul.f32.gmra.mxu0 %v5188
    %v5294 = vpop.f32.mrf.mxu0
    %v5295 = vadd.f32 0.0, %v5294
    %5296 = vmatmul.f32.gmra.mxu0 %v5189
    %v5297 = vpop.f32.mrf.mxu0
    %v5298 = vadd.f32 0.0, %v5297
    %5299 = vmatmul.f32.gmra.mxu0 %v5190
    %v5300 = vpop.f32.mrf.mxu0
    %v5301 = vadd.f32 0.0, %v5300
    %5302 = vmatmul.f32.gmra.mxu0 %v5191
    %v5303 = vpop.f32.mrf.mxu0
    %v5304 = vadd.f32 0.0, %v5303
    %5305 = vmatmul.f32.gmra.mxu0 %v5192
    %v5306 = vpop.f32.mrf.mxu0
    %v5307 = vadd.f32 0.0, %v5306
    %5308 = vmatmul.f32.gmra.mxu0 %v5193
    %v5309 = vpop.f32.mrf.mxu0
    %v5310 = vadd.f32 0.0, %v5309
    %5311 = vmatmul.f32.gmra.mxu0 %v5194
    %v5312 = vpop.f32.mrf.mxu0
    %v5313 = vadd.f32 0.0, %v5312
    %5314 = vmatmul.f32.gmra.mxu0 %v5195
    %v5315 = vpop.f32.mrf.mxu0
    %v5316 = vadd.f32 0.0, %v5315
    %5317 = vmatmul.f32.gmra.mxu0 %v5196
    %v5318 = vpop.f32.mrf.mxu0
    %v5319 = vadd.f32 0.0, %v5318
    %5320 = vmatmul.f32.gmra.mxu0 %v5197
    %v5321 = vpop.f32.mrf.mxu0
    %v5322 = vadd.f32 0.0, %v5321
    %5323 = vmatmul.f32.gmra.mxu0 %v5198
    %v5324 = vpop.f32.mrf.mxu0
    %v5325 = vadd.f32 0.0, %v5324
    %5326 = vmatmul.f32.gmra.mxu0 %v5199
    %v5327 = vpop.f32.mrf.mxu0
    %v5328 = vadd.f32 0.0, %v5327
    %5329 = vmatmul.f32.gmra.mxu0 %v5200
    %v5330 = vpop.f32.mrf.mxu0
    %v5331 = vadd.f32 0.0, %v5330
    %5332 = vmatmul.f32.gmra.mxu0 %v5201
    %v5333 = vpop.f32.mrf.mxu0
    %v5334 = vadd.f32 0.0, %v5333
    %5335 = vmatmul.f32.gmra.mxu0 %v5202
    %v5336 = vpop.f32.mrf.mxu0
    %v5337 = vadd.f32 0.0, %v5336
    %5338 = vmatmul.f32.gmra.mxu0 %v5203
    %v5339 = vpop.f32.mrf.mxu0
    %v5340 = vadd.f32 0.0, %v5339
    %5341 = vmatmul.f32.gmra.mxu0 %v5204
    %v5342 = vpop.f32.mrf.mxu0
    %v5343 = vadd.f32 0.0, %v5342
    %5344 = vmatmul.f32.gmra.mxu0 %v5205
    %v5345 = vpop.f32.mrf.mxu0
    %v5346 = vadd.f32 0.0, %v5345
    %5347 = vmatmul.f32.gmra.mxu0 %v5206
    %v5348 = vpop.f32.mrf.mxu0
    %v5349 = vadd.f32 0.0, %v5348
    %5350 = vmatmul.f32.gmra.mxu0 %v5207
    %v5351 = vpop.f32.mrf.mxu0
    %v5352 = vadd.f32 0.0, %v5351
    %5353 = vmatmul.f32.gmra.mxu0 %v5208
    %v5354 = vpop.f32.mrf.mxu0
    %v5355 = vadd.f32 0.0, %v5354
    %5356 = vmatmul.f32.gmra.mxu0 %v5209
    %v5357 = vpop.f32.mrf.mxu0
    %v5358 = vadd.f32 0.0, %v5357
    %5359 = vmatmul.f32.gmra.mxu0 %v5210
    %v5360 = vpop.f32.mrf.mxu0
    %v5361 = vadd.f32 0.0, %v5360
    %5362 = vmatmul.f32.gmra.mxu0 %v5211
    %v5363 = vpop.f32.mrf.mxu0
    %v5364 = vadd.f32 0.0, %v5363
    %5365 = vmatmul.f32.gmra.mxu0 %v5212
    %v5366 = vpop.f32.mrf.mxu0
    %v5367 = vadd.f32 0.0, %v5366
    %5368 = vmatmul.f32.gmra.mxu0 %v5213
    %v5369 = vpop.f32.mrf.mxu0
    %v5370 = vadd.f32 0.0, %v5369
    %5371 = vmatmul.f32.gmra.mxu0 %v5214
    %v5372 = vpop.f32.mrf.mxu0
    %v5373 = vadd.f32 0.0, %v5372
    %5374 = vmatmul.f32.gmra.mxu0 %v5215
    %v5375 = vpop.f32.mrf.mxu0
    %v5376 = vadd.f32 0.0, %v5375
    %5377 = vmatmul.f32.gmra.mxu0 %v5216
    %v5378 = vpop.f32.mrf.mxu0
    %v5379 = vadd.f32 0.0, %v5378
    %5380 = vmatmul.f32.gmra.mxu0 %v5217
    %v5381 = vpop.f32.mrf.mxu0
    %v5382 = vadd.f32 0.0, %v5381
    %5383 = vmatmul.f32.gmra.mxu0 %v5218
    %v5384 = vpop.f32.mrf.mxu0
    %v5385 = vadd.f32 0.0, %v5384
    %5386 = vmatmul.f32.gmra.mxu0 %v5219
    %v5387 = vpop.f32.mrf.mxu0
    %v5388 = vadd.f32 0.0, %v5387
    %5389 = vmatmul.f32.gmra.mxu0 %v5224
    %v5390 = vpop.f32.mrf.mxu0
    %v5391 = vadd.f32 0.0, %v5390
    %5392 = vmatmul.f32.gmra.mxu0 %v5225
    %v5393 = vpop.f32.mrf.mxu0
    %v5394 = vadd.f32 0.0, %v5393
    %5395 = vmatmul.f32.gmra.mxu0 %v5226
    %v5396 = vpop.f32.mrf.mxu0
    %v5397 = vadd.f32 0.0, %v5396
    %5398 = vmatmul.f32.gmra.mxu0 %v5227
    %v5399 = vpop.f32.mrf.mxu0
    %v5400 = vadd.f32 0.0, %v5399
    %5401 = vmatmul.f32.gmra.mxu0 %v5228
    %v5402 = vpop.f32.mrf.mxu0
    %v5403 = vadd.f32 0.0, %v5402
    %5404 = vmatmul.f32.gmra.mxu0 %v5229
    %v5405 = vpop.f32.mrf.mxu0
    %v5406 = vadd.f32 0.0, %v5405
    %5407 = vmatmul.f32.gmra.mxu0 %v5230
    %v5408 = vpop.f32.mrf.mxu0
    %v5409 = vadd.f32 0.0, %v5408
    %5410 = vmatmul.f32.gmra.mxu0 %v5231
    %v5411 = vpop.f32.mrf.mxu0
    %v5412 = vadd.f32 0.0, %v5411
    %5413 = vmatmul.f32.gmra.mxu0 %v5232
    %v5414 = vpop.f32.mrf.mxu0
    %v5415 = vadd.f32 0.0, %v5414
    %5416 = vmatmul.f32.gmra.mxu0 %v5233
    %v5417 = vpop.f32.mrf.mxu0
    %v5418 = vadd.f32 0.0, %v5417
    %5419 = vmatmul.f32.gmra.mxu0 %v5234
    %v5420 = vpop.f32.mrf.mxu0
    %v5421 = vadd.f32 0.0, %v5420
    %5422 = vmatmul.f32.gmra.mxu0 %v5235
    %v5423 = vpop.f32.mrf.mxu0
    %v5424 = vadd.f32 0.0, %v5423
    %5425 = vmatmul.f32.gmra.mxu0 %v5236
    %v5426 = vpop.f32.mrf.mxu0
    %v5427 = vadd.f32 0.0, %v5426
    %5428 = vmatmul.f32.gmra.mxu0 %v5237
    %v5429 = vpop.f32.mrf.mxu0
    %v5430 = vadd.f32 0.0, %v5429
    %5431 = vmatmul.f32.gmra.mxu0 %v5238
    %v5432 = vpop.f32.mrf.mxu0
    %v5433 = vadd.f32 0.0, %v5432
    %5434 = vmatmul.f32.gmra.mxu0 %v5239
    %v5435 = vpop.f32.mrf.mxu0
    %v5436 = vadd.f32 0.0, %v5435
    %5437 = vmatmul.f32.gmra.mxu0 %v5240
    %v5438 = vpop.f32.mrf.mxu0
    %v5439 = vadd.f32 0.0, %v5438
    %5440 = vmatmul.f32.gmra.mxu0 %v5241
    %v5441 = vpop.f32.mrf.mxu0
    %v5442 = vadd.f32 0.0, %v5441
    %5443 = vmatmul.f32.gmra.mxu0 %v5242
    %v5444 = vpop.f32.mrf.mxu0
    %v5445 = vadd.f32 0.0, %v5444
    %5446 = vmatmul.f32.gmra.mxu0 %v5243
    %v5447 = vpop.f32.mrf.mxu0
    %v5448 = vadd.f32 0.0, %v5447
    %5449 = vmatmul.f32.gmra.mxu0 %v5244
    %v5450 = vpop.f32.mrf.mxu0
    %v5451 = vadd.f32 0.0, %v5450
    %5452 = vmatmul.f32.gmra.mxu0 %v5245
    %v5453 = vpop.f32.mrf.mxu0
    %v5454 = vadd.f32 0.0, %v5453
    %5455 = vmatmul.f32.gmra.mxu0 %v5246
    %v5456 = vpop.f32.mrf.mxu0
    %v5457 = vadd.f32 0.0, %v5456
    %5458 = vmatmul.f32.gmra.mxu0 %v5247
    %v5459 = vpop.f32.mrf.mxu0
    %v5460 = vadd.f32 0.0, %v5459
    %5461 = vmatmul.f32.gmra.mxu0 %v5248
    %v5462 = vpop.f32.mrf.mxu0
    %v5463 = vadd.f32 0.0, %v5462
    %5464 = vmatmul.f32.gmra.mxu0 %v5249
    %v5465 = vpop.f32.mrf.mxu0
    %v5466 = vadd.f32 0.0, %v5465
    %5467 = vmatmul.f32.gmra.mxu0 %v5250
    %v5468 = vpop.f32.mrf.mxu0
    %v5469 = vadd.f32 0.0, %v5468
    %5470 = vmatmul.f32.gmra.mxu0 %v5251
    %v5471 = vpop.f32.mrf.mxu0
    %v5472 = vadd.f32 0.0, %v5471
    %5473 = vmatmul.f32.gmra.mxu0 %v5252
    %v5474 = vpop.f32.mrf.mxu0
    %v5475 = vadd.f32 0.0, %v5474
    %5476 = vmatmul.f32.gmra.mxu0 %v5253
    %v5477 = vpop.f32.mrf.mxu0
    %v5478 = vadd.f32 0.0, %v5477
    %5479 = vmatmul.f32.gmra.mxu0 %v5254
    %v5480 = vpop.f32.mrf.mxu0
    %v5481 = vadd.f32 0.0, %v5480
    %5482 = vmatmul.f32.gmra.mxu0 %v5255
    %v5483 = vpop.f32.mrf.mxu0
    %v5484 = vadd.f32 0.0, %v5483
    %5485 = vdwg.mxu0
    %v5486 = vadd.f32 %v5124, %v5295
    %v5487 = vadd.f32 %v5125, %v5298
    %v5488 = vadd.f32 %v5126, %v5301
    %v5489 = vadd.f32 %v5127, %v5304
    %v5490 = vadd.f32 %v5128, %v5307
    %v5491 = vadd.f32 %v5129, %v5310
    %v5492 = vadd.f32 %v5130, %v5313
    %v5493 = vadd.f32 %v5131, %v5316
    %v5494 = vadd.f32 %v5132, %v5319
    %v5495 = vadd.f32 %v5133, %v5322
    %v5496 = vadd.f32 %v5134, %v5325
    %v5497 = vadd.f32 %v5135, %v5328
    %v5498 = vadd.f32 %v5136, %v5331
    %v5499 = vadd.f32 %v5137, %v5334
    %v5500 = vadd.f32 %v5138, %v5337
    %v5501 = vadd.f32 %v5139, %v5340
    %v5502 = vadd.f32 %v5140, %v5343
    %v5503 = vadd.f32 %v5141, %v5346
    %v5504 = vadd.f32 %v5142, %v5349
    %v5505 = vadd.f32 %v5143, %v5352
    %v5506 = vadd.f32 %v5144, %v5355
    %v5507 = vadd.f32 %v5145, %v5358
    %v5508 = vadd.f32 %v5146, %v5361
    %v5509 = vadd.f32 %v5147, %v5364
    %v5510 = vadd.f32 %v5148, %v5367
    %v5511 = vadd.f32 %v5149, %v5370
    %v5512 = vadd.f32 %v5150, %v5373
    %v5513 = vadd.f32 %v5151, %v5376
    %v5514 = vadd.f32 %v5152, %v5379
    %v5515 = vadd.f32 %v5153, %v5382
    %v5516 = vadd.f32 %v5154, %v5385
    %v5517 = vadd.f32 %v5155, %v5388
    %v5518 = vadd.f32 %v5156, %v5391
    %v5519 = vadd.f32 %v5157, %v5394
    %v5520 = vadd.f32 %v5158, %v5397
    %v5521 = vadd.f32 %v5159, %v5400
    %v5522 = vadd.f32 %v5160, %v5403
    %v5523 = vadd.f32 %v5161, %v5406
    %v5524 = vadd.f32 %v5162, %v5409
    %v5525 = vadd.f32 %v5163, %v5412
    %v5526 = vadd.f32 %v5164, %v5415
    %v5527 = vadd.f32 %v5165, %v5418
    %v5528 = vadd.f32 %v5166, %v5421
    %v5529 = vadd.f32 %v5167, %v5424
    %v5530 = vadd.f32 %v5168, %v5427
    %v5531 = vadd.f32 %v5169, %v5430
    %v5532 = vadd.f32 %v5170, %v5433
    %v5533 = vadd.f32 %v5171, %v5436
    %v5534 = vadd.f32 %v5172, %v5439
    %v5535 = vadd.f32 %v5173, %v5442
    %v5536 = vadd.f32 %v5174, %v5445
    %v5537 = vadd.f32 %v5175, %v5448
    %v5538 = vadd.f32 %v5176, %v5451
    %v5539 = vadd.f32 %v5177, %v5454
    %v5540 = vadd.f32 %v5178, %v5457
    %v5541 = vadd.f32 %v5179, %v5460
    %v5542 = vadd.f32 %v5180, %v5463
    %v5543 = vadd.f32 %v5181, %v5466
    %v5544 = vadd.f32 %v5182, %v5469
    %v5545 = vadd.f32 %v5183, %v5472
    %v5546 = vadd.f32 %v5184, %v5475
    %v5547 = vadd.f32 %v5185, %v5478
    %v5548 = vadd.f32 %v5186, %v5481
    %v5549 = vadd.f32 %v5187, %v5484
    %s5550 = scalar_lea.vmem [#allocation6], 640
    %v5551 = vld [vmem:[%s5550] sm:$0xff]
    %v5552 = vld [vmem:[%s5550 + $0x8] sm:$0xff]
    %v5553 = vld [vmem:[%s5550 + $0x10] sm:$0xff]
    %v5554 = vld [vmem:[%s5550 + $0x18] sm:$0xff]
    %v5555 = vld [vmem:[%s5550 + $0x20] sm:$0xff]
    %v5556 = vld [vmem:[%s5550 + $0x28] sm:$0xff]
    %v5557 = vld [vmem:[%s5550 + $0x30] sm:$0xff]
    %v5558 = vld [vmem:[%s5550 + $0x38] sm:$0xff]
    %v5559 = vld [vmem:[%s5550 + $0x40] sm:$0xff]
    %v5560 = vld [vmem:[%s5550 + $0x48] sm:$0xff]
    %v5561 = vld [vmem:[%s5550 + $0x50] sm:$0xff]
    %v5562 = vld [vmem:[%s5550 + $0x58] sm:$0xff]
    %v5563 = vld [vmem:[%s5550 + $0x60] sm:$0xff]
    %v5564 = vld [vmem:[%s5550 + $0x68] sm:$0xff]
    %v5565 = vld [vmem:[%s5550 + $0x70] sm:$0xff]
    %v5566 = vld [vmem:[%s5550 + $0x78] sm:$0xff]
    %5567 = vmatpush.msra.mxu0 %v5566
    %5568 = vmatpush.msra.mxu0 %v5565
    %5569 = vmatpush.msra.mxu0 %v5564
    %5570 = vmatpush.msra.mxu0 %v5563
    %5571 = vmatpush.msra.mxu0 %v5562
    %5572 = vmatpush.msra.mxu0 %v5561
    %5573 = vmatpush.msra.mxu0 %v5560
    %5574 = vmatpush.msra.mxu0 %v5559
    %5575 = vmatpush.msra.mxu0 %v5558
    %5576 = vmatpush.msra.mxu0 %v5557
    %5577 = vmatpush.msra.mxu0 %v5556
    %5578 = vmatpush.msra.mxu0 %v5555
    %5579 = vmatpush.msra.mxu0 %v5554
    %5580 = vmatpush.msra.mxu0 %v5553
    %5581 = vmatpush.msra.mxu0 %v5552
    %5582 = vmatpush.msra.mxu0 %v5551
    %5583 = vmatmul.f32.gmra.mxu0 %v5190
    %v5584 = vpop.f32.mrf.mxu0
    %v5585 = vadd.f32 0.0, %v5584
    %5586 = vmatmul.f32.gmra.mxu0 %v5191
    %v5587 = vpop.f32.mrf.mxu0
    %v5588 = vadd.f32 0.0, %v5587
    %5589 = vmatmul.f32.gmra.mxu0 %v5192
    %v5590 = vpop.f32.mrf.mxu0
    %v5591 = vadd.f32 0.0, %v5590
    %5592 = vmatmul.f32.gmra.mxu0 %v5193
    %v5593 = vpop.f32.mrf.mxu0
    %v5594 = vadd.f32 0.0, %v5593
    %5595 = vmatmul.f32.gmra.mxu0 %v5194
    %v5596 = vpop.f32.mrf.mxu0
    %v5597 = vadd.f32 0.0, %v5596
    %5598 = vmatmul.f32.gmra.mxu0 %v5195
    %v5599 = vpop.f32.mrf.mxu0
    %v5600 = vadd.f32 0.0, %v5599
    %5601 = vmatmul.f32.gmra.mxu0 %v5196
    %v5602 = vpop.f32.mrf.mxu0
    %v5603 = vadd.f32 0.0, %v5602
    %5604 = vmatmul.f32.gmra.mxu0 %v5197
    %v5605 = vpop.f32.mrf.mxu0
    %v5606 = vadd.f32 0.0, %v5605
    %5607 = vmatmul.f32.gmra.mxu0 %v5198
    %v5608 = vpop.f32.mrf.mxu0
    %v5609 = vadd.f32 0.0, %v5608
    %5610 = vmatmul.f32.gmra.mxu0 %v5199
    %v5611 = vpop.f32.mrf.mxu0
    %v5612 = vadd.f32 0.0, %v5611
    %5613 = vmatmul.f32.gmra.mxu0 %v5200
    %v5614 = vpop.f32.mrf.mxu0
    %v5615 = vadd.f32 0.0, %v5614
    %5616 = vmatmul.f32.gmra.mxu0 %v5201
    %v5617 = vpop.f32.mrf.mxu0
    %v5618 = vadd.f32 0.0, %v5617
    %5619 = vmatmul.f32.gmra.mxu0 %v5202
    %v5620 = vpop.f32.mrf.mxu0
    %v5621 = vadd.f32 0.0, %v5620
    %5622 = vmatmul.f32.gmra.mxu0 %v5203
    %v5623 = vpop.f32.mrf.mxu0
    %v5624 = vadd.f32 0.0, %v5623
    %5625 = vmatmul.f32.gmra.mxu0 %v5204
    %v5626 = vpop.f32.mrf.mxu0
    %v5627 = vadd.f32 0.0, %v5626
    %5628 = vmatmul.f32.gmra.mxu0 %v5205
    %v5629 = vpop.f32.mrf.mxu0
    %v5630 = vadd.f32 0.0, %v5629
    %5631 = vmatmul.f32.gmra.mxu0 %v5206
    %v5632 = vpop.f32.mrf.mxu0
    %v5633 = vadd.f32 0.0, %v5632
    %5634 = vmatmul.f32.gmra.mxu0 %v5207
    %v5635 = vpop.f32.mrf.mxu0
    %v5636 = vadd.f32 0.0, %v5635
    %5637 = vmatmul.f32.gmra.mxu0 %v5208
    %v5638 = vpop.f32.mrf.mxu0
    %v5639 = vadd.f32 0.0, %v5638
    %5640 = vmatmul.f32.gmra.mxu0 %v5209
    %v5641 = vpop.f32.mrf.mxu0
    %v5642 = vadd.f32 0.0, %v5641
    %5643 = vmatmul.f32.gmra.mxu0 %v5210
    %v5644 = vpop.f32.mrf.mxu0
    %v5645 = vadd.f32 0.0, %v5644
    %5646 = vmatmul.f32.gmra.mxu0 %v5211
    %v5647 = vpop.f32.mrf.mxu0
    %v5648 = vadd.f32 0.0, %v5647
    %5649 = vmatmul.f32.gmra.mxu0 %v5212
    %v5650 = vpop.f32.mrf.mxu0
    %v5651 = vadd.f32 0.0, %v5650
    %5652 = vmatmul.f32.gmra.mxu0 %v5213
    %v5653 = vpop.f32.mrf.mxu0
    %v5654 = vadd.f32 0.0, %v5653
    %5655 = vmatmul.f32.gmra.mxu0 %v5214
    %v5656 = vpop.f32.mrf.mxu0
    %v5657 = vadd.f32 0.0, %v5656
    %5658 = vmatmul.f32.gmra.mxu0 %v5215
    %v5659 = vpop.f32.mrf.mxu0
    %v5660 = vadd.f32 0.0, %v5659
    %5661 = vmatmul.f32.gmra.mxu0 %v5216
    %v5662 = vpop.f32.mrf.mxu0
    %v5663 = vadd.f32 0.0, %v5662
    %5664 = vmatmul.f32.gmra.mxu0 %v5217
    %v5665 = vpop.f32.mrf.mxu0
    %v5666 = vadd.f32 0.0, %v5665
    %5667 = vmatmul.f32.gmra.mxu0 %v5218
    %v5668 = vpop.f32.mrf.mxu0
    %v5669 = vadd.f32 0.0, %v5668
    %5670 = vmatmul.f32.gmra.mxu0 %v5219
    %v5671 = vpop.f32.mrf.mxu0
    %v5672 = vadd.f32 0.0, %v5671
    %5673 = vmatmul.f32.gmra.mxu0 %v5220
    %v5674 = vpop.f32.mrf.mxu0
    %v5675 = vadd.f32 0.0, %v5674
    %5676 = vmatmul.f32.gmra.mxu0 %v5221
    %v5677 = vpop.f32.mrf.mxu0
    %v5678 = vadd.f32 0.0, %v5677
    %5679 = vmatmul.f32.gmra.mxu0 %v5226
    %v5680 = vpop.f32.mrf.mxu0
    %v5681 = vadd.f32 0.0, %v5680
    %5682 = vmatmul.f32.gmra.mxu0 %v5227
    %v5683 = vpop.f32.mrf.mxu0
    %v5684 = vadd.f32 0.0, %v5683
    %5685 = vmatmul.f32.gmra.mxu0 %v5228
    %v5686 = vpop.f32.mrf.mxu0
    %v5687 = vadd.f32 0.0, %v5686
    %5688 = vmatmul.f32.gmra.mxu0 %v5229
    %v5689 = vpop.f32.mrf.mxu0
    %v5690 = vadd.f32 0.0, %v5689
    %5691 = vmatmul.f32.gmra.mxu0 %v5230
    %v5692 = vpop.f32.mrf.mxu0
    %v5693 = vadd.f32 0.0, %v5692
    %5694 = vmatmul.f32.gmra.mxu0 %v5231
    %v5695 = vpop.f32.mrf.mxu0
    %v5696 = vadd.f32 0.0, %v5695
    %5697 = vmatmul.f32.gmra.mxu0 %v5232
    %v5698 = vpop.f32.mrf.mxu0
    %v5699 = vadd.f32 0.0, %v5698
    %5700 = vmatmul.f32.gmra.mxu0 %v5233
    %v5701 = vpop.f32.mrf.mxu0
    %v5702 = vadd.f32 0.0, %v5701
    %5703 = vmatmul.f32.gmra.mxu0 %v5234
    %v5704 = vpop.f32.mrf.mxu0
    %v5705 = vadd.f32 0.0, %v5704
    %5706 = vmatmul.f32.gmra.mxu0 %v5235
    %v5707 = vpop.f32.mrf.mxu0
    %v5708 = vadd.f32 0.0, %v5707
    %5709 = vmatmul.f32.gmra.mxu0 %v5236
    %v5710 = vpop.f32.mrf.mxu0
    %v5711 = vadd.f32 0.0, %v5710
    %5712 = vmatmul.f32.gmra.mxu0 %v5237
    %v5713 = vpop.f32.mrf.mxu0
    %v5714 = vadd.f32 0.0, %v5713
    %5715 = vmatmul.f32.gmra.mxu0 %v5238
    %v5716 = vpop.f32.mrf.mxu0
    %v5717 = vadd.f32 0.0, %v5716
    %5718 = vmatmul.f32.gmra.mxu0 %v5239
    %v5719 = vpop.f32.mrf.mxu0
    %v5720 = vadd.f32 0.0, %v5719
    %5721 = vmatmul.f32.gmra.mxu0 %v5240
    %v5722 = vpop.f32.mrf.mxu0
    %v5723 = vadd.f32 0.0, %v5722
    %5724 = vmatmul.f32.gmra.mxu0 %v5241
    %v5725 = vpop.f32.mrf.mxu0
    %v5726 = vadd.f32 0.0, %v5725
    %5727 = vmatmul.f32.gmra.mxu0 %v5242
    %v5728 = vpop.f32.mrf.mxu0
    %v5729 = vadd.f32 0.0, %v5728
    %5730 = vmatmul.f32.gmra.mxu0 %v5243
    %v5731 = vpop.f32.mrf.mxu0
    %v5732 = vadd.f32 0.0, %v5731
    %5733 = vmatmul.f32.gmra.mxu0 %v5244
    %v5734 = vpop.f32.mrf.mxu0
    %v5735 = vadd.f32 0.0, %v5734
    %5736 = vmatmul.f32.gmra.mxu0 %v5245
    %v5737 = vpop.f32.mrf.mxu0
    %v5738 = vadd.f32 0.0, %v5737
    %5739 = vmatmul.f32.gmra.mxu0 %v5246
    %v5740 = vpop.f32.mrf.mxu0
    %v5741 = vadd.f32 0.0, %v5740
    %5742 = vmatmul.f32.gmra.mxu0 %v5247
    %v5743 = vpop.f32.mrf.mxu0
    %v5744 = vadd.f32 0.0, %v5743
    %5745 = vmatmul.f32.gmra.mxu0 %v5248
    %v5746 = vpop.f32.mrf.mxu0
    %v5747 = vadd.f32 0.0, %v5746
    %5748 = vmatmul.f32.gmra.mxu0 %v5249
    %v5749 = vpop.f32.mrf.mxu0
    %v5750 = vadd.f32 0.0, %v5749
    %5751 = vmatmul.f32.gmra.mxu0 %v5250
    %v5752 = vpop.f32.mrf.mxu0
    %v5753 = vadd.f32 0.0, %v5752
    %5754 = vmatmul.f32.gmra.mxu0 %v5251
    %v5755 = vpop.f32.mrf.mxu0
    %v5756 = vadd.f32 0.0, %v5755
    %5757 = vmatmul.f32.gmra.mxu0 %v5252
    %v5758 = vpop.f32.mrf.mxu0
    %v5759 = vadd.f32 0.0, %v5758
    %5760 = vmatmul.f32.gmra.mxu0 %v5253
    %v5761 = vpop.f32.mrf.mxu0
    %v5762 = vadd.f32 0.0, %v5761
    %5763 = vmatmul.f32.gmra.mxu0 %v5254
    %v5764 = vpop.f32.mrf.mxu0
    %v5765 = vadd.f32 0.0, %v5764
    %5766 = vmatmul.f32.gmra.mxu0 %v5255
    %v5767 = vpop.f32.mrf.mxu0
    %v5768 = vadd.f32 0.0, %v5767
    %5769 = vmatmul.f32.gmra.mxu0 %v5256
    %v5770 = vpop.f32.mrf.mxu0
    %v5771 = vadd.f32 0.0, %v5770
    %5772 = vmatmul.f32.gmra.mxu0 %v5257
    %v5773 = vpop.f32.mrf.mxu0
    %v5774 = vadd.f32 0.0, %v5773
    %5775 = vdwg.mxu0
    %v5776 = vadd.f32 %v5486, %v5585
    %v5777 = vadd.f32 %v5487, %v5588
    %v5778 = vadd.f32 %v5488, %v5591
    %v5779 = vadd.f32 %v5489, %v5594
    %v5780 = vadd.f32 %v5490, %v5597
    %v5781 = vadd.f32 %v5491, %v5600
    %v5782 = vadd.f32 %v5492, %v5603
    %v5783 = vadd.f32 %v5493, %v5606
    %v5784 = vadd.f32 %v5494, %v5609
    %v5785 = vadd.f32 %v5495, %v5612
    %v5786 = vadd.f32 %v5496, %v5615
    %v5787 = vadd.f32 %v5497, %v5618
    %v5788 = vadd.f32 %v5498, %v5621
    %v5789 = vadd.f32 %v5499, %v5624
    %v5790 = vadd.f32 %v5500, %v5627
    %v5791 = vadd.f32 %v5501, %v5630
    %v5792 = vadd.f32 %v5502, %v5633
    %v5793 = vadd.f32 %v5503, %v5636
    %v5794 = vadd.f32 %v5504, %v5639
    %v5795 = vadd.f32 %v5505, %v5642
    %v5796 = vadd.f32 %v5506, %v5645
    %v5797 = vadd.f32 %v5507, %v5648
    %v5798 = vadd.f32 %v5508, %v5651
    %v5799 = vadd.f32 %v5509, %v5654
    %v5800 = vadd.f32 %v5510, %v5657
    %v5801 = vadd.f32 %v5511, %v5660
    %v5802 = vadd.f32 %v5512, %v5663
    %v5803 = vadd.f32 %v5513, %v5666
    %v5804 = vadd.f32 %v5514, %v5669
    %v5805 = vadd.f32 %v5515, %v5672
    %v5806 = vadd.f32 %v5516, %v5675
    %v5807 = vadd.f32 %v5517, %v5678
    %v5808 = vadd.f32 %v5518, %v5681
    %v5809 = vadd.f32 %v5519, %v5684
    %v5810 = vadd.f32 %v5520, %v5687
    %v5811 = vadd.f32 %v5521, %v5690
    %v5812 = vadd.f32 %v5522, %v5693
    %v5813 = vadd.f32 %v5523, %v5696
    %v5814 = vadd.f32 %v5524, %v5699
    %v5815 = vadd.f32 %v5525, %v5702
    %v5816 = vadd.f32 %v5526, %v5705
    %v5817 = vadd.f32 %v5527, %v5708
    %v5818 = vadd.f32 %v5528, %v5711
    %v5819 = vadd.f32 %v5529, %v5714
    %v5820 = vadd.f32 %v5530, %v5717
    %v5821 = vadd.f32 %v5531, %v5720
    %v5822 = vadd.f32 %v5532, %v5723
    %v5823 = vadd.f32 %v5533, %v5726
    %v5824 = vadd.f32 %v5534, %v5729
    %v5825 = vadd.f32 %v5535, %v5732
    %v5826 = vadd.f32 %v5536, %v5735
    %v5827 = vadd.f32 %v5537, %v5738
    %v5828 = vadd.f32 %v5538, %v5741
    %v5829 = vadd.f32 %v5539, %v5744
    %v5830 = vadd.f32 %v5540, %v5747
    %v5831 = vadd.f32 %v5541, %v5750
    %v5832 = vadd.f32 %v5542, %v5753
    %v5833 = vadd.f32 %v5543, %v5756
    %v5834 = vadd.f32 %v5544, %v5759
    %v5835 = vadd.f32 %v5545, %v5762
    %v5836 = vadd.f32 %v5546, %v5765
    %v5837 = vadd.f32 %v5547, %v5768
    %v5838 = vadd.f32 %v5548, %v5771
    %v5839 = vadd.f32 %v5549, %v5774
    %s5840 = scalar_lea.vmem [#allocation6], 1024
    %v5841 = vld [vmem:[%s5840] sm:$0xff]
    %v5842 = vld [vmem:[%s5840 + $0x8] sm:$0xff]
    %v5843 = vld [vmem:[%s5840 + $0x10] sm:$0xff]
    %v5844 = vld [vmem:[%s5840 + $0x18] sm:$0xff]
    %v5845 = vld [vmem:[%s5840 + $0x20] sm:$0xff]
    %v5846 = vld [vmem:[%s5840 + $0x28] sm:$0xff]
    %v5847 = vld [vmem:[%s5840 + $0x30] sm:$0xff]
    %v5848 = vld [vmem:[%s5840 + $0x38] sm:$0xff]
    %v5849 = vld [vmem:[%s5840 + $0x40] sm:$0xff]
    %v5850 = vld [vmem:[%s5840 + $0x48] sm:$0xff]
    %v5851 = vld [vmem:[%s5840 + $0x50] sm:$0xff]
    %v5852 = vld [vmem:[%s5840 + $0x58] sm:$0xff]
    %v5853 = vld [vmem:[%s5840 + $0x60] sm:$0xff]
    %v5854 = vld [vmem:[%s5840 + $0x68] sm:$0xff]
    %v5855 = vld [vmem:[%s5840 + $0x70] sm:$0xff]
    %v5856 = vld [vmem:[%s5840 + $0x78] sm:$0xff]
    %5857 = vmatpush.msra.mxu0 %v5856
    %5858 = vmatpush.msra.mxu0 %v5855
    %5859 = vmatpush.msra.mxu0 %v5854
    %5860 = vmatpush.msra.mxu0 %v5853
    %5861 = vmatpush.msra.mxu0 %v5852
    %5862 = vmatpush.msra.mxu0 %v5851
    %5863 = vmatpush.msra.mxu0 %v5850
    %5864 = vmatpush.msra.mxu0 %v5849
    %5865 = vmatpush.msra.mxu0 %v5848
    %5866 = vmatpush.msra.mxu0 %v5847
    %5867 = vmatpush.msra.mxu0 %v5846
    %5868 = vmatpush.msra.mxu0 %v5845
    %5869 = vmatpush.msra.mxu0 %v5844
    %5870 = vmatpush.msra.mxu0 %v5843
    %5871 = vmatpush.msra.mxu0 %v5842
    %5872 = vmatpush.msra.mxu0 %v5841
    %5873 = vmatmul.f32.gmra.mxu0 %v5192
    %v5874 = vpop.f32.mrf.mxu0
    %v5875 = vadd.f32 0.0, %v5874
    %5876 = vmatmul.f32.gmra.mxu0 %v5193
    %v5877 = vpop.f32.mrf.mxu0
    %v5878 = vadd.f32 0.0, %v5877
    %5879 = vmatmul.f32.gmra.mxu0 %v5194
    %v5880 = vpop.f32.mrf.mxu0
    %v5881 = vadd.f32 0.0, %v5880
    %5882 = vmatmul.f32.gmra.mxu0 %v5195
    %v5883 = vpop.f32.mrf.mxu0
    %v5884 = vadd.f32 0.0, %v5883
    %5885 = vmatmul.f32.gmra.mxu0 %v5196
    %v5886 = vpop.f32.mrf.mxu0
    %v5887 = vadd.f32 0.0, %v5886
    %5888 = vmatmul.f32.gmra.mxu0 %v5197
    %v5889 = vpop.f32.mrf.mxu0
    %v5890 = vadd.f32 0.0, %v5889
    %5891 = vmatmul.f32.gmra.mxu0 %v5198
    %v5892 = vpop.f32.mrf.mxu0
    %v5893 = vadd.f32 0.0, %v5892
    %5894 = vmatmul.f32.gmra.mxu0 %v5199
    %v5895 = vpop.f32.mrf.mxu0
    %v5896 = vadd.f32 0.0, %v5895
    %5897 = vmatmul.f32.gmra.mxu0 %v5200
    %v5898 = vpop.f32.mrf.mxu0
    %v5899 = vadd.f32 0.0, %v5898
    %5900 = vmatmul.f32.gmra.mxu0 %v5201
    %v5901 = vpop.f32.mrf.mxu0
    %v5902 = vadd.f32 0.0, %v5901
    %5903 = vmatmul.f32.gmra.mxu0 %v5202
    %v5904 = vpop.f32.mrf.mxu0
    %v5905 = vadd.f32 0.0, %v5904
    %5906 = vmatmul.f32.gmra.mxu0 %v5203
    %v5907 = vpop.f32.mrf.mxu0
    %v5908 = vadd.f32 0.0, %v5907
    %5909 = vmatmul.f32.gmra.mxu0 %v5204
    %v5910 = vpop.f32.mrf.mxu0
    %v5911 = vadd.f32 0.0, %v5910
    %5912 = vmatmul.f32.gmra.mxu0 %v5205
    %v5913 = vpop.f32.mrf.mxu0
    %v5914 = vadd.f32 0.0, %v5913
    %5915 = vmatmul.f32.gmra.mxu0 %v5206
    %v5916 = vpop.f32.mrf.mxu0
    %v5917 = vadd.f32 0.0, %v5916
    %5918 = vmatmul.f32.gmra.mxu0 %v5207
    %v5919 = vpop.f32.mrf.mxu0
    %v5920 = vadd.f32 0.0, %v5919
    %5921 = vmatmul.f32.gmra.mxu0 %v5208
    %v5922 = vpop.f32.mrf.mxu0
    %v5923 = vadd.f32 0.0, %v5922
    %5924 = vmatmul.f32.gmra.mxu0 %v5209
    %v5925 = vpop.f32.mrf.mxu0
    %v5926 = vadd.f32 0.0, %v5925
    %5927 = vmatmul.f32.gmra.mxu0 %v5210
    %v5928 = vpop.f32.mrf.mxu0
    %v5929 = vadd.f32 0.0, %v5928
    %5930 = vmatmul.f32.gmra.mxu0 %v5211
    %v5931 = vpop.f32.mrf.mxu0
    %v5932 = vadd.f32 0.0, %v5931
    %5933 = vmatmul.f32.gmra.mxu0 %v5212
    %v5934 = vpop.f32.mrf.mxu0
    %v5935 = vadd.f32 0.0, %v5934
    %5936 = vmatmul.f32.gmra.mxu0 %v5213
    %v5937 = vpop.f32.mrf.mxu0
    %v5938 = vadd.f32 0.0, %v5937
    %5939 = vmatmul.f32.gmra.mxu0 %v5214
    %v5940 = vpop.f32.mrf.mxu0
    %v5941 = vadd.f32 0.0, %v5940
    %5942 = vmatmul.f32.gmra.mxu0 %v5215
    %v5943 = vpop.f32.mrf.mxu0
    %v5944 = vadd.f32 0.0, %v5943
    %5945 = vmatmul.f32.gmra.mxu0 %v5216
    %v5946 = vpop.f32.mrf.mxu0
    %v5947 = vadd.f32 0.0, %v5946
    %5948 = vmatmul.f32.gmra.mxu0 %v5217
    %v5949 = vpop.f32.mrf.mxu0
    %v5950 = vadd.f32 0.0, %v5949
    %5951 = vmatmul.f32.gmra.mxu0 %v5218
    %v5952 = vpop.f32.mrf.mxu0
    %v5953 = vadd.f32 0.0, %v5952
    %5954 = vmatmul.f32.gmra.mxu0 %v5219
    %v5955 = vpop.f32.mrf.mxu0
    %v5956 = vadd.f32 0.0, %v5955
    %5957 = vmatmul.f32.gmra.mxu0 %v5220
    %v5958 = vpop.f32.mrf.mxu0
    %v5959 = vadd.f32 0.0, %v5958
    %5960 = vmatmul.f32.gmra.mxu0 %v5221
    %v5961 = vpop.f32.mrf.mxu0
    %v5962 = vadd.f32 0.0, %v5961
    %5963 = vmatmul.f32.gmra.mxu0 %v5222
    %v5964 = vpop.f32.mrf.mxu0
    %v5965 = vadd.f32 0.0, %v5964
    %5966 = vmatmul.f32.gmra.mxu0 %v5223
    %v5967 = vpop.f32.mrf.mxu0
    %v5968 = vadd.f32 0.0, %v5967
    %5969 = vmatmul.f32.gmra.mxu0 %v5228
    %v5970 = vpop.f32.mrf.mxu0
    %v5971 = vadd.f32 0.0, %v5970
    %5972 = vmatmul.f32.gmra.mxu0 %v5229
    %v5973 = vpop.f32.mrf.mxu0
    %v5974 = vadd.f32 0.0, %v5973
    %5975 = vmatmul.f32.gmra.mxu0 %v5230
    %v5976 = vpop.f32.mrf.mxu0
    %v5977 = vadd.f32 0.0, %v5976
    %5978 = vmatmul.f32.gmra.mxu0 %v5231
    %v5979 = vpop.f32.mrf.mxu0
    %v5980 = vadd.f32 0.0, %v5979
    %5981 = vmatmul.f32.gmra.mxu0 %v5232
    %v5982 = vpop.f32.mrf.mxu0
    %v5983 = vadd.f32 0.0, %v5982
    %5984 = vmatmul.f32.gmra.mxu0 %v5233
    %v5985 = vpop.f32.mrf.mxu0
    %v5986 = vadd.f32 0.0, %v5985
    %5987 = vmatmul.f32.gmra.mxu0 %v5234
    %v5988 = vpop.f32.mrf.mxu0
    %v5989 = vadd.f32 0.0, %v5988
    %5990 = vmatmul.f32.gmra.mxu0 %v5235
    %v5991 = vpop.f32.mrf.mxu0
    %v5992 = vadd.f32 0.0, %v5991
    %5993 = vmatmul.f32.gmra.mxu0 %v5236
    %v5994 = vpop.f32.mrf.mxu0
    %v5995 = vadd.f32 0.0, %v5994
    %5996 = vmatmul.f32.gmra.mxu0 %v5237
    %v5997 = vpop.f32.mrf.mxu0
    %v5998 = vadd.f32 0.0, %v5997
    %5999 = vmatmul.f32.gmra.mxu0 %v5238
    %v6000 = vpop.f32.mrf.mxu0
    %v6001 = vadd.f32 0.0, %v6000
    %6002 = vmatmul.f32.gmra.mxu0 %v5239
    %v6003 = vpop.f32.mrf.mxu0
    %v6004 = vadd.f32 0.0, %v6003
    %6005 = vmatmul.f32.gmra.mxu0 %v5240
    %v6006 = vpop.f32.mrf.mxu0
    %v6007 = vadd.f32 0.0, %v6006
    %6008 = vmatmul.f32.gmra.mxu0 %v5241
    %v6009 = vpop.f32.mrf.mxu0
    %v6010 = vadd.f32 0.0, %v6009
    %6011 = vmatmul.f32.gmra.mxu0 %v5242
    %v6012 = vpop.f32.mrf.mxu0
    %v6013 = vadd.f32 0.0, %v6012
    %6014 = vmatmul.f32.gmra.mxu0 %v5243
    %v6015 = vpop.f32.mrf.mxu0
    %v6016 = vadd.f32 0.0, %v6015
    %6017 = vmatmul.f32.gmra.mxu0 %v5244
    %v6018 = vpop.f32.mrf.mxu0
    %v6019 = vadd.f32 0.0, %v6018
    %6020 = vmatmul.f32.gmra.mxu0 %v5245
    %v6021 = vpop.f32.mrf.mxu0
    %v6022 = vadd.f32 0.0, %v6021
    %6023 = vmatmul.f32.gmra.mxu0 %v5246
    %v6024 = vpop.f32.mrf.mxu0
    %v6025 = vadd.f32 0.0, %v6024
    %6026 = vmatmul.f32.gmra.mxu0 %v5247
    %v6027 = vpop.f32.mrf.mxu0
    %v6028 = vadd.f32 0.0, %v6027
    %6029 = vmatmul.f32.gmra.mxu0 %v5248
    %v6030 = vpop.f32.mrf.mxu0
    %v6031 = vadd.f32 0.0, %v6030
    %6032 = vmatmul.f32.gmra.mxu0 %v5249
    %v6033 = vpop.f32.mrf.mxu0
    %v6034 = vadd.f32 0.0, %v6033
    %6035 = vmatmul.f32.gmra.mxu0 %v5250
    %v6036 = vpop.f32.mrf.mxu0
    %v6037 = vadd.f32 0.0, %v6036
    %6038 = vmatmul.f32.gmra.mxu0 %v5251
    %v6039 = vpop.f32.mrf.mxu0
    %v6040 = vadd.f32 0.0, %v6039
    %6041 = vmatmul.f32.gmra.mxu0 %v5252
    %v6042 = vpop.f32.mrf.mxu0
    %v6043 = vadd.f32 0.0, %v6042
    %6044 = vmatmul.f32.gmra.mxu0 %v5253
    %v6045 = vpop.f32.mrf.mxu0
    %v6046 = vadd.f32 0.0, %v6045
    %6047 = vmatmul.f32.gmra.mxu0 %v5254
    %v6048 = vpop.f32.mrf.mxu0
    %v6049 = vadd.f32 0.0, %v6048
    %6050 = vmatmul.f32.gmra.mxu0 %v5255
    %v6051 = vpop.f32.mrf.mxu0
    %v6052 = vadd.f32 0.0, %v6051
    %6053 = vmatmul.f32.gmra.mxu0 %v5256
    %v6054 = vpop.f32.mrf.mxu0
    %v6055 = vadd.f32 0.0, %v6054
    %6056 = vmatmul.f32.gmra.mxu0 %v5257
    %v6057 = vpop.f32.mrf.mxu0
    %v6058 = vadd.f32 0.0, %v6057
    %6059 = vmatmul.f32.gmra.mxu0 %v5258
    %v6060 = vpop.f32.mrf.mxu0
    %v6061 = vadd.f32 0.0, %v6060
    %6062 = vmatmul.f32.gmra.mxu0 %v5259
    %v6063 = vpop.f32.mrf.mxu0
    %v6064 = vadd.f32 0.0, %v6063
    %6065 = vdwg.mxu0
    %v6066 = vadd.f32 %v5776, %v5875
    %v6067 = vadd.f32 %v5777, %v5878
    %v6068 = vadd.f32 %v5778, %v5881
    %v6069 = vadd.f32 %v5779, %v5884
    %v6070 = vadd.f32 %v5780, %v5887
    %v6071 = vadd.f32 %v5781, %v5890
    %v6072 = vadd.f32 %v5782, %v5893
    %v6073 = vadd.f32 %v5783, %v5896
    %v6074 = vadd.f32 %v5784, %v5899
    %v6075 = vadd.f32 %v5785, %v5902
    %v6076 = vadd.f32 %v5786, %v5905
    %v6077 = vadd.f32 %v5787, %v5908
    %v6078 = vadd.f32 %v5788, %v5911
    %v6079 = vadd.f32 %v5789, %v5914
    %v6080 = vadd.f32 %v5790, %v5917
    %v6081 = vadd.f32 %v5791, %v5920
    %v6082 = vadd.f32 %v5792, %v5923
    %v6083 = vadd.f32 %v5793, %v5926
    %v6084 = vadd.f32 %v5794, %v5929
    %v6085 = vadd.f32 %v5795, %v5932
    %v6086 = vadd.f32 %v5796, %v5935
    %v6087 = vadd.f32 %v5797, %v5938
    %v6088 = vadd.f32 %v5798, %v5941
    %v6089 = vadd.f32 %v5799, %v5944
    %v6090 = vadd.f32 %v5800, %v5947
    %v6091 = vadd.f32 %v5801, %v5950
    %v6092 = vadd.f32 %v5802, %v5953
    %v6093 = vadd.f32 %v5803, %v5956
    %v6094 = vadd.f32 %v5804, %v5959
    %v6095 = vadd.f32 %v5805, %v5962
    %v6096 = vadd.f32 %v5806, %v5965
    %v6097 = vadd.f32 %v5807, %v5968
    %v6098 = vadd.f32 %v5808, %v5971
    %v6099 = vadd.f32 %v5809, %v5974
    %v6100 = vadd.f32 %v5810, %v5977
    %v6101 = vadd.f32 %v5811, %v5980
    %v6102 = vadd.f32 %v5812, %v5983
    %v6103 = vadd.f32 %v5813, %v5986
    %v6104 = vadd.f32 %v5814, %v5989
    %v6105 = vadd.f32 %v5815, %v5992
    %v6106 = vadd.f32 %v5816, %v5995
    %v6107 = vadd.f32 %v5817, %v5998
    %v6108 = vadd.f32 %v5818, %v6001
    %v6109 = vadd.f32 %v5819, %v6004
    %v6110 = vadd.f32 %v5820, %v6007
    %v6111 = vadd.f32 %v5821, %v6010
    %v6112 = vadd.f32 %v5822, %v6013
    %v6113 = vadd.f32 %v5823, %v6016
    %v6114 = vadd.f32 %v5824, %v6019
    %v6115 = vadd.f32 %v5825, %v6022
    %v6116 = vadd.f32 %v5826, %v6025
    %v6117 = vadd.f32 %v5827, %v6028
    %v6118 = vadd.f32 %v5828, %v6031
    %v6119 = vadd.f32 %v5829, %v6034
    %v6120 = vadd.f32 %v5830, %v6037
    %v6121 = vadd.f32 %v5831, %v6040
    %v6122 = vadd.f32 %v5832, %v6043
    %v6123 = vadd.f32 %v5833, %v6046
    %v6124 = vadd.f32 %v5834, %v6049
    %v6125 = vadd.f32 %v5835, %v6052
    %v6126 = vadd.f32 %v5836, %v6055
    %v6127 = vadd.f32 %v5837, %v6058
    %v6128 = vadd.f32 %v5838, %v6061
    %v6129 = vadd.f32 %v5839, %v6064
    %v6130 = vld [vmem:[%s5] sm:$0x1]
    %v6132 = vperm.slane %v6130, 0
    %v6134 = vmul.f32 %v6066, %v6132
    %v6135 = vmul.f32 %v6067, %v6132
    %v6136 = vmul.f32 %v6068, %v6132
    %v6137 = vmul.f32 %v6069, %v6132
    %v6138 = vmul.f32 %v6070, %v6132
    %v6139 = vmul.f32 %v6071, %v6132
    %v6140 = vmul.f32 %v6072, %v6132
    %v6141 = vmul.f32 %v6073, %v6132
    %v6142 = vmul.f32 %v6074, %v6132
    %v6143 = vmul.f32 %v6075, %v6132
    %v6144 = vmul.f32 %v6076, %v6132
    %v6145 = vmul.f32 %v6077, %v6132
    %v6146 = vmul.f32 %v6078, %v6132
    %v6147 = vmul.f32 %v6079, %v6132
    %v6148 = vmul.f32 %v6080, %v6132
    %v6149 = vmul.f32 %v6081, %v6132
    %v6150 = vmul.f32 %v6082, %v6132
    %v6151 = vmul.f32 %v6083, %v6132
    %v6152 = vmul.f32 %v6084, %v6132
    %v6153 = vmul.f32 %v6085, %v6132
    %v6154 = vmul.f32 %v6086, %v6132
    %v6155 = vmul.f32 %v6087, %v6132
    %v6156 = vmul.f32 %v6088, %v6132
    %v6157 = vmul.f32 %v6089, %v6132
    %v6158 = vmul.f32 %v6090, %v6132
    %v6159 = vmul.f32 %v6091, %v6132
    %v6160 = vmul.f32 %v6092, %v6132
    %v6161 = vmul.f32 %v6093, %v6132
    %v6162 = vmul.f32 %v6094, %v6132
    %v6163 = vmul.f32 %v6095, %v6132
    %v6164 = vmul.f32 %v6096, %v6132
    %v6165 = vmul.f32 %v6097, %v6132
    %v6166 = vmul.f32 %v6098, %v6132
    %v6167 = vmul.f32 %v6099, %v6132
    %v6168 = vmul.f32 %v6100, %v6132
    %v6169 = vmul.f32 %v6101, %v6132
    %v6170 = vmul.f32 %v6102, %v6132
    %v6171 = vmul.f32 %v6103, %v6132
    %v6172 = vmul.f32 %v6104, %v6132
    %v6173 = vmul.f32 %v6105, %v6132
    %v6174 = vmul.f32 %v6106, %v6132
    %v6175 = vmul.f32 %v6107, %v6132
    %v6176 = vmul.f32 %v6108, %v6132
    %v6177 = vmul.f32 %v6109, %v6132
    %v6178 = vmul.f32 %v6110, %v6132
    %v6179 = vmul.f32 %v6111, %v6132
    %v6180 = vmul.f32 %v6112, %v6132
    %v6181 = vmul.f32 %v6113, %v6132
    %v6182 = vmul.f32 %v6114, %v6132
    %v6183 = vmul.f32 %v6115, %v6132
    %v6184 = vmul.f32 %v6116, %v6132
    %v6185 = vmul.f32 %v6117, %v6132
    %v6186 = vmul.f32 %v6118, %v6132
    %v6187 = vmul.f32 %v6119, %v6132
    %v6188 = vmul.f32 %v6120, %v6132
    %v6189 = vmul.f32 %v6121, %v6132
    %v6190 = vmul.f32 %v6122, %v6132
    %v6191 = vmul.f32 %v6123, %v6132
    %v6192 = vmul.f32 %v6124, %v6132
    %v6193 = vmul.f32 %v6125, %v6132
    %v6194 = vmul.f32 %v6126, %v6132
    %v6195 = vmul.f32 %v6127, %v6132
    %v6196 = vmul.f32 %v6128, %v6132
    %v6197 = vmul.f32 %v6129, %v6132
    %v6198 = vld [vmem:[%s6] sm:$0x1]
    %v6200 = vperm.slane %v6198, 0
    %v6202 = vadd.f32 %v6134, %v6200
    %v6203 = vadd.f32 %v6135, %v6200
    %v6204 = vadd.f32 %v6136, %v6200
    %v6205 = vadd.f32 %v6137, %v6200
    %v6206 = vadd.f32 %v6138, %v6200
    %v6207 = vadd.f32 %v6139, %v6200
    %v6208 = vadd.f32 %v6140, %v6200
    %v6209 = vadd.f32 %v6141, %v6200
    %v6210 = vadd.f32 %v6142, %v6200
    %v6211 = vadd.f32 %v6143, %v6200
    %v6212 = vadd.f32 %v6144, %v6200
    %v6213 = vadd.f32 %v6145, %v6200
    %v6214 = vadd.f32 %v6146, %v6200
    %v6215 = vadd.f32 %v6147, %v6200
    %v6216 = vadd.f32 %v6148, %v6200
    %v6217 = vadd.f32 %v6149, %v6200
    %v6218 = vadd.f32 %v6150, %v6200
    %v6219 = vadd.f32 %v6151, %v6200
    %v6220 = vadd.f32 %v6152, %v6200
    %v6221 = vadd.f32 %v6153, %v6200
    %v6222 = vadd.f32 %v6154, %v6200
    %v6223 = vadd.f32 %v6155, %v6200
    %v6224 = vadd.f32 %v6156, %v6200
    %v6225 = vadd.f32 %v6157, %v6200
    %v6226 = vadd.f32 %v6158, %v6200
    %v6227 = vadd.f32 %v6159, %v6200
    %v6228 = vadd.f32 %v6160, %v6200
    %v6229 = vadd.f32 %v6161, %v6200
    %v6230 = vadd.f32 %v6162, %v6200
    %v6231 = vadd.f32 %v6163, %v6200
    %v6232 = vadd.f32 %v6164, %v6200
    %v6233 = vadd.f32 %v6165, %v6200
    %v6234 = vadd.f32 %v6166, %v6200
    %v6235 = vadd.f32 %v6167, %v6200
    %v6236 = vadd.f32 %v6168, %v6200
    %v6237 = vadd.f32 %v6169, %v6200
    %v6238 = vadd.f32 %v6170, %v6200
    %v6239 = vadd.f32 %v6171, %v6200
    %v6240 = vadd.f32 %v6172, %v6200
    %v6241 = vadd.f32 %v6173, %v6200
    %v6242 = vadd.f32 %v6174, %v6200
    %v6243 = vadd.f32 %v6175, %v6200
    %v6244 = vadd.f32 %v6176, %v6200
    %v6245 = vadd.f32 %v6177, %v6200
    %v6246 = vadd.f32 %v6178, %v6200
    %v6247 = vadd.f32 %v6179, %v6200
    %v6248 = vadd.f32 %v6180, %v6200
    %v6249 = vadd.f32 %v6181, %v6200
    %v6250 = vadd.f32 %v6182, %v6200
    %v6251 = vadd.f32 %v6183, %v6200
    %v6252 = vadd.f32 %v6184, %v6200
    %v6253 = vadd.f32 %v6185, %v6200
    %v6254 = vadd.f32 %v6186, %v6200
    %v6255 = vadd.f32 %v6187, %v6200
    %v6256 = vadd.f32 %v6188, %v6200
    %v6257 = vadd.f32 %v6189, %v6200
    %v6258 = vadd.f32 %v6190, %v6200
    %v6259 = vadd.f32 %v6191, %v6200
    %v6260 = vadd.f32 %v6192, %v6200
    %v6261 = vadd.f32 %v6193, %v6200
    %v6262 = vadd.f32 %v6194, %v6200
    %v6263 = vadd.f32 %v6195, %v6200
    %v6264 = vadd.f32 %v6196, %v6200
    %v6265 = vadd.f32 %v6197, %v6200
    %vm6266 = vcmask 64512
    %6267 = vst.msk [vmem:[%s7] sm:$0xff] %vm6266, %v6202
    %6268 = vst.msk [vmem:[%s7 + $0x8] sm:$0xff] %vm6266, %v6203
    %6269 = vst.msk [vmem:[%s7 + $0x10] sm:$0xff] %vm6266, %v6204
    %6270 = vst.msk [vmem:[%s7 + $0x18] sm:$0xff] %vm6266, %v6205
    %6271 = vst.msk [vmem:[%s7 + $0x20] sm:$0xff] %vm6266, %v6206
    %6272 = vst.msk [vmem:[%s7 + $0x28] sm:$0xff] %vm6266, %v6207
    %6273 = vst.msk [vmem:[%s7 + $0x30] sm:$0xff] %vm6266, %v6208
    %6274 = vst.msk [vmem:[%s7 + $0x38] sm:$0xff] %vm6266, %v6209
    %6275 = vst.msk [vmem:[%s7 + $0x40] sm:$0xff] %vm6266, %v6210
    %6276 = vst.msk [vmem:[%s7 + $0x48] sm:$0xff] %vm6266, %v6211
    %6277 = vst.msk [vmem:[%s7 + $0x50] sm:$0xff] %vm6266, %v6212
    %6278 = vst.msk [vmem:[%s7 + $0x58] sm:$0xff] %vm6266, %v6213
    %6279 = vst.msk [vmem:[%s7 + $0x60] sm:$0xff] %vm6266, %v6214
    %6280 = vst.msk [vmem:[%s7 + $0x68] sm:$0xff] %vm6266, %v6215
    %6281 = vst.msk [vmem:[%s7 + $0x70] sm:$0xff] %vm6266, %v6216
    %6282 = vst.msk [vmem:[%s7 + $0x78] sm:$0xff] %vm6266, %v6217
    %6283 = vst.msk [vmem:[%s7 + $0x80] sm:$0xff] %vm6266, %v6218
    %6284 = vst.msk [vmem:[%s7 + $0x88] sm:$0xff] %vm6266, %v6219
    %6285 = vst.msk [vmem:[%s7 + $0x90] sm:$0xff] %vm6266, %v6220
    %6286 = vst.msk [vmem:[%s7 + $0x98] sm:$0xff] %vm6266, %v6221
    %6287 = vst.msk [vmem:[%s7 + $0xa0] sm:$0xff] %vm6266, %v6222
    %6288 = vst.msk [vmem:[%s7 + $0xa8] sm:$0xff] %vm6266, %v6223
    %6289 = vst.msk [vmem:[%s7 + $0xb0] sm:$0xff] %vm6266, %v6224
    %6290 = vst.msk [vmem:[%s7 + $0xb8] sm:$0xff] %vm6266, %v6225
    %6291 = vst.msk [vmem:[%s7 + $0xc0] sm:$0xff] %vm6266, %v6226
    %6292 = vst.msk [vmem:[%s7 + $0xc8] sm:$0xff] %vm6266, %v6227
    %6293 = vst.msk [vmem:[%s7 + $0xd0] sm:$0xff] %vm6266, %v6228
    %6294 = vst.msk [vmem:[%s7 + $0xd8] sm:$0xff] %vm6266, %v6229
    %6295 = vst.msk [vmem:[%s7 + $0xe0] sm:$0xff] %vm6266, %v6230
    %6296 = vst.msk [vmem:[%s7 + $0xe8] sm:$0xff] %vm6266, %v6231
    %6297 = vst.msk [vmem:[%s7 + $0xf0] sm:$0xff] %vm6266, %v6232
    %6298 = vst.msk [vmem:[%s7 + $0xf8] sm:$0xff] %vm6266, %v6233
    %6299 = vst.msk [vmem:[%s7 + $0x100] sm:$0xff] %vm6266, %v6234
    %6300 = vst.msk [vmem:[%s7 + $0x108] sm:$0xff] %vm6266, %v6235
    %6301 = vst.msk [vmem:[%s7 + $0x110] sm:$0xff] %vm6266, %v6236
    %6302 = vst.msk [vmem:[%s7 + $0x118] sm:$0xff] %vm6266, %v6237
    %6303 = vst.msk [vmem:[%s7 + $0x120] sm:$0xff] %vm6266, %v6238
    %6304 = vst.msk [vmem:[%s7 + $0x128] sm:$0xff] %vm6266, %v6239
    %6305 = vst.msk [vmem:[%s7 + $0x130] sm:$0xff] %vm6266, %v6240
    %6306 = vst.msk [vmem:[%s7 + $0x138] sm:$0xff] %vm6266, %v6241
    %6307 = vst.msk [vmem:[%s7 + $0x140] sm:$0xff] %vm6266, %v6242
    %6308 = vst.msk [vmem:[%s7 + $0x148] sm:$0xff] %vm6266, %v6243
    %6309 = vst.msk [vmem:[%s7 + $0x150] sm:$0xff] %vm6266, %v6244
    %6310 = vst.msk [vmem:[%s7 + $0x158] sm:$0xff] %vm6266, %v6245
    %6311 = vst.msk [vmem:[%s7 + $0x160] sm:$0xff] %vm6266, %v6246
    %6312 = vst.msk [vmem:[%s7 + $0x168] sm:$0xff] %vm6266, %v6247
    %6313 = vst.msk [vmem:[%s7 + $0x170] sm:$0xff] %vm6266, %v6248
    %6314 = vst.msk [vmem:[%s7 + $0x178] sm:$0xff] %vm6266, %v6249
    %6315 = vst.msk [vmem:[%s7 + $0x180] sm:$0xff] %vm6266, %v6250
    %6316 = vst.msk [vmem:[%s7 + $0x188] sm:$0xff] %vm6266, %v6251
    %6317 = vst.msk [vmem:[%s7 + $0x190] sm:$0xff] %vm6266, %v6252
    %6318 = vst.msk [vmem:[%s7 + $0x198] sm:$0xff] %vm6266, %v6253
    %6319 = vst.msk [vmem:[%s7 + $0x1a0] sm:$0xff] %vm6266, %v6254
    %6320 = vst.msk [vmem:[%s7 + $0x1a8] sm:$0xff] %vm6266, %v6255
    %6321 = vst.msk [vmem:[%s7 + $0x1b0] sm:$0xff] %vm6266, %v6256
    %6322 = vst.msk [vmem:[%s7 + $0x1b8] sm:$0xff] %vm6266, %v6257
    %6323 = vst.msk [vmem:[%s7 + $0x1c0] sm:$0xff] %vm6266, %v6258
    %6324 = vst.msk [vmem:[%s7 + $0x1c8] sm:$0xff] %vm6266, %v6259
    %6325 = vst.msk [vmem:[%s7 + $0x1d0] sm:$0xff] %vm6266, %v6260
    %6326 = vst.msk [vmem:[%s7 + $0x1d8] sm:$0xff] %vm6266, %v6261
    %6327 = vst.msk [vmem:[%s7 + $0x1e0] sm:$0xff] %vm6266, %v6262
    %6328 = vst.msk [vmem:[%s7 + $0x1e8] sm:$0xff] %vm6266, %v6263
    %6329 = vst.msk [vmem:[%s7 + $0x1f0] sm:$0xff] %vm6266, %v6264
    %6330 = vst.msk [vmem:[%s7 + $0x1f8] sm:$0xff] %vm6266, %v6265
    // Predicated region
    $region38: #{tpu_custom_call.1} parent=1 // pred_check
      _
    $region39: #{tpu_custom_call.1} parent=1 // pred_check_branch
      %6332 = sbr.rel (0) target = $region41
    $region40: #{tpu_custom_call.1} parent=1 // pred_region
      _
    $region41: #{tpu_custom_call.1} parent=1 // pred_fallthru
      _
    // Predicated region
    $region42: #{tpu_custom_call.1} parent=1 // pred_check
      _
    $region43: #{tpu_custom_call.1} parent=1 // pred_check_branch
      %6334 = sbr.rel (0) target = $region45
    $region44: #{tpu_custom_call.1} parent=1 // pred_region
      _
    $region45: #{tpu_custom_call.1} parent=1 // pred_fallthru
      _
    %6335 = vsyncpa [#allocation5], 1
    %6336 = vsyncpa [#allocation7], 1

</llo_original>
